<compile_context>
chip_gen: v6e
topology: v6e:2x2x1
jax: 0.10.0
libtpu: 0.0.40
codegen_flags: <defaults>
</compile_context>

<pallas_src>
import functools
import math

import jax
import jax.numpy as jnp
from jax import lax
from jax.experimental import pallas as pl
from jax.experimental.pallas import tpu as pltpu

EPS = 1e-5


# --------------------------------------------------------------------------
# In-kernel helpers (operate on values, never on strided refs)
# --------------------------------------------------------------------------
def _im2col(x, K, pad, l_out):
    """x: (L, Cin) value -> (l_out, K*Cin); zero padding rows built in registers."""
    _, cin = x.shape
    if pad:
        z = jnp.zeros((pad, cin), x.dtype)
        xp = jnp.concatenate([z, x, z], axis=0)
    else:
        xp = x
    cols = [xp[k:k + l_out, :] for k in range(K)]
    if K == 1:
        return cols[0]
    return jnp.concatenate(cols, axis=-1)


def _accum_stats(y, s1, s2):
    """One-pass sums for BN: s1 += sum(y), s2 += sum(y*y) via MXU ones-matmuls."""
    ones = jnp.ones((1, y.shape[0]), jnp.float32)
    s1 = s1 + jnp.dot(ones, y, preferred_element_type=jnp.float32)
    s2 = s2 + jnp.dot(ones, y * y, preferred_element_type=jnp.float32)
    return s1, s2


def _finalize_stats(s1, s2, count, gamma, beta):
    mean = s1 / count
    var = jnp.maximum(s2 / count - mean * mean, 0.0)
    scale = gamma * lax.rsqrt(var + EPS)
    shift = beta - mean * scale
    return scale, shift


def _mm_bf16(lhs_f32, rhs_bf16):
    return jnp.dot(lhs_f32.astype(jnp.bfloat16), rhs_bf16,
                   preferred_element_type=jnp.float32)


# --------------------------------------------------------------------------
# Pallas kernels
# --------------------------------------------------------------------------
def _stem_kernel(x_ref, w_ref, g_ref, b_ref, o_ref, y_ref, *,
                 K, conv_pad, pool_k, pool_s, pool_p):
    """conv1 (im2col matmul) -> bn1 (batch stats) -> relu -> maxpool(pool_k, pool_s, pool_p).

    x_ref : (N, L0, Cin)   w_ref : (K*Cin, Cout)   o_ref : (N, Lp, Cout)
    y_ref : (N, L1, Cout) VMEM scratch (raw conv output).
    """
    N = x_ref.shape[0]
    L1, Cout = y_ref.shape[1], y_ref.shape[2]
    Lp = o_ref.shape[1]
    Lf = L1 + 2 * pool_p - pool_k + 1
    cnt = float(N * L1)

    w = w_ref[...].astype(jnp.bfloat16)
    s1 = jnp.zeros((1, Cout), jnp.float32)
    s2 = jnp.zeros((1, Cout), jnp.float32)
    for n in range(N):
        y = _mm_bf16(_im2col(x_ref[n], K, conv_pad, L1), w)
        y_ref[n] = y
        s1, s2 = _accum_stats(y, s1, s2)
    scale, shift = _finalize_stats(s1, s2, cnt, g_ref[...], b_ref[...])

    # Stride-pool_s decimation as an exact 0/1 selection matmul (no strided refs).
    ri = lax.broadcasted_iota(jnp.int32, (Lp, Lf), 0)
    ci = lax.broadcasted_iota(jnp.int32, (Lp, Lf), 1)
    sel = (ci == pool_s * ri).astype(jnp.float32)

    for n in range(N):
        a = jnp.maximum(y_ref[n] * scale + shift, 0.0)          # bn1 + relu (>= 0)
        if pool_p:
            z = jnp.zeros((pool_p, Cout), jnp.float32)
            ap = jnp.concatenate([z, a, z], axis=0)              # zero pad post-relu: safe
        else:
            ap = a
        m = ap[0:Lf, :]
        for k in range(1, pool_k):
            m = jnp.maximum(m, ap[k:k + Lf, :])
        o_ref[n] = jnp.dot(sel, m, preferred_element_type=jnp.float32)


def _block_kernel(*refs, K, has_down):
    """One fused BasicBlock:
       conv1 -> bn1 -> relu -> conv2 -> bn2 (+ 1x1 downsample conv + BN) -> add -> relu.

    refs (no downsample): x, w1, g1, b1, w2, g2, b2, out, y_scratch
    refs (downsample)   : x, w1, g1, b1, w2, g2, b2, wd, gd, bd, out, y_scratch
      x : (N, L, Cin)   w1 : (K*Cin, Cout)   w2 : (K*Cout, Cout)   wd : (Cin, Cout)
      out : (N, L, Cout)   y_scratch : (N, L, Cout) VMEM (reused for y1 then y2).
    """
    if has_down:
        (x_ref, w1_ref, g1_ref, b1_ref, w2_ref, g2_ref, b2_ref,
         wd_ref, gd_ref, bd_ref, o_ref, y_ref) = refs
    else:
        (x_ref, w1_ref, g1_ref, b1_ref, w2_ref, g2_ref, b2_ref,
         o_ref, y_ref) = refs
        wd_ref = gd_ref = bd_ref = None

    N, L, _ = x_ref.shape
    Cout = o_ref.shape[2]
    pad = (K - 1) // 2                      # k=3 / p=1 convs preserve L
    cnt = float(N * L)

    # ---- conv1 (single im2col matmul per sample) + one-pass bn1 stats ----
    w1 = w1_ref[...].astype(jnp.bfloat16)
    s1 = jnp.zeros((1, Cout), jnp.float32)
    s2 = jnp.zeros((1, Cout), jnp.float32)
    for n in range(N):
        y = _mm_bf16(_im2col(x_ref[n], K, pad, L), w1)
        y_ref[n] = y
        s1, s2 = _accum_stats(y, s1, s2)
    sc1, sh1 = _finalize_stats(s1, s2, cnt, g1_ref[...], b1_ref[...])

    # ---- bn1 + relu fused into conv2; scratch slot reused for conv2 out ----
    w2 = w2_ref[...].astype(jnp.bfloat16)
    s1 = jnp.zeros((1, Cout), jnp.float32)
    s2 = jnp.zeros((1, Cout), jnp.float32)
    for n in range(N):
        a = jnp.maximum(y_ref[n] * sc1 + sh1, 0.0)
        y = _mm_bf16(_im2col(a, K, pad, L), w2)
        y_ref[n] = y
        s1, s2 = _accum_stats(y, s1, s2)
    sc2, sh2 = _finalize_stats(s1, s2, cnt, g2_ref[...], b2_ref[...])

    # ---- tail: bn2 (+ downsample conv + BN) + residual add + relu ----
    if has_down:
        wd = wd_ref[...].astype(jnp.bfloat16)
        s1 = jnp.zeros((1, Cout), jnp.float32)
        s2 = jnp.zeros((1, Cout), jnp.float32)
        for n in range(N):
            d = _mm_bf16(x_ref[n], wd)
            s1, s2 = _accum_stats(d, s1, s2)
        scd, shd = _finalize_stats(s1, s2, cnt, gd_ref[...], bd_ref[...])
        for n in range(N):
            # TODO(synk): recomputes the cheap 1x1 conv rather than adding a
            #             second (N, L, Cout) scratch buffer.
            d = _mm_bf16(x_ref[n], wd)
            o_ref[n] = jnp.maximum(y_ref[n] * sc2 + sh2 + d * scd + shd, 0.0)
    else:
        for n in range(N):
            o_ref[n] = jnp.maximum(y_ref[n] * sc2 + sh2 + x_ref[n], 0.0)


# --------------------------------------------------------------------------
# Wrappers (one pallas_call per stage; whole tensors as single VMEM blocks)
# --------------------------------------------------------------------------
def _cparams(*f32_shapes):
    need = sum(4 * math.prod(s) for s in f32_shapes)
    limit = int(min(max(4 * need, 32 * 1024 * 1024), 60 * 1024 * 1024))
    return pltpu.CompilerParams(vmem_limit_bytes=limit)


def stem_forward(x_nlc, w_kio, gamma, beta, *, conv_pad=0,
                 pool_k=3, pool_s=2, pool_p=1):
    N, L0, Cin = x_nlc.shape
    K, _, Cout = w_kio.shape
    L1 = L0 + 2 * conv_pad - K + 1
    Lp = (L1 + 2 * pool_p - pool_k) // pool_s + 1
    assert pool_p < pool_k              # zero-pad-after-ReLU trick requires this
    w2d = w_kio.reshape(K * Cin, Cout)
    return pl.pallas_call(
        functools.partial(_stem_kernel, K=K, conv_pad=conv_pad,
                          pool_k=pool_k, pool_s=pool_s, pool_p=pool_p),
        out_shape=jax.ShapeDtypeStruct((N, Lp, Cout), jnp.float32),
        scratch_shapes=[pltpu.VMEM((N, L1, Cout), jnp.float32)],
        compiler_params=_cparams((N, L0, Cin), (K * Cin, Cout),
                                 (N, Lp, Cout), (N, L1, Cout)),
    )(x_nlc, w2d, gamma.reshape(1, Cout), beta.reshape(1, Cout))


def block_forward(x_nlc, blk):
    N, L, Cin = x_nlc.shape
    K, _, Cout = blk["conv1_w"].shape
    has_down = "down_w" in blk
    args = [x_nlc,
            blk["conv1_w"].reshape(K * Cin, Cout),
            blk["bn1_g"].reshape(1, Cout), blk["bn1_b"].reshape(1, Cout),
            blk["conv2_w"].reshape(K * Cout, Cout),
            blk["bn2_g"].reshape(1, Cout), blk["bn2_b"].reshape(1, Cout)]
    if has_down:
        args += [blk["down_w"],
                 blk["dbn_g"].reshape(1, Cout), blk["dbn_b"].reshape(1, Cout)]
    return pl.pallas_call(
        functools.partial(_block_kernel, K=K, has_down=has_down),
        out_shape=jax.ShapeDtypeStruct((N, L, Cout), jnp.float32),
        scratch_shapes=[pltpu.VMEM((N, L, Cout), jnp.float32)],
        compiler_params=_cparams((N, L, Cin), (K * Cin, Cout), (K * Cout, Cout),
                                 (N, L, Cout), (N, L, Cout)),
    )(*args)


# --------------------------------------------------------------------------
# Model: parameters + forward
# --------------------------------------------------------------------------
def _kaiming_conv(key, K, cin, cout):
    # kaiming_normal_(mode='fan_out', nonlinearity='relu'): fan_out = cout * K
    std = (2.0 / (cout * K)) ** 0.5
    return std * jax.random.normal(key, (K, cin, cout), jnp.float32)


def init_params(key, in_channels, out_channels, layers, kernel_size=3):
    keys = iter(jax.random.split(key, 128))
    p = {
        "conv1_w": _kaiming_conv(next(keys), kernel_size, in_channels, out_channels),
        "bn1_g": jnp.ones((out_channels,), jnp.float32),
        "bn1_b": jnp.zeros((out_channels,), jnp.float32),
    }
    inc = out_channels
    for li, (mult, nblocks) in enumerate(zip((1, 2, 4, 8), layers), start=1):
        outc = out_channels * mult
        blocks = []
        for b in range(nblocks):
            blk = {
                "conv1_w": _kaiming_conv(next(keys), 3, inc, outc),
                "bn1_g": jnp.ones((outc,), jnp.float32),
                "bn1_b": jnp.zeros((outc,), jnp.float32),
                "conv2_w": _kaiming_conv(next(keys), 3, outc, outc),
                "bn2_g": jnp.ones((outc,), jnp.float32),
                "bn2_b": jnp.zeros((outc,), jnp.float32),
            }
            if b == 0 and inc != outc:      # stride==1 everywhere (module default)
                blk["down_w"] = _kaiming_conv(next(keys), 1, inc, outc)[0]  # (Cin, Cout)
                blk["dbn_g"] = jnp.ones((outc,), jnp.float32)
                blk["dbn_b"] = jnp.zeros((outc,), jnp.float32)
            blocks.append(blk)
            inc = outc
        p[f"layer{li}"] = blocks
    return p


def resnet1d_forward(params, x_ncl, *, stem_padding=0):
    x = jnp.transpose(x_ncl, (0, 2, 1))                    # NCL -> NLC
    x = stem_forward(x, params["conv1_w"], params["bn1_g"], params["bn1_b"],
                     conv_pad=stem_padding)                # conv1+bn1+relu+maxpool fused
    for name in ("layer1", "layer2", "layer3", "layer4"):
        for blk in params[name]:
            x = block_forward(x, blk)                      # one pallas_call per block
    # TODO(synk): fold this NLC->NCL transpose into the last block's kernel.
    return jnp.transpose(x, (0, 2, 1))


# --------------------------------------------------------------------------
if __name__ == "__main__":
    key = jax.random.PRNGKey(0)
    pkey, xkey = jax.random.split(key)

    # Module-consistent small shapes: ResNet1D(in_channels=4, out_channels=8,
    # kernel_size=3, stride=1, padding=0, layers=[1,1,1,1]); input (N, C, L).
    N, C_IN, L = 2, 4, 16
    OUT_CH = 8
    params = init_params(pkey, in_channels=C_IN, out_channels=OUT_CH,
                         layers=(1, 1, 1, 1), kernel_size=3)
    x = jax.random.normal(xkey, (N, C_IN, L), jnp.float32)

    fwd = jax.jit(functools.partial(resnet1d_forward, stem_padding=0))
    out = fwd(params, x)
    out = jax.block_until_ready(out)

    # conv1: 16 -> 14 ; maxpool(3,2,1): 14 -> 7 ; layers preserve length; C = 8*8 = 64
    assert out.shape == (N, OUT_CH * 8, 7), out.shape
    assert bool(jnp.all(jnp.isfinite(out)))
    print("KERNEL_OK")
</pallas_src>

<mosaic_0001>
module attributes {stable_mosaic.version = 11 : i64} {
  func.func @_stem_kernel(%arg0: memref<2x16x4xf32, #tpu.memory_space<vmem>>, %arg1: memref<12x8xf32, #tpu.memory_space<vmem>>, %arg2: memref<1x8xf32, #tpu.memory_space<vmem>>, %arg3: memref<1x8xf32, #tpu.memory_space<vmem>>, %arg4: memref<2x7x8xf32, #tpu.memory_space<vmem>>, %arg5: memref<2x14x8xf32, #tpu.memory_space<vmem>>) attributes {dimension_semantics = [], scalar_prefetch = 0 : i64, scratch_operands = 1 : i64, tpu.core_type = #tpu.core_type<tc>} {
    %c0 = arith.constant 0 : index
    %c0_0 = arith.constant 0 : index
    %0 = vector.load %arg1[%c0, %c0_0] : memref<12x8xf32, #tpu.memory_space<vmem>>, vector<12x8xf32>
    %1 = arith.truncf %0 : vector<12x8xf32> to vector<12x8xbf16>
    %cst = arith.constant 0.000000e+00 : f32
    %2 = vector.broadcast %cst : f32 to vector<1x8xf32>
    %cst_1 = arith.constant 0.000000e+00 : f32
    %3 = vector.broadcast %cst_1 : f32 to vector<1x8xf32>
    %c0_2 = arith.constant 0 : index
    %c0_3 = arith.constant 0 : index
    %c0_4 = arith.constant 0 : index
    %4 = vector.load %arg0[%c0_2, %c0_3, %c0_4] : memref<2x16x4xf32, #tpu.memory_space<vmem>>, vector<1x16x4xf32>
    %5 = vector.shape_cast %4 : vector<1x16x4xf32> to vector<16x4xf32>
    %6 = vector.extract_strided_slice %5 {offsets = [0, 0], sizes = [14, 4], strides = [1, 1]} : vector<16x4xf32> to vector<14x4xf32>
    %7 = vector.extract_strided_slice %5 {offsets = [1, 0], sizes = [14, 4], strides = [1, 1]} : vector<16x4xf32> to vector<14x4xf32>
    %8 = vector.extract_strided_slice %5 {offsets = [2, 0], sizes = [14, 4], strides = [1, 1]} : vector<16x4xf32> to vector<14x4xf32>
    %9 = tpu.concatenate %6, %7, %8 in 1 : vector<14x4xf32>, vector<14x4xf32>, vector<14x4xf32> -> vector<14x12xf32>
    %10 = arith.truncf %9 : vector<14x12xf32> to vector<14x12xbf16>
    %cst_5 = arith.constant dense<0.000000e+00> : vector<14x8xf32>
    %11 = tpu.matmul %10, %1, %cst_5 {dimension_numbers = #tpu.dot_dimension_numbers<[1], [0], [0], [1], [0, 0, 1, 1], [], []>} : vector<14x12xbf16>, vector<12x8xbf16>, vector<14x8xf32> -> vector<14x8xf32>
    %c0_6 = arith.constant 0 : index
    %c0_7 = arith.constant 0 : index
    %c0_8 = arith.constant 0 : index
    %12 = vector.load %arg5[%c0_6, %c0_7, %c0_8] : memref<2x14x8xf32, #tpu.memory_space<vmem>>, vector<1x14x8xf32>
    %13 = vector.shape_cast %12 : vector<1x14x8xf32> to vector<14x8xf32>
    %14 = vector.shape_cast %11 : vector<14x8xf32> to vector<1x14x8xf32>
    tpu.vector_store %arg5[%c0_6, %c0_7, %c0_8], %14 {strides = array<i32>} : memref<2x14x8xf32, #tpu.memory_space<vmem>>, vector<1x14x8xf32>,
    %cst_9 = arith.constant 1.000000e+00 : f32
    %15 = vector.broadcast %cst_9 : f32 to vector<1x14xf32>
    %cst_10 = arith.constant dense<0.000000e+00> : vector<1x8xf32>
    %16 = tpu.matmul %15, %11, %cst_10 {dimension_numbers = #tpu.dot_dimension_numbers<[1], [0], [0], [1], [0, 0, 1, 1], [], []>} : vector<1x14xf32>, vector<14x8xf32>, vector<1x8xf32> -> vector<1x8xf32>
    %17 = arith.addf %2, %16 : vector<1x8xf32>
    %18 = arith.mulf %11, %11 : vector<14x8xf32>
    %cst_11 = arith.constant dense<0.000000e+00> : vector<1x8xf32>
    %19 = tpu.matmul %15, %18, %cst_11 {dimension_numbers = #tpu.dot_dimension_numbers<[1], [0], [0], [1], [0, 0, 1, 1], [], []>} : vector<1x14xf32>, vector<14x8xf32>, vector<1x8xf32> -> vector<1x8xf32>
    %20 = arith.addf %3, %19 : vector<1x8xf32>
    %c1 = arith.constant 1 : index
    %c0_12 = arith.constant 0 : index
    %c0_13 = arith.constant 0 : index
    %21 = vector.load %arg0[%c1, %c0_12, %c0_13] : memref<2x16x4xf32, #tpu.memory_space<vmem>>, vector<1x16x4xf32>
    %22 = vector.shape_cast %21 : vector<1x16x4xf32> to vector<16x4xf32>
    %23 = vector.extract_strided_slice %22 {offsets = [0, 0], sizes = [14, 4], strides = [1, 1]} : vector<16x4xf32> to vector<14x4xf32>
    %24 = vector.extract_strided_slice %22 {offsets = [1, 0], sizes = [14, 4], strides = [1, 1]} : vector<16x4xf32> to vector<14x4xf32>
    %25 = vector.extract_strided_slice %22 {offsets = [2, 0], sizes = [14, 4], strides = [1, 1]} : vector<16x4xf32> to vector<14x4xf32>
    %26 = tpu.concatenate %23, %24, %25 in 1 : vector<14x4xf32>, vector<14x4xf32>, vector<14x4xf32> -> vector<14x12xf32>
    %27 = arith.truncf %26 : vector<14x12xf32> to vector<14x12xbf16>
    %cst_14 = arith.constant dense<0.000000e+00> : vector<14x8xf32>
    %28 = tpu.matmul %27, %1, %cst_14 {dimension_numbers = #tpu.dot_dimension_numbers<[1], [0], [0], [1], [0, 0, 1, 1], [], []>} : vector<14x12xbf16>, vector<12x8xbf16>, vector<14x8xf32> -> vector<14x8xf32>
    %c1_15 = arith.constant 1 : index
    %c0_16 = arith.constant 0 : index
    %c0_17 = arith.constant 0 : index
    %29 = vector.load %arg5[%c1_15, %c0_16, %c0_17] : memref<2x14x8xf32, #tpu.memory_space<vmem>>, vector<1x14x8xf32>
    %30 = vector.shape_cast %29 : vector<1x14x8xf32> to vector<14x8xf32>
    %31 = vector.shape_cast %28 : vector<14x8xf32> to vector<1x14x8xf32>
    tpu.vector_store %arg5[%c1_15, %c0_16, %c0_17], %31 {strides = array<i32>} : memref<2x14x8xf32, #tpu.memory_space<vmem>>, vector<1x14x8xf32>,
    %cst_18 = arith.constant 1.000000e+00 : f32
    %32 = vector.broadcast %cst_18 : f32 to vector<1x14xf32>
    %cst_19 = arith.constant dense<0.000000e+00> : vector<1x8xf32>
    %33 = tpu.matmul %32, %28, %cst_19 {dimension_numbers = #tpu.dot_dimension_numbers<[1], [0], [0], [1], [0, 0, 1, 1], [], []>} : vector<1x14xf32>, vector<14x8xf32>, vector<1x8xf32> -> vector<1x8xf32>
    %34 = arith.addf %17, %33 : vector<1x8xf32>
    %35 = arith.mulf %28, %28 : vector<14x8xf32>
    %cst_20 = arith.constant dense<0.000000e+00> : vector<1x8xf32>
    %36 = tpu.matmul %32, %35, %cst_20 {dimension_numbers = #tpu.dot_dimension_numbers<[1], [0], [0], [1], [0, 0, 1, 1], [], []>} : vector<1x14xf32>, vector<14x8xf32>, vector<1x8xf32> -> vector<1x8xf32>
    %37 = arith.addf %20, %36 : vector<1x8xf32>
    %c0_21 = arith.constant 0 : index
    %c0_22 = arith.constant 0 : index
    %38 = vector.load %arg2[%c0_21, %c0_22] : memref<1x8xf32, #tpu.memory_space<vmem>>, vector<1x8xf32>
    %c0_23 = arith.constant 0 : index
    %c0_24 = arith.constant 0 : index
    %39 = vector.load %arg3[%c0_23, %c0_24] : memref<1x8xf32, #tpu.memory_space<vmem>>, vector<1x8xf32>
    %cst_25 = arith.constant 2.800000e+01 : f32
    %40 = vector.broadcast %cst_25 : f32 to vector<1x8xf32>
    %41 = arith.divf %34, %40 : vector<1x8xf32>
    %cst_26 = arith.constant 2.800000e+01 : f32
    %42 = vector.broadcast %cst_26 : f32 to vector<1x8xf32>
    %43 = arith.divf %37, %42 : vector<1x8xf32>
    %44 = arith.mulf %41, %41 : vector<1x8xf32>
    %45 = arith.subf %43, %44 : vector<1x8xf32>
    %cst_27 = arith.constant 0.000000e+00 : f32
    %46 = vector.broadcast %cst_27 : f32 to vector<1x8xf32>
    %47 = arith.maximumf %45, %46 : vector<1x8xf32>
    %cst_28 = arith.constant 9.99999974E-6 : f32
    %48 = vector.broadcast %cst_28 : f32 to vector<1x8xf32>
    %49 = arith.addf %47, %48 : vector<1x8xf32>
    %50 = math.rsqrt %49 : vector<1x8xf32>
    %51 = arith.mulf %38, %50 : vector<1x8xf32>
    %52 = arith.mulf %41, %51 : vector<1x8xf32>
    %53 = arith.subf %39, %52 : vector<1x8xf32>
    %54 = tpu.iota {dimensions = array<i32: 0>} : vector<7x14xi32>
    %55 = tpu.iota {dimensions = array<i32: 1>} : vector<7x14xi32>
    %c2_i32 = arith.constant 2 : i32
    %56 = vector.broadcast %c2_i32 : i32 to vector<7x14xi32>
    %57 = arith.muli %56, %54 : vector<7x14xi32>
    %58 = arith.cmpi eq, %55, %57 : vector<7x14xi32>
    %59 = arith.extui %58 : vector<7x14xi1> to vector<7x14xi32>
    %60 = arith.sitofp %59 : vector<7x14xi32> to vector<7x14xf32>
    %c0_29 = arith.constant 0 : index
    %c0_30 = arith.constant 0 : index
    %c0_31 = arith.constant 0 : index
    %61 = vector.load %arg5[%c0_29, %c0_30, %c0_31] : memref<2x14x8xf32, #tpu.memory_space<vmem>>, vector<1x14x8xf32>
    %62 = vector.shape_cast %61 : vector<1x14x8xf32> to vector<14x8xf32>
    %63 = vector.broadcast %51 : vector<1x8xf32> to vector<14x8xf32>
    %64 = arith.mulf %62, %63 : vector<14x8xf32>
    %65 = vector.broadcast %53 : vector<1x8xf32> to vector<14x8xf32>
    %66 = arith.addf %64, %65 : vector<14x8xf32>
    %cst_32 = arith.constant 0.000000e+00 : f32
    %67 = vector.broadcast %cst_32 : f32 to vector<14x8xf32>
    %68 = arith.maximumf %66, %67 : vector<14x8xf32>
    %cst_33 = arith.constant 0.000000e+00 : f32
    %69 = vector.broadcast %cst_33 : f32 to vector<1x8xf32>
    %70 = tpu.concatenate %69, %68, %69 in 0 : vector<1x8xf32>, vector<14x8xf32>, vector<1x8xf32> -> vector<16x8xf32>
    %71 = vector.extract_strided_slice %70 {offsets = [0, 0], sizes = [14, 8], strides = [1, 1]} : vector<16x8xf32> to vector<14x8xf32>
    %72 = vector.extract_strided_slice %70 {offsets = [1, 0], sizes = [14, 8], strides = [1, 1]} : vector<16x8xf32> to vector<14x8xf32>
    %73 = arith.maximumf %71, %72 : vector<14x8xf32>
    %74 = vector.extract_strided_slice %70 {offsets = [2, 0], sizes = [14, 8], strides = [1, 1]} : vector<16x8xf32> to vector<14x8xf32>
    %75 = arith.maximumf %73, %74 : vector<14x8xf32>
    %cst_34 = arith.constant dense<0.000000e+00> : vector<7x8xf32>
    %76 = tpu.matmul %60, %75, %cst_34 {dimension_numbers = #tpu.dot_dimension_numbers<[1], [0], [0], [1], [0, 0, 1, 1], [], []>} : vector<7x14xf32>, vector<14x8xf32>, vector<7x8xf32> -> vector<7x8xf32>
    %c0_35 = arith.constant 0 : index
    %c0_36 = arith.constant 0 : index
    %c0_37 = arith.constant 0 : index
    %77 = vector.load %arg4[%c0_35, %c0_36, %c0_37] : memref<2x7x8xf32, #tpu.memory_space<vmem>>, vector<1x7x8xf32>
    %78 = vector.shape_cast %77 : vector<1x7x8xf32> to vector<7x8xf32>
    %79 = vector.shape_cast %76 : vector<7x8xf32> to vector<1x7x8xf32>
    tpu.vector_store %arg4[%c0_35, %c0_36, %c0_37], %79 {strides = array<i32>} : memref<2x7x8xf32, #tpu.memory_space<vmem>>, vector<1x7x8xf32>,
    %c1_38 = arith.constant 1 : index
    %c0_39 = arith.constant 0 : index
    %c0_40 = arith.constant 0 : index
    %80 = vector.load %arg5[%c1_38, %c0_39, %c0_40] : memref<2x14x8xf32, #tpu.memory_space<vmem>>, vector<1x14x8xf32>
    %81 = vector.shape_cast %80 : vector<1x14x8xf32> to vector<14x8xf32>
    %82 = vector.broadcast %51 : vector<1x8xf32> to vector<14x8xf32>
    %83 = arith.mulf %81, %82 : vector<14x8xf32>
    %84 = vector.broadcast %53 : vector<1x8xf32> to vector<14x8xf32>
    %85 = arith.addf %83, %84 : vector<14x8xf32>
    %cst_41 = arith.constant 0.000000e+00 : f32
    %86 = vector.broadcast %cst_41 : f32 to vector<14x8xf32>
    %87 = arith.maximumf %85, %86 : vector<14x8xf32>
    %cst_42 = arith.constant 0.000000e+00 : f32
    %88 = vector.broadcast %cst_42 : f32 to vector<1x8xf32>
    %89 = tpu.concatenate %88, %87, %88 in 0 : vector<1x8xf32>, vector<14x8xf32>, vector<1x8xf32> -> vector<16x8xf32>
    %90 = vector.extract_strided_slice %89 {offsets = [0, 0], sizes = [14, 8], strides = [1, 1]} : vector<16x8xf32> to vector<14x8xf32>
    %91 = vector.extract_strided_slice %89 {offsets = [1, 0], sizes = [14, 8], strides = [1, 1]} : vector<16x8xf32> to vector<14x8xf32>
    %92 = arith.maximumf %90, %91 : vector<14x8xf32>
    %93 = vector.extract_strided_slice %89 {offsets = [2, 0], sizes = [14, 8], strides = [1, 1]} : vector<16x8xf32> to vector<14x8xf32>
    %94 = arith.maximumf %92, %93 : vector<14x8xf32>
    %cst_43 = arith.constant dense<0.000000e+00> : vector<7x8xf32>
    %95 = tpu.matmul %60, %94, %cst_43 {dimension_numbers = #tpu.dot_dimension_numbers<[1], [0], [0], [1], [0, 0, 1, 1], [], []>} : vector<7x14xf32>, vector<14x8xf32>, vector<7x8xf32> -> vector<7x8xf32>
    %c1_44 = arith.constant 1 : index
    %c0_45 = arith.constant 0 : index
    %c0_46 = arith.constant 0 : index
    %96 = vector.load %arg4[%c1_44, %c0_45, %c0_46] : memref<2x7x8xf32, #tpu.memory_space<vmem>>, vector<1x7x8xf32>
    %97 = vector.shape_cast %96 : vector<1x7x8xf32> to vector<7x8xf32>
    %98 = vector.shape_cast %95 : vector<7x8xf32> to vector<1x7x8xf32>
    tpu.vector_store %arg4[%c1_44, %c0_45, %c0_46], %98 {strides = array<i32>} : memref<2x7x8xf32, #tpu.memory_space<vmem>>, vector<1x7x8xf32>,
    return
  }
}

module attributes {stable_mosaic.version = 11 : i64} {
  func.func @_block_kernel(%arg0: memref<2x7x8xf32, #tpu.memory_space<vmem>>, %arg1: memref<24x8xf32, #tpu.memory_space<vmem>>, %arg2: memref<1x8xf32, #tpu.memory_space<vmem>>, %arg3: memref<1x8xf32, #tpu.memory_space<vmem>>, %arg4: memref<24x8xf32, #tpu.memory_space<vmem>>, %arg5: memref<1x8xf32, #tpu.memory_space<vmem>>, %arg6: memref<1x8xf32, #tpu.memory_space<vmem>>, %arg7: memref<2x7x8xf32, #tpu.memory_space<vmem>>, %arg8: memref<2x7x8xf32, #tpu.memory_space<vmem>>) attributes {dimension_semantics = [], scalar_prefetch = 0 : i64, scratch_operands = 1 : i64, tpu.core_type = #tpu.core_type<tc>} {
    %c0 = arith.constant 0 : index
    %c0_0 = arith.constant 0 : index
    %0 = vector.load %arg1[%c0, %c0_0] : memref<24x8xf32, #tpu.memory_space<vmem>>, vector<24x8xf32>
    %1 = arith.truncf %0 : vector<24x8xf32> to vector<24x8xbf16>
    %cst = arith.constant 0.000000e+00 : f32
    %2 = vector.broadcast %cst : f32 to vector<1x8xf32>
    %cst_1 = arith.constant 0.000000e+00 : f32
    %3 = vector.broadcast %cst_1 : f32 to vector<1x8xf32>
    %c0_2 = arith.constant 0 : index
    %c0_3 = arith.constant 0 : index
    %c0_4 = arith.constant 0 : index
    %4 = vector.load %arg0[%c0_2, %c0_3, %c0_4] : memref<2x7x8xf32, #tpu.memory_space<vmem>>, vector<1x7x8xf32>
    %5 = vector.shape_cast %4 : vector<1x7x8xf32> to vector<7x8xf32>
    %cst_5 = arith.constant 0.000000e+00 : f32
    %6 = vector.broadcast %cst_5 : f32 to vector<1x8xf32>
    %7 = tpu.concatenate %6, %5, %6 in 0 : vector<1x8xf32>, vector<7x8xf32>, vector<1x8xf32> -> vector<9x8xf32>
    %8 = vector.extract_strided_slice %7 {offsets = [0, 0], sizes = [7, 8], strides = [1, 1]} : vector<9x8xf32> to vector<7x8xf32>
    %9 = vector.extract_strided_slice %7 {offsets = [1, 0], sizes = [7, 8], strides = [1, 1]} : vector<9x8xf32> to vector<7x8xf32>
    %10 = vector.extract_strided_slice %7 {offsets = [2, 0], sizes = [7, 8], strides = [1, 1]} : vector<9x8xf32> to vector<7x8xf32>
    %11 = tpu.concatenate %8, %9, %10 in 1 : vector<7x8xf32>, vector<7x8xf32>, vector<7x8xf32> -> vector<7x24xf32>
    %12 = arith.truncf %11 : vector<7x24xf32> to vector<7x24xbf16>
    %cst_6 = arith.constant dense<0.000000e+00> : vector<7x8xf32>
    %13 = tpu.matmul %12, %1, %cst_6 {dimension_numbers = #tpu.dot_dimension_numbers<[1], [0], [0], [1], [0, 0, 1, 1], [], []>} : vector<7x24xbf16>, vector<24x8xbf16>, vector<7x8xf32> -> vector<7x8xf32>
    %c0_7 = arith.constant 0 : index
    %c0_8 = arith.constant 0 : index
    %c0_9 = arith.constant 0 : index
    %14 = vector.load %arg8[%c0_7, %c0_8, %c0_9] : memref<2x7x8xf32, #tpu.memory_space<vmem>>, vector<1x7x8xf32>
    %15 = vector.shape_cast %14 : vector<1x7x8xf32> to vector<7x8xf32>
    %16 = vector.shape_cast %13 : vector<7x8xf32> to vector<1x7x8xf32>
    tpu.vector_store %arg8[%c0_7, %c0_8, %c0_9], %16 {strides = array<i32>} : memref<2x7x8xf32, #tpu.memory_space<vmem>>, vector<1x7x8xf32>,
    %cst_10 = arith.constant 1.000000e+00 : f32
    %17 = vector.broadcast %cst_10 : f32 to vector<1x7xf32>
    %cst_11 = arith.constant dense<0.000000e+00> : vector<1x8xf32>
    %18 = tpu.matmul %17, %13, %cst_11 {dimension_numbers = #tpu.dot_dimension_numbers<[1], [0], [0], [1], [0, 0, 1, 1], [], []>} : vector<1x7xf32>, vector<7x8xf32>, vector<1x8xf32> -> vector<1x8xf32>
    %19 = arith.addf %2, %18 : vector<1x8xf32>
    %20 = arith.mulf %13, %13 : vector<7x8xf32>
    %cst_12 = arith.constant dense<0.000000e+00> : vector<1x8xf32>
    %21 = tpu.matmul %17, %20, %cst_12 {dimension_numbers = #tpu.dot_dimension_numbers<[1], [0], [0], [1], [0, 0, 1, 1], [], []>} : vector<1x7xf32>, vector<7x8xf32>, vector<1x8xf32> -> vector<1x8xf32>
    %22 = arith.addf %3, %21 : vector<1x8xf32>
    %c1 = arith.constant 1 : index
    %c0_13 = arith.constant 0 : index
    %c0_14 = arith.constant 0 : index
    %23 = vector.load %arg0[%c1, %c0_13, %c0_14] : memref<2x7x8xf32, #tpu.memory_space<vmem>>, vector<1x7x8xf32>
    %24 = vector.shape_cast %23 : vector<1x7x8xf32> to vector<7x8xf32>
    %cst_15 = arith.constant 0.000000e+00 : f32
    %25 = vector.broadcast %cst_15 : f32 to vector<1x8xf32>
    %26 = tpu.concatenate %25, %24, %25 in 0 : vector<1x8xf32>, vector<7x8xf32>, vector<1x8xf32> -> vector<9x8xf32>
    %27 = vector.extract_strided_slice %26 {offsets = [0, 0], sizes = [7, 8], strides = [1, 1]} : vector<9x8xf32> to vector<7x8xf32>
    %28 = vector.extract_strided_slice %26 {offsets = [1, 0], sizes = [7, 8], strides = [1, 1]} : vector<9x8xf32> to vector<7x8xf32>
    %29 = vector.extract_strided_slice %26 {offsets = [2, 0], sizes = [7, 8], strides = [1, 1]} : vector<9x8xf32> to vector<7x8xf32>
    %30 = tpu.concatenate %27, %28, %29 in 1 : vector<7x8xf32>, vector<7x8xf32>, vector<7x8xf32> -> vector<7x24xf32>
    %31 = arith.truncf %30 : vector<7x24xf32> to vector<7x24xbf16>
    %cst_16 = arith.constant dense<0.000000e+00> : vector<7x8xf32>
    %32 = tpu.matmul %31, %1, %cst_16 {dimension_numbers = #tpu.dot_dimension_numbers<[1], [0], [0], [1], [0, 0, 1, 1], [], []>} : vector<7x24xbf16>, vector<24x8xbf16>, vector<7x8xf32> -> vector<7x8xf32>
    %c1_17 = arith.constant 1 : index
    %c0_18 = arith.constant 0 : index
    %c0_19 = arith.constant 0 : index
    %33 = vector.load %arg8[%c1_17, %c0_18, %c0_19] : memref<2x7x8xf32, #tpu.memory_space<vmem>>, vector<1x7x8xf32>
    %34 = vector.shape_cast %33 : vector<1x7x8xf32> to vector<7x8xf32>
    %35 = vector.shape_cast %32 : vector<7x8xf32> to vector<1x7x8xf32>
    tpu.vector_store %arg8[%c1_17, %c0_18, %c0_19], %35 {strides = array<i32>} : memref<2x7x8xf32, #tpu.memory_space<vmem>>, vector<1x7x8xf32>,
    %cst_20 = arith.constant 1.000000e+00 : f32
    %36 = vector.broadcast %cst_20 : f32 to vector<1x7xf32>
    %cst_21 = arith.constant dense<0.000000e+00> : vector<1x8xf32>
    %37 = tpu.matmul %36, %32, %cst_21 {dimension_numbers = #tpu.dot_dimension_numbers<[1], [0], [0], [1], [0, 0, 1, 1], [], []>} : vector<1x7xf32>, vector<7x8xf32>, vector<1x8xf32> -> vector<1x8xf32>
    %38 = arith.addf %19, %37 : vector<1x8xf32>
    %39 = arith.mulf %32, %32 : vector<7x8xf32>
    %cst_22 = arith.constant dense<0.000000e+00> : vector<1x8xf32>
    %40 = tpu.matmul %36, %39, %cst_22 {dimension_numbers = #tpu.dot_dimension_numbers<[1], [0], [0], [1], [0, 0, 1, 1], [], []>} : vector<1x7xf32>, vector<7x8xf32>, vector<1x8xf32> -> vector<1x8xf32>
    %41 = arith.addf %22, %40 : vector<1x8xf32>
    %c0_23 = arith.constant 0 : index
    %c0_24 = arith.constant 0 : index
    %42 = vector.load %arg2[%c0_23, %c0_24] : memref<1x8xf32, #tpu.memory_space<vmem>>, vector<1x8xf32>
    %c0_25 = arith.constant 0 : index
    %c0_26 = arith.constant 0 : index
    %43 = vector.load %arg3[%c0_25, %c0_26] : memref<1x8xf32, #tpu.memory_space<vmem>>, vector<1x8xf32>
    %cst_27 = arith.constant 1.400000e+01 : f32
    %44 = vector.broadcast %cst_27 : f32 to vector<1x8xf32>
    %45 = arith.divf %38, %44 : vector<1x8xf32>
    %cst_28 = arith.constant 1.400000e+01 : f32
    %46 = vector.broadcast %cst_28 : f32 to vector<1x8xf32>
    %47 = arith.divf %41, %46 : vector<1x8xf32>
    %48 = arith.mulf %45, %45 : vector<1x8xf32>
    %49 = arith.subf %47, %48 : vector<1x8xf32>
    %cst_29 = arith.constant 0.000000e+00 : f32
    %50 = vector.broadcast %cst_29 : f32 to vector<1x8xf32>
    %51 = arith.maximumf %49, %50 : vector<1x8xf32>
    %cst_30 = arith.constant 9.99999974E-6 : f32
    %52 = vector.broadcast %cst_30 : f32 to vector<1x8xf32>
    %53 = arith.addf %51, %52 : vector<1x8xf32>
    %54 = math.rsqrt %53 : vector<1x8xf32>
    %55 = arith.mulf %42, %54 : vector<1x8xf32>
    %56 = arith.mulf %45, %55 : vector<1x8xf32>
    %57 = arith.subf %43, %56 : vector<1x8xf32>
    %c0_31 = arith.constant 0 : index
    %c0_32 = arith.constant 0 : index
    %58 = vector.load %arg4[%c0_31, %c0_32] : memref<24x8xf32, #tpu.memory_space<vmem>>, vector<24x8xf32>
    %59 = arith.truncf %58 : vector<24x8xf32> to vector<24x8xbf16>
    %cst_33 = arith.constant 0.000000e+00 : f32
    %60 = vector.broadcast %cst_33 : f32 to vector<1x8xf32>
    %cst_34 = arith.constant 0.000000e+00 : f32
    %61 = vector.broadcast %cst_34 : f32 to vector<1x8xf32>
    %c0_35 = arith.constant 0 : index
    %c0_36 = arith.constant 0 : index
    %c0_37 = arith.constant 0 : index
    %62 = vector.load %arg8[%c0_35, %c0_36, %c0_37] : memref<2x7x8xf32, #tpu.memory_space<vmem>>, vector<1x7x8xf32>
    %63 = vector.shape_cast %62 : vector<1x7x8xf32> to vector<7x8xf32>
    %64 = vector.broadcast %55 : vector<1x8xf32> to vector<7x8xf32>
    %65 = arith.mulf %63, %64 : vector<7x8xf32>
    %66 = vector.broadcast %57 : vector<1x8xf32> to vector<7x8xf32>
    %67 = arith.addf %65, %66 : vector<7x8xf32>
    %cst_38 = arith.constant 0.000000e+00 : f32
    %68 = vector.broadcast %cst_38 : f32 to vector<7x8xf32>
    %69 = arith.maximumf %67, %68 : vector<7x8xf32>
    %cst_39 = arith.constant 0.000000e+00 : f32
    %70 = vector.broadcast %cst_39 : f32 to vector<1x8xf32>
    %71 = tpu.concatenate %70, %69, %70 in 0 : vector<1x8xf32>, vector<7x8xf32>, vector<1x8xf32> -> vector<9x8xf32>
    %72 = vector.extract_strided_slice %71 {offsets = [0, 0], sizes = [7, 8], strides = [1, 1]} : vector<9x8xf32> to vector<7x8xf32>
    %73 = vector.extract_strided_slice %71 {offsets = [1, 0], sizes = [7, 8], strides = [1, 1]} : vector<9x8xf32> to vector<7x8xf32>
    %74 = vector.extract_strided_slice %71 {offsets = [2, 0], sizes = [7, 8], strides = [1, 1]} : vector<9x8xf32> to vector<7x8xf32>
    %75 = tpu.concatenate %72, %73, %74 in 1 : vector<7x8xf32>, vector<7x8xf32>, vector<7x8xf32> -> vector<7x24xf32>
    %76 = arith.truncf %75 : vector<7x24xf32> to vector<7x24xbf16>
    %cst_40 = arith.constant dense<0.000000e+00> : vector<7x8xf32>
    %77 = tpu.matmul %76, %59, %cst_40 {dimension_numbers = #tpu.dot_dimension_numbers<[1], [0], [0], [1], [0, 0, 1, 1], [], []>} : vector<7x24xbf16>, vector<24x8xbf16>, vector<7x8xf32> -> vector<7x8xf32>
    %c0_41 = arith.constant 0 : index
    %c0_42 = arith.constant 0 : index
    %c0_43 = arith.constant 0 : index
    %78 = vector.load %arg8[%c0_41, %c0_42, %c0_43] : memref<2x7x8xf32, #tpu.memory_space<vmem>>, vector<1x7x8xf32>
    %79 = vector.shape_cast %78 : vector<1x7x8xf32> to vector<7x8xf32>
    %80 = vector.shape_cast %77 : vector<7x8xf32> to vector<1x7x8xf32>
    tpu.vector_store %arg8[%c0_41, %c0_42, %c0_43], %80 {strides = array<i32>} : memref<2x7x8xf32, #tpu.memory_space<vmem>>, vector<1x7x8xf32>,
    %cst_44 = arith.constant 1.000000e+00 : f32
    %81 = vector.broadcast %cst_44 : f32 to vector<1x7xf32>
    %cst_45 = arith.constant dense<0.000000e+00> : vector<1x8xf32>
    %82 = tpu.matmul %81, %77, %cst_45 {dimension_numbers = #tpu.dot_dimension_numbers<[1], [0], [0], [1], [0, 0, 1, 1], [], []>} : vector<1x7xf32>, vector<7x8xf32>, vector<1x8xf32> -> vector<1x8xf32>
    %83 = arith.addf %60, %82 : vector<1x8xf32>
    %84 = arith.mulf %77, %77 : vector<7x8xf32>
    %cst_46 = arith.constant dense<0.000000e+00> : vector<1x8xf32>
    %85 = tpu.matmul %81, %84, %cst_46 {dimension_numbers = #tpu.dot_dimension_numbers<[1], [0], [0], [1], [0, 0, 1, 1], [], []>} : vector<1x7xf32>, vector<7x8xf32>, vector<1x8xf32> -> vector<1x8xf32>
    %86 = arith.addf %61, %85 : vector<1x8xf32>
    %c1_47 = arith.constant 1 : index
    %c0_48 = arith.constant 0 : index
    %c0_49 = arith.constant 0 : index
    %87 = vector.load %arg8[%c1_47, %c0_48, %c0_49] : memref<2x7x8xf32, #tpu.memory_space<vmem>>, vector<1x7x8xf32>
    %88 = vector.shape_cast %87 : vector<1x7x8xf32> to vector<7x8xf32>
    %89 = vector.broadcast %55 : vector<1x8xf32> to vector<7x8xf32>
    %90 = arith.mulf %88, %89 : vector<7x8xf32>
    %91 = vector.broadcast %57 : vector<1x8xf32> to vector<7x8xf32>
    %92 = arith.addf %90, %91 : vector<7x8xf32>
    %cst_50 = arith.constant 0.000000e+00 : f32
    %93 = vector.broadcast %cst_50 : f32 to vector<7x8xf32>
    %94 = arith.maximumf %92, %93 : vector<7x8xf32>
    %cst_51 = arith.constant 0.000000e+00 : f32
    %95 = vector.broadcast %cst_51 : f32 to vector<1x8xf32>
    %96 = tpu.concatenate %95, %94, %95 in 0 : vector<1x8xf32>, vector<7x8xf32>, vector<1x8xf32> -> vector<9x8xf32>
    %97 = vector.extract_strided_slice %96 {offsets = [0, 0], sizes = [7, 8], strides = [1, 1]} : vector<9x8xf32> to vector<7x8xf32>
    %98 = vector.extract_strided_slice %96 {offsets = [1, 0], sizes = [7, 8], strides = [1, 1]} : vector<9x8xf32> to vector<7x8xf32>
    %99 = vector.extract_strided_slice %96 {offsets = [2, 0], sizes = [7, 8], strides = [1, 1]} : vector<9x8xf32> to vector<7x8xf32>
    %100 = tpu.concatenate %97, %98, %99 in 1 : vector<7x8xf32>, vector<7x8xf32>, vector<7x8xf32> -> vector<7x24xf32>
    %101 = arith.truncf %100 : vector<7x24xf32> to vector<7x24xbf16>
    %cst_52 = arith.constant dense<0.000000e+00> : vector<7x8xf32>
    %102 = tpu.matmul %101, %59, %cst_52 {dimension_numbers = #tpu.dot_dimension_numbers<[1], [0], [0], [1], [0, 0, 1, 1], [], []>} : vector<7x24xbf16>, vector<24x8xbf16>, vector<7x8xf32> -> vector<7x8xf32>
    %c1_53 = arith.constant 1 : index
    %c0_54 = arith.constant 0 : index
    %c0_55 = arith.constant 0 : index
    %103 = vector.load %arg8[%c1_53, %c0_54, %c0_55] : memref<2x7x8xf32, #tpu.memory_space<vmem>>, vector<1x7x8xf32>
    %104 = vector.shape_cast %103 : vector<1x7x8xf32> to vector<7x8xf32>
    %105 = vector.shape_cast %102 : vector<7x8xf32> to vector<1x7x8xf32>
    tpu.vector_store %arg8[%c1_53, %c0_54, %c0_55], %105 {strides = array<i32>} : memref<2x7x8xf32, #tpu.memory_space<vmem>>, vector<1x7x8xf32>,
    %cst_56 = arith.constant 1.000000e+00 : f32
    %106 = vector.broadcast %cst_56 : f32 to vector<1x7xf32>
    %cst_57 = arith.constant dense<0.000000e+00> : vector<1x8xf32>
    %107 = tpu.matmul %106, %102, %cst_57 {dimension_numbers = #tpu.dot_dimension_numbers<[1], [0], [0], [1], [0, 0, 1, 1], [], []>} : vector<1x7xf32>, vector<7x8xf32>, vector<1x8xf32> -> vector<1x8xf32>
    %108 = arith.addf %83, %107 : vector<1x8xf32>
    %109 = arith.mulf %102, %102 : vector<7x8xf32>
    %cst_58 = arith.constant dense<0.000000e+00> : vector<1x8xf32>
    %110 = tpu.matmul %106, %109, %cst_58 {dimension_numbers = #tpu.dot_dimension_numbers<[1], [0], [0], [1], [0, 0, 1, 1], [], []>} : vector<1x7xf32>, vector<7x8xf32>, vector<1x8xf32> -> vector<1x8xf32>
    %111 = arith.addf %86, %110 : vector<1x8xf32>
    %c0_59 = arith.constant 0 : index
    %c0_60 = arith.constant 0 : index
    %112 = vector.load %arg5[%c0_59, %c0_60] : memref<1x8xf32, #tpu.memory_space<vmem>>, vector<1x8xf32>
    %c0_61 = arith.constant 0 : index
    %c0_62 = arith.constant 0 : index
    %113 = vector.load %arg6[%c0_61, %c0_62] : memref<1x8xf32, #tpu.memory_space<vmem>>, vector<1x8xf32>
    %cst_63 = arith.constant 1.400000e+01 : f32
    %114 = vector.broadcast %cst_63 : f32 to vector<1x8xf32>
    %115 = arith.divf %108, %114 : vector<1x8xf32>
    %cst_64 = arith.constant 1.400000e+01 : f32
    %116 = vector.broadcast %cst_64 : f32 to vector<1x8xf32>
    %117 = arith.divf %111, %116 : vector<1x8xf32>
    %118 = arith.mulf %115, %115 : vector<1x8xf32>
    %119 = arith.subf %117, %118 : vector<1x8xf32>
    %cst_65 = arith.constant 0.000000e+00 : f32
    %120 = vector.broadcast %cst_65 : f32 to vector<1x8xf32>
    %121 = arith.maximumf %119, %120 : vector<1x8xf32>
    %cst_66 = arith.constant 9.99999974E-6 : f32
    %122 = vector.broadcast %cst_66 : f32 to vector<1x8xf32>
    %123 = arith.addf %121, %122 : vector<1x8xf32>
    %124 = math.rsqrt %123 : vector<1x8xf32>
    %125 = arith.mulf %112, %124 : vector<1x8xf32>
    %126 = arith.mulf %115, %125 : vector<1x8xf32>
    %127 = arith.subf %113, %126 : vector<1x8xf32>
    %c0_67 = arith.constant 0 : index
    %c0_68 = arith.constant 0 : index
    %c0_69 = arith.constant 0 : index
    %128 = vector.load %arg8[%c0_67, %c0_68, %c0_69] : memref<2x7x8xf32, #tpu.memory_space<vmem>>, vector<1x7x8xf32>
    %129 = vector.shape_cast %128 : vector<1x7x8xf32> to vector<7x8xf32>
    %130 = vector.broadcast %125 : vector<1x8xf32> to vector<7x8xf32>
    %131 = arith.mulf %129, %130 : vector<7x8xf32>
    %132 = vector.broadcast %127 : vector<1x8xf32> to vector<7x8xf32>
    %133 = arith.addf %131, %132 : vector<7x8xf32>
    %c0_70 = arith.constant 0 : index
    %c0_71 = arith.constant 0 : index
    %c0_72 = arith.constant 0 : index
    %134 = vector.load %arg0[%c0_70, %c0_71, %c0_72] : memref<2x7x8xf32, #tpu.memory_space<vmem>>, vector<1x7x8xf32>
    %135 = vector.shape_cast %134 : vector<1x7x8xf32> to vector<7x8xf32>
    %136 = arith.addf %133, %135 : vector<7x8xf32>
    %cst_73 = arith.constant 0.000000e+00 : f32
    %137 = vector.broadcast %cst_73 : f32 to vector<7x8xf32>
    %138 = arith.maximumf %136, %137 : vector<7x8xf32>
    %c0_74 = arith.constant 0 : index
    %c0_75 = arith.constant 0 : index
    %c0_76 = arith.constant 0 : index
    %139 = vector.load %arg7[%c0_74, %c0_75, %c0_76] : memref<2x7x8xf32, #tpu.memory_space<vmem>>, vector<1x7x8xf32>
    %140 = vector.shape_cast %139 : vector<1x7x8xf32> to vector<7x8xf32>
    %141 = vector.shape_cast %138 : vector<7x8xf32> to vector<1x7x8xf32>
    tpu.vector_store %arg7[%c0_74, %c0_75, %c0_76], %141 {strides = array<i32>} : memref<2x7x8xf32, #tpu.memory_space<vmem>>, vector<1x7x8xf32>,
    %c1_77 = arith.constant 1 : index
    %c0_78 = arith.constant 0 : index
    %c0_79 = arith.constant 0 : index
    %142 = vector.load %arg8[%c1_77, %c0_78, %c0_79] : memref<2x7x8xf32, #tpu.memory_space<vmem>>, vector<1x7x8xf32>
    %143 = vector.shape_cast %142 : vector<1x7x8xf32> to vector<7x8xf32>
    %144 = vector.broadcast %125 : vector<1x8xf32> to vector<7x8xf32>
    %145 = arith.mulf %143, %144 : vector<7x8xf32>
    %146 = vector.broadcast %127 : vector<1x8xf32> to vector<7x8xf32>
    %147 = arith.addf %145, %146 : vector<7x8xf32>
    %c1_80 = arith.constant 1 : index
    %c0_81 = arith.constant 0 : index
    %c0_82 = arith.constant 0 : index
    %148 = vector.load %arg0[%c1_80, %c0_81, %c0_82] : memref<2x7x8xf32, #tpu.memory_space<vmem>>, vector<1x7x8xf32>
    %149 = vector.shape_cast %148 : vector<1x7x8xf32> to vector<7x8xf32>
    %150 = arith.addf %147, %149 : vector<7x8xf32>
    %cst_83 = arith.constant 0.000000e+00 : f32
    %151 = vector.broadcast %cst_83 : f32 to vector<7x8xf32>
    %152 = arith.maximumf %150, %151 : vector<7x8xf32>
    %c1_84 = arith.constant 1 : index
    %c0_85 = arith.constant 0 : index
    %c0_86 = arith.constant 0 : index
    %153 = vector.load %arg7[%c1_84, %c0_85, %c0_86] : memref<2x7x8xf32, #tpu.memory_space<vmem>>, vector<1x7x8xf32>
    %154 = vector.shape_cast %153 : vector<1x7x8xf32> to vector<7x8xf32>
    %155 = vector.shape_cast %152 : vector<7x8xf32> to vector<1x7x8xf32>
    tpu.vector_store %arg7[%c1_84, %c0_85, %c0_86], %155 {strides = array<i32>} : memref<2x7x8xf32, #tpu.memory_space<vmem>>, vector<1x7x8xf32>,
    return
  }
}

module attributes {stable_mosaic.version = 11 : i64} {
  func.func @_block_kernel(%arg0: memref<2x7x16xf32, #tpu.memory_space<vmem>>, %arg1: memref<48x32xf32, #tpu.memory_space<vmem>>, %arg2: memref<1x32xf32, #tpu.memory_space<vmem>>, %arg3: memref<1x32xf32, #tpu.memory_space<vmem>>, %arg4: memref<96x32xf32, #tpu.memory_space<vmem>>, %arg5: memref<1x32xf32, #tpu.memory_space<vmem>>, %arg6: memref<1x32xf32, #tpu.memory_space<vmem>>, %arg7: memref<16x32xf32, #tpu.memory_space<vmem>>, %arg8: memref<1x32xf32, #tpu.memory_space<vmem>>, %arg9: memref<1x32xf32, #tpu.memory_space<vmem>>, %arg10: memref<2x7x32xf32, #tpu.memory_space<vmem>>, %arg11: memref<2x7x32xf32, #tpu.memory_space<vmem>>) attributes {dimension_semantics = [], scalar_prefetch = 0 : i64, scratch_operands = 1 : i64, tpu.core_type = #tpu.core_type<tc>} {
    %c0 = arith.constant 0 : index
    %c0_0 = arith.constant 0 : index
    %0 = vector.load %arg1[%c0, %c0_0] : memref<48x32xf32, #tpu.memory_space<vmem>>, vector<48x32xf32>
    %1 = arith.truncf %0 : vector<48x32xf32> to vector<48x32xbf16>
    %cst = arith.constant 0.000000e+00 : f32
    %2 = vector.broadcast %cst : f32 to vector<1x32xf32>
    %cst_1 = arith.constant 0.000000e+00 : f32
    %3 = vector.broadcast %cst_1 : f32 to vector<1x32xf32>
    %c0_2 = arith.constant 0 : index
    %c0_3 = arith.constant 0 : index
    %c0_4 = arith.constant 0 : index
    %4 = vector.load %arg0[%c0_2, %c0_3, %c0_4] : memref<2x7x16xf32, #tpu.memory_space<vmem>>, vector<1x7x16xf32>
    %5 = vector.shape_cast %4 : vector<1x7x16xf32> to vector<7x16xf32>
    %cst_5 = arith.constant 0.000000e+00 : f32
    %6 = vector.broadcast %cst_5 : f32 to vector<1x16xf32>
    %7 = tpu.concatenate %6, %5, %6 in 0 : vector<1x16xf32>, vector<7x16xf32>, vector<1x16xf32> -> vector<9x16xf32>
    %8 = vector.extract_strided_slice %7 {offsets = [0, 0], sizes = [7, 16], strides = [1, 1]} : vector<9x16xf32> to vector<7x16xf32>
    %9 = vector.extract_strided_slice %7 {offsets = [1, 0], sizes = [7, 16], strides = [1, 1]} : vector<9x16xf32> to vector<7x16xf32>
    %10 = vector.extract_strided_slice %7 {offsets = [2, 0], sizes = [7, 16], strides = [1, 1]} : vector<9x16xf32> to vector<7x16xf32>
    %11 = tpu.concatenate %8, %9, %10 in 1 : vector<7x16xf32>, vector<7x16xf32>, vector<7x16xf32> -> vector<7x48xf32>
    %12 = arith.truncf %11 : vector<7x48xf32> to vector<7x48xbf16>
    %cst_6 = arith.constant dense<0.000000e+00> : vector<7x32xf32>
    %13 = tpu.matmul %12, %1, %cst_6 {dimension_numbers = #tpu.dot_dimension_numbers<[1], [0], [0], [1], [0, 0, 1, 1], [], []>} : vector<7x48xbf16>, vector<48x32xbf16>, vector<7x32xf32> -> vector<7x32xf32>
    %c0_7 = arith.constant 0 : index
    %c0_8 = arith.constant 0 : index
    %c0_9 = arith.constant 0 : index
    %14 = vector.load %arg11[%c0_7, %c0_8, %c0_9] : memref<2x7x32xf32, #tpu.memory_space<vmem>>, vector<1x7x32xf32>
    %15 = vector.shape_cast %14 : vector<1x7x32xf32> to vector<7x32xf32>
    %16 = vector.shape_cast %13 : vector<7x32xf32> to vector<1x7x32xf32>
    tpu.vector_store %arg11[%c0_7, %c0_8, %c0_9], %16 {strides = array<i32>} : memref<2x7x32xf32, #tpu.memory_space<vmem>>, vector<1x7x32xf32>,
    %cst_10 = arith.constant 1.000000e+00 : f32
    %17 = vector.broadcast %cst_10 : f32 to vector<1x7xf32>
    %cst_11 = arith.constant dense<0.000000e+00> : vector<1x32xf32>
    %18 = tpu.matmul %17, %13, %cst_11 {dimension_numbers = #tpu.dot_dimension_numbers<[1], [0], [0], [1], [0, 0, 1, 1], [], []>} : vector<1x7xf32>, vector<7x32xf32>, vector<1x32xf32> -> vector<1x32xf32>
    %19 = arith.addf %2, %18 : vector<1x32xf32>
    %20 = arith.mulf %13, %13 : vector<7x32xf32>
    %cst_12 = arith.constant dense<0.000000e+00> : vector<1x32xf32>
    %21 = tpu.matmul %17, %20, %cst_12 {dimension_numbers = #tpu.dot_dimension_numbers<[1], [0], [0], [1], [0, 0, 1, 1], [], []>} : vector<1x7xf32>, vector<7x32xf32>, vector<1x32xf32> -> vector<1x32xf32>
    %22 = arith.addf %3, %21 : vector<1x32xf32>
    %c1 = arith.constant 1 : index
    %c0_13 = arith.constant 0 : index
    %c0_14 = arith.constant 0 : index
    %23 = vector.load %arg0[%c1, %c0_13, %c0_14] : memref<2x7x16xf32, #tpu.memory_space<vmem>>, vector<1x7x16xf32>
    %24 = vector.shape_cast %23 : vector<1x7x16xf32> to vector<7x16xf32>
    %cst_15 = arith.constant 0.000000e+00 : f32
    %25 = vector.broadcast %cst_15 : f32 to vector<1x16xf32>
    %26 = tpu.concatenate %25, %24, %25 in 0 : vector<1x16xf32>, vector<7x16xf32>, vector<1x16xf32> -> vector<9x16xf32>
    %27 = vector.extract_strided_slice %26 {offsets = [0, 0], sizes = [7, 16], strides = [1, 1]} : vector<9x16xf32> to vector<7x16xf32>
    %28 = vector.extract_strided_slice %26 {offsets = [1, 0], sizes = [7, 16], strides = [1, 1]} : vector<9x16xf32> to vector<7x16xf32>
    %29 = vector.extract_strided_slice %26 {offsets = [2, 0], sizes = [7, 16], strides = [1, 1]} : vector<9x16xf32> to vector<7x16xf32>
    %30 = tpu.concatenate %27, %28, %29 in 1 : vector<7x16xf32>, vector<7x16xf32>, vector<7x16xf32> -> vector<7x48xf32>
    %31 = arith.truncf %30 : vector<7x48xf32> to vector<7x48xbf16>
    %cst_16 = arith.constant dense<0.000000e+00> : vector<7x32xf32>
    %32 = tpu.matmul %31, %1, %cst_16 {dimension_numbers = #tpu.dot_dimension_numbers<[1], [0], [0], [1], [0, 0, 1, 1], [], []>} : vector<7x48xbf16>, vector<48x32xbf16>, vector<7x32xf32> -> vector<7x32xf32>
    %c1_17 = arith.constant 1 : index
    %c0_18 = arith.constant 0 : index
    %c0_19 = arith.constant 0 : index
    %33 = vector.load %arg11[%c1_17, %c0_18, %c0_19] : memref<2x7x32xf32, #tpu.memory_space<vmem>>, vector<1x7x32xf32>
    %34 = vector.shape_cast %33 : vector<1x7x32xf32> to vector<7x32xf32>
    %35 = vector.shape_cast %32 : vector<7x32xf32> to vector<1x7x32xf32>
    tpu.vector_store %arg11[%c1_17, %c0_18, %c0_19], %35 {strides = array<i32>} : memref<2x7x32xf32, #tpu.memory_space<vmem>>, vector<1x7x32xf32>,
    %cst_20 = arith.constant 1.000000e+00 : f32
    %36 = vector.broadcast %cst_20 : f32 to vector<1x7xf32>
    %cst_21 = arith.constant dense<0.000000e+00> : vector<1x32xf32>
    %37 = tpu.matmul %36, %32, %cst_21 {dimension_numbers = #tpu.dot_dimension_numbers<[1], [0], [0], [1], [0, 0, 1, 1], [], []>} : vector<1x7xf32>, vector<7x32xf32>, vector<1x32xf32> -> vector<1x32xf32>
    %38 = arith.addf %19, %37 : vector<1x32xf32>
    %39 = arith.mulf %32, %32 : vector<7x32xf32>
    %cst_22 = arith.constant dense<0.000000e+00> : vector<1x32xf32>
    %40 = tpu.matmul %36, %39, %cst_22 {dimension_numbers = #tpu.dot_dimension_numbers<[1], [0], [0], [1], [0, 0, 1, 1], [], []>} : vector<1x7xf32>, vector<7x32xf32>, vector<1x32xf32> -> vector<1x32xf32>
    %41 = arith.addf %22, %40 : vector<1x32xf32>
    %c0_23 = arith.constant 0 : index
    %c0_24 = arith.constant 0 : index
    %42 = vector.load %arg2[%c0_23, %c0_24] : memref<1x32xf32, #tpu.memory_space<vmem>>, vector<1x32xf32>
    %c0_25 = arith.constant 0 : index
    %c0_26 = arith.constant 0 : index
    %43 = vector.load %arg3[%c0_25, %c0_26] : memref<1x32xf32, #tpu.memory_space<vmem>>, vector<1x32xf32>
    %cst_27 = arith.constant 1.400000e+01 : f32
    %44 = vector.broadcast %cst_27 : f32 to vector<1x32xf32>
    %45 = arith.divf %38, %44 : vector<1x32xf32>
    %cst_28 = arith.constant 1.400000e+01 : f32
    %46 = vector.broadcast %cst_28 : f32 to vector<1x32xf32>
    %47 = arith.divf %41, %46 : vector<1x32xf32>
    %48 = arith.mulf %45, %45 : vector<1x32xf32>
    %49 = arith.subf %47, %48 : vector<1x32xf32>
    %cst_29 = arith.constant 0.000000e+00 : f32
    %50 = vector.broadcast %cst_29 : f32 to vector<1x32xf32>
    %51 = arith.maximumf %49, %50 : vector<1x32xf32>
    %cst_30 = arith.constant 9.99999974E-6 : f32
    %52 = vector.broadcast %cst_30 : f32 to vector<1x32xf32>
    %53 = arith.addf %51, %52 : vector<1x32xf32>
    %54 = math.rsqrt %53 : vector<1x32xf32>
    %55 = arith.mulf %42, %54 : vector<1x32xf32>
    %56 = arith.mulf %45, %55 : vector<1x32xf32>
    %57 = arith.subf %43, %56 : vector<1x32xf32>
    %c0_31 = arith.constant 0 : index
    %c0_32 = arith.constant 0 : index
    %58 = vector.load %arg4[%c0_31, %c0_32] : memref<96x32xf32, #tpu.memory_space<vmem>>, vector<96x32xf32>
    %59 = arith.truncf %58 : vector<96x32xf32> to vector<96x32xbf16>
    %cst_33 = arith.constant 0.000000e+00 : f32
    %60 = vector.broadcast %cst_33 : f32 to vector<1x32xf32>
    %cst_34 = arith.constant 0.000000e+00 : f32
    %61 = vector.broadcast %cst_34 : f32 to vector<1x32xf32>
    %c0_35 = arith.constant 0 : index
    %c0_36 = arith.constant 0 : index
    %c0_37 = arith.constant 0 : index
    %62 = vector.load %arg11[%c0_35, %c0_36, %c0_37] : memref<2x7x32xf32, #tpu.memory_space<vmem>>, vector<1x7x32xf32>
    %63 = vector.shape_cast %62 : vector<1x7x32xf32> to vector<7x32xf32>
    %64 = vector.broadcast %55 : vector<1x32xf32> to vector<7x32xf32>
    %65 = arith.mulf %63, %64 : vector<7x32xf32>
    %66 = vector.broadcast %57 : vector<1x32xf32> to vector<7x32xf32>
    %67 = arith.addf %65, %66 : vector<7x32xf32>
    %cst_38 = arith.constant 0.000000e+00 : f32
    %68 = vector.broadcast %cst_38 : f32 to vector<7x32xf32>
    %69 = arith.maximumf %67, %68 : vector<7x32xf32>
    %cst_39 = arith.constant 0.000000e+00 : f32
    %70 = vector.broadcast %cst_39 : f32 to vector<1x32xf32>
    %71 = tpu.concatenate %70, %69, %70 in 0 : vector<1x32xf32>, vector<7x32xf32>, vector<1x32xf32> -> vector<9x32xf32>
    %72 = vector.extract_strided_slice %71 {offsets = [0, 0], sizes = [7, 32], strides = [1, 1]} : vector<9x32xf32> to vector<7x32xf32>
    %73 = vector.extract_strided_slice %71 {offsets = [1, 0], sizes = [7, 32], strides = [1, 1]} : vector<9x32xf32> to vector<7x32xf32>
    %74 = vector.extract_strided_slice %71 {offsets = [2, 0], sizes = [7, 32], strides = [1, 1]} : vector<9x32xf32> to vector<7x32xf32>
    %75 = tpu.concatenate %72, %73, %74 in 1 : vector<7x32xf32>, vector<7x32xf32>, vector<7x32xf32> -> vector<7x96xf32>
    %76 = arith.truncf %75 : vector<7x96xf32> to vector<7x96xbf16>
    %cst_40 = arith.constant dense<0.000000e+00> : vector<7x32xf32>
    %77 = tpu.matmul %76, %59, %cst_40 {dimension_numbers = #tpu.dot_dimension_numbers<[1], [0], [0], [1], [0, 0, 1, 1], [], []>} : vector<7x96xbf16>, vector<96x32xbf16>, vector<7x32xf32> -> vector<7x32xf32>
    %c0_41 = arith.constant 0 : index
    %c0_42 = arith.constant 0 : index
    %c0_43 = arith.constant 0 : index
    %78 = vector.load %arg11[%c0_41, %c0_42, %c0_43] : memref<2x7x32xf32, #tpu.memory_space<vmem>>, vector<1x7x32xf32>
    %79 = vector.shape_cast %78 : vector<1x7x32xf32> to vector<7x32xf32>
    %80 = vector.shape_cast %77 : vector<7x32xf32> to vector<1x7x32xf32>
    tpu.vector_store %arg11[%c0_41, %c0_42, %c0_43], %80 {strides = array<i32>} : memref<2x7x32xf32, #tpu.memory_space<vmem>>, vector<1x7x32xf32>,
    %cst_44 = arith.constant 1.000000e+00 : f32
    %81 = vector.broadcast %cst_44 : f32 to vector<1x7xf32>
    %cst_45 = arith.constant dense<0.000000e+00> : vector<1x32xf32>
    %82 = tpu.matmul %81, %77, %cst_45 {dimension_numbers = #tpu.dot_dimension_numbers<[1], [0], [0], [1], [0, 0, 1, 1], [], []>} : vector<1x7xf32>, vector<7x32xf32>, vector<1x32xf32> -> vector<1x32xf32>
    %83 = arith.addf %60, %82 : vector<1x32xf32>
    %84 = arith.mulf %77, %77 : vector<7x32xf32>
    %cst_46 = arith.constant dense<0.000000e+00> : vector<1x32xf32>
    %85 = tpu.matmul %81, %84, %cst_46 {dimension_numbers = #tpu.dot_dimension_numbers<[1], [0], [0], [1], [0, 0, 1, 1], [], []>} : vector<1x7xf32>, vector<7x32xf32>, vector<1x32xf32> -> vector<1x32xf32>
    %86 = arith.addf %61, %85 : vector<1x32xf32>
    %c1_47 = arith.constant 1 : index
    %c0_48 = arith.constant 0 : index
    %c0_49 = arith.constant 0 : index
    %87 = vector.load %arg11[%c1_47, %c0_48, %c0_49] : memref<2x7x32xf32, #tpu.memory_space<vmem>>, vector<1x7x32xf32>
    %88 = vector.shape_cast %87 : vector<1x7x32xf32> to vector<7x32xf32>
    %89 = vector.broadcast %55 : vector<1x32xf32> to vector<7x32xf32>
    %90 = arith.mulf %88, %89 : vector<7x32xf32>
    %91 = vector.broadcast %57 : vector<1x32xf32> to vector<7x32xf32>
    %92 = arith.addf %90, %91 : vector<7x32xf32>
    %cst_50 = arith.constant 0.000000e+00 : f32
    %93 = vector.broadcast %cst_50 : f32 to vector<7x32xf32>
    %94 = arith.maximumf %92, %93 : vector<7x32xf32>
    %cst_51 = arith.constant 0.000000e+00 : f32
    %95 = vector.broadcast %cst_51 : f32 to vector<1x32xf32>
    %96 = tpu.concatenate %95, %94, %95 in 0 : vector<1x32xf32>, vector<7x32xf32>, vector<1x32xf32> -> vector<9x32xf32>
    %97 = vector.extract_strided_slice %96 {offsets = [0, 0], sizes = [7, 32], strides = [1, 1]} : vector<9x32xf32> to vector<7x32xf32>
    %98 = vector.extract_strided_slice %96 {offsets = [1, 0], sizes = [7, 32], strides = [1, 1]} : vector<9x32xf32> to vector<7x32xf32>
    %99 = vector.extract_strided_slice %96 {offsets = [2, 0], sizes = [7, 32], strides = [1, 1]} : vector<9x32xf32> to vector<7x32xf32>
    %100 = tpu.concatenate %97, %98, %99 in 1 : vector<7x32xf32>, vector<7x32xf32>, vector<7x32xf32> -> vector<7x96xf32>
    %101 = arith.truncf %100 : vector<7x96xf32> to vector<7x96xbf16>
    %cst_52 = arith.constant dense<0.000000e+00> : vector<7x32xf32>
    %102 = tpu.matmul %101, %59, %cst_52 {dimension_numbers = #tpu.dot_dimension_numbers<[1], [0], [0], [1], [0, 0, 1, 1], [], []>} : vector<7x96xbf16>, vector<96x32xbf16>, vector<7x32xf32> -> vector<7x32xf32>
    %c1_53 = arith.constant 1 : index
    %c0_54 = arith.constant 0 : index
    %c0_55 = arith.constant 0 : index
    %103 = vector.load %arg11[%c1_53, %c0_54, %c0_55] : memref<2x7x32xf32, #tpu.memory_space<vmem>>, vector<1x7x32xf32>
    %104 = vector.shape_cast %103 : vector<1x7x32xf32> to vector<7x32xf32>
    %105 = vector.shape_cast %102 : vector<7x32xf32> to vector<1x7x32xf32>
    tpu.vector_store %arg11[%c1_53, %c0_54, %c0_55], %105 {strides = array<i32>} : memref<2x7x32xf32, #tpu.memory_space<vmem>>, vector<1x7x32xf32>,
    %cst_56 = arith.constant 1.000000e+00 : f32
    %106 = vector.broadcast %cst_56 : f32 to vector<1x7xf32>
    %cst_57 = arith.constant dense<0.000000e+00> : vector<1x32xf32>
    %107 = tpu.matmul %106, %102, %cst_57 {dimension_numbers = #tpu.dot_dimension_numbers<[1], [0], [0], [1], [0, 0, 1, 1], [], []>} : vector<1x7xf32>, vector<7x32xf32>, vector<1x32xf32> -> vector<1x32xf32>
    %108 = arith.addf %83, %107 : vector<1x32xf32>
    %109 = arith.mulf %102, %102 : vector<7x32xf32>
    %cst_58 = arith.constant dense<0.000000e+00> : vector<1x32xf32>
    %110 = tpu.matmul %106, %109, %cst_58 {dimension_numbers = #tpu.dot_dimension_numbers<[1], [0], [0], [1], [0, 0, 1, 1], [], []>} : vector<1x7xf32>, vector<7x32xf32>, vector<1x32xf32> -> vector<1x32xf32>
    %111 = arith.addf %86, %110 : vector<1x32xf32>
    %c0_59 = arith.constant 0 : index
    %c0_60 = arith.constant 0 : index
    %112 = vector.load %arg5[%c0_59, %c0_60] : memref<1x32xf32, #tpu.memory_space<vmem>>, vector<1x32xf32>
    %c0_61 = arith.constant 0 : index
    %c0_62 = arith.constant 0 : index
    %113 = vector.load %arg6[%c0_61, %c0_62] : memref<1x32xf32, #tpu.memory_space<vmem>>, vector<1x32xf32>
    %cst_63 = arith.constant 1.400000e+01 : f32
    %114 = vector.broadcast %cst_63 : f32 to vector<1x32xf32>
    %115 = arith.divf %108, %114 : vector<1x32xf32>
    %cst_64 = arith.constant 1.400000e+01 : f32
    %116 = vector.broadcast %cst_64 : f32 to vector<1x32xf32>
    %117 = arith.divf %111, %116 : vector<1x32xf32>
    %118 = arith.mulf %115, %115 : vector<1x32xf32>
    %119 = arith.subf %117, %118 : vector<1x32xf32>
    %cst_65 = arith.constant 0.000000e+00 : f32
    %120 = vector.broadcast %cst_65 : f32 to vector<1x32xf32>
    %121 = arith.maximumf %119, %120 : vector<1x32xf32>
    %cst_66 = arith.constant 9.99999974E-6 : f32
    %122 = vector.broadcast %cst_66 : f32 to vector<1x32xf32>
    %123 = arith.addf %121, %122 : vector<1x32xf32>
    %124 = math.rsqrt %123 : vector<1x32xf32>
    %125 = arith.mulf %112, %124 : vector<1x32xf32>
    %126 = arith.mulf %115, %125 : vector<1x32xf32>
    %127 = arith.subf %113, %126 : vector<1x32xf32>
    %c0_67 = arith.constant 0 : index
    %c0_68 = arith.constant 0 : index
    %128 = vector.load %arg7[%c0_67, %c0_68] : memref<16x32xf32, #tpu.memory_space<vmem>>, vector<16x32xf32>
    %129 = arith.truncf %128 : vector<16x32xf32> to vector<16x32xbf16>
    %cst_69 = arith.constant 0.000000e+00 : f32
    %130 = vector.broadcast %cst_69 : f32 to vector<1x32xf32>
    %cst_70 = arith.constant 0.000000e+00 : f32
    %131 = vector.broadcast %cst_70 : f32 to vector<1x32xf32>
    %c0_71 = arith.constant 0 : index
    %c0_72 = arith.constant 0 : index
    %c0_73 = arith.constant 0 : index
    %132 = vector.load %arg0[%c0_71, %c0_72, %c0_73] : memref<2x7x16xf32, #tpu.memory_space<vmem>>, vector<1x7x16xf32>
    %133 = vector.shape_cast %132 : vector<1x7x16xf32> to vector<7x16xf32>
    %134 = arith.truncf %133 : vector<7x16xf32> to vector<7x16xbf16>
    %cst_74 = arith.constant dense<0.000000e+00> : vector<7x32xf32>
    %135 = tpu.matmul %134, %129, %cst_74 {dimension_numbers = #tpu.dot_dimension_numbers<[1], [0], [0], [1], [0, 0, 1, 1], [], []>} : vector<7x16xbf16>, vector<16x32xbf16>, vector<7x32xf32> -> vector<7x32xf32>
    %cst_75 = arith.constant 1.000000e+00 : f32
    %136 = vector.broadcast %cst_75 : f32 to vector<1x7xf32>
    %cst_76 = arith.constant dense<0.000000e+00> : vector<1x32xf32>
    %137 = tpu.matmul %136, %135, %cst_76 {dimension_numbers = #tpu.dot_dimension_numbers<[1], [0], [0], [1], [0, 0, 1, 1], [], []>} : vector<1x7xf32>, vector<7x32xf32>, vector<1x32xf32> -> vector<1x32xf32>
    %138 = arith.addf %130, %137 : vector<1x32xf32>
    %139 = arith.mulf %135, %135 : vector<7x32xf32>
    %cst_77 = arith.constant dense<0.000000e+00> : vector<1x32xf32>
    %140 = tpu.matmul %136, %139, %cst_77 {dimension_numbers = #tpu.dot_dimension_numbers<[1], [0], [0], [1], [0, 0, 1, 1], [], []>} : vector<1x7xf32>, vector<7x32xf32>, vector<1x32xf32> -> vector<1x32xf32>
    %141 = arith.addf %131, %140 : vector<1x32xf32>
    %c1_78 = arith.constant 1 : index
    %c0_79 = arith.constant 0 : index
    %c0_80 = arith.constant 0 : index
    %142 = vector.load %arg0[%c1_78, %c0_79, %c0_80] : memref<2x7x16xf32, #tpu.memory_space<vmem>>, vector<1x7x16xf32>
    %143 = vector.shape_cast %142 : vector<1x7x16xf32> to vector<7x16xf32>
    %144 = arith.truncf %143 : vector<7x16xf32> to vector<7x16xbf16>
    %cst_81 = arith.constant dense<0.000000e+00> : vector<7x32xf32>
    %145 = tpu.matmul %144, %129, %cst_81 {dimension_numbers = #tpu.dot_dimension_numbers<[1], [0], [0], [1], [0, 0, 1, 1], [], []>} : vector<7x16xbf16>, vector<16x32xbf16>, vector<7x32xf32> -> vector<7x32xf32>
    %cst_82 = arith.constant 1.000000e+00 : f32
    %146 = vector.broadcast %cst_82 : f32 to vector<1x7xf32>
    %cst_83 = arith.constant dense<0.000000e+00> : vector<1x32xf32>
    %147 = tpu.matmul %146, %145, %cst_83 {dimension_numbers = #tpu.dot_dimension_numbers<[1], [0], [0], [1], [0, 0, 1, 1], [], []>} : vector<1x7xf32>, vector<7x32xf32>, vector<1x32xf32> -> vector<1x32xf32>
    %148 = arith.addf %138, %147 : vector<1x32xf32>
    %149 = arith.mulf %145, %145 : vector<7x32xf32>
    %cst_84 = arith.constant dense<0.000000e+00> : vector<1x32xf32>
    %150 = tpu.matmul %146, %149, %cst_84 {dimension_numbers = #tpu.dot_dimension_numbers<[1], [0], [0], [1], [0, 0, 1, 1], [], []>} : vector<1x7xf32>, vector<7x32xf32>, vector<1x32xf32> -> vector<1x32xf32>
    %151 = arith.addf %141, %150 : vector<1x32xf32>
    %c0_85 = arith.constant 0 : index
    %c0_86 = arith.constant 0 : index
    %152 = vector.load %arg8[%c0_85, %c0_86] : memref<1x32xf32, #tpu.memory_space<vmem>>, vector<1x32xf32>
    %c0_87 = arith.constant 0 : index
    %c0_88 = arith.constant 0 : index
    %153 = vector.load %arg9[%c0_87, %c0_88] : memref<1x32xf32, #tpu.memory_space<vmem>>, vector<1x32xf32>
    %cst_89 = arith.constant 1.400000e+01 : f32
    %154 = vector.broadcast %cst_89 : f32 to vector<1x32xf32>
    %155 = arith.divf %148, %154 : vector<1x32xf32>
    %cst_90 = arith.constant 1.400000e+01 : f32
    %156 = vector.broadcast %cst_90 : f32 to vector<1x32xf32>
    %157 = arith.divf %151, %156 : vector<1x32xf32>
    %158 = arith.mulf %155, %155 : vector<1x32xf32>
    %159 = arith.subf %157, %158 : vector<1x32xf32>
    %cst_91 = arith.constant 0.000000e+00 : f32
    %160 = vector.broadcast %cst_91 : f32 to vector<1x32xf32>
    %161 = arith.maximumf %159, %160 : vector<1x32xf32>
    %cst_92 = arith.constant 9.99999974E-6 : f32
    %162 = vector.broadcast %cst_92 : f32 to vector<1x32xf32>
    %163 = arith.addf %161, %162 : vector<1x32xf32>
    %164 = math.rsqrt %163 : vector<1x32xf32>
    %165 = arith.mulf %152, %164 : vector<1x32xf32>
    %166 = arith.mulf %155, %165 : vector<1x32xf32>
    %167 = arith.subf %153, %166 : vector<1x32xf32>
    %c0_93 = arith.constant 0 : index
    %c0_94 = arith.constant 0 : index
    %c0_95 = arith.constant 0 : index
    %168 = vector.load %arg0[%c0_93, %c0_94, %c0_95] : memref<2x7x16xf32, #tpu.memory_space<vmem>>, vector<1x7x16xf32>
    %169 = vector.shape_cast %168 : vector<1x7x16xf32> to vector<7x16xf32>
    %170 = arith.truncf %169 : vector<7x16xf32> to vector<7x16xbf16>
    %cst_96 = arith.constant dense<0.000000e+00> : vector<7x32xf32>
    %171 = tpu.matmul %170, %129, %cst_96 {dimension_numbers = #tpu.dot_dimension_numbers<[1], [0], [0], [1], [0, 0, 1, 1], [], []>} : vector<7x16xbf16>, vector<16x32xbf16>, vector<7x32xf32> -> vector<7x32xf32>
    %c0_97 = arith.constant 0 : index
    %c0_98 = arith.constant 0 : index
    %c0_99 = arith.constant 0 : index
    %172 = vector.load %arg11[%c0_97, %c0_98, %c0_99] : memref<2x7x32xf32, #tpu.memory_space<vmem>>, vector<1x7x32xf32>
    %173 = vector.shape_cast %172 : vector<1x7x32xf32> to vector<7x32xf32>
    %174 = vector.broadcast %125 : vector<1x32xf32> to vector<7x32xf32>
    %175 = arith.mulf %173, %174 : vector<7x32xf32>
    %176 = vector.broadcast %127 : vector<1x32xf32> to vector<7x32xf32>
    %177 = arith.addf %175, %176 : vector<7x32xf32>
    %178 = vector.broadcast %165 : vector<1x32xf32> to vector<7x32xf32>
    %179 = arith.mulf %171, %178 : vector<7x32xf32>
    %180 = arith.addf %177, %179 : vector<7x32xf32>
    %181 = vector.broadcast %167 : vector<1x32xf32> to vector<7x32xf32>
    %182 = arith.addf %180, %181 : vector<7x32xf32>
    %cst_100 = arith.constant 0.000000e+00 : f32
    %183 = vector.broadcast %cst_100 : f32 to vector<7x32xf32>
    %184 = arith.maximumf %182, %183 : vector<7x32xf32>
    %c0_101 = arith.constant 0 : index
    %c0_102 = arith.constant 0 : index
    %c0_103 = arith.constant 0 : index
    %185 = vector.load %arg10[%c0_101, %c0_102, %c0_103] : memref<2x7x32xf32, #tpu.memory_space<vmem>>, vector<1x7x32xf32>
    %186 = vector.shape_cast %185 : vector<1x7x32xf32> to vector<7x32xf32>
    %187 = vector.shape_cast %184 : vector<7x32xf32> to vector<1x7x32xf32>
    tpu.vector_store %arg10[%c0_101, %c0_102, %c0_103], %187 {strides = array<i32>} : memref<2x7x32xf32, #tpu.memory_space<vmem>>, vector<1x7x32xf32>,
    %c1_104 = arith.constant 1 : index
    %c0_105 = arith.constant 0 : index
    %c0_106 = arith.constant 0 : index
    %188 = vector.load %arg0[%c1_104, %c0_105, %c0_106] : memref<2x7x16xf32, #tpu.memory_space<vmem>>, vector<1x7x16xf32>
    %189 = vector.shape_cast %188 : vector<1x7x16xf32> to vector<7x16xf32>
    %190 = arith.truncf %189 : vector<7x16xf32> to vector<7x16xbf16>
    %cst_107 = arith.constant dense<0.000000e+00> : vector<7x32xf32>
    %191 = tpu.matmul %190, %129, %cst_107 {dimension_numbers = #tpu.dot_dimension_numbers<[1], [0], [0], [1], [0, 0, 1, 1], [], []>} : vector<7x16xbf16>, vector<16x32xbf16>, vector<7x32xf32> -> vector<7x32xf32>
    %c1_108 = arith.constant 1 : index
    %c0_109 = arith.constant 0 : index
    %c0_110 = arith.constant 0 : index
    %192 = vector.load %arg11[%c1_108, %c0_109, %c0_110] : memref<2x7x32xf32, #tpu.memory_space<vmem>>, vector<1x7x32xf32>
    %193 = vector.shape_cast %192 : vector<1x7x32xf32> to vector<7x32xf32>
    %194 = vector.broadcast %125 : vector<1x32xf32> to vector<7x32xf32>
    %195 = arith.mulf %193, %194 : vector<7x32xf32>
    %196 = vector.broadcast %127 : vector<1x32xf32> to vector<7x32xf32>
    %197 = arith.addf %195, %196 : vector<7x32xf32>
    %198 = vector.broadcast %165 : vector<1x32xf32> to vector<7x32xf32>
    %199 = arith.mulf %191, %198 : vector<7x32xf32>
    %200 = arith.addf %197, %199 : vector<7x32xf32>
    %201 = vector.broadcast %167 : vector<1x32xf32> to vector<7x32xf32>
    %202 = arith.addf %200, %201 : vector<7x32xf32>
    %cst_111 = arith.constant 0.000000e+00 : f32
    %203 = vector.broadcast %cst_111 : f32 to vector<7x32xf32>
    %204 = arith.maximumf %202, %203 : vector<7x32xf32>
    %c1_112 = arith.constant 1 : index
    %c0_113 = arith.constant 0 : index
    %c0_114 = arith.constant 0 : index
    %205 = vector.load %arg10[%c1_112, %c0_113, %c0_114] : memref<2x7x32xf32, #tpu.memory_space<vmem>>, vector<1x7x32xf32>
    %206 = vector.shape_cast %205 : vector<1x7x32xf32> to vector<7x32xf32>
    %207 = vector.shape_cast %204 : vector<7x32xf32> to vector<1x7x32xf32>
    tpu.vector_store %arg10[%c1_112, %c0_113, %c0_114], %207 {strides = array<i32>} : memref<2x7x32xf32, #tpu.memory_space<vmem>>, vector<1x7x32xf32>,
    return
  }
}

module attributes {stable_mosaic.version = 11 : i64} {
  func.func @_block_kernel(%arg0: memref<2x7x8xf32, #tpu.memory_space<vmem>>, %arg1: memref<24x16xf32, #tpu.memory_space<vmem>>, %arg2: memref<1x16xf32, #tpu.memory_space<vmem>>, %arg3: memref<1x16xf32, #tpu.memory_space<vmem>>, %arg4: memref<48x16xf32, #tpu.memory_space<vmem>>, %arg5: memref<1x16xf32, #tpu.memory_space<vmem>>, %arg6: memref<1x16xf32, #tpu.memory_space<vmem>>, %arg7: memref<8x16xf32, #tpu.memory_space<vmem>>, %arg8: memref<1x16xf32, #tpu.memory_space<vmem>>, %arg9: memref<1x16xf32, #tpu.memory_space<vmem>>, %arg10: memref<2x7x16xf32, #tpu.memory_space<vmem>>, %arg11: memref<2x7x16xf32, #tpu.memory_space<vmem>>) attributes {dimension_semantics = [], scalar_prefetch = 0 : i64, scratch_operands = 1 : i64, tpu.core_type = #tpu.core_type<tc>} {
    %c0 = arith.constant 0 : index
    %c0_0 = arith.constant 0 : index
    %0 = vector.load %arg1[%c0, %c0_0] : memref<24x16xf32, #tpu.memory_space<vmem>>, vector<24x16xf32>
    %1 = arith.truncf %0 : vector<24x16xf32> to vector<24x16xbf16>
    %cst = arith.constant 0.000000e+00 : f32
    %2 = vector.broadcast %cst : f32 to vector<1x16xf32>
    %cst_1 = arith.constant 0.000000e+00 : f32
    %3 = vector.broadcast %cst_1 : f32 to vector<1x16xf32>
    %c0_2 = arith.constant 0 : index
    %c0_3 = arith.constant 0 : index
    %c0_4 = arith.constant 0 : index
    %4 = vector.load %arg0[%c0_2, %c0_3, %c0_4] : memref<2x7x8xf32, #tpu.memory_space<vmem>>, vector<1x7x8xf32>
    %5 = vector.shape_cast %4 : vector<1x7x8xf32> to vector<7x8xf32>
    %cst_5 = arith.constant 0.000000e+00 : f32
    %6 = vector.broadcast %cst_5 : f32 to vector<1x8xf32>
    %7 = tpu.concatenate %6, %5, %6 in 0 : vector<1x8xf32>, vector<7x8xf32>, vector<1x8xf32> -> vector<9x8xf32>
    %8 = vector.extract_strided_slice %7 {offsets = [0, 0], sizes = [7, 8], strides = [1, 1]} : vector<9x8xf32> to vector<7x8xf32>
    %9 = vector.extract_strided_slice %7 {offsets = [1, 0], sizes = [7, 8], strides = [1, 1]} : vector<9x8xf32> to vector<7x8xf32>
    %10 = vector.extract_strided_slice %7 {offsets = [2, 0], sizes = [7, 8], strides = [1, 1]} : vector<9x8xf32> to vector<7x8xf32>
    %11 = tpu.concatenate %8, %9, %10 in 1 : vector<7x8xf32>, vector<7x8xf32>, vector<7x8xf32> -> vector<7x24xf32>
    %12 = arith.truncf %11 : vector<7x24xf32> to vector<7x24xbf16>
    %cst_6 = arith.constant dense<0.000000e+00> : vector<7x16xf32>
    %13 = tpu.matmul %12, %1, %cst_6 {dimension_numbers = #tpu.dot_dimension_numbers<[1], [0], [0], [1], [0, 0, 1, 1], [], []>} : vector<7x24xbf16>, vector<24x16xbf16>, vector<7x16xf32> -> vector<7x16xf32>
    %c0_7 = arith.constant 0 : index
    %c0_8 = arith.constant 0 : index
    %c0_9 = arith.constant 0 : index
    %14 = vector.load %arg11[%c0_7, %c0_8, %c0_9] : memref<2x7x16xf32, #tpu.memory_space<vmem>>, vector<1x7x16xf32>
    %15 = vector.shape_cast %14 : vector<1x7x16xf32> to vector<7x16xf32>
    %16 = vector.shape_cast %13 : vector<7x16xf32> to vector<1x7x16xf32>
    tpu.vector_store %arg11[%c0_7, %c0_8, %c0_9], %16 {strides = array<i32>} : memref<2x7x16xf32, #tpu.memory_space<vmem>>, vector<1x7x16xf32>,
    %cst_10 = arith.constant 1.000000e+00 : f32
    %17 = vector.broadcast %cst_10 : f32 to vector<1x7xf32>
    %cst_11 = arith.constant dense<0.000000e+00> : vector<1x16xf32>
    %18 = tpu.matmul %17, %13, %cst_11 {dimension_numbers = #tpu.dot_dimension_numbers<[1], [0], [0], [1], [0, 0, 1, 1], [], []>} : vector<1x7xf32>, vector<7x16xf32>, vector<1x16xf32> -> vector<1x16xf32>
    %19 = arith.addf %2, %18 : vector<1x16xf32>
    %20 = arith.mulf %13, %13 : vector<7x16xf32>
    %cst_12 = arith.constant dense<0.000000e+00> : vector<1x16xf32>
    %21 = tpu.matmul %17, %20, %cst_12 {dimension_numbers = #tpu.dot_dimension_numbers<[1], [0], [0], [1], [0, 0, 1, 1], [], []>} : vector<1x7xf32>, vector<7x16xf32>, vector<1x16xf32> -> vector<1x16xf32>
    %22 = arith.addf %3, %21 : vector<1x16xf32>
    %c1 = arith.constant 1 : index
    %c0_13 = arith.constant 0 : index
    %c0_14 = arith.constant 0 : index
    %23 = vector.load %arg0[%c1, %c0_13, %c0_14] : memref<2x7x8xf32, #tpu.memory_space<vmem>>, vector<1x7x8xf32>
    %24 = vector.shape_cast %23 : vector<1x7x8xf32> to vector<7x8xf32>
    %cst_15 = arith.constant 0.000000e+00 : f32
    %25 = vector.broadcast %cst_15 : f32 to vector<1x8xf32>
    %26 = tpu.concatenate %25, %24, %25 in 0 : vector<1x8xf32>, vector<7x8xf32>, vector<1x8xf32> -> vector<9x8xf32>
    %27 = vector.extract_strided_slice %26 {offsets = [0, 0], sizes = [7, 8], strides = [1, 1]} : vector<9x8xf32> to vector<7x8xf32>
    %28 = vector.extract_strided_slice %26 {offsets = [1, 0], sizes = [7, 8], strides = [1, 1]} : vector<9x8xf32> to vector<7x8xf32>
    %29 = vector.extract_strided_slice %26 {offsets = [2, 0], sizes = [7, 8], strides = [1, 1]} : vector<9x8xf32> to vector<7x8xf32>
    %30 = tpu.concatenate %27, %28, %29 in 1 : vector<7x8xf32>, vector<7x8xf32>, vector<7x8xf32> -> vector<7x24xf32>
    %31 = arith.truncf %30 : vector<7x24xf32> to vector<7x24xbf16>
    %cst_16 = arith.constant dense<0.000000e+00> : vector<7x16xf32>
    %32 = tpu.matmul %31, %1, %cst_16 {dimension_numbers = #tpu.dot_dimension_numbers<[1], [0], [0], [1], [0, 0, 1, 1], [], []>} : vector<7x24xbf16>, vector<24x16xbf16>, vector<7x16xf32> -> vector<7x16xf32>
    %c1_17 = arith.constant 1 : index
    %c0_18 = arith.constant 0 : index
    %c0_19 = arith.constant 0 : index
    %33 = vector.load %arg11[%c1_17, %c0_18, %c0_19] : memref<2x7x16xf32, #tpu.memory_space<vmem>>, vector<1x7x16xf32>
    %34 = vector.shape_cast %33 : vector<1x7x16xf32> to vector<7x16xf32>
    %35 = vector.shape_cast %32 : vector<7x16xf32> to vector<1x7x16xf32>
    tpu.vector_store %arg11[%c1_17, %c0_18, %c0_19], %35 {strides = array<i32>} : memref<2x7x16xf32, #tpu.memory_space<vmem>>, vector<1x7x16xf32>,
    %cst_20 = arith.constant 1.000000e+00 : f32
    %36 = vector.broadcast %cst_20 : f32 to vector<1x7xf32>
    %cst_21 = arith.constant dense<0.000000e+00> : vector<1x16xf32>
    %37 = tpu.matmul %36, %32, %cst_21 {dimension_numbers = #tpu.dot_dimension_numbers<[1], [0], [0], [1], [0, 0, 1, 1], [], []>} : vector<1x7xf32>, vector<7x16xf32>, vector<1x16xf32> -> vector<1x16xf32>
    %38 = arith.addf %19, %37 : vector<1x16xf32>
    %39 = arith.mulf %32, %32 : vector<7x16xf32>
    %cst_22 = arith.constant dense<0.000000e+00> : vector<1x16xf32>
    %40 = tpu.matmul %36, %39, %cst_22 {dimension_numbers = #tpu.dot_dimension_numbers<[1], [0], [0], [1], [0, 0, 1, 1], [], []>} : vector<1x7xf32>, vector<7x16xf32>, vector<1x16xf32> -> vector<1x16xf32>
    %41 = arith.addf %22, %40 : vector<1x16xf32>
    %c0_23 = arith.constant 0 : index
    %c0_24 = arith.constant 0 : index
    %42 = vector.load %arg2[%c0_23, %c0_24] : memref<1x16xf32, #tpu.memory_space<vmem>>, vector<1x16xf32>
    %c0_25 = arith.constant 0 : index
    %c0_26 = arith.constant 0 : index
    %43 = vector.load %arg3[%c0_25, %c0_26] : memref<1x16xf32, #tpu.memory_space<vmem>>, vector<1x16xf32>
    %cst_27 = arith.constant 1.400000e+01 : f32
    %44 = vector.broadcast %cst_27 : f32 to vector<1x16xf32>
    %45 = arith.divf %38, %44 : vector<1x16xf32>
    %cst_28 = arith.constant 1.400000e+01 : f32
    %46 = vector.broadcast %cst_28 : f32 to vector<1x16xf32>
    %47 = arith.divf %41, %46 : vector<1x16xf32>
    %48 = arith.mulf %45, %45 : vector<1x16xf32>
    %49 = arith.subf %47, %48 : vector<1x16xf32>
    %cst_29 = arith.constant 0.000000e+00 : f32
    %50 = vector.broadcast %cst_29 : f32 to vector<1x16xf32>
    %51 = arith.maximumf %49, %50 : vector<1x16xf32>
    %cst_30 = arith.constant 9.99999974E-6 : f32
    %52 = vector.broadcast %cst_30 : f32 to vector<1x16xf32>
    %53 = arith.addf %51, %52 : vector<1x16xf32>
    %54 = math.rsqrt %53 : vector<1x16xf32>
    %55 = arith.mulf %42, %54 : vector<1x16xf32>
    %56 = arith.mulf %45, %55 : vector<1x16xf32>
    %57 = arith.subf %43, %56 : vector<1x16xf32>
    %c0_31 = arith.constant 0 : index
    %c0_32 = arith.constant 0 : index
    %58 = vector.load %arg4[%c0_31, %c0_32] : memref<48x16xf32, #tpu.memory_space<vmem>>, vector<48x16xf32>
    %59 = arith.truncf %58 : vector<48x16xf32> to vector<48x16xbf16>
    %cst_33 = arith.constant 0.000000e+00 : f32
    %60 = vector.broadcast %cst_33 : f32 to vector<1x16xf32>
    %cst_34 = arith.constant 0.000000e+00 : f32
    %61 = vector.broadcast %cst_34 : f32 to vector<1x16xf32>
    %c0_35 = arith.constant 0 : index
    %c0_36 = arith.constant 0 : index
    %c0_37 = arith.constant 0 : index
    %62 = vector.load %arg11[%c0_35, %c0_36, %c0_37] : memref<2x7x16xf32, #tpu.memory_space<vmem>>, vector<1x7x16xf32>
    %63 = vector.shape_cast %62 : vector<1x7x16xf32> to vector<7x16xf32>
    %64 = vector.broadcast %55 : vector<1x16xf32> to vector<7x16xf32>
    %65 = arith.mulf %63, %64 : vector<7x16xf32>
    %66 = vector.broadcast %57 : vector<1x16xf32> to vector<7x16xf32>
    %67 = arith.addf %65, %66 : vector<7x16xf32>
    %cst_38 = arith.constant 0.000000e+00 : f32
    %68 = vector.broadcast %cst_38 : f32 to vector<7x16xf32>
    %69 = arith.maximumf %67, %68 : vector<7x16xf32>
    %cst_39 = arith.constant 0.000000e+00 : f32
    %70 = vector.broadcast %cst_39 : f32 to vector<1x16xf32>
    %71 = tpu.concatenate %70, %69, %70 in 0 : vector<1x16xf32>, vector<7x16xf32>, vector<1x16xf32> -> vector<9x16xf32>
    %72 = vector.extract_strided_slice %71 {offsets = [0, 0], sizes = [7, 16], strides = [1, 1]} : vector<9x16xf32> to vector<7x16xf32>
    %73 = vector.extract_strided_slice %71 {offsets = [1, 0], sizes = [7, 16], strides = [1, 1]} : vector<9x16xf32> to vector<7x16xf32>
    %74 = vector.extract_strided_slice %71 {offsets = [2, 0], sizes = [7, 16], strides = [1, 1]} : vector<9x16xf32> to vector<7x16xf32>
    %75 = tpu.concatenate %72, %73, %74 in 1 : vector<7x16xf32>, vector<7x16xf32>, vector<7x16xf32> -> vector<7x48xf32>
    %76 = arith.truncf %75 : vector<7x48xf32> to vector<7x48xbf16>
    %cst_40 = arith.constant dense<0.000000e+00> : vector<7x16xf32>
    %77 = tpu.matmul %76, %59, %cst_40 {dimension_numbers = #tpu.dot_dimension_numbers<[1], [0], [0], [1], [0, 0, 1, 1], [], []>} : vector<7x48xbf16>, vector<48x16xbf16>, vector<7x16xf32> -> vector<7x16xf32>
    %c0_41 = arith.constant 0 : index
    %c0_42 = arith.constant 0 : index
    %c0_43 = arith.constant 0 : index
    %78 = vector.load %arg11[%c0_41, %c0_42, %c0_43] : memref<2x7x16xf32, #tpu.memory_space<vmem>>, vector<1x7x16xf32>
    %79 = vector.shape_cast %78 : vector<1x7x16xf32> to vector<7x16xf32>
    %80 = vector.shape_cast %77 : vector<7x16xf32> to vector<1x7x16xf32>
    tpu.vector_store %arg11[%c0_41, %c0_42, %c0_43], %80 {strides = array<i32>} : memref<2x7x16xf32, #tpu.memory_space<vmem>>, vector<1x7x16xf32>,
    %cst_44 = arith.constant 1.000000e+00 : f32
    %81 = vector.broadcast %cst_44 : f32 to vector<1x7xf32>
    %cst_45 = arith.constant dense<0.000000e+00> : vector<1x16xf32>
    %82 = tpu.matmul %81, %77, %cst_45 {dimension_numbers = #tpu.dot_dimension_numbers<[1], [0], [0], [1], [0, 0, 1, 1], [], []>} : vector<1x7xf32>, vector<7x16xf32>, vector<1x16xf32> -> vector<1x16xf32>
    %83 = arith.addf %60, %82 : vector<1x16xf32>
    %84 = arith.mulf %77, %77 : vector<7x16xf32>
    %cst_46 = arith.constant dense<0.000000e+00> : vector<1x16xf32>
    %85 = tpu.matmul %81, %84, %cst_46 {dimension_numbers = #tpu.dot_dimension_numbers<[1], [0], [0], [1], [0, 0, 1, 1], [], []>} : vector<1x7xf32>, vector<7x16xf32>, vector<1x16xf32> -> vector<1x16xf32>
    %86 = arith.addf %61, %85 : vector<1x16xf32>
    %c1_47 = arith.constant 1 : index
    %c0_48 = arith.constant 0 : index
    %c0_49 = arith.constant 0 : index
    %87 = vector.load %arg11[%c1_47, %c0_48, %c0_49] : memref<2x7x16xf32, #tpu.memory_space<vmem>>, vector<1x7x16xf32>
    %88 = vector.shape_cast %87 : vector<1x7x16xf32> to vector<7x16xf32>
    %89 = vector.broadcast %55 : vector<1x16xf32> to vector<7x16xf32>
    %90 = arith.mulf %88, %89 : vector<7x16xf32>
    %91 = vector.broadcast %57 : vector<1x16xf32> to vector<7x16xf32>
    %92 = arith.addf %90, %91 : vector<7x16xf32>
    %cst_50 = arith.constant 0.000000e+00 : f32
    %93 = vector.broadcast %cst_50 : f32 to vector<7x16xf32>
    %94 = arith.maximumf %92, %93 : vector<7x16xf32>
    %cst_51 = arith.constant 0.000000e+00 : f32
    %95 = vector.broadcast %cst_51 : f32 to vector<1x16xf32>
    %96 = tpu.concatenate %95, %94, %95 in 0 : vector<1x16xf32>, vector<7x16xf32>, vector<1x16xf32> -> vector<9x16xf32>
    %97 = vector.extract_strided_slice %96 {offsets = [0, 0], sizes = [7, 16], strides = [1, 1]} : vector<9x16xf32> to vector<7x16xf32>
    %98 = vector.extract_strided_slice %96 {offsets = [1, 0], sizes = [7, 16], strides = [1, 1]} : vector<9x16xf32> to vector<7x16xf32>
    %99 = vector.extract_strided_slice %96 {offsets = [2, 0], sizes = [7, 16], strides = [1, 1]} : vector<9x16xf32> to vector<7x16xf32>
    %100 = tpu.concatenate %97, %98, %99 in 1 : vector<7x16xf32>, vector<7x16xf32>, vector<7x16xf32> -> vector<7x48xf32>
    %101 = arith.truncf %100 : vector<7x48xf32> to vector<7x48xbf16>
    %cst_52 = arith.constant dense<0.000000e+00> : vector<7x16xf32>
    %102 = tpu.matmul %101, %59, %cst_52 {dimension_numbers = #tpu.dot_dimension_numbers<[1], [0], [0], [1], [0, 0, 1, 1], [], []>} : vector<7x48xbf16>, vector<48x16xbf16>, vector<7x16xf32> -> vector<7x16xf32>
    %c1_53 = arith.constant 1 : index
    %c0_54 = arith.constant 0 : index
    %c0_55 = arith.constant 0 : index
    %103 = vector.load %arg11[%c1_53, %c0_54, %c0_55] : memref<2x7x16xf32, #tpu.memory_space<vmem>>, vector<1x7x16xf32>
    %104 = vector.shape_cast %103 : vector<1x7x16xf32> to vector<7x16xf32>
    %105 = vector.shape_cast %102 : vector<7x16xf32> to vector<1x7x16xf32>
    tpu.vector_store %arg11[%c1_53, %c0_54, %c0_55], %105 {strides = array<i32>} : memref<2x7x16xf32, #tpu.memory_space<vmem>>, vector<1x7x16xf32>,
    %cst_56 = arith.constant 1.000000e+00 : f32
    %106 = vector.broadcast %cst_56 : f32 to vector<1x7xf32>
    %cst_57 = arith.constant dense<0.000000e+00> : vector<1x16xf32>
    %107 = tpu.matmul %106, %102, %cst_57 {dimension_numbers = #tpu.dot_dimension_numbers<[1], [0], [0], [1], [0, 0, 1, 1], [], []>} : vector<1x7xf32>, vector<7x16xf32>, vector<1x16xf32> -> vector<1x16xf32>
    %108 = arith.addf %83, %107 : vector<1x16xf32>
    %109 = arith.mulf %102, %102 : vector<7x16xf32>
    %cst_58 = arith.constant dense<0.000000e+00> : vector<1x16xf32>
    %110 = tpu.matmul %106, %109, %cst_58 {dimension_numbers = #tpu.dot_dimension_numbers<[1], [0], [0], [1], [0, 0, 1, 1], [], []>} : vector<1x7xf32>, vector<7x16xf32>, vector<1x16xf32> -> vector<1x16xf32>
    %111 = arith.addf %86, %110 : vector<1x16xf32>
    %c0_59 = arith.constant 0 : index
    %c0_60 = arith.constant 0 : index
    %112 = vector.load %arg5[%c0_59, %c0_60] : memref<1x16xf32, #tpu.memory_space<vmem>>, vector<1x16xf32>
    %c0_61 = arith.constant 0 : index
    %c0_62 = arith.constant 0 : index
    %113 = vector.load %arg6[%c0_61, %c0_62] : memref<1x16xf32, #tpu.memory_space<vmem>>, vector<1x16xf32>
    %cst_63 = arith.constant 1.400000e+01 : f32
    %114 = vector.broadcast %cst_63 : f32 to vector<1x16xf32>
    %115 = arith.divf %108, %114 : vector<1x16xf32>
    %cst_64 = arith.constant 1.400000e+01 : f32
    %116 = vector.broadcast %cst_64 : f32 to vector<1x16xf32>
    %117 = arith.divf %111, %116 : vector<1x16xf32>
    %118 = arith.mulf %115, %115 : vector<1x16xf32>
    %119 = arith.subf %117, %118 : vector<1x16xf32>
    %cst_65 = arith.constant 0.000000e+00 : f32
    %120 = vector.broadcast %cst_65 : f32 to vector<1x16xf32>
    %121 = arith.maximumf %119, %120 : vector<1x16xf32>
    %cst_66 = arith.constant 9.99999974E-6 : f32
    %122 = vector.broadcast %cst_66 : f32 to vector<1x16xf32>
    %123 = arith.addf %121, %122 : vector<1x16xf32>
    %124 = math.rsqrt %123 : vector<1x16xf32>
    %125 = arith.mulf %112, %124 : vector<1x16xf32>
    %126 = arith.mulf %115, %125 : vector<1x16xf32>
    %127 = arith.subf %113, %126 : vector<1x16xf32>
    %c0_67 = arith.constant 0 : index
    %c0_68 = arith.constant 0 : index
    %128 = vector.load %arg7[%c0_67, %c0_68] : memref<8x16xf32, #tpu.memory_space<vmem>>, vector<8x16xf32>
    %129 = arith.truncf %128 : vector<8x16xf32> to vector<8x16xbf16>
    %cst_69 = arith.constant 0.000000e+00 : f32
    %130 = vector.broadcast %cst_69 : f32 to vector<1x16xf32>
    %cst_70 = arith.constant 0.000000e+00 : f32
    %131 = vector.broadcast %cst_70 : f32 to vector<1x16xf32>
    %c0_71 = arith.constant 0 : index
    %c0_72 = arith.constant 0 : index
    %c0_73 = arith.constant 0 : index
    %132 = vector.load %arg0[%c0_71, %c0_72, %c0_73] : memref<2x7x8xf32, #tpu.memory_space<vmem>>, vector<1x7x8xf32>
    %133 = vector.shape_cast %132 : vector<1x7x8xf32> to vector<7x8xf32>
    %134 = arith.truncf %133 : vector<7x8xf32> to vector<7x8xbf16>
    %cst_74 = arith.constant dense<0.000000e+00> : vector<7x16xf32>
    %135 = tpu.matmul %134, %129, %cst_74 {dimension_numbers = #tpu.dot_dimension_numbers<[1], [0], [0], [1], [0, 0, 1, 1], [], []>} : vector<7x8xbf16>, vector<8x16xbf16>, vector<7x16xf32> -> vector<7x16xf32>
    %cst_75 = arith.constant 1.000000e+00 : f32
    %136 = vector.broadcast %cst_75 : f32 to vector<1x7xf32>
    %cst_76 = arith.constant dense<0.000000e+00> : vector<1x16xf32>
    %137 = tpu.matmul %136, %135, %cst_76 {dimension_numbers = #tpu.dot_dimension_numbers<[1], [0], [0], [1], [0, 0, 1, 1], [], []>} : vector<1x7xf32>, vector<7x16xf32>, vector<1x16xf32> -> vector<1x16xf32>
    %138 = arith.addf %130, %137 : vector<1x16xf32>
    %139 = arith.mulf %135, %135 : vector<7x16xf32>
    %cst_77 = arith.constant dense<0.000000e+00> : vector<1x16xf32>
    %140 = tpu.matmul %136, %139, %cst_77 {dimension_numbers = #tpu.dot_dimension_numbers<[1], [0], [0], [1], [0, 0, 1, 1], [], []>} : vector<1x7xf32>, vector<7x16xf32>, vector<1x16xf32> -> vector<1x16xf32>
    %141 = arith.addf %131, %140 : vector<1x16xf32>
    %c1_78 = arith.constant 1 : index
    %c0_79 = arith.constant 0 : index
    %c0_80 = arith.constant 0 : index
    %142 = vector.load %arg0[%c1_78, %c0_79, %c0_80] : memref<2x7x8xf32, #tpu.memory_space<vmem>>, vector<1x7x8xf32>
    %143 = vector.shape_cast %142 : vector<1x7x8xf32> to vector<7x8xf32>
    %144 = arith.truncf %143 : vector<7x8xf32> to vector<7x8xbf16>
    %cst_81 = arith.constant dense<0.000000e+00> : vector<7x16xf32>
    %145 = tpu.matmul %144, %129, %cst_81 {dimension_numbers = #tpu.dot_dimension_numbers<[1], [0], [0], [1], [0, 0, 1, 1], [], []>} : vector<7x8xbf16>, vector<8x16xbf16>, vector<7x16xf32> -> vector<7x16xf32>
    %cst_82 = arith.constant 1.000000e+00 : f32
    %146 = vector.broadcast %cst_82 : f32 to vector<1x7xf32>
    %cst_83 = arith.constant dense<0.000000e+00> : vector<1x16xf32>
    %147 = tpu.matmul %146, %145, %cst_83 {dimension_numbers = #tpu.dot_dimension_numbers<[1], [0], [0], [1], [0, 0, 1, 1], [], []>} : vector<1x7xf32>, vector<7x16xf32>, vector<1x16xf32> -> vector<1x16xf32>
    %148 = arith.addf %138, %147 : vector<1x16xf32>
    %149 = arith.mulf %145, %145 : vector<7x16xf32>
    %cst_84 = arith.constant dense<0.000000e+00> : vector<1x16xf32>
    %150 = tpu.matmul %146, %149, %cst_84 {dimension_numbers = #tpu.dot_dimension_numbers<[1], [0], [0], [1], [0, 0, 1, 1], [], []>} : vector<1x7xf32>, vector<7x16xf32>, vector<1x16xf32> -> vector<1x16xf32>
    %151 = arith.addf %141, %150 : vector<1x16xf32>
    %c0_85 = arith.constant 0 : index
    %c0_86 = arith.constant 0 : index
    %152 = vector.load %arg8[%c0_85, %c0_86] : memref<1x16xf32, #tpu.memory_space<vmem>>, vector<1x16xf32>
    %c0_87 = arith.constant 0 : index
    %c0_88 = arith.constant 0 : index
    %153 = vector.load %arg9[%c0_87, %c0_88] : memref<1x16xf32, #tpu.memory_space<vmem>>, vector<1x16xf32>
    %cst_89 = arith.constant 1.400000e+01 : f32
    %154 = vector.broadcast %cst_89 : f32 to vector<1x16xf32>
    %155 = arith.divf %148, %154 : vector<1x16xf32>
    %cst_90 = arith.constant 1.400000e+01 : f32
    %156 = vector.broadcast %cst_90 : f32 to vector<1x16xf32>
    %157 = arith.divf %151, %156 : vector<1x16xf32>
    %158 = arith.mulf %155, %155 : vector<1x16xf32>
    %159 = arith.subf %157, %158 : vector<1x16xf32>
    %cst_91 = arith.constant 0.000000e+00 : f32
    %160 = vector.broadcast %cst_91 : f32 to vector<1x16xf32>
    %161 = arith.maximumf %159, %160 : vector<1x16xf32>
    %cst_92 = arith.constant 9.99999974E-6 : f32
    %162 = vector.broadcast %cst_92 : f32 to vector<1x16xf32>
    %163 = arith.addf %161, %162 : vector<1x16xf32>
    %164 = math.rsqrt %163 : vector<1x16xf32>
    %165 = arith.mulf %152, %164 : vector<1x16xf32>
    %166 = arith.mulf %155, %165 : vector<1x16xf32>
    %167 = arith.subf %153, %166 : vector<1x16xf32>
    %c0_93 = arith.constant 0 : index
    %c0_94 = arith.constant 0 : index
    %c0_95 = arith.constant 0 : index
    %168 = vector.load %arg0[%c0_93, %c0_94, %c0_95] : memref<2x7x8xf32, #tpu.memory_space<vmem>>, vector<1x7x8xf32>
    %169 = vector.shape_cast %168 : vector<1x7x8xf32> to vector<7x8xf32>
    %170 = arith.truncf %169 : vector<7x8xf32> to vector<7x8xbf16>
    %cst_96 = arith.constant dense<0.000000e+00> : vector<7x16xf32>
    %171 = tpu.matmul %170, %129, %cst_96 {dimension_numbers = #tpu.dot_dimension_numbers<[1], [0], [0], [1], [0, 0, 1, 1], [], []>} : vector<7x8xbf16>, vector<8x16xbf16>, vector<7x16xf32> -> vector<7x16xf32>
    %c0_97 = arith.constant 0 : index
    %c0_98 = arith.constant 0 : index
    %c0_99 = arith.constant 0 : index
    %172 = vector.load %arg11[%c0_97, %c0_98, %c0_99] : memref<2x7x16xf32, #tpu.memory_space<vmem>>, vector<1x7x16xf32>
    %173 = vector.shape_cast %172 : vector<1x7x16xf32> to vector<7x16xf32>
    %174 = vector.broadcast %125 : vector<1x16xf32> to vector<7x16xf32>
    %175 = arith.mulf %173, %174 : vector<7x16xf32>
    %176 = vector.broadcast %127 : vector<1x16xf32> to vector<7x16xf32>
    %177 = arith.addf %175, %176 : vector<7x16xf32>
    %178 = vector.broadcast %165 : vector<1x16xf32> to vector<7x16xf32>
    %179 = arith.mulf %171, %178 : vector<7x16xf32>
    %180 = arith.addf %177, %179 : vector<7x16xf32>
    %181 = vector.broadcast %167 : vector<1x16xf32> to vector<7x16xf32>
    %182 = arith.addf %180, %181 : vector<7x16xf32>
    %cst_100 = arith.constant 0.000000e+00 : f32
    %183 = vector.broadcast %cst_100 : f32 to vector<7x16xf32>
    %184 = arith.maximumf %182, %183 : vector<7x16xf32>
    %c0_101 = arith.constant 0 : index
    %c0_102 = arith.constant 0 : index
    %c0_103 = arith.constant 0 : index
    %185 = vector.load %arg10[%c0_101, %c0_102, %c0_103] : memref<2x7x16xf32, #tpu.memory_space<vmem>>, vector<1x7x16xf32>
    %186 = vector.shape_cast %185 : vector<1x7x16xf32> to vector<7x16xf32>
    %187 = vector.shape_cast %184 : vector<7x16xf32> to vector<1x7x16xf32>
    tpu.vector_store %arg10[%c0_101, %c0_102, %c0_103], %187 {strides = array<i32>} : memref<2x7x16xf32, #tpu.memory_space<vmem>>, vector<1x7x16xf32>,
    %c1_104 = arith.constant 1 : index
    %c0_105 = arith.constant 0 : index
    %c0_106 = arith.constant 0 : index
    %188 = vector.load %arg0[%c1_104, %c0_105, %c0_106] : memref<2x7x8xf32, #tpu.memory_space<vmem>>, vector<1x7x8xf32>
    %189 = vector.shape_cast %188 : vector<1x7x8xf32> to vector<7x8xf32>
    %190 = arith.truncf %189 : vector<7x8xf32> to vector<7x8xbf16>
    %cst_107 = arith.constant dense<0.000000e+00> : vector<7x16xf32>
    %191 = tpu.matmul %190, %129, %cst_107 {dimension_numbers = #tpu.dot_dimension_numbers<[1], [0], [0], [1], [0, 0, 1, 1], [], []>} : vector<7x8xbf16>, vector<8x16xbf16>, vector<7x16xf32> -> vector<7x16xf32>
    %c1_108 = arith.constant 1 : index
    %c0_109 = arith.constant 0 : index
    %c0_110 = arith.constant 0 : index
    %192 = vector.load %arg11[%c1_108, %c0_109, %c0_110] : memref<2x7x16xf32, #tpu.memory_space<vmem>>, vector<1x7x16xf32>
    %193 = vector.shape_cast %192 : vector<1x7x16xf32> to vector<7x16xf32>
    %194 = vector.broadcast %125 : vector<1x16xf32> to vector<7x16xf32>
    %195 = arith.mulf %193, %194 : vector<7x16xf32>
    %196 = vector.broadcast %127 : vector<1x16xf32> to vector<7x16xf32>
    %197 = arith.addf %195, %196 : vector<7x16xf32>
    %198 = vector.broadcast %165 : vector<1x16xf32> to vector<7x16xf32>
    %199 = arith.mulf %191, %198 : vector<7x16xf32>
    %200 = arith.addf %197, %199 : vector<7x16xf32>
    %201 = vector.broadcast %167 : vector<1x16xf32> to vector<7x16xf32>
    %202 = arith.addf %200, %201 : vector<7x16xf32>
    %cst_111 = arith.constant 0.000000e+00 : f32
    %203 = vector.broadcast %cst_111 : f32 to vector<7x16xf32>
    %204 = arith.maximumf %202, %203 : vector<7x16xf32>
    %c1_112 = arith.constant 1 : index
    %c0_113 = arith.constant 0 : index
    %c0_114 = arith.constant 0 : index
    %205 = vector.load %arg10[%c1_112, %c0_113, %c0_114] : memref<2x7x16xf32, #tpu.memory_space<vmem>>, vector<1x7x16xf32>
    %206 = vector.shape_cast %205 : vector<1x7x16xf32> to vector<7x16xf32>
    %207 = vector.shape_cast %204 : vector<7x16xf32> to vector<1x7x16xf32>
    tpu.vector_store %arg10[%c1_112, %c0_113, %c0_114], %207 {strides = array<i32>} : memref<2x7x16xf32, #tpu.memory_space<vmem>>, vector<1x7x16xf32>,
    return
  }
}

module attributes {stable_mosaic.version = 11 : i64} {
  func.func @_block_kernel(%arg0: memref<2x7x32xf32, #tpu.memory_space<vmem>>, %arg1: memref<96x64xf32, #tpu.memory_space<vmem>>, %arg2: memref<1x64xf32, #tpu.memory_space<vmem>>, %arg3: memref<1x64xf32, #tpu.memory_space<vmem>>, %arg4: memref<192x64xf32, #tpu.memory_space<vmem>>, %arg5: memref<1x64xf32, #tpu.memory_space<vmem>>, %arg6: memref<1x64xf32, #tpu.memory_space<vmem>>, %arg7: memref<32x64xf32, #tpu.memory_space<vmem>>, %arg8: memref<1x64xf32, #tpu.memory_space<vmem>>, %arg9: memref<1x64xf32, #tpu.memory_space<vmem>>, %arg10: memref<2x7x64xf32, #tpu.memory_space<vmem>>, %arg11: memref<2x7x64xf32, #tpu.memory_space<vmem>>) attributes {dimension_semantics = [], scalar_prefetch = 0 : i64, scratch_operands = 1 : i64, tpu.core_type = #tpu.core_type<tc>} {
    %c0 = arith.constant 0 : index
    %c0_0 = arith.constant 0 : index
    %0 = vector.load %arg1[%c0, %c0_0] : memref<96x64xf32, #tpu.memory_space<vmem>>, vector<96x64xf32>
    %1 = arith.truncf %0 : vector<96x64xf32> to vector<96x64xbf16>
    %cst = arith.constant 0.000000e+00 : f32
    %2 = vector.broadcast %cst : f32 to vector<1x64xf32>
    %cst_1 = arith.constant 0.000000e+00 : f32
    %3 = vector.broadcast %cst_1 : f32 to vector<1x64xf32>
    %c0_2 = arith.constant 0 : index
    %c0_3 = arith.constant 0 : index
    %c0_4 = arith.constant 0 : index
    %4 = vector.load %arg0[%c0_2, %c0_3, %c0_4] : memref<2x7x32xf32, #tpu.memory_space<vmem>>, vector<1x7x32xf32>
    %5 = vector.shape_cast %4 : vector<1x7x32xf32> to vector<7x32xf32>
    %cst_5 = arith.constant 0.000000e+00 : f32
    %6 = vector.broadcast %cst_5 : f32 to vector<1x32xf32>
    %7 = tpu.concatenate %6, %5, %6 in 0 : vector<1x32xf32>, vector<7x32xf32>, vector<1x32xf32> -> vector<9x32xf32>
    %8 = vector.extract_strided_slice %7 {offsets = [0, 0], sizes = [7, 32], strides = [1, 1]} : vector<9x32xf32> to vector<7x32xf32>
    %9 = vector.extract_strided_slice %7 {offsets = [1, 0], sizes = [7, 32], strides = [1, 1]} : vector<9x32xf32> to vector<7x32xf32>
    %10 = vector.extract_strided_slice %7 {offsets = [2, 0], sizes = [7, 32], strides = [1, 1]} : vector<9x32xf32> to vector<7x32xf32>
    %11 = tpu.concatenate %8, %9, %10 in 1 : vector<7x32xf32>, vector<7x32xf32>, vector<7x32xf32> -> vector<7x96xf32>
    %12 = arith.truncf %11 : vector<7x96xf32> to vector<7x96xbf16>
    %cst_6 = arith.constant dense<0.000000e+00> : vector<7x64xf32>
    %13 = tpu.matmul %12, %1, %cst_6 {dimension_numbers = #tpu.dot_dimension_numbers<[1], [0], [0], [1], [0, 0, 1, 1], [], []>} : vector<7x96xbf16>, vector<96x64xbf16>, vector<7x64xf32> -> vector<7x64xf32>
    %c0_7 = arith.constant 0 : index
    %c0_8 = arith.constant 0 : index
    %c0_9 = arith.constant 0 : index
    %14 = vector.load %arg11[%c0_7, %c0_8, %c0_9] : memref<2x7x64xf32, #tpu.memory_space<vmem>>, vector<1x7x64xf32>
    %15 = vector.shape_cast %14 : vector<1x7x64xf32> to vector<7x64xf32>
    %16 = vector.shape_cast %13 : vector<7x64xf32> to vector<1x7x64xf32>
    tpu.vector_store %arg11[%c0_7, %c0_8, %c0_9], %16 {strides = array<i32>} : memref<2x7x64xf32, #tpu.memory_space<vmem>>, vector<1x7x64xf32>,
    %cst_10 = arith.constant 1.000000e+00 : f32
    %17 = vector.broadcast %cst_10 : f32 to vector<1x7xf32>
    %cst_11 = arith.constant dense<0.000000e+00> : vector<1x64xf32>
    %18 = tpu.matmul %17, %13, %cst_11 {dimension_numbers = #tpu.dot_dimension_numbers<[1], [0], [0], [1], [0, 0, 1, 1], [], []>} : vector<1x7xf32>, vector<7x64xf32>, vector<1x64xf32> -> vector<1x64xf32>
    %19 = arith.addf %2, %18 : vector<1x64xf32>
    %20 = arith.mulf %13, %13 : vector<7x64xf32>
    %cst_12 = arith.constant dense<0.000000e+00> : vector<1x64xf32>
    %21 = tpu.matmul %17, %20, %cst_12 {dimension_numbers = #tpu.dot_dimension_numbers<[1], [0], [0], [1], [0, 0, 1, 1], [], []>} : vector<1x7xf32>, vector<7x64xf32>, vector<1x64xf32> -> vector<1x64xf32>
    %22 = arith.addf %3, %21 : vector<1x64xf32>
    %c1 = arith.constant 1 : index
    %c0_13 = arith.constant 0 : index
    %c0_14 = arith.constant 0 : index
    %23 = vector.load %arg0[%c1, %c0_13, %c0_14] : memref<2x7x32xf32, #tpu.memory_space<vmem>>, vector<1x7x32xf32>
    %24 = vector.shape_cast %23 : vector<1x7x32xf32> to vector<7x32xf32>
    %cst_15 = arith.constant 0.000000e+00 : f32
    %25 = vector.broadcast %cst_15 : f32 to vector<1x32xf32>
    %26 = tpu.concatenate %25, %24, %25 in 0 : vector<1x32xf32>, vector<7x32xf32>, vector<1x32xf32> -> vector<9x32xf32>
    %27 = vector.extract_strided_slice %26 {offsets = [0, 0], sizes = [7, 32], strides = [1, 1]} : vector<9x32xf32> to vector<7x32xf32>
    %28 = vector.extract_strided_slice %26 {offsets = [1, 0], sizes = [7, 32], strides = [1, 1]} : vector<9x32xf32> to vector<7x32xf32>
    %29 = vector.extract_strided_slice %26 {offsets = [2, 0], sizes = [7, 32], strides = [1, 1]} : vector<9x32xf32> to vector<7x32xf32>
    %30 = tpu.concatenate %27, %28, %29 in 1 : vector<7x32xf32>, vector<7x32xf32>, vector<7x32xf32> -> vector<7x96xf32>
    %31 = arith.truncf %30 : vector<7x96xf32> to vector<7x96xbf16>
    %cst_16 = arith.constant dense<0.000000e+00> : vector<7x64xf32>
    %32 = tpu.matmul %31, %1, %cst_16 {dimension_numbers = #tpu.dot_dimension_numbers<[1], [0], [0], [1], [0, 0, 1, 1], [], []>} : vector<7x96xbf16>, vector<96x64xbf16>, vector<7x64xf32> -> vector<7x64xf32>
    %c1_17 = arith.constant 1 : index
    %c0_18 = arith.constant 0 : index
    %c0_19 = arith.constant 0 : index
    %33 = vector.load %arg11[%c1_17, %c0_18, %c0_19] : memref<2x7x64xf32, #tpu.memory_space<vmem>>, vector<1x7x64xf32>
    %34 = vector.shape_cast %33 : vector<1x7x64xf32> to vector<7x64xf32>
    %35 = vector.shape_cast %32 : vector<7x64xf32> to vector<1x7x64xf32>
    tpu.vector_store %arg11[%c1_17, %c0_18, %c0_19], %35 {strides = array<i32>} : memref<2x7x64xf32, #tpu.memory_space<vmem>>, vector<1x7x64xf32>,
    %cst_20 = arith.constant 1.000000e+00 : f32
    %36 = vector.broadcast %cst_20 : f32 to vector<1x7xf32>
    %cst_21 = arith.constant dense<0.000000e+00> : vector<1x64xf32>
    %37 = tpu.matmul %36, %32, %cst_21 {dimension_numbers = #tpu.dot_dimension_numbers<[1], [0], [0], [1], [0, 0, 1, 1], [], []>} : vector<1x7xf32>, vector<7x64xf32>, vector<1x64xf32> -> vector<1x64xf32>
    %38 = arith.addf %19, %37 : vector<1x64xf32>
    %39 = arith.mulf %32, %32 : vector<7x64xf32>
    %cst_22 = arith.constant dense<0.000000e+00> : vector<1x64xf32>
    %40 = tpu.matmul %36, %39, %cst_22 {dimension_numbers = #tpu.dot_dimension_numbers<[1], [0], [0], [1], [0, 0, 1, 1], [], []>} : vector<1x7xf32>, vector<7x64xf32>, vector<1x64xf32> -> vector<1x64xf32>
    %41 = arith.addf %22, %40 : vector<1x64xf32>
    %c0_23 = arith.constant 0 : index
    %c0_24 = arith.constant 0 : index
    %42 = vector.load %arg2[%c0_23, %c0_24] : memref<1x64xf32, #tpu.memory_space<vmem>>, vector<1x64xf32>
    %c0_25 = arith.constant 0 : index
    %c0_26 = arith.constant 0 : index
    %43 = vector.load %arg3[%c0_25, %c0_26] : memref<1x64xf32, #tpu.memory_space<vmem>>, vector<1x64xf32>
    %cst_27 = arith.constant 1.400000e+01 : f32
    %44 = vector.broadcast %cst_27 : f32 to vector<1x64xf32>
    %45 = arith.divf %38, %44 : vector<1x64xf32>
    %cst_28 = arith.constant 1.400000e+01 : f32
    %46 = vector.broadcast %cst_28 : f32 to vector<1x64xf32>
    %47 = arith.divf %41, %46 : vector<1x64xf32>
    %48 = arith.mulf %45, %45 : vector<1x64xf32>
    %49 = arith.subf %47, %48 : vector<1x64xf32>
    %cst_29 = arith.constant 0.000000e+00 : f32
    %50 = vector.broadcast %cst_29 : f32 to vector<1x64xf32>
    %51 = arith.maximumf %49, %50 : vector<1x64xf32>
    %cst_30 = arith.constant 9.99999974E-6 : f32
    %52 = vector.broadcast %cst_30 : f32 to vector<1x64xf32>
    %53 = arith.addf %51, %52 : vector<1x64xf32>
    %54 = math.rsqrt %53 : vector<1x64xf32>
    %55 = arith.mulf %42, %54 : vector<1x64xf32>
    %56 = arith.mulf %45, %55 : vector<1x64xf32>
    %57 = arith.subf %43, %56 : vector<1x64xf32>
    %c0_31 = arith.constant 0 : index
    %c0_32 = arith.constant 0 : index
    %58 = vector.load %arg4[%c0_31, %c0_32] : memref<192x64xf32, #tpu.memory_space<vmem>>, vector<192x64xf32>
    %59 = arith.truncf %58 : vector<192x64xf32> to vector<192x64xbf16>
    %cst_33 = arith.constant 0.000000e+00 : f32
    %60 = vector.broadcast %cst_33 : f32 to vector<1x64xf32>
    %cst_34 = arith.constant 0.000000e+00 : f32
    %61 = vector.broadcast %cst_34 : f32 to vector<1x64xf32>
    %c0_35 = arith.constant 0 : index
    %c0_36 = arith.constant 0 : index
    %c0_37 = arith.constant 0 : index
    %62 = vector.load %arg11[%c0_35, %c0_36, %c0_37] : memref<2x7x64xf32, #tpu.memory_space<vmem>>, vector<1x7x64xf32>
    %63 = vector.shape_cast %62 : vector<1x7x64xf32> to vector<7x64xf32>
    %64 = vector.broadcast %55 : vector<1x64xf32> to vector<7x64xf32>
    %65 = arith.mulf %63, %64 : vector<7x64xf32>
    %66 = vector.broadcast %57 : vector<1x64xf32> to vector<7x64xf32>
    %67 = arith.addf %65, %66 : vector<7x64xf32>
    %cst_38 = arith.constant 0.000000e+00 : f32
    %68 = vector.broadcast %cst_38 : f32 to vector<7x64xf32>
    %69 = arith.maximumf %67, %68 : vector<7x64xf32>
    %cst_39 = arith.constant 0.000000e+00 : f32
    %70 = vector.broadcast %cst_39 : f32 to vector<1x64xf32>
    %71 = tpu.concatenate %70, %69, %70 in 0 : vector<1x64xf32>, vector<7x64xf32>, vector<1x64xf32> -> vector<9x64xf32>
    %72 = vector.extract_strided_slice %71 {offsets = [0, 0], sizes = [7, 64], strides = [1, 1]} : vector<9x64xf32> to vector<7x64xf32>
    %73 = vector.extract_strided_slice %71 {offsets = [1, 0], sizes = [7, 64], strides = [1, 1]} : vector<9x64xf32> to vector<7x64xf32>
    %74 = vector.extract_strided_slice %71 {offsets = [2, 0], sizes = [7, 64], strides = [1, 1]} : vector<9x64xf32> to vector<7x64xf32>
    %75 = tpu.concatenate %72, %73, %74 in 1 : vector<7x64xf32>, vector<7x64xf32>, vector<7x64xf32> -> vector<7x192xf32>
    %76 = arith.truncf %75 : vector<7x192xf32> to vector<7x192xbf16>
    %cst_40 = arith.constant dense<0.000000e+00> : vector<7x64xf32>
    %77 = tpu.matmul %76, %59, %cst_40 {dimension_numbers = #tpu.dot_dimension_numbers<[1], [0], [0], [1], [0, 0, 1, 1], [], []>} : vector<7x192xbf16>, vector<192x64xbf16>, vector<7x64xf32> -> vector<7x64xf32>
    %c0_41 = arith.constant 0 : index
    %c0_42 = arith.constant 0 : index
    %c0_43 = arith.constant 0 : index
    %78 = vector.load %arg11[%c0_41, %c0_42, %c0_43] : memref<2x7x64xf32, #tpu.memory_space<vmem>>, vector<1x7x64xf32>
    %79 = vector.shape_cast %78 : vector<1x7x64xf32> to vector<7x64xf32>
    %80 = vector.shape_cast %77 : vector<7x64xf32> to vector<1x7x64xf32>
    tpu.vector_store %arg11[%c0_41, %c0_42, %c0_43], %80 {strides = array<i32>} : memref<2x7x64xf32, #tpu.memory_space<vmem>>, vector<1x7x64xf32>,
    %cst_44 = arith.constant 1.000000e+00 : f32
    %81 = vector.broadcast %cst_44 : f32 to vector<1x7xf32>
    %cst_45 = arith.constant dense<0.000000e+00> : vector<1x64xf32>
    %82 = tpu.matmul %81, %77, %cst_45 {dimension_numbers = #tpu.dot_dimension_numbers<[1], [0], [0], [1], [0, 0, 1, 1], [], []>} : vector<1x7xf32>, vector<7x64xf32>, vector<1x64xf32> -> vector<1x64xf32>
    %83 = arith.addf %60, %82 : vector<1x64xf32>
    %84 = arith.mulf %77, %77 : vector<7x64xf32>
    %cst_46 = arith.constant dense<0.000000e+00> : vector<1x64xf32>
    %85 = tpu.matmul %81, %84, %cst_46 {dimension_numbers = #tpu.dot_dimension_numbers<[1], [0], [0], [1], [0, 0, 1, 1], [], []>} : vector<1x7xf32>, vector<7x64xf32>, vector<1x64xf32> -> vector<1x64xf32>
    %86 = arith.addf %61, %85 : vector<1x64xf32>
    %c1_47 = arith.constant 1 : index
    %c0_48 = arith.constant 0 : index
    %c0_49 = arith.constant 0 : index
    %87 = vector.load %arg11[%c1_47, %c0_48, %c0_49] : memref<2x7x64xf32, #tpu.memory_space<vmem>>, vector<1x7x64xf32>
    %88 = vector.shape_cast %87 : vector<1x7x64xf32> to vector<7x64xf32>
    %89 = vector.broadcast %55 : vector<1x64xf32> to vector<7x64xf32>
    %90 = arith.mulf %88, %89 : vector<7x64xf32>
    %91 = vector.broadcast %57 : vector<1x64xf32> to vector<7x64xf32>
    %92 = arith.addf %90, %91 : vector<7x64xf32>
    %cst_50 = arith.constant 0.000000e+00 : f32
    %93 = vector.broadcast %cst_50 : f32 to vector<7x64xf32>
    %94 = arith.maximumf %92, %93 : vector<7x64xf32>
    %cst_51 = arith.constant 0.000000e+00 : f32
    %95 = vector.broadcast %cst_51 : f32 to vector<1x64xf32>
    %96 = tpu.concatenate %95, %94, %95 in 0 : vector<1x64xf32>, vector<7x64xf32>, vector<1x64xf32> -> vector<9x64xf32>
    %97 = vector.extract_strided_slice %96 {offsets = [0, 0], sizes = [7, 64], strides = [1, 1]} : vector<9x64xf32> to vector<7x64xf32>
    %98 = vector.extract_strided_slice %96 {offsets = [1, 0], sizes = [7, 64], strides = [1, 1]} : vector<9x64xf32> to vector<7x64xf32>
    %99 = vector.extract_strided_slice %96 {offsets = [2, 0], sizes = [7, 64], strides = [1, 1]} : vector<9x64xf32> to vector<7x64xf32>
    %100 = tpu.concatenate %97, %98, %99 in 1 : vector<7x64xf32>, vector<7x64xf32>, vector<7x64xf32> -> vector<7x192xf32>
    %101 = arith.truncf %100 : vector<7x192xf32> to vector<7x192xbf16>
    %cst_52 = arith.constant dense<0.000000e+00> : vector<7x64xf32>
    %102 = tpu.matmul %101, %59, %cst_52 {dimension_numbers = #tpu.dot_dimension_numbers<[1], [0], [0], [1], [0, 0, 1, 1], [], []>} : vector<7x192xbf16>, vector<192x64xbf16>, vector<7x64xf32> -> vector<7x64xf32>
    %c1_53 = arith.constant 1 : index
    %c0_54 = arith.constant 0 : index
    %c0_55 = arith.constant 0 : index
    %103 = vector.load %arg11[%c1_53, %c0_54, %c0_55] : memref<2x7x64xf32, #tpu.memory_space<vmem>>, vector<1x7x64xf32>
    %104 = vector.shape_cast %103 : vector<1x7x64xf32> to vector<7x64xf32>
    %105 = vector.shape_cast %102 : vector<7x64xf32> to vector<1x7x64xf32>
    tpu.vector_store %arg11[%c1_53, %c0_54, %c0_55], %105 {strides = array<i32>} : memref<2x7x64xf32, #tpu.memory_space<vmem>>, vector<1x7x64xf32>,
    %cst_56 = arith.constant 1.000000e+00 : f32
    %106 = vector.broadcast %cst_56 : f32 to vector<1x7xf32>
    %cst_57 = arith.constant dense<0.000000e+00> : vector<1x64xf32>
    %107 = tpu.matmul %106, %102, %cst_57 {dimension_numbers = #tpu.dot_dimension_numbers<[1], [0], [0], [1], [0, 0, 1, 1], [], []>} : vector<1x7xf32>, vector<7x64xf32>, vector<1x64xf32> -> vector<1x64xf32>
    %108 = arith.addf %83, %107 : vector<1x64xf32>
    %109 = arith.mulf %102, %102 : vector<7x64xf32>
    %cst_58 = arith.constant dense<0.000000e+00> : vector<1x64xf32>
    %110 = tpu.matmul %106, %109, %cst_58 {dimension_numbers = #tpu.dot_dimension_numbers<[1], [0], [0], [1], [0, 0, 1, 1], [], []>} : vector<1x7xf32>, vector<7x64xf32>, vector<1x64xf32> -> vector<1x64xf32>
    %111 = arith.addf %86, %110 : vector<1x64xf32>
    %c0_59 = arith.constant 0 : index
    %c0_60 = arith.constant 0 : index
    %112 = vector.load %arg5[%c0_59, %c0_60] : memref<1x64xf32, #tpu.memory_space<vmem>>, vector<1x64xf32>
    %c0_61 = arith.constant 0 : index
    %c0_62 = arith.constant 0 : index
    %113 = vector.load %arg6[%c0_61, %c0_62] : memref<1x64xf32, #tpu.memory_space<vmem>>, vector<1x64xf32>
    %cst_63 = arith.constant 1.400000e+01 : f32
    %114 = vector.broadcast %cst_63 : f32 to vector<1x64xf32>
    %115 = arith.divf %108, %114 : vector<1x64xf32>
    %cst_64 = arith.constant 1.400000e+01 : f32
    %116 = vector.broadcast %cst_64 : f32 to vector<1x64xf32>
    %117 = arith.divf %111, %116 : vector<1x64xf32>
    %118 = arith.mulf %115, %115 : vector<1x64xf32>
    %119 = arith.subf %117, %118 : vector<1x64xf32>
    %cst_65 = arith.constant 0.000000e+00 : f32
    %120 = vector.broadcast %cst_65 : f32 to vector<1x64xf32>
    %121 = arith.maximumf %119, %120 : vector<1x64xf32>
    %cst_66 = arith.constant 9.99999974E-6 : f32
    %122 = vector.broadcast %cst_66 : f32 to vector<1x64xf32>
    %123 = arith.addf %121, %122 : vector<1x64xf32>
    %124 = math.rsqrt %123 : vector<1x64xf32>
    %125 = arith.mulf %112, %124 : vector<1x64xf32>
    %126 = arith.mulf %115, %125 : vector<1x64xf32>
    %127 = arith.subf %113, %126 : vector<1x64xf32>
    %c0_67 = arith.constant 0 : index
    %c0_68 = arith.constant 0 : index
    %128 = vector.load %arg7[%c0_67, %c0_68] : memref<32x64xf32, #tpu.memory_space<vmem>>, vector<32x64xf32>
    %129 = arith.truncf %128 : vector<32x64xf32> to vector<32x64xbf16>
    %cst_69 = arith.constant 0.000000e+00 : f32
    %130 = vector.broadcast %cst_69 : f32 to vector<1x64xf32>
    %cst_70 = arith.constant 0.000000e+00 : f32
    %131 = vector.broadcast %cst_70 : f32 to vector<1x64xf32>
    %c0_71 = arith.constant 0 : index
    %c0_72 = arith.constant 0 : index
    %c0_73 = arith.constant 0 : index
    %132 = vector.load %arg0[%c0_71, %c0_72, %c0_73] : memref<2x7x32xf32, #tpu.memory_space<vmem>>, vector<1x7x32xf32>
    %133 = vector.shape_cast %132 : vector<1x7x32xf32> to vector<7x32xf32>
    %134 = arith.truncf %133 : vector<7x32xf32> to vector<7x32xbf16>
    %cst_74 = arith.constant dense<0.000000e+00> : vector<7x64xf32>
    %135 = tpu.matmul %134, %129, %cst_74 {dimension_numbers = #tpu.dot_dimension_numbers<[1], [0], [0], [1], [0, 0, 1, 1], [], []>} : vector<7x32xbf16>, vector<32x64xbf16>, vector<7x64xf32> -> vector<7x64xf32>
    %cst_75 = arith.constant 1.000000e+00 : f32
    %136 = vector.broadcast %cst_75 : f32 to vector<1x7xf32>
    %cst_76 = arith.constant dense<0.000000e+00> : vector<1x64xf32>
    %137 = tpu.matmul %136, %135, %cst_76 {dimension_numbers = #tpu.dot_dimension_numbers<[1], [0], [0], [1], [0, 0, 1, 1], [], []>} : vector<1x7xf32>, vector<7x64xf32>, vector<1x64xf32> -> vector<1x64xf32>
    %138 = arith.addf %130, %137 : vector<1x64xf32>
    %139 = arith.mulf %135, %135 : vector<7x64xf32>
    %cst_77 = arith.constant dense<0.000000e+00> : vector<1x64xf32>
    %140 = tpu.matmul %136, %139, %cst_77 {dimension_numbers = #tpu.dot_dimension_numbers<[1], [0], [0], [1], [0, 0, 1, 1], [], []>} : vector<1x7xf32>, vector<7x64xf32>, vector<1x64xf32> -> vector<1x64xf32>
    %141 = arith.addf %131, %140 : vector<1x64xf32>
    %c1_78 = arith.constant 1 : index
    %c0_79 = arith.constant 0 : index
    %c0_80 = arith.constant 0 : index
    %142 = vector.load %arg0[%c1_78, %c0_79, %c0_80] : memref<2x7x32xf32, #tpu.memory_space<vmem>>, vector<1x7x32xf32>
    %143 = vector.shape_cast %142 : vector<1x7x32xf32> to vector<7x32xf32>
    %144 = arith.truncf %143 : vector<7x32xf32> to vector<7x32xbf16>
    %cst_81 = arith.constant dense<0.000000e+00> : vector<7x64xf32>
    %145 = tpu.matmul %144, %129, %cst_81 {dimension_numbers = #tpu.dot_dimension_numbers<[1], [0], [0], [1], [0, 0, 1, 1], [], []>} : vector<7x32xbf16>, vector<32x64xbf16>, vector<7x64xf32> -> vector<7x64xf32>
    %cst_82 = arith.constant 1.000000e+00 : f32
    %146 = vector.broadcast %cst_82 : f32 to vector<1x7xf32>
    %cst_83 = arith.constant dense<0.000000e+00> : vector<1x64xf32>
    %147 = tpu.matmul %146, %145, %cst_83 {dimension_numbers = #tpu.dot_dimension_numbers<[1], [0], [0], [1], [0, 0, 1, 1], [], []>} : vector<1x7xf32>, vector<7x64xf32>, vector<1x64xf32> -> vector<1x64xf32>
    %148 = arith.addf %138, %147 : vector<1x64xf32>
    %149 = arith.mulf %145, %145 : vector<7x64xf32>
    %cst_84 = arith.constant dense<0.000000e+00> : vector<1x64xf32>
    %150 = tpu.matmul %146, %149, %cst_84 {dimension_numbers = #tpu.dot_dimension_numbers<[1], [0], [0], [1], [0, 0, 1, 1], [], []>} : vector<1x7xf32>, vector<7x64xf32>, vector<1x64xf32> -> vector<1x64xf32>
    %151 = arith.addf %141, %150 : vector<1x64xf32>
    %c0_85 = arith.constant 0 : index
    %c0_86 = arith.constant 0 : index
    %152 = vector.load %arg8[%c0_85, %c0_86] : memref<1x64xf32, #tpu.memory_space<vmem>>, vector<1x64xf32>
    %c0_87 = arith.constant 0 : index
    %c0_88 = arith.constant 0 : index
    %153 = vector.load %arg9[%c0_87, %c0_88] : memref<1x64xf32, #tpu.memory_space<vmem>>, vector<1x64xf32>
    %cst_89 = arith.constant 1.400000e+01 : f32
    %154 = vector.broadcast %cst_89 : f32 to vector<1x64xf32>
    %155 = arith.divf %148, %154 : vector<1x64xf32>
    %cst_90 = arith.constant 1.400000e+01 : f32
    %156 = vector.broadcast %cst_90 : f32 to vector<1x64xf32>
    %157 = arith.divf %151, %156 : vector<1x64xf32>
    %158 = arith.mulf %155, %155 : vector<1x64xf32>
    %159 = arith.subf %157, %158 : vector<1x64xf32>
    %cst_91 = arith.constant 0.000000e+00 : f32
    %160 = vector.broadcast %cst_91 : f32 to vector<1x64xf32>
    %161 = arith.maximumf %159, %160 : vector<1x64xf32>
    %cst_92 = arith.constant 9.99999974E-6 : f32
    %162 = vector.broadcast %cst_92 : f32 to vector<1x64xf32>
    %163 = arith.addf %161, %162 : vector<1x64xf32>
    %164 = math.rsqrt %163 : vector<1x64xf32>
    %165 = arith.mulf %152, %164 : vector<1x64xf32>
    %166 = arith.mulf %155, %165 : vector<1x64xf32>
    %167 = arith.subf %153, %166 : vector<1x64xf32>
    %c0_93 = arith.constant 0 : index
    %c0_94 = arith.constant 0 : index
    %c0_95 = arith.constant 0 : index
    %168 = vector.load %arg0[%c0_93, %c0_94, %c0_95] : memref<2x7x32xf32, #tpu.memory_space<vmem>>, vector<1x7x32xf32>
    %169 = vector.shape_cast %168 : vector<1x7x32xf32> to vector<7x32xf32>
    %170 = arith.truncf %169 : vector<7x32xf32> to vector<7x32xbf16>
    %cst_96 = arith.constant dense<0.000000e+00> : vector<7x64xf32>
    %171 = tpu.matmul %170, %129, %cst_96 {dimension_numbers = #tpu.dot_dimension_numbers<[1], [0], [0], [1], [0, 0, 1, 1], [], []>} : vector<7x32xbf16>, vector<32x64xbf16>, vector<7x64xf32> -> vector<7x64xf32>
    %c0_97 = arith.constant 0 : index
    %c0_98 = arith.constant 0 : index
    %c0_99 = arith.constant 0 : index
    %172 = vector.load %arg11[%c0_97, %c0_98, %c0_99] : memref<2x7x64xf32, #tpu.memory_space<vmem>>, vector<1x7x64xf32>
    %173 = vector.shape_cast %172 : vector<1x7x64xf32> to vector<7x64xf32>
    %174 = vector.broadcast %125 : vector<1x64xf32> to vector<7x64xf32>
    %175 = arith.mulf %173, %174 : vector<7x64xf32>
    %176 = vector.broadcast %127 : vector<1x64xf32> to vector<7x64xf32>
    %177 = arith.addf %175, %176 : vector<7x64xf32>
    %178 = vector.broadcast %165 : vector<1x64xf32> to vector<7x64xf32>
    %179 = arith.mulf %171, %178 : vector<7x64xf32>
    %180 = arith.addf %177, %179 : vector<7x64xf32>
    %181 = vector.broadcast %167 : vector<1x64xf32> to vector<7x64xf32>
    %182 = arith.addf %180, %181 : vector<7x64xf32>
    %cst_100 = arith.constant 0.000000e+00 : f32
    %183 = vector.broadcast %cst_100 : f32 to vector<7x64xf32>
    %184 = arith.maximumf %182, %183 : vector<7x64xf32>
    %c0_101 = arith.constant 0 : index
    %c0_102 = arith.constant 0 : index
    %c0_103 = arith.constant 0 : index
    %185 = vector.load %arg10[%c0_101, %c0_102, %c0_103] : memref<2x7x64xf32, #tpu.memory_space<vmem>>, vector<1x7x64xf32>
    %186 = vector.shape_cast %185 : vector<1x7x64xf32> to vector<7x64xf32>
    %187 = vector.shape_cast %184 : vector<7x64xf32> to vector<1x7x64xf32>
    tpu.vector_store %arg10[%c0_101, %c0_102, %c0_103], %187 {strides = array<i32>} : memref<2x7x64xf32, #tpu.memory_space<vmem>>, vector<1x7x64xf32>,
    %c1_104 = arith.constant 1 : index
    %c0_105 = arith.constant 0 : index
    %c0_106 = arith.constant 0 : index
    %188 = vector.load %arg0[%c1_104, %c0_105, %c0_106] : memref<2x7x32xf32, #tpu.memory_space<vmem>>, vector<1x7x32xf32>
    %189 = vector.shape_cast %188 : vector<1x7x32xf32> to vector<7x32xf32>
    %190 = arith.truncf %189 : vector<7x32xf32> to vector<7x32xbf16>
    %cst_107 = arith.constant dense<0.000000e+00> : vector<7x64xf32>
    %191 = tpu.matmul %190, %129, %cst_107 {dimension_numbers = #tpu.dot_dimension_numbers<[1], [0], [0], [1], [0, 0, 1, 1], [], []>} : vector<7x32xbf16>, vector<32x64xbf16>, vector<7x64xf32> -> vector<7x64xf32>
    %c1_108 = arith.constant 1 : index
    %c0_109 = arith.constant 0 : index
    %c0_110 = arith.constant 0 : index
    %192 = vector.load %arg11[%c1_108, %c0_109, %c0_110] : memref<2x7x64xf32, #tpu.memory_space<vmem>>, vector<1x7x64xf32>
    %193 = vector.shape_cast %192 : vector<1x7x64xf32> to vector<7x64xf32>
    %194 = vector.broadcast %125 : vector<1x64xf32> to vector<7x64xf32>
    %195 = arith.mulf %193, %194 : vector<7x64xf32>
    %196 = vector.broadcast %127 : vector<1x64xf32> to vector<7x64xf32>
    %197 = arith.addf %195, %196 : vector<7x64xf32>
    %198 = vector.broadcast %165 : vector<1x64xf32> to vector<7x64xf32>
    %199 = arith.mulf %191, %198 : vector<7x64xf32>
    %200 = arith.addf %197, %199 : vector<7x64xf32>
    %201 = vector.broadcast %167 : vector<1x64xf32> to vector<7x64xf32>
    %202 = arith.addf %200, %201 : vector<7x64xf32>
    %cst_111 = arith.constant 0.000000e+00 : f32
    %203 = vector.broadcast %cst_111 : f32 to vector<7x64xf32>
    %204 = arith.maximumf %202, %203 : vector<7x64xf32>
    %c1_112 = arith.constant 1 : index
    %c0_113 = arith.constant 0 : index
    %c0_114 = arith.constant 0 : index
    %205 = vector.load %arg10[%c1_112, %c0_113, %c0_114] : memref<2x7x64xf32, #tpu.memory_space<vmem>>, vector<1x7x64xf32>
    %206 = vector.shape_cast %205 : vector<1x7x64xf32> to vector<7x64xf32>
    %207 = vector.shape_cast %204 : vector<7x64xf32> to vector<1x7x64xf32>
    tpu.vector_store %arg10[%c1_112, %c0_113, %c0_114], %207 {strides = array<i32>} : memref<2x7x64xf32, #tpu.memory_space<vmem>>, vector<1x7x64xf32>,
    return
  }
}

</mosaic_0001>

<llo_original>
// kernel: resnet1d_forward.5
$region0: #{resnet1d_forward.5}
  #allocation0 [shape = 'u32[]', space=smem, size = 0x4, offset = 0x4, fixed_abs, tag = 'smem constant byte address 0x4 - core index']
  #allocation1 [shape = 'u32[144,128]{1,0:T(1,128)}', space=vmem, size = 0x12000, scoped, tag = 'internal scratch']
  #allocation2 [shape = 'f32[2,14,8]{2,1,0:T(8,128)}', space=vmem, size = 0x4000, scoped, tag = 'scratch operand']
  %s0 = inlined_call_operand.vmem [shape: f32[2,16,4], index: 0, kind: input, shape index: {}]
  %s1 = inlined_call_operand.vmem [shape: f32[12,8], index: 1, kind: input, shape index: {}]
  %s2 = inlined_call_operand.hbm [shape: f32[1,8], index: 2, kind: input, shape index: {}]
  %s3 = inlined_call_operand.hbm [shape: f32[1,8], index: 3, kind: input, shape index: {}]
  %s4 = inlined_call_operand.vmem [shape: f32[2,7,8], index: 4, kind: output, shape index: {}]
  %s5 = sld [smem:[#allocation0]]
  $region34: #{resnet1d_forward.5} parent=0
    _
  %s7 = ssub.s32 1, %s5
  %s8 = scalar_select 0, %s7, %s5
  $region1: #{resnet1d_forward.5} parent=0
    #allocation3 [shape = 'u8[512]{0}', space=vmem, size = 0x400, scoped, tag = 'input window, operand 2, single buffered']
    #allocation4 [shape = 's32[1]{0}', space=sflag, size = 0x4, scoped, tag = 'scoped memory for resnet1d_forward.5']
    #allocation5 [shape = 'u8[512]{0}', space=vmem, size = 0x400, scoped, tag = 'input window, operand 3, single buffered']
    #allocation6 [shape = 's32[1]{0}', space=sflag, size = 0x4, scoped, tag = 'scoped memory for resnet1d_forward.5']
    %9 = vsyncpa [#allocation4], 0
    %10 = vsyncpa [#allocation6], 0
    // Predicated region
    $region2: #{resnet1d_forward.5} parent=1 // pred_check
      _
    $region3: #{resnet1d_forward.5} parent=1 // pred_check_branch
      %12 = sbr.rel (0) target = $region5
    $region4: #{resnet1d_forward.5} parent=1 // pred_region
      _
    $region5: #{resnet1d_forward.5} parent=1 // pred_fallthru
      _
    // Predicated region
    $region6: #{resnet1d_forward.5} parent=1 // pred_check
      _
    $region7: #{resnet1d_forward.5} parent=1 // pred_check_branch
      %14 = sbr.rel (0) target = $region9
    $region8: #{resnet1d_forward.5} parent=1 // pred_region
      _
    $region9: #{resnet1d_forward.5} parent=1 // pred_fallthru
      _
    // Predicated region
    $region10: #{resnet1d_forward.5} parent=1 // pred_check
      _
    $region11: #{resnet1d_forward.5} parent=1 // pred_check_branch
      %16 = sbr.rel (0) target = $region13
    $region12: #{resnet1d_forward.5} parent=1 // pred_region
      %s18 = ssub.s32 16, 16
      %19 = vsyncadd [#allocation4], %s18
      %s21 = sshll.u32 [#allocation3], 4
      %s22 = int_to_ptr.vmem [resolvable:$true] %s21
      %24 = dma.hbm_to_vmem [thread:$0]  %s2, 16, %s22, [#allocation4]
    $region13: #{resnet1d_forward.5} parent=1 // pred_fallthru
      _
    // Predicated region
    $region14: #{resnet1d_forward.5} parent=1 // pred_check
      _
    $region15: #{resnet1d_forward.5} parent=1 // pred_check_branch
      %26 = sbr.rel (0) target = $region17
    $region16: #{resnet1d_forward.5} parent=1 // pred_region
      %s28 = ssub.s32 16, 16
      %29 = vsyncadd [#allocation6], %s28
      %s31 = sshll.u32 [#allocation5], 4
      %s32 = int_to_ptr.vmem [resolvable:$true] %s31
      %34 = dma.hbm_to_vmem [thread:$0]  %s3, 16, %s32, [#allocation6]
    $region17: #{resnet1d_forward.5} parent=1 // pred_fallthru
      _
    // Predicated region
    $region18: #{resnet1d_forward.5} parent=1 // pred_check
      _
    $region19: #{resnet1d_forward.5} parent=1 // pred_check_branch
      %36 = sbr.rel (0) target = $region21
    $region20: #{resnet1d_forward.5} parent=1 // pred_region
      %37 = dma.done [#allocation4], 16
    $region21: #{resnet1d_forward.5} parent=1 // pred_fallthru
      _
    // Predicated region
    $region22: #{resnet1d_forward.5} parent=1 // pred_check
      _
    $region23: #{resnet1d_forward.5} parent=1 // pred_check_branch
      %39 = sbr.rel (0) target = $region25
    $region24: #{resnet1d_forward.5} parent=1 // pred_region
      %40 = dma.done [#allocation6], 16
    $region25: #{resnet1d_forward.5} parent=1 // pred_fallthru
      _
    %v42 = vld [vmem:[%s1] sm:$0xff]
    %v43 = vld [vmem:[%s1 + $0x8] sm:$0xf]
    %v44 = vpack.c.bf16 %v43, %v42
    %v45 = vld [vmem:[%s0] sm:$0xff]
    %v46 = vld [vmem:[%s0 + $0x8] sm:$0xff]
    %vm49 = vcmask 1046528
    %v50 = vrot.slane %v45, 1
    %v51 = vrot.slane %v46, 1
    %v52 = vsel %vm49, %v50, %v51
    %53 = vrot.lane.b32.xlu0 %v52, 4
    %v54 = vpop.permute.xlu0 %53
    %55 = vrot.lane.b32.xlu0 %v51, 4
    %v56 = vpop.permute.xlu0 %55
    %vm59 = vcmask 1045504
    %v60 = vrot.slane %v45, 2
    %v61 = vrot.slane %v46, 2
    %v62 = vsel %vm59, %v60, %v61
    %63 = vrot.lane.b32.xlu0 %v62, 8
    %v64 = vpop.permute.xlu0 %63
    %65 = vrot.lane.b32.xlu0 %v61, 8
    %v66 = vpop.permute.xlu0 %65
    %vm69 = vcmask 31744
    %v70 = vsel %vm69, %v45, %v54
    %v71 = vsel %vm69, %v46, %v56
    %vm72 = vcmask 64512
    %v73 = vsel %vm72, %v70, %v64
    %v74 = vsel %vm72, %v71, %v66
    %v75 = vpack.c.bf16 %v74, %v73
    %vm76 = vcmask 97280
    %v78 = vsel %vm76, %v75, 0
    %v81 = vsel %vm59, %v44, 0
    %83 = vmatprep.subr.bf16.mxu0 0
    %84 = vmatpush1.bf16.msra.mxu0 0
    %85 = vmatprep.subr.bf16.mxu0 0
    %86 = vmatpush1.bf16.msra.mxu0 0
    %87 = vmatprep.subr.bf16.mxu0 0
    %88 = vmatpush1.bf16.msra.mxu0 0
    %89 = vmatprep.subr.bf16.mxu0 0
    %90 = vmatpush1.bf16.msra.mxu0 0
    %91 = vmatprep.subr.bf16.mxu0 0
    %92 = vmatpush1.bf16.msra.mxu0 0
    %93 = vmatprep.subr.bf16.mxu0 0
    %94 = vmatpush1.bf16.msra.mxu0 0
    %95 = vmatprep.subr.bf16.mxu0 0
    %96 = vmatpush1.bf16.msra.mxu0 0
    %97 = vmatprep.subr.bf16.mxu0 0
    %98 = vmatpush1.bf16.msra.mxu0 %v81
    %99 = vmatprep.subr.bf16.mxu0 0
    %100 = vmatpush2.bf16.msra.mxu0 0
    %101 = vmatprep.subr.bf16.mxu0 0
    %102 = vmatpush2.bf16.msra.mxu0 0
    %103 = vmatprep.subr.bf16.mxu0 0
    %104 = vmatpush2.bf16.msra.mxu0 0
    %105 = vmatprep.subr.bf16.mxu0 0
    %106 = vmatpush2.bf16.msra.mxu0 0
    %107 = vmatprep.subr.bf16.mxu0 0
    %108 = vmatpush2.bf16.msra.mxu0 0
    %109 = vmatprep.subr.bf16.mxu0 0
    %110 = vmatpush2.bf16.msra.mxu0 0
    %111 = vmatprep.subr.bf16.mxu0 0
    %112 = vmatpush2.bf16.msra.mxu0 0
    %113 = vmatprep.subr.bf16.mxu0 0
    %114 = vmatpush2.bf16.msra.mxu0 0
    %115 = vmatprep.mubr.bf16.mxu0 0
    %116 = vmatmul.mubr.bf16.gmra.mxu0 %v78
    %v117 = vpop.f32.mrf.mxu0
    %v118 = vadd.f32 0.0, %v117
    %v119 = vpop.f32.mrf.mxu0
    %v120 = vpop.f32.mrf.mxu0
    %v121 = vadd.f32 0.0, %v120
    %v122 = vpop.f32.mrf.mxu0
    %123 = vdwg.mxu0
    %124 = vst.msk [vmem:[#allocation2] sm:$0xff] %vm72, %v118
    %vm125 = vcmask 62464
    %126 = vst.msk [vmem:[#allocation2 + $0x8] sm:$0x3f] %vm125, %v121
    %v127 = vmul.f32 %v118, %v118
    %v128 = vmul.f32 %v121, %v121
    %s129 = scalar_lea.vmem %s0, 16
    %v130 = vld [vmem:[%s129] sm:$0xff]
    %v131 = vld [vmem:[%s129 + $0x8] sm:$0xff]
    %v134 = vrot.slane %v130, 1
    %v135 = vrot.slane %v131, 1
    %v136 = vsel %vm49, %v134, %v135
    %137 = vrot.lane.b32.xlu0 %v136, 4
    %v138 = vpop.permute.xlu0 %137
    %139 = vrot.lane.b32.xlu0 %v135, 4
    %v140 = vpop.permute.xlu0 %139
    %v143 = vrot.slane %v130, 2
    %v144 = vrot.slane %v131, 2
    %v145 = vsel %vm59, %v143, %v144
    %146 = vrot.lane.b32.xlu0 %v145, 8
    %v147 = vpop.permute.xlu0 %146
    %148 = vrot.lane.b32.xlu0 %v144, 8
    %v149 = vpop.permute.xlu0 %148
    %v152 = vsel %vm69, %v130, %v138
    %v153 = vsel %vm69, %v131, %v140
    %v154 = vsel %vm72, %v152, %v147
    %v155 = vsel %vm72, %v153, %v149
    %v156 = vpack.c.bf16 %v155, %v154
    %v158 = vsel %vm76, %v156, 0
    %160 = vmatprep.subr.bf16.mxu0 0
    %161 = vmatpush1.bf16.msra.mxu0 0
    %162 = vmatprep.subr.bf16.mxu0 0
    %163 = vmatpush1.bf16.msra.mxu0 0
    %164 = vmatprep.subr.bf16.mxu0 0
    %165 = vmatpush1.bf16.msra.mxu0 0
    %166 = vmatprep.subr.bf16.mxu0 0
    %167 = vmatpush1.bf16.msra.mxu0 0
    %168 = vmatprep.subr.bf16.mxu0 0
    %169 = vmatpush1.bf16.msra.mxu0 0
    %170 = vmatprep.subr.bf16.mxu0 0
    %171 = vmatpush1.bf16.msra.mxu0 0
    %172 = vmatprep.subr.bf16.mxu0 0
    %173 = vmatpush1.bf16.msra.mxu0 0
    %174 = vmatprep.subr.bf16.mxu0 0
    %175 = vmatpush1.bf16.msra.mxu0 %v81
    %176 = vmatprep.subr.bf16.mxu0 0
    %177 = vmatpush2.bf16.msra.mxu0 0
    %178 = vmatprep.subr.bf16.mxu0 0
    %179 = vmatpush2.bf16.msra.mxu0 0
    %180 = vmatprep.subr.bf16.mxu0 0
    %181 = vmatpush2.bf16.msra.mxu0 0
    %182 = vmatprep.subr.bf16.mxu0 0
    %183 = vmatpush2.bf16.msra.mxu0 0
    %184 = vmatprep.subr.bf16.mxu0 0
    %185 = vmatpush2.bf16.msra.mxu0 0
    %186 = vmatprep.subr.bf16.mxu0 0
    %187 = vmatpush2.bf16.msra.mxu0 0
    %188 = vmatprep.subr.bf16.mxu0 0
    %189 = vmatpush2.bf16.msra.mxu0 0
    %190 = vmatprep.subr.bf16.mxu0 0
    %191 = vmatpush2.bf16.msra.mxu0 0
    %192 = vmatprep.mubr.bf16.mxu0 0
    %193 = vmatmul.mubr.bf16.gmra.mxu0 %v158
    %v194 = vpop.f32.mrf.mxu0
    %v195 = vadd.f32 0.0, %v194
    %v196 = vpop.f32.mrf.mxu0
    %v197 = vpop.f32.mrf.mxu0
    %v198 = vadd.f32 0.0, %v197
    %v199 = vpop.f32.mrf.mxu0
    %200 = vdwg.mxu0
    %s201 = scalar_lea.vmem [#allocation2], 16
    %202 = vst.msk [vmem:[%s201] sm:$0xff] %vm72, %v195
    %203 = vst.msk [vmem:[%s201 + $0x8] sm:$0x3f] %vm125, %v198
    %vm204 = vcmask 113664
    %v206 = vsel %vm204, 1.0, 0
    %v209 = vsel %vm59, %v198, 0
    %211 = vmatprep.subr.mxu0 0.0
    %212 = vmatpush1.msra.mxu0 0.0
    %213 = vmatprep.subr.mxu0 0.0
    %214 = vmatpush1.msra.mxu0 0.0
    %215 = vmatprep.subr.mxu0 0.0
    %216 = vmatpush1.msra.mxu0 0.0
    %217 = vmatprep.subr.mxu0 0.0
    %218 = vmatpush1.msra.mxu0 0.0
    %219 = vmatprep.subr.mxu0 0.0
    %220 = vmatpush1.msra.mxu0 0.0
    %221 = vmatprep.subr.mxu0 0.0
    %222 = vmatpush1.msra.mxu0 0.0
    %223 = vmatprep.subr.mxu0 0.0
    %224 = vmatpush1.msra.mxu0 0.0
    %225 = vmatprep.subr.mxu0 0.0
    %226 = vmatpush1.msra.mxu0 0.0
    %227 = vmatprep.subr.mxu0 0.0
    %228 = vmatpush1.msra.mxu0 0.0
    %229 = vmatprep.subr.mxu0 0.0
    %230 = vmatpush1.msra.mxu0 0.0
    %231 = vmatprep.subr.mxu0 0.0
    %232 = vmatpush1.msra.mxu0 0.0
    %233 = vmatprep.subr.mxu0 0.0
    %234 = vmatpush1.msra.mxu0 0.0
    %235 = vmatprep.subr.mxu0 0.0
    %236 = vmatpush1.msra.mxu0 0.0
    %237 = vmatprep.subr.mxu0 0.0
    %238 = vmatpush1.msra.mxu0 0.0
    %239 = vmatprep.subr.mxu0 0.0
    %240 = vmatpush1.msra.mxu0 %v209
    %241 = vmatprep.subr.mxu0 0.0
    %242 = vmatpush1.msra.mxu0 %v195
    %243 = vmatprep.subr.mxu0 0.0
    %244 = vmatpush2.msra.mxu0 0.0
    %245 = vmatprep.subr.mxu0 0.0
    %246 = vmatpush2.msra.mxu0 0.0
    %247 = vmatprep.subr.mxu0 0.0
    %248 = vmatpush2.msra.mxu0 0.0
    %249 = vmatprep.subr.mxu0 0.0
    %250 = vmatpush2.msra.mxu0 0.0
    %251 = vmatprep.subr.mxu0 0.0
    %252 = vmatpush2.msra.mxu0 0.0
    %253 = vmatprep.subr.mxu0 0.0
    %254 = vmatpush2.msra.mxu0 0.0
    %255 = vmatprep.subr.mxu0 0.0
    %256 = vmatpush2.msra.mxu0 0.0
    %257 = vmatprep.subr.mxu0 0.0
    %258 = vmatpush2.msra.mxu0 0.0
    %259 = vmatprep.subr.mxu0 0.0
    %260 = vmatpush2.msra.mxu0 0.0
    %261 = vmatprep.subr.mxu0 0.0
    %262 = vmatpush2.msra.mxu0 0.0
    %263 = vmatprep.subr.mxu0 0.0
    %264 = vmatpush2.msra.mxu0 0.0
    %265 = vmatprep.subr.mxu0 0.0
    %266 = vmatpush2.msra.mxu0 0.0
    %267 = vmatprep.subr.mxu0 0.0
    %268 = vmatpush2.msra.mxu0 0.0
    %269 = vmatprep.subr.mxu0 0.0
    %270 = vmatpush2.msra.mxu0 0.0
    %271 = vmatprep.subr.mxu0 0.0
    %272 = vmatpush2.msra.mxu0 0.0
    %273 = vmatprep.subr.mxu0 0.0
    %274 = vmatpush2.msra.mxu0 0.0
    %275 = vmatprep.mubr.f32.mxu0 0.0
    %276 = vmatmul.mubr.f32.gmra.mxu0 %v206
    %v277 = vpop.f32.mrf.mxu0
    %v278 = vadd.f32 0.0, %v277
    %v279 = vpop.f32.mrf.mxu0
    %280 = vdwg.mxu0
    %v282 = vsel %vm59, %v121, 0
    %284 = vmatprep.subr.mxu0 0.0
    %285 = vmatpush1.msra.mxu0 0.0
    %286 = vmatprep.subr.mxu0 0.0
    %287 = vmatpush1.msra.mxu0 0.0
    %288 = vmatprep.subr.mxu0 0.0
    %289 = vmatpush1.msra.mxu0 0.0
    %290 = vmatprep.subr.mxu0 0.0
    %291 = vmatpush1.msra.mxu0 0.0
    %292 = vmatprep.subr.mxu0 0.0
    %293 = vmatpush1.msra.mxu0 0.0
    %294 = vmatprep.subr.mxu0 0.0
    %295 = vmatpush1.msra.mxu0 0.0
    %296 = vmatprep.subr.mxu0 0.0
    %297 = vmatpush1.msra.mxu0 0.0
    %298 = vmatprep.subr.mxu0 0.0
    %299 = vmatpush1.msra.mxu0 0.0
    %300 = vmatprep.subr.mxu0 0.0
    %301 = vmatpush1.msra.mxu0 0.0
    %302 = vmatprep.subr.mxu0 0.0
    %303 = vmatpush1.msra.mxu0 0.0
    %304 = vmatprep.subr.mxu0 0.0
    %305 = vmatpush1.msra.mxu0 0.0
    %306 = vmatprep.subr.mxu0 0.0
    %307 = vmatpush1.msra.mxu0 0.0
    %308 = vmatprep.subr.mxu0 0.0
    %309 = vmatpush1.msra.mxu0 0.0
    %310 = vmatprep.subr.mxu0 0.0
    %311 = vmatpush1.msra.mxu0 0.0
    %312 = vmatprep.subr.mxu0 0.0
    %313 = vmatpush1.msra.mxu0 %v282
    %314 = vmatprep.subr.mxu0 0.0
    %315 = vmatpush1.msra.mxu0 %v118
    %316 = vmatprep.subr.mxu0 0.0
    %317 = vmatpush2.msra.mxu0 0.0
    %318 = vmatprep.subr.mxu0 0.0
    %319 = vmatpush2.msra.mxu0 0.0
    %320 = vmatprep.subr.mxu0 0.0
    %321 = vmatpush2.msra.mxu0 0.0
    %322 = vmatprep.subr.mxu0 0.0
    %323 = vmatpush2.msra.mxu0 0.0
    %324 = vmatprep.subr.mxu0 0.0
    %325 = vmatpush2.msra.mxu0 0.0
    %326 = vmatprep.subr.mxu0 0.0
    %327 = vmatpush2.msra.mxu0 0.0
    %328 = vmatprep.subr.mxu0 0.0
    %329 = vmatpush2.msra.mxu0 0.0
    %330 = vmatprep.subr.mxu0 0.0
    %331 = vmatpush2.msra.mxu0 0.0
    %332 = vmatprep.subr.mxu0 0.0
    %333 = vmatpush2.msra.mxu0 0.0
    %334 = vmatprep.subr.mxu0 0.0
    %335 = vmatpush2.msra.mxu0 0.0
    %336 = vmatprep.subr.mxu0 0.0
    %337 = vmatpush2.msra.mxu0 0.0
    %338 = vmatprep.subr.mxu0 0.0
    %339 = vmatpush2.msra.mxu0 0.0
    %340 = vmatprep.subr.mxu0 0.0
    %341 = vmatpush2.msra.mxu0 0.0
    %342 = vmatprep.subr.mxu0 0.0
    %343 = vmatpush2.msra.mxu0 0.0
    %344 = vmatprep.subr.mxu0 0.0
    %345 = vmatpush2.msra.mxu0 0.0
    %346 = vmatprep.subr.mxu0 0.0
    %347 = vmatpush2.msra.mxu0 0.0
    %348 = vmatprep.mubr.f32.mxu0 0.0
    %349 = vmatmul.mubr.f32.gmra.mxu0 %v206
    %v350 = vpop.f32.mrf.mxu0
    %v351 = vadd.f32 %v278, %v350
    %v352 = vpop.f32.mrf.mxu0
    %353 = vdwg.mxu0
    %v354 = vmul.f32 %v195, %v195
    %v355 = vmul.f32 %v198, %v198
    %v357 = vsel %vm59, %v355, 0
    %359 = vmatprep.subr.mxu0 0.0
    %360 = vmatpush1.msra.mxu0 0.0
    %361 = vmatprep.subr.mxu0 0.0
    %362 = vmatpush1.msra.mxu0 0.0
    %363 = vmatprep.subr.mxu0 0.0
    %364 = vmatpush1.msra.mxu0 0.0
    %365 = vmatprep.subr.mxu0 0.0
    %366 = vmatpush1.msra.mxu0 0.0
    %367 = vmatprep.subr.mxu0 0.0
    %368 = vmatpush1.msra.mxu0 0.0
    %369 = vmatprep.subr.mxu0 0.0
    %370 = vmatpush1.msra.mxu0 0.0
    %371 = vmatprep.subr.mxu0 0.0
    %372 = vmatpush1.msra.mxu0 0.0
    %373 = vmatprep.subr.mxu0 0.0
    %374 = vmatpush1.msra.mxu0 0.0
    %375 = vmatprep.subr.mxu0 0.0
    %376 = vmatpush1.msra.mxu0 0.0
    %377 = vmatprep.subr.mxu0 0.0
    %378 = vmatpush1.msra.mxu0 0.0
    %379 = vmatprep.subr.mxu0 0.0
    %380 = vmatpush1.msra.mxu0 0.0
    %381 = vmatprep.subr.mxu0 0.0
    %382 = vmatpush1.msra.mxu0 0.0
    %383 = vmatprep.subr.mxu0 0.0
    %384 = vmatpush1.msra.mxu0 0.0
    %385 = vmatprep.subr.mxu0 0.0
    %386 = vmatpush1.msra.mxu0 0.0
    %387 = vmatprep.subr.mxu0 0.0
    %388 = vmatpush1.msra.mxu0 %v357
    %389 = vmatprep.subr.mxu0 0.0
    %390 = vmatpush1.msra.mxu0 %v354
    %391 = vmatprep.subr.mxu0 0.0
    %392 = vmatpush2.msra.mxu0 0.0
    %393 = vmatprep.subr.mxu0 0.0
    %394 = vmatpush2.msra.mxu0 0.0
    %395 = vmatprep.subr.mxu0 0.0
    %396 = vmatpush2.msra.mxu0 0.0
    %397 = vmatprep.subr.mxu0 0.0
    %398 = vmatpush2.msra.mxu0 0.0
    %399 = vmatprep.subr.mxu0 0.0
    %400 = vmatpush2.msra.mxu0 0.0
    %401 = vmatprep.subr.mxu0 0.0
    %402 = vmatpush2.msra.mxu0 0.0
    %403 = vmatprep.subr.mxu0 0.0
    %404 = vmatpush2.msra.mxu0 0.0
    %405 = vmatprep.subr.mxu0 0.0
    %406 = vmatpush2.msra.mxu0 0.0
    %407 = vmatprep.subr.mxu0 0.0
    %408 = vmatpush2.msra.mxu0 0.0
    %409 = vmatprep.subr.mxu0 0.0
    %410 = vmatpush2.msra.mxu0 0.0
    %411 = vmatprep.subr.mxu0 0.0
    %412 = vmatpush2.msra.mxu0 0.0
    %413 = vmatprep.subr.mxu0 0.0
    %414 = vmatpush2.msra.mxu0 0.0
    %415 = vmatprep.subr.mxu0 0.0
    %416 = vmatpush2.msra.mxu0 0.0
    %417 = vmatprep.subr.mxu0 0.0
    %418 = vmatpush2.msra.mxu0 0.0
    %419 = vmatprep.subr.mxu0 0.0
    %420 = vmatpush2.msra.mxu0 0.0
    %421 = vmatprep.subr.mxu0 0.0
    %422 = vmatpush2.msra.mxu0 0.0
    %423 = vmatprep.mubr.f32.mxu0 0.0
    %424 = vmatmul.mubr.f32.gmra.mxu0 %v206
    %v425 = vpop.f32.mrf.mxu0
    %v426 = vadd.f32 0.0, %v425
    %v427 = vpop.f32.mrf.mxu0
    %428 = vdwg.mxu0
    %v430 = vsel %vm59, %v128, 0
    %432 = vmatprep.subr.mxu0 0.0
    %433 = vmatpush1.msra.mxu0 0.0
    %434 = vmatprep.subr.mxu0 0.0
    %435 = vmatpush1.msra.mxu0 0.0
    %436 = vmatprep.subr.mxu0 0.0
    %437 = vmatpush1.msra.mxu0 0.0
    %438 = vmatprep.subr.mxu0 0.0
    %439 = vmatpush1.msra.mxu0 0.0
    %440 = vmatprep.subr.mxu0 0.0
    %441 = vmatpush1.msra.mxu0 0.0
    %442 = vmatprep.subr.mxu0 0.0
    %443 = vmatpush1.msra.mxu0 0.0
    %444 = vmatprep.subr.mxu0 0.0
    %445 = vmatpush1.msra.mxu0 0.0
    %446 = vmatprep.subr.mxu0 0.0
    %447 = vmatpush1.msra.mxu0 0.0
    %448 = vmatprep.subr.mxu0 0.0
    %449 = vmatpush1.msra.mxu0 0.0
    %450 = vmatprep.subr.mxu0 0.0
    %451 = vmatpush1.msra.mxu0 0.0
    %452 = vmatprep.subr.mxu0 0.0
    %453 = vmatpush1.msra.mxu0 0.0
    %454 = vmatprep.subr.mxu0 0.0
    %455 = vmatpush1.msra.mxu0 0.0
    %456 = vmatprep.subr.mxu0 0.0
    %457 = vmatpush1.msra.mxu0 0.0
    %458 = vmatprep.subr.mxu0 0.0
    %459 = vmatpush1.msra.mxu0 0.0
    %460 = vmatprep.subr.mxu0 0.0
    %461 = vmatpush1.msra.mxu0 %v430
    %462 = vmatprep.subr.mxu0 0.0
    %463 = vmatpush1.msra.mxu0 %v127
    %464 = vmatprep.subr.mxu0 0.0
    %465 = vmatpush2.msra.mxu0 0.0
    %466 = vmatprep.subr.mxu0 0.0
    %467 = vmatpush2.msra.mxu0 0.0
    %468 = vmatprep.subr.mxu0 0.0
    %469 = vmatpush2.msra.mxu0 0.0
    %470 = vmatprep.subr.mxu0 0.0
    %471 = vmatpush2.msra.mxu0 0.0
    %472 = vmatprep.subr.mxu0 0.0
    %473 = vmatpush2.msra.mxu0 0.0
    %474 = vmatprep.subr.mxu0 0.0
    %475 = vmatpush2.msra.mxu0 0.0
    %476 = vmatprep.subr.mxu0 0.0
    %477 = vmatpush2.msra.mxu0 0.0
    %478 = vmatprep.subr.mxu0 0.0
    %479 = vmatpush2.msra.mxu0 0.0
    %480 = vmatprep.subr.mxu0 0.0
    %481 = vmatpush2.msra.mxu0 0.0
    %482 = vmatprep.subr.mxu0 0.0
    %483 = vmatpush2.msra.mxu0 0.0
    %484 = vmatprep.subr.mxu0 0.0
    %485 = vmatpush2.msra.mxu0 0.0
    %486 = vmatprep.subr.mxu0 0.0
    %487 = vmatpush2.msra.mxu0 0.0
    %488 = vmatprep.subr.mxu0 0.0
    %489 = vmatpush2.msra.mxu0 0.0
    %490 = vmatprep.subr.mxu0 0.0
    %491 = vmatpush2.msra.mxu0 0.0
    %492 = vmatprep.subr.mxu0 0.0
    %493 = vmatpush2.msra.mxu0 0.0
    %494 = vmatprep.subr.mxu0 0.0
    %495 = vmatpush2.msra.mxu0 0.0
    %496 = vmatprep.mubr.f32.mxu0 0.0
    %497 = vmatmul.mubr.f32.gmra.mxu0 %v206
    %v498 = vpop.f32.mrf.mxu0
    %v499 = vadd.f32 %v426, %v498
    %v500 = vpop.f32.mrf.mxu0
    %501 = vdwg.mxu0
    %v502 = vld [vmem:[#allocation3] sm:$0x1]
    %v503 = vld [vmem:[#allocation5] sm:$0x1]
    %v504 = vrcp.pop 28.0
    %v505 = vmul.f32 %v351, %v504
    %v506 = vmul.f32 %v499, %v504
    %v507 = vmul.f32 %v505, %v505
    %v508 = vsub.f32 %v506, %v507
    %v509 = vmax.f32 %v508, 0.0
    %v510 = vadd.f32 %v509, 1e-05
    %v511 = vrsqrt.pop %v510
    %v512 = vmul.f32 %v502, %v511
    %v513 = vmul.f32 %v505, %v512
    %v514 = vsub.f32 %v503, %v513
    %v515 = vlaneseq
    %v516 = vshrl.u32 %v515, 7
    %v517 = vlaneseq
    %v518 = vand.u32 %v517, 127
    %v519 = vmul.u32 %v516, 2
    %vm520 = vcmp.eq.s32.totalorder %v518, %v519
    %v521 = vsel %vm520, 1, 0
    %v522 = vcvt.s32.f32 %v521
    %v523 = vld [vmem:[#allocation2] sm:$0xff]
    %v524 = vld [vmem:[#allocation2 + $0x8] sm:$0x3f]
    %v526 = vlaneseq
    %v527 = vshrl.u32 %v526, 7
    %v528 = vsub.s32 0, %v527
    %v529 = vrot.slane %v512, %v528
    %v531 = vmul.f32 %v523, %v529
    %v532 = vmul.f32 %v524, %v529
    %v534 = vlaneseq
    %v535 = vshrl.u32 %v534, 7
    %v536 = vsub.s32 0, %v535
    %v537 = vrot.slane %v514, %v536
    %v539 = vadd.f32 %v531, %v537
    %v540 = vadd.f32 %v532, %v537
    %v541 = vmax.f32 %v539, 0.0
    %v542 = vmax.f32 %v540, 0.0
    %vm545 = vcmask 1040384
    %v546 = vrot.slane %v541, 7
    %v547 = vrot.slane %v542, 7
    %v548 = vsel %vm545, %v546, %v547
    %v551 = vsel %vm545, 0.0, %v546
    %v552 = vsel %vm49, %v548, 0.0
    %v555 = vrot.slane %v551, 1
    %v556 = vrot.slane %v552, 1
    %v557 = vsel %vm49, %v555, %v556
    %v560 = vmax.f32 %v551, %v557
    %v561 = vmax.f32 %v552, %v556
    %v562 = vrot.slane %v551, 2
    %v563 = vrot.slane %v552, 2
    %v564 = vsel %vm59, %v562, %v563
    %v567 = vmax.f32 %v560, %v564
    %v568 = vmax.f32 %v561, %v563
    %v570 = vsel %vm204, %v522, 0
    %v573 = vsel %vm59, %v568, 0
    %575 = vmatprep.subr.mxu0 0.0
    %576 = vmatpush1.msra.mxu0 0.0
    %577 = vmatprep.subr.mxu0 0.0
    %578 = vmatpush1.msra.mxu0 0.0
    %579 = vmatprep.subr.mxu0 0.0
    %580 = vmatpush1.msra.mxu0 0.0
    %581 = vmatprep.subr.mxu0 0.0
    %582 = vmatpush1.msra.mxu0 0.0
    %583 = vmatprep.subr.mxu0 0.0
    %584 = vmatpush1.msra.mxu0 0.0
    %585 = vmatprep.subr.mxu0 0.0
    %586 = vmatpush1.msra.mxu0 0.0
    %587 = vmatprep.subr.mxu0 0.0
    %588 = vmatpush1.msra.mxu0 0.0
    %589 = vmatprep.subr.mxu0 0.0
    %590 = vmatpush1.msra.mxu0 0.0
    %591 = vmatprep.subr.mxu0 0.0
    %592 = vmatpush1.msra.mxu0 0.0
    %593 = vmatprep.subr.mxu0 0.0
    %594 = vmatpush1.msra.mxu0 0.0
    %595 = vmatprep.subr.mxu0 0.0
    %596 = vmatpush1.msra.mxu0 0.0
    %597 = vmatprep.subr.mxu0 0.0
    %598 = vmatpush1.msra.mxu0 0.0
    %599 = vmatprep.subr.mxu0 0.0
    %600 = vmatpush1.msra.mxu0 0.0
    %601 = vmatprep.subr.mxu0 0.0
    %602 = vmatpush1.msra.mxu0 0.0
    %603 = vmatprep.subr.mxu0 0.0
    %604 = vmatpush1.msra.mxu0 %v573
    %605 = vmatprep.subr.mxu0 0.0
    %606 = vmatpush1.msra.mxu0 %v567
    %607 = vmatprep.subr.mxu0 0.0
    %608 = vmatpush2.msra.mxu0 0.0
    %609 = vmatprep.subr.mxu0 0.0
    %610 = vmatpush2.msra.mxu0 0.0
    %611 = vmatprep.subr.mxu0 0.0
    %612 = vmatpush2.msra.mxu0 0.0
    %613 = vmatprep.subr.mxu0 0.0
    %614 = vmatpush2.msra.mxu0 0.0
    %615 = vmatprep.subr.mxu0 0.0
    %616 = vmatpush2.msra.mxu0 0.0
    %617 = vmatprep.subr.mxu0 0.0
    %618 = vmatpush2.msra.mxu0 0.0
    %619 = vmatprep.subr.mxu0 0.0
    %620 = vmatpush2.msra.mxu0 0.0
    %621 = vmatprep.subr.mxu0 0.0
    %622 = vmatpush2.msra.mxu0 0.0
    %623 = vmatprep.subr.mxu0 0.0
    %624 = vmatpush2.msra.mxu0 0.0
    %625 = vmatprep.subr.mxu0 0.0
    %626 = vmatpush2.msra.mxu0 0.0
    %627 = vmatprep.subr.mxu0 0.0
    %628 = vmatpush2.msra.mxu0 0.0
    %629 = vmatprep.subr.mxu0 0.0
    %630 = vmatpush2.msra.mxu0 0.0
    %631 = vmatprep.subr.mxu0 0.0
    %632 = vmatpush2.msra.mxu0 0.0
    %633 = vmatprep.subr.mxu0 0.0
    %634 = vmatpush2.msra.mxu0 0.0
    %635 = vmatprep.subr.mxu0 0.0
    %636 = vmatpush2.msra.mxu0 0.0
    %637 = vmatprep.subr.mxu0 0.0
    %638 = vmatpush2.msra.mxu0 0.0
    %639 = vmatprep.mubr.f32.mxu0 0.0
    %640 = vmatmul.mubr.f32.gmra.mxu0 %v570
    %v641 = vpop.f32.mrf.mxu0
    %v642 = vadd.f32 0.0, %v641
    %v643 = vpop.f32.mrf.mxu0
    %644 = vdwg.mxu0
    %vm645 = vcmask 63488
    %646 = vst.msk [vmem:[%s4] sm:$0x7f] %vm645, %v642
    %v647 = vld [vmem:[%s201] sm:$0xff]
    %v648 = vld [vmem:[%s201 + $0x8] sm:$0x3f]
    %v649 = vmul.f32 %v647, %v529
    %v650 = vmul.f32 %v648, %v529
    %v651 = vadd.f32 %v649, %v537
    %v652 = vadd.f32 %v650, %v537
    %v653 = vmax.f32 %v651, 0.0
    %v654 = vmax.f32 %v652, 0.0
    %v657 = vrot.slane %v653, 7
    %v658 = vrot.slane %v654, 7
    %v659 = vsel %vm545, %v657, %v658
    %v662 = vsel %vm545, 0.0, %v657
    %v663 = vsel %vm49, %v659, 0.0
    %v666 = vrot.slane %v662, 1
    %v667 = vrot.slane %v663, 1
    %v668 = vsel %vm49, %v666, %v667
    %v671 = vmax.f32 %v662, %v668
    %v672 = vmax.f32 %v663, %v667
    %v673 = vrot.slane %v662, 2
    %v674 = vrot.slane %v663, 2
    %v675 = vsel %vm59, %v673, %v674
    %v678 = vmax.f32 %v671, %v675
    %v679 = vmax.f32 %v672, %v674
    %v681 = vsel %vm59, %v679, 0
    %683 = vmatprep.subr.mxu0 0.0
    %684 = vmatpush1.msra.mxu0 0.0
    %685 = vmatprep.subr.mxu0 0.0
    %686 = vmatpush1.msra.mxu0 0.0
    %687 = vmatprep.subr.mxu0 0.0
    %688 = vmatpush1.msra.mxu0 0.0
    %689 = vmatprep.subr.mxu0 0.0
    %690 = vmatpush1.msra.mxu0 0.0
    %691 = vmatprep.subr.mxu0 0.0
    %692 = vmatpush1.msra.mxu0 0.0
    %693 = vmatprep.subr.mxu0 0.0
    %694 = vmatpush1.msra.mxu0 0.0
    %695 = vmatprep.subr.mxu0 0.0
    %696 = vmatpush1.msra.mxu0 0.0
    %697 = vmatprep.subr.mxu0 0.0
    %698 = vmatpush1.msra.mxu0 0.0
    %699 = vmatprep.subr.mxu0 0.0
    %700 = vmatpush1.msra.mxu0 0.0
    %701 = vmatprep.subr.mxu0 0.0
    %702 = vmatpush1.msra.mxu0 0.0
    %703 = vmatprep.subr.mxu0 0.0
    %704 = vmatpush1.msra.mxu0 0.0
    %705 = vmatprep.subr.mxu0 0.0
    %706 = vmatpush1.msra.mxu0 0.0
    %707 = vmatprep.subr.mxu0 0.0
    %708 = vmatpush1.msra.mxu0 0.0
    %709 = vmatprep.subr.mxu0 0.0
    %710 = vmatpush1.msra.mxu0 0.0
    %711 = vmatprep.subr.mxu0 0.0
    %712 = vmatpush1.msra.mxu0 %v681
    %713 = vmatprep.subr.mxu0 0.0
    %714 = vmatpush1.msra.mxu0 %v678
    %715 = vmatprep.subr.mxu0 0.0
    %716 = vmatpush2.msra.mxu0 0.0
    %717 = vmatprep.subr.mxu0 0.0
    %718 = vmatpush2.msra.mxu0 0.0
    %719 = vmatprep.subr.mxu0 0.0
    %720 = vmatpush2.msra.mxu0 0.0
    %721 = vmatprep.subr.mxu0 0.0
    %722 = vmatpush2.msra.mxu0 0.0
    %723 = vmatprep.subr.mxu0 0.0
    %724 = vmatpush2.msra.mxu0 0.0
    %725 = vmatprep.subr.mxu0 0.0
    %726 = vmatpush2.msra.mxu0 0.0
    %727 = vmatprep.subr.mxu0 0.0
    %728 = vmatpush2.msra.mxu0 0.0
    %729 = vmatprep.subr.mxu0 0.0
    %730 = vmatpush2.msra.mxu0 0.0
    %731 = vmatprep.subr.mxu0 0.0
    %732 = vmatpush2.msra.mxu0 0.0
    %733 = vmatprep.subr.mxu0 0.0
    %734 = vmatpush2.msra.mxu0 0.0
    %735 = vmatprep.subr.mxu0 0.0
    %736 = vmatpush2.msra.mxu0 0.0
    %737 = vmatprep.subr.mxu0 0.0
    %738 = vmatpush2.msra.mxu0 0.0
    %739 = vmatprep.subr.mxu0 0.0
    %740 = vmatpush2.msra.mxu0 0.0
    %741 = vmatprep.subr.mxu0 0.0
    %742 = vmatpush2.msra.mxu0 0.0
    %743 = vmatprep.subr.mxu0 0.0
    %744 = vmatpush2.msra.mxu0 0.0
    %745 = vmatprep.subr.mxu0 0.0
    %746 = vmatpush2.msra.mxu0 0.0
    %747 = vmatprep.mubr.f32.mxu0 0.0
    %748 = vmatmul.mubr.f32.gmra.mxu0 %v570
    %v749 = vpop.f32.mrf.mxu0
    %v750 = vadd.f32 0.0, %v749
    %v751 = vpop.f32.mrf.mxu0
    %752 = vdwg.mxu0
    %s753 = scalar_lea.vmem %s4, 8
    %754 = vst.msk [vmem:[%s753] sm:$0x7f] %vm645, %v750
    // Predicated region
    $region26: #{resnet1d_forward.5} parent=1 // pred_check
      _
    $region27: #{resnet1d_forward.5} parent=1 // pred_check_branch
      %756 = sbr.rel (0) target = $region29
    $region28: #{resnet1d_forward.5} parent=1 // pred_region
      _
    $region29: #{resnet1d_forward.5} parent=1 // pred_fallthru
      _
    // Predicated region
    $region30: #{resnet1d_forward.5} parent=1 // pred_check
      _
    $region31: #{resnet1d_forward.5} parent=1 // pred_check_branch
      %758 = sbr.rel (0) target = $region33
    $region32: #{resnet1d_forward.5} parent=1 // pred_region
      _
    $region33: #{resnet1d_forward.5} parent=1 // pred_fallthru
      _
    %759 = vsyncpa [#allocation4], 1
    %760 = vsyncpa [#allocation6], 1

// kernel: resnet1d_forward.6
$region0: #{resnet1d_forward.6}
  #allocation0 [shape = 'u32[]', space=smem, size = 0x4, offset = 0x4, fixed_abs, tag = 'smem constant byte address 0x4 - core index']
  #allocation1 [shape = 'u32[144,128]{1,0:T(1,128)}', space=vmem, size = 0x12000, scoped, tag = 'internal scratch']
  #allocation2 [shape = 'f32[2,7,8]{2,1,0:T(8,128)}', space=vmem, size = 0x2000, scoped, tag = 'scratch operand']
  %s0 = inlined_call_operand.vmem [shape: f32[2,7,8], index: 0, kind: input, shape index: {}]
  %s1 = inlined_call_operand.vmem [shape: f32[24,8], index: 1, kind: input, shape index: {}]
  %s2 = inlined_call_operand.hbm [shape: f32[1,8], index: 2, kind: input, shape index: {}]
  %s3 = inlined_call_operand.hbm [shape: f32[1,8], index: 3, kind: input, shape index: {}]
  %s4 = inlined_call_operand.vmem [shape: f32[24,8], index: 4, kind: input, shape index: {}]
  %s5 = inlined_call_operand.hbm [shape: f32[1,8], index: 5, kind: input, shape index: {}]
  %s6 = inlined_call_operand.hbm [shape: f32[1,8], index: 6, kind: input, shape index: {}]
  %s7 = inlined_call_operand.vmem [shape: f32[2,7,8], index: 7, kind: output, shape index: {}]
  %s8 = sld [smem:[#allocation0]]
  $region54: #{resnet1d_forward.6} parent=0
    _
  %s10 = ssub.s32 1, %s8
  %s11 = scalar_select 0, %s10, %s8
  $region1: #{resnet1d_forward.6} parent=0
    #allocation3 [shape = 'u8[512]{0}', space=vmem, size = 0x400, scoped, tag = 'input window, operand 2, single buffered']
    #allocation4 [shape = 's32[1]{0}', space=sflag, size = 0x4, scoped, tag = 'scoped memory for resnet1d_forward.6']
    #allocation5 [shape = 'u8[512]{0}', space=vmem, size = 0x400, scoped, tag = 'input window, operand 3, single buffered']
    #allocation6 [shape = 's32[1]{0}', space=sflag, size = 0x4, scoped, tag = 'scoped memory for resnet1d_forward.6']
    #allocation7 [shape = 'u8[512]{0}', space=vmem, size = 0x400, scoped, tag = 'input window, operand 5, single buffered']
    #allocation8 [shape = 'u8[512]{0}', space=vmem, size = 0x400, scoped, tag = 'input window, operand 6, single buffered']
    #allocation9 [shape = 's32[1]{0}', space=sflag, size = 0x4, scoped, tag = 'scoped memory for resnet1d_forward.6']
    %12 = vsyncpa [#allocation4], 0
    %13 = vsyncpa [#allocation6], 0
    %14 = vsyncpa [#allocation9], 0
    // Predicated region
    $region2: #{resnet1d_forward.6} parent=1 // pred_check
      _
    $region3: #{resnet1d_forward.6} parent=1 // pred_check_branch
      %16 = sbr.rel (0) target = $region5
    $region4: #{resnet1d_forward.6} parent=1 // pred_region
      _
    $region5: #{resnet1d_forward.6} parent=1 // pred_fallthru
      _
    // Predicated region
    $region6: #{resnet1d_forward.6} parent=1 // pred_check
      _
    $region7: #{resnet1d_forward.6} parent=1 // pred_check_branch
      %18 = sbr.rel (0) target = $region9
    $region8: #{resnet1d_forward.6} parent=1 // pred_region
      _
    $region9: #{resnet1d_forward.6} parent=1 // pred_fallthru
      _
    // Predicated region
    $region10: #{resnet1d_forward.6} parent=1 // pred_check
      _
    $region11: #{resnet1d_forward.6} parent=1 // pred_check_branch
      %20 = sbr.rel (0) target = $region13
    $region12: #{resnet1d_forward.6} parent=1 // pred_region
      %s22 = ssub.s32 16, 16
      %23 = vsyncadd [#allocation4], %s22
      %s25 = sshll.u32 [#allocation3], 4
      %s26 = int_to_ptr.vmem [resolvable:$true] %s25
      %28 = dma.hbm_to_vmem [thread:$0]  %s2, 16, %s26, [#allocation4]
    $region13: #{resnet1d_forward.6} parent=1 // pred_fallthru
      _
    // Predicated region
    $region14: #{resnet1d_forward.6} parent=1 // pred_check
      _
    $region15: #{resnet1d_forward.6} parent=1 // pred_check_branch
      %30 = sbr.rel (0) target = $region17
    $region16: #{resnet1d_forward.6} parent=1 // pred_region
      %s32 = ssub.s32 16, 16
      %33 = vsyncadd [#allocation6], %s32
      %s35 = sshll.u32 [#allocation5], 4
      %s36 = int_to_ptr.vmem [resolvable:$true] %s35
      %38 = dma.hbm_to_vmem [thread:$0]  %s3, 16, %s36, [#allocation6]
    $region17: #{resnet1d_forward.6} parent=1 // pred_fallthru
      _
    // Predicated region
    $region18: #{resnet1d_forward.6} parent=1 // pred_check
      _
    $region19: #{resnet1d_forward.6} parent=1 // pred_check_branch
      %40 = sbr.rel (0) target = $region21
    $region20: #{resnet1d_forward.6} parent=1 // pred_region
      _
    $region21: #{resnet1d_forward.6} parent=1 // pred_fallthru
      _
    // Predicated region
    $region22: #{resnet1d_forward.6} parent=1 // pred_check
      _
    $region23: #{resnet1d_forward.6} parent=1 // pred_check_branch
      %42 = sbr.rel (0) target = $region25
    $region24: #{resnet1d_forward.6} parent=1 // pred_region
      %s44 = ssub.s32 16, 16
      %45 = vsyncadd [#allocation6], %s44
      %s47 = sshll.u32 [#allocation7], 4
      %s48 = int_to_ptr.vmem [resolvable:$true] %s47
      %50 = dma.hbm_to_vmem [thread:$0]  %s5, 16, %s48, [#allocation6]
    $region25: #{resnet1d_forward.6} parent=1 // pred_fallthru
      _
    // Predicated region
    $region26: #{resnet1d_forward.6} parent=1 // pred_check
      _
    $region27: #{resnet1d_forward.6} parent=1 // pred_check_branch
      %52 = sbr.rel (0) target = $region29
    $region28: #{resnet1d_forward.6} parent=1 // pred_region
      %s54 = ssub.s32 16, 16
      %55 = vsyncadd [#allocation9], %s54
      %s57 = sshll.u32 [#allocation8], 4
      %s58 = int_to_ptr.vmem [resolvable:$true] %s57
      %60 = dma.hbm_to_vmem [thread:$0]  %s6, 16, %s58, [#allocation9]
    $region29: #{resnet1d_forward.6} parent=1 // pred_fallthru
      _
    // Predicated region
    $region30: #{resnet1d_forward.6} parent=1 // pred_check
      _
    $region31: #{resnet1d_forward.6} parent=1 // pred_check_branch
      %62 = sbr.rel (0) target = $region33
    $region32: #{resnet1d_forward.6} parent=1 // pred_region
      %63 = dma.done [#allocation4], 16
    $region33: #{resnet1d_forward.6} parent=1 // pred_fallthru
      _
    // Predicated region
    $region34: #{resnet1d_forward.6} parent=1 // pred_check
      _
    $region35: #{resnet1d_forward.6} parent=1 // pred_check_branch
      %65 = sbr.rel (0) target = $region37
    $region36: #{resnet1d_forward.6} parent=1 // pred_region
      %66 = dma.done [#allocation6], 16
    $region37: #{resnet1d_forward.6} parent=1 // pred_fallthru
      _
    // Predicated region
    $region38: #{resnet1d_forward.6} parent=1 // pred_check
      _
    $region39: #{resnet1d_forward.6} parent=1 // pred_check_branch
      %68 = sbr.rel (0) target = $region41
    $region40: #{resnet1d_forward.6} parent=1 // pred_region
      %69 = dma.done [#allocation6], 16
    $region41: #{resnet1d_forward.6} parent=1 // pred_fallthru
      _
    // Predicated region
    $region42: #{resnet1d_forward.6} parent=1 // pred_check
      _
    $region43: #{resnet1d_forward.6} parent=1 // pred_check_branch
      %71 = sbr.rel (0) target = $region45
    $region44: #{resnet1d_forward.6} parent=1 // pred_region
      %72 = dma.done [#allocation9], 16
    $region45: #{resnet1d_forward.6} parent=1 // pred_fallthru
      _
    %v74 = vld [vmem:[%s1] sm:$0xff]
    %v75 = vld [vmem:[%s1 + $0x8] sm:$0xff]
    %v76 = vld [vmem:[%s1 + $0x10] sm:$0xff]
    %v77 = vpack.c.bf16 %v75, %v74
    %v78 = vpack.c.bf16 %v76, %v76
    %v79 = vld [vmem:[%s0] sm:$0x7f]
    %v81 = vrot.slane %v79, 7
    %vm83 = vcmask 1040384
    %v84 = vsel %vm83, 0.0, %v81
    %v86 = vrot.slane %v84, 1
    %87 = vrot.lane.b32.xlu0 %v86, 8
    %v88 = vpop.permute.xlu0 %87
    %vm91 = vcmask 1045504
    %v92 = vrot.slane %v84, 2
    %v93 = vrot.slane 0.0, 2
    %v94 = vsel %vm91, %v92, %v93
    %95 = vrot.lane.b32.xlu0 %v94, 16
    %v96 = vpop.permute.xlu0 %95
    %vm98 = vcmask 64512
    %v99 = vsel %vm98, %v84, %v88
    %vm100 = vcmask 130048
    %v101 = vsel %vm100, %v99, %v96
    %v102 = vpack.c.bf16 %v101, %v101
    %vm103 = vcmask 195584
    %v105 = vsel %vm103, %v102, 0
    %vm107 = vcmask 1043456
    %v109 = vsel %vm107, %v78, 0
    %111 = vmatprep.subr.bf16.mxu0 0
    %112 = vmatpush1.bf16.msra.mxu0 0
    %113 = vmatprep.subr.bf16.mxu0 0
    %114 = vmatpush1.bf16.msra.mxu0 0
    %115 = vmatprep.subr.bf16.mxu0 0
    %116 = vmatpush1.bf16.msra.mxu0 0
    %117 = vmatprep.subr.bf16.mxu0 0
    %118 = vmatpush1.bf16.msra.mxu0 0
    %119 = vmatprep.subr.bf16.mxu0 0
    %120 = vmatpush1.bf16.msra.mxu0 0
    %121 = vmatprep.subr.bf16.mxu0 0
    %122 = vmatpush1.bf16.msra.mxu0 0
    %123 = vmatprep.subr.bf16.mxu0 0
    %124 = vmatpush1.bf16.msra.mxu0 %v109
    %125 = vmatprep.subr.bf16.mxu0 0
    %126 = vmatpush1.bf16.msra.mxu0 %v77
    %127 = vmatprep.subr.bf16.mxu0 0
    %128 = vmatpush2.bf16.msra.mxu0 0
    %129 = vmatprep.subr.bf16.mxu0 0
    %130 = vmatpush2.bf16.msra.mxu0 0
    %131 = vmatprep.subr.bf16.mxu0 0
    %132 = vmatpush2.bf16.msra.mxu0 0
    %133 = vmatprep.subr.bf16.mxu0 0
    %134 = vmatpush2.bf16.msra.mxu0 0
    %135 = vmatprep.subr.bf16.mxu0 0
    %136 = vmatpush2.bf16.msra.mxu0 0
    %137 = vmatprep.subr.bf16.mxu0 0
    %138 = vmatpush2.bf16.msra.mxu0 0
    %139 = vmatprep.subr.bf16.mxu0 0
    %140 = vmatpush2.bf16.msra.mxu0 0
    %141 = vmatprep.subr.bf16.mxu0 0
    %142 = vmatpush2.bf16.msra.mxu0 0
    %143 = vmatprep.mubr.bf16.mxu0 0
    %144 = vmatmul.mubr.bf16.gmra.mxu0 %v105
    %v145 = vpop.f32.mrf.mxu0
    %v146 = vadd.f32 0.0, %v145
    %v147 = vpop.f32.mrf.mxu0
    %v148 = vpop.f32.mrf.mxu0
    %v149 = vpop.f32.mrf.mxu0
    %150 = vdwg.mxu0
    %vm151 = vcmask 63488
    %152 = vst.msk [vmem:[#allocation2] sm:$0x7f] %vm151, %v146
    %v153 = vmul.f32 %v146, %v146
    %s154 = scalar_lea.vmem %s0, 8
    %v155 = vld [vmem:[%s154] sm:$0x7f]
    %v157 = vrot.slane %v155, 7
    %v159 = vsel %vm83, 0.0, %v157
    %v161 = vrot.slane %v159, 1
    %162 = vrot.lane.b32.xlu0 %v161, 8
    %v163 = vpop.permute.xlu0 %162
    %v165 = vrot.slane %v159, 2
    %v166 = vsel %vm91, %v165, %v93
    %167 = vrot.lane.b32.xlu0 %v166, 16
    %v168 = vpop.permute.xlu0 %167
    %v170 = vsel %vm98, %v159, %v163
    %v171 = vsel %vm100, %v170, %v168
    %v172 = vpack.c.bf16 %v171, %v171
    %v174 = vsel %vm103, %v172, 0
    %176 = vmatprep.subr.bf16.mxu0 0
    %177 = vmatpush1.bf16.msra.mxu0 0
    %178 = vmatprep.subr.bf16.mxu0 0
    %179 = vmatpush1.bf16.msra.mxu0 0
    %180 = vmatprep.subr.bf16.mxu0 0
    %181 = vmatpush1.bf16.msra.mxu0 0
    %182 = vmatprep.subr.bf16.mxu0 0
    %183 = vmatpush1.bf16.msra.mxu0 0
    %184 = vmatprep.subr.bf16.mxu0 0
    %185 = vmatpush1.bf16.msra.mxu0 0
    %186 = vmatprep.subr.bf16.mxu0 0
    %187 = vmatpush1.bf16.msra.mxu0 0
    %188 = vmatprep.subr.bf16.mxu0 0
    %189 = vmatpush1.bf16.msra.mxu0 %v109
    %190 = vmatprep.subr.bf16.mxu0 0
    %191 = vmatpush1.bf16.msra.mxu0 %v77
    %192 = vmatprep.subr.bf16.mxu0 0
    %193 = vmatpush2.bf16.msra.mxu0 0
    %194 = vmatprep.subr.bf16.mxu0 0
    %195 = vmatpush2.bf16.msra.mxu0 0
    %196 = vmatprep.subr.bf16.mxu0 0
    %197 = vmatpush2.bf16.msra.mxu0 0
    %198 = vmatprep.subr.bf16.mxu0 0
    %199 = vmatpush2.bf16.msra.mxu0 0
    %200 = vmatprep.subr.bf16.mxu0 0
    %201 = vmatpush2.bf16.msra.mxu0 0
    %202 = vmatprep.subr.bf16.mxu0 0
    %203 = vmatpush2.bf16.msra.mxu0 0
    %204 = vmatprep.subr.bf16.mxu0 0
    %205 = vmatpush2.bf16.msra.mxu0 0
    %206 = vmatprep.subr.bf16.mxu0 0
    %207 = vmatpush2.bf16.msra.mxu0 0
    %208 = vmatprep.mubr.bf16.mxu0 0
    %209 = vmatmul.mubr.bf16.gmra.mxu0 %v174
    %v210 = vpop.f32.mrf.mxu0
    %v211 = vadd.f32 0.0, %v210
    %v212 = vpop.f32.mrf.mxu0
    %v213 = vpop.f32.mrf.mxu0
    %v214 = vpop.f32.mrf.mxu0
    %215 = vdwg.mxu0
    %s216 = scalar_lea.vmem [#allocation2], 8
    %217 = vst.msk [vmem:[%s216] sm:$0x7f] %vm151, %v211
    %vm218 = vcmask 56320
    %v220 = vsel %vm218, 1.0, 0
    %vm222 = vcmask 1046528
    %v224 = vsel %vm222, %v211, 0
    %226 = vmatprep.subr.mxu0 0.0
    %227 = vmatpush1.msra.mxu0 0.0
    %228 = vmatprep.subr.mxu0 0.0
    %229 = vmatpush1.msra.mxu0 0.0
    %230 = vmatprep.subr.mxu0 0.0
    %231 = vmatpush1.msra.mxu0 0.0
    %232 = vmatprep.subr.mxu0 0.0
    %233 = vmatpush1.msra.mxu0 0.0
    %234 = vmatprep.subr.mxu0 0.0
    %235 = vmatpush1.msra.mxu0 0.0
    %236 = vmatprep.subr.mxu0 0.0
    %237 = vmatpush1.msra.mxu0 0.0
    %238 = vmatprep.subr.mxu0 0.0
    %239 = vmatpush1.msra.mxu0 0.0
    %240 = vmatprep.subr.mxu0 0.0
    %241 = vmatpush1.msra.mxu0 0.0
    %242 = vmatprep.subr.mxu0 0.0
    %243 = vmatpush1.msra.mxu0 0.0
    %244 = vmatprep.subr.mxu0 0.0
    %245 = vmatpush1.msra.mxu0 0.0
    %246 = vmatprep.subr.mxu0 0.0
    %247 = vmatpush1.msra.mxu0 0.0
    %248 = vmatprep.subr.mxu0 0.0
    %249 = vmatpush1.msra.mxu0 0.0
    %250 = vmatprep.subr.mxu0 0.0
    %251 = vmatpush1.msra.mxu0 0.0
    %252 = vmatprep.subr.mxu0 0.0
    %253 = vmatpush1.msra.mxu0 0.0
    %254 = vmatprep.subr.mxu0 0.0
    %255 = vmatpush1.msra.mxu0 0.0
    %256 = vmatprep.subr.mxu0 0.0
    %257 = vmatpush1.msra.mxu0 %v224
    %258 = vmatprep.subr.mxu0 0.0
    %259 = vmatpush2.msra.mxu0 0.0
    %260 = vmatprep.subr.mxu0 0.0
    %261 = vmatpush2.msra.mxu0 0.0
    %262 = vmatprep.subr.mxu0 0.0
    %263 = vmatpush2.msra.mxu0 0.0
    %264 = vmatprep.subr.mxu0 0.0
    %265 = vmatpush2.msra.mxu0 0.0
    %266 = vmatprep.subr.mxu0 0.0
    %267 = vmatpush2.msra.mxu0 0.0
    %268 = vmatprep.subr.mxu0 0.0
    %269 = vmatpush2.msra.mxu0 0.0
    %270 = vmatprep.subr.mxu0 0.0
    %271 = vmatpush2.msra.mxu0 0.0
    %272 = vmatprep.subr.mxu0 0.0
    %273 = vmatpush2.msra.mxu0 0.0
    %274 = vmatprep.subr.mxu0 0.0
    %275 = vmatpush2.msra.mxu0 0.0
    %276 = vmatprep.subr.mxu0 0.0
    %277 = vmatpush2.msra.mxu0 0.0
    %278 = vmatprep.subr.mxu0 0.0
    %279 = vmatpush2.msra.mxu0 0.0
    %280 = vmatprep.subr.mxu0 0.0
    %281 = vmatpush2.msra.mxu0 0.0
    %282 = vmatprep.subr.mxu0 0.0
    %283 = vmatpush2.msra.mxu0 0.0
    %284 = vmatprep.subr.mxu0 0.0
    %285 = vmatpush2.msra.mxu0 0.0
    %286 = vmatprep.subr.mxu0 0.0
    %287 = vmatpush2.msra.mxu0 0.0
    %288 = vmatprep.subr.mxu0 0.0
    %289 = vmatpush2.msra.mxu0 0.0
    %290 = vmatprep.mubr.f32.mxu0 0.0
    %291 = vmatmul.mubr.f32.gmra.mxu0 %v220
    %v292 = vpop.f32.mrf.mxu0
    %v293 = vadd.f32 0.0, %v292
    %v294 = vpop.f32.mrf.mxu0
    %295 = vdwg.mxu0
    %v297 = vsel %vm222, %v146, 0
    %299 = vmatprep.subr.mxu0 0.0
    %300 = vmatpush1.msra.mxu0 0.0
    %301 = vmatprep.subr.mxu0 0.0
    %302 = vmatpush1.msra.mxu0 0.0
    %303 = vmatprep.subr.mxu0 0.0
    %304 = vmatpush1.msra.mxu0 0.0
    %305 = vmatprep.subr.mxu0 0.0
    %306 = vmatpush1.msra.mxu0 0.0
    %307 = vmatprep.subr.mxu0 0.0
    %308 = vmatpush1.msra.mxu0 0.0
    %309 = vmatprep.subr.mxu0 0.0
    %310 = vmatpush1.msra.mxu0 0.0
    %311 = vmatprep.subr.mxu0 0.0
    %312 = vmatpush1.msra.mxu0 0.0
    %313 = vmatprep.subr.mxu0 0.0
    %314 = vmatpush1.msra.mxu0 0.0
    %315 = vmatprep.subr.mxu0 0.0
    %316 = vmatpush1.msra.mxu0 0.0
    %317 = vmatprep.subr.mxu0 0.0
    %318 = vmatpush1.msra.mxu0 0.0
    %319 = vmatprep.subr.mxu0 0.0
    %320 = vmatpush1.msra.mxu0 0.0
    %321 = vmatprep.subr.mxu0 0.0
    %322 = vmatpush1.msra.mxu0 0.0
    %323 = vmatprep.subr.mxu0 0.0
    %324 = vmatpush1.msra.mxu0 0.0
    %325 = vmatprep.subr.mxu0 0.0
    %326 = vmatpush1.msra.mxu0 0.0
    %327 = vmatprep.subr.mxu0 0.0
    %328 = vmatpush1.msra.mxu0 0.0
    %329 = vmatprep.subr.mxu0 0.0
    %330 = vmatpush1.msra.mxu0 %v297
    %331 = vmatprep.subr.mxu0 0.0
    %332 = vmatpush2.msra.mxu0 0.0
    %333 = vmatprep.subr.mxu0 0.0
    %334 = vmatpush2.msra.mxu0 0.0
    %335 = vmatprep.subr.mxu0 0.0
    %336 = vmatpush2.msra.mxu0 0.0
    %337 = vmatprep.subr.mxu0 0.0
    %338 = vmatpush2.msra.mxu0 0.0
    %339 = vmatprep.subr.mxu0 0.0
    %340 = vmatpush2.msra.mxu0 0.0
    %341 = vmatprep.subr.mxu0 0.0
    %342 = vmatpush2.msra.mxu0 0.0
    %343 = vmatprep.subr.mxu0 0.0
    %344 = vmatpush2.msra.mxu0 0.0
    %345 = vmatprep.subr.mxu0 0.0
    %346 = vmatpush2.msra.mxu0 0.0
    %347 = vmatprep.subr.mxu0 0.0
    %348 = vmatpush2.msra.mxu0 0.0
    %349 = vmatprep.subr.mxu0 0.0
    %350 = vmatpush2.msra.mxu0 0.0
    %351 = vmatprep.subr.mxu0 0.0
    %352 = vmatpush2.msra.mxu0 0.0
    %353 = vmatprep.subr.mxu0 0.0
    %354 = vmatpush2.msra.mxu0 0.0
    %355 = vmatprep.subr.mxu0 0.0
    %356 = vmatpush2.msra.mxu0 0.0
    %357 = vmatprep.subr.mxu0 0.0
    %358 = vmatpush2.msra.mxu0 0.0
    %359 = vmatprep.subr.mxu0 0.0
    %360 = vmatpush2.msra.mxu0 0.0
    %361 = vmatprep.subr.mxu0 0.0
    %362 = vmatpush2.msra.mxu0 0.0
    %363 = vmatprep.mubr.f32.mxu0 0.0
    %364 = vmatmul.mubr.f32.gmra.mxu0 %v220
    %v365 = vpop.f32.mrf.mxu0
    %v366 = vadd.f32 %v293, %v365
    %v367 = vpop.f32.mrf.mxu0
    %368 = vdwg.mxu0
    %v369 = vmul.f32 %v211, %v211
    %v371 = vsel %vm222, %v369, 0
    %373 = vmatprep.subr.mxu0 0.0
    %374 = vmatpush1.msra.mxu0 0.0
    %375 = vmatprep.subr.mxu0 0.0
    %376 = vmatpush1.msra.mxu0 0.0
    %377 = vmatprep.subr.mxu0 0.0
    %378 = vmatpush1.msra.mxu0 0.0
    %379 = vmatprep.subr.mxu0 0.0
    %380 = vmatpush1.msra.mxu0 0.0
    %381 = vmatprep.subr.mxu0 0.0
    %382 = vmatpush1.msra.mxu0 0.0
    %383 = vmatprep.subr.mxu0 0.0
    %384 = vmatpush1.msra.mxu0 0.0
    %385 = vmatprep.subr.mxu0 0.0
    %386 = vmatpush1.msra.mxu0 0.0
    %387 = vmatprep.subr.mxu0 0.0
    %388 = vmatpush1.msra.mxu0 0.0
    %389 = vmatprep.subr.mxu0 0.0
    %390 = vmatpush1.msra.mxu0 0.0
    %391 = vmatprep.subr.mxu0 0.0
    %392 = vmatpush1.msra.mxu0 0.0
    %393 = vmatprep.subr.mxu0 0.0
    %394 = vmatpush1.msra.mxu0 0.0
    %395 = vmatprep.subr.mxu0 0.0
    %396 = vmatpush1.msra.mxu0 0.0
    %397 = vmatprep.subr.mxu0 0.0
    %398 = vmatpush1.msra.mxu0 0.0
    %399 = vmatprep.subr.mxu0 0.0
    %400 = vmatpush1.msra.mxu0 0.0
    %401 = vmatprep.subr.mxu0 0.0
    %402 = vmatpush1.msra.mxu0 0.0
    %403 = vmatprep.subr.mxu0 0.0
    %404 = vmatpush1.msra.mxu0 %v371
    %405 = vmatprep.subr.mxu0 0.0
    %406 = vmatpush2.msra.mxu0 0.0
    %407 = vmatprep.subr.mxu0 0.0
    %408 = vmatpush2.msra.mxu0 0.0
    %409 = vmatprep.subr.mxu0 0.0
    %410 = vmatpush2.msra.mxu0 0.0
    %411 = vmatprep.subr.mxu0 0.0
    %412 = vmatpush2.msra.mxu0 0.0
    %413 = vmatprep.subr.mxu0 0.0
    %414 = vmatpush2.msra.mxu0 0.0
    %415 = vmatprep.subr.mxu0 0.0
    %416 = vmatpush2.msra.mxu0 0.0
    %417 = vmatprep.subr.mxu0 0.0
    %418 = vmatpush2.msra.mxu0 0.0
    %419 = vmatprep.subr.mxu0 0.0
    %420 = vmatpush2.msra.mxu0 0.0
    %421 = vmatprep.subr.mxu0 0.0
    %422 = vmatpush2.msra.mxu0 0.0
    %423 = vmatprep.subr.mxu0 0.0
    %424 = vmatpush2.msra.mxu0 0.0
    %425 = vmatprep.subr.mxu0 0.0
    %426 = vmatpush2.msra.mxu0 0.0
    %427 = vmatprep.subr.mxu0 0.0
    %428 = vmatpush2.msra.mxu0 0.0
    %429 = vmatprep.subr.mxu0 0.0
    %430 = vmatpush2.msra.mxu0 0.0
    %431 = vmatprep.subr.mxu0 0.0
    %432 = vmatpush2.msra.mxu0 0.0
    %433 = vmatprep.subr.mxu0 0.0
    %434 = vmatpush2.msra.mxu0 0.0
    %435 = vmatprep.subr.mxu0 0.0
    %436 = vmatpush2.msra.mxu0 0.0
    %437 = vmatprep.mubr.f32.mxu0 0.0
    %438 = vmatmul.mubr.f32.gmra.mxu0 %v220
    %v439 = vpop.f32.mrf.mxu0
    %v440 = vadd.f32 0.0, %v439
    %v441 = vpop.f32.mrf.mxu0
    %442 = vdwg.mxu0
    %v444 = vsel %vm222, %v153, 0
    %446 = vmatprep.subr.mxu0 0.0
    %447 = vmatpush1.msra.mxu0 0.0
    %448 = vmatprep.subr.mxu0 0.0
    %449 = vmatpush1.msra.mxu0 0.0
    %450 = vmatprep.subr.mxu0 0.0
    %451 = vmatpush1.msra.mxu0 0.0
    %452 = vmatprep.subr.mxu0 0.0
    %453 = vmatpush1.msra.mxu0 0.0
    %454 = vmatprep.subr.mxu0 0.0
    %455 = vmatpush1.msra.mxu0 0.0
    %456 = vmatprep.subr.mxu0 0.0
    %457 = vmatpush1.msra.mxu0 0.0
    %458 = vmatprep.subr.mxu0 0.0
    %459 = vmatpush1.msra.mxu0 0.0
    %460 = vmatprep.subr.mxu0 0.0
    %461 = vmatpush1.msra.mxu0 0.0
    %462 = vmatprep.subr.mxu0 0.0
    %463 = vmatpush1.msra.mxu0 0.0
    %464 = vmatprep.subr.mxu0 0.0
    %465 = vmatpush1.msra.mxu0 0.0
    %466 = vmatprep.subr.mxu0 0.0
    %467 = vmatpush1.msra.mxu0 0.0
    %468 = vmatprep.subr.mxu0 0.0
    %469 = vmatpush1.msra.mxu0 0.0
    %470 = vmatprep.subr.mxu0 0.0
    %471 = vmatpush1.msra.mxu0 0.0
    %472 = vmatprep.subr.mxu0 0.0
    %473 = vmatpush1.msra.mxu0 0.0
    %474 = vmatprep.subr.mxu0 0.0
    %475 = vmatpush1.msra.mxu0 0.0
    %476 = vmatprep.subr.mxu0 0.0
    %477 = vmatpush1.msra.mxu0 %v444
    %478 = vmatprep.subr.mxu0 0.0
    %479 = vmatpush2.msra.mxu0 0.0
    %480 = vmatprep.subr.mxu0 0.0
    %481 = vmatpush2.msra.mxu0 0.0
    %482 = vmatprep.subr.mxu0 0.0
    %483 = vmatpush2.msra.mxu0 0.0
    %484 = vmatprep.subr.mxu0 0.0
    %485 = vmatpush2.msra.mxu0 0.0
    %486 = vmatprep.subr.mxu0 0.0
    %487 = vmatpush2.msra.mxu0 0.0
    %488 = vmatprep.subr.mxu0 0.0
    %489 = vmatpush2.msra.mxu0 0.0
    %490 = vmatprep.subr.mxu0 0.0
    %491 = vmatpush2.msra.mxu0 0.0
    %492 = vmatprep.subr.mxu0 0.0
    %493 = vmatpush2.msra.mxu0 0.0
    %494 = vmatprep.subr.mxu0 0.0
    %495 = vmatpush2.msra.mxu0 0.0
    %496 = vmatprep.subr.mxu0 0.0
    %497 = vmatpush2.msra.mxu0 0.0
    %498 = vmatprep.subr.mxu0 0.0
    %499 = vmatpush2.msra.mxu0 0.0
    %500 = vmatprep.subr.mxu0 0.0
    %501 = vmatpush2.msra.mxu0 0.0
    %502 = vmatprep.subr.mxu0 0.0
    %503 = vmatpush2.msra.mxu0 0.0
    %504 = vmatprep.subr.mxu0 0.0
    %505 = vmatpush2.msra.mxu0 0.0
    %506 = vmatprep.subr.mxu0 0.0
    %507 = vmatpush2.msra.mxu0 0.0
    %508 = vmatprep.subr.mxu0 0.0
    %509 = vmatpush2.msra.mxu0 0.0
    %510 = vmatprep.mubr.f32.mxu0 0.0
    %511 = vmatmul.mubr.f32.gmra.mxu0 %v220
    %v512 = vpop.f32.mrf.mxu0
    %v513 = vadd.f32 %v440, %v512
    %v514 = vpop.f32.mrf.mxu0
    %515 = vdwg.mxu0
    %v516 = vld [vmem:[#allocation3] sm:$0x1]
    %v517 = vld [vmem:[#allocation5] sm:$0x1]
    %v518 = vrcp.pop 14.0
    %v519 = vmul.f32 %v366, %v518
    %v520 = vmul.f32 %v513, %v518
    %v521 = vmul.f32 %v519, %v519
    %v522 = vsub.f32 %v520, %v521
    %v523 = vmax.f32 %v522, 0.0
    %v524 = vadd.f32 %v523, 1e-05
    %v525 = vrsqrt.pop %v524
    %v526 = vmul.f32 %v516, %v525
    %v527 = vmul.f32 %v519, %v526
    %v528 = vsub.f32 %v517, %v527
    %v529 = vld [vmem:[%s4] sm:$0xff]
    %v530 = vld [vmem:[%s4 + $0x8] sm:$0xff]
    %v531 = vld [vmem:[%s4 + $0x10] sm:$0xff]
    %v532 = vpack.c.bf16 %v530, %v529
    %v533 = vpack.c.bf16 %v531, %v531
    %v534 = vld [vmem:[#allocation2] sm:$0x7f]
    %v536 = vlaneseq
    %v537 = vshrl.u32 %v536, 7
    %v538 = vsub.s32 0, %v537
    %v539 = vrot.slane %v526, %v538
    %v541 = vmul.f32 %v534, %v539
    %v543 = vlaneseq
    %v544 = vshrl.u32 %v543, 7
    %v545 = vsub.s32 0, %v544
    %v546 = vrot.slane %v528, %v545
    %v548 = vadd.f32 %v541, %v546
    %v549 = vmax.f32 %v548, 0.0
    %v551 = vrot.slane %v549, 7
    %v553 = vsel %vm83, 0.0, %v551
    %v555 = vrot.slane %v553, 1
    %556 = vrot.lane.b32.xlu0 %v555, 8
    %v557 = vpop.permute.xlu0 %556
    %v559 = vrot.slane %v553, 2
    %v560 = vsel %vm91, %v559, %v93
    %561 = vrot.lane.b32.xlu0 %v560, 16
    %v562 = vpop.permute.xlu0 %561
    %v564 = vsel %vm98, %v553, %v557
    %v565 = vsel %vm100, %v564, %v562
    %v566 = vpack.c.bf16 %v565, %v565
    %v568 = vsel %vm103, %v566, 0
    %v571 = vsel %vm107, %v533, 0
    %573 = vmatprep.subr.bf16.mxu0 0
    %574 = vmatpush1.bf16.msra.mxu0 0
    %575 = vmatprep.subr.bf16.mxu0 0
    %576 = vmatpush1.bf16.msra.mxu0 0
    %577 = vmatprep.subr.bf16.mxu0 0
    %578 = vmatpush1.bf16.msra.mxu0 0
    %579 = vmatprep.subr.bf16.mxu0 0
    %580 = vmatpush1.bf16.msra.mxu0 0
    %581 = vmatprep.subr.bf16.mxu0 0
    %582 = vmatpush1.bf16.msra.mxu0 0
    %583 = vmatprep.subr.bf16.mxu0 0
    %584 = vmatpush1.bf16.msra.mxu0 0
    %585 = vmatprep.subr.bf16.mxu0 0
    %586 = vmatpush1.bf16.msra.mxu0 %v571
    %587 = vmatprep.subr.bf16.mxu0 0
    %588 = vmatpush1.bf16.msra.mxu0 %v532
    %589 = vmatprep.subr.bf16.mxu0 0
    %590 = vmatpush2.bf16.msra.mxu0 0
    %591 = vmatprep.subr.bf16.mxu0 0
    %592 = vmatpush2.bf16.msra.mxu0 0
    %593 = vmatprep.subr.bf16.mxu0 0
    %594 = vmatpush2.bf16.msra.mxu0 0
    %595 = vmatprep.subr.bf16.mxu0 0
    %596 = vmatpush2.bf16.msra.mxu0 0
    %597 = vmatprep.subr.bf16.mxu0 0
    %598 = vmatpush2.bf16.msra.mxu0 0
    %599 = vmatprep.subr.bf16.mxu0 0
    %600 = vmatpush2.bf16.msra.mxu0 0
    %601 = vmatprep.subr.bf16.mxu0 0
    %602 = vmatpush2.bf16.msra.mxu0 0
    %603 = vmatprep.subr.bf16.mxu0 0
    %604 = vmatpush2.bf16.msra.mxu0 0
    %605 = vmatprep.mubr.bf16.mxu0 0
    %606 = vmatmul.mubr.bf16.gmra.mxu0 %v568
    %v607 = vpop.f32.mrf.mxu0
    %v608 = vadd.f32 0.0, %v607
    %v609 = vpop.f32.mrf.mxu0
    %v610 = vpop.f32.mrf.mxu0
    %v611 = vpop.f32.mrf.mxu0
    %612 = vdwg.mxu0
    %613 = vst.msk [vmem:[#allocation2] sm:$0x7f] %vm151, %v608
    %v614 = vmul.f32 %v608, %v608
    %v615 = vld [vmem:[%s216] sm:$0x7f]
    %v616 = vmul.f32 %v615, %v539
    %v617 = vadd.f32 %v616, %v546
    %v618 = vmax.f32 %v617, 0.0
    %v620 = vrot.slane %v618, 7
    %v622 = vsel %vm83, 0.0, %v620
    %v624 = vrot.slane %v622, 1
    %625 = vrot.lane.b32.xlu0 %v624, 8
    %v626 = vpop.permute.xlu0 %625
    %v628 = vrot.slane %v622, 2
    %v629 = vsel %vm91, %v628, %v93
    %630 = vrot.lane.b32.xlu0 %v629, 16
    %v631 = vpop.permute.xlu0 %630
    %v633 = vsel %vm98, %v622, %v626
    %v634 = vsel %vm100, %v633, %v631
    %v635 = vpack.c.bf16 %v634, %v634
    %v637 = vsel %vm103, %v635, 0
    %639 = vmatprep.subr.bf16.mxu0 0
    %640 = vmatpush1.bf16.msra.mxu0 0
    %641 = vmatprep.subr.bf16.mxu0 0
    %642 = vmatpush1.bf16.msra.mxu0 0
    %643 = vmatprep.subr.bf16.mxu0 0
    %644 = vmatpush1.bf16.msra.mxu0 0
    %645 = vmatprep.subr.bf16.mxu0 0
    %646 = vmatpush1.bf16.msra.mxu0 0
    %647 = vmatprep.subr.bf16.mxu0 0
    %648 = vmatpush1.bf16.msra.mxu0 0
    %649 = vmatprep.subr.bf16.mxu0 0
    %650 = vmatpush1.bf16.msra.mxu0 0
    %651 = vmatprep.subr.bf16.mxu0 0
    %652 = vmatpush1.bf16.msra.mxu0 %v571
    %653 = vmatprep.subr.bf16.mxu0 0
    %654 = vmatpush1.bf16.msra.mxu0 %v532
    %655 = vmatprep.subr.bf16.mxu0 0
    %656 = vmatpush2.bf16.msra.mxu0 0
    %657 = vmatprep.subr.bf16.mxu0 0
    %658 = vmatpush2.bf16.msra.mxu0 0
    %659 = vmatprep.subr.bf16.mxu0 0
    %660 = vmatpush2.bf16.msra.mxu0 0
    %661 = vmatprep.subr.bf16.mxu0 0
    %662 = vmatpush2.bf16.msra.mxu0 0
    %663 = vmatprep.subr.bf16.mxu0 0
    %664 = vmatpush2.bf16.msra.mxu0 0
    %665 = vmatprep.subr.bf16.mxu0 0
    %666 = vmatpush2.bf16.msra.mxu0 0
    %667 = vmatprep.subr.bf16.mxu0 0
    %668 = vmatpush2.bf16.msra.mxu0 0
    %669 = vmatprep.subr.bf16.mxu0 0
    %670 = vmatpush2.bf16.msra.mxu0 0
    %671 = vmatprep.mubr.bf16.mxu0 0
    %672 = vmatmul.mubr.bf16.gmra.mxu0 %v637
    %v673 = vpop.f32.mrf.mxu0
    %v674 = vadd.f32 0.0, %v673
    %v675 = vpop.f32.mrf.mxu0
    %v676 = vpop.f32.mrf.mxu0
    %v677 = vpop.f32.mrf.mxu0
    %678 = vdwg.mxu0
    %679 = vst.msk [vmem:[%s216] sm:$0x7f] %vm151, %v674
    %v681 = vsel %vm222, %v674, 0
    %683 = vmatprep.subr.mxu0 0.0
    %684 = vmatpush1.msra.mxu0 0.0
    %685 = vmatprep.subr.mxu0 0.0
    %686 = vmatpush1.msra.mxu0 0.0
    %687 = vmatprep.subr.mxu0 0.0
    %688 = vmatpush1.msra.mxu0 0.0
    %689 = vmatprep.subr.mxu0 0.0
    %690 = vmatpush1.msra.mxu0 0.0
    %691 = vmatprep.subr.mxu0 0.0
    %692 = vmatpush1.msra.mxu0 0.0
    %693 = vmatprep.subr.mxu0 0.0
    %694 = vmatpush1.msra.mxu0 0.0
    %695 = vmatprep.subr.mxu0 0.0
    %696 = vmatpush1.msra.mxu0 0.0
    %697 = vmatprep.subr.mxu0 0.0
    %698 = vmatpush1.msra.mxu0 0.0
    %699 = vmatprep.subr.mxu0 0.0
    %700 = vmatpush1.msra.mxu0 0.0
    %701 = vmatprep.subr.mxu0 0.0
    %702 = vmatpush1.msra.mxu0 0.0
    %703 = vmatprep.subr.mxu0 0.0
    %704 = vmatpush1.msra.mxu0 0.0
    %705 = vmatprep.subr.mxu0 0.0
    %706 = vmatpush1.msra.mxu0 0.0
    %707 = vmatprep.subr.mxu0 0.0
    %708 = vmatpush1.msra.mxu0 0.0
    %709 = vmatprep.subr.mxu0 0.0
    %710 = vmatpush1.msra.mxu0 0.0
    %711 = vmatprep.subr.mxu0 0.0
    %712 = vmatpush1.msra.mxu0 0.0
    %713 = vmatprep.subr.mxu0 0.0
    %714 = vmatpush1.msra.mxu0 %v681
    %715 = vmatprep.subr.mxu0 0.0
    %716 = vmatpush2.msra.mxu0 0.0
    %717 = vmatprep.subr.mxu0 0.0
    %718 = vmatpush2.msra.mxu0 0.0
    %719 = vmatprep.subr.mxu0 0.0
    %720 = vmatpush2.msra.mxu0 0.0
    %721 = vmatprep.subr.mxu0 0.0
    %722 = vmatpush2.msra.mxu0 0.0
    %723 = vmatprep.subr.mxu0 0.0
    %724 = vmatpush2.msra.mxu0 0.0
    %725 = vmatprep.subr.mxu0 0.0
    %726 = vmatpush2.msra.mxu0 0.0
    %727 = vmatprep.subr.mxu0 0.0
    %728 = vmatpush2.msra.mxu0 0.0
    %729 = vmatprep.subr.mxu0 0.0
    %730 = vmatpush2.msra.mxu0 0.0
    %731 = vmatprep.subr.mxu0 0.0
    %732 = vmatpush2.msra.mxu0 0.0
    %733 = vmatprep.subr.mxu0 0.0
    %734 = vmatpush2.msra.mxu0 0.0
    %735 = vmatprep.subr.mxu0 0.0
    %736 = vmatpush2.msra.mxu0 0.0
    %737 = vmatprep.subr.mxu0 0.0
    %738 = vmatpush2.msra.mxu0 0.0
    %739 = vmatprep.subr.mxu0 0.0
    %740 = vmatpush2.msra.mxu0 0.0
    %741 = vmatprep.subr.mxu0 0.0
    %742 = vmatpush2.msra.mxu0 0.0
    %743 = vmatprep.subr.mxu0 0.0
    %744 = vmatpush2.msra.mxu0 0.0
    %745 = vmatprep.subr.mxu0 0.0
    %746 = vmatpush2.msra.mxu0 0.0
    %747 = vmatprep.mubr.f32.mxu0 0.0
    %748 = vmatmul.mubr.f32.gmra.mxu0 %v220
    %v749 = vpop.f32.mrf.mxu0
    %v750 = vadd.f32 0.0, %v749
    %v751 = vpop.f32.mrf.mxu0
    %752 = vdwg.mxu0
    %v754 = vsel %vm222, %v608, 0
    %756 = vmatprep.subr.mxu0 0.0
    %757 = vmatpush1.msra.mxu0 0.0
    %758 = vmatprep.subr.mxu0 0.0
    %759 = vmatpush1.msra.mxu0 0.0
    %760 = vmatprep.subr.mxu0 0.0
    %761 = vmatpush1.msra.mxu0 0.0
    %762 = vmatprep.subr.mxu0 0.0
    %763 = vmatpush1.msra.mxu0 0.0
    %764 = vmatprep.subr.mxu0 0.0
    %765 = vmatpush1.msra.mxu0 0.0
    %766 = vmatprep.subr.mxu0 0.0
    %767 = vmatpush1.msra.mxu0 0.0
    %768 = vmatprep.subr.mxu0 0.0
    %769 = vmatpush1.msra.mxu0 0.0
    %770 = vmatprep.subr.mxu0 0.0
    %771 = vmatpush1.msra.mxu0 0.0
    %772 = vmatprep.subr.mxu0 0.0
    %773 = vmatpush1.msra.mxu0 0.0
    %774 = vmatprep.subr.mxu0 0.0
    %775 = vmatpush1.msra.mxu0 0.0
    %776 = vmatprep.subr.mxu0 0.0
    %777 = vmatpush1.msra.mxu0 0.0
    %778 = vmatprep.subr.mxu0 0.0
    %779 = vmatpush1.msra.mxu0 0.0
    %780 = vmatprep.subr.mxu0 0.0
    %781 = vmatpush1.msra.mxu0 0.0
    %782 = vmatprep.subr.mxu0 0.0
    %783 = vmatpush1.msra.mxu0 0.0
    %784 = vmatprep.subr.mxu0 0.0
    %785 = vmatpush1.msra.mxu0 0.0
    %786 = vmatprep.subr.mxu0 0.0
    %787 = vmatpush1.msra.mxu0 %v754
    %788 = vmatprep.subr.mxu0 0.0
    %789 = vmatpush2.msra.mxu0 0.0
    %790 = vmatprep.subr.mxu0 0.0
    %791 = vmatpush2.msra.mxu0 0.0
    %792 = vmatprep.subr.mxu0 0.0
    %793 = vmatpush2.msra.mxu0 0.0
    %794 = vmatprep.subr.mxu0 0.0
    %795 = vmatpush2.msra.mxu0 0.0
    %796 = vmatprep.subr.mxu0 0.0
    %797 = vmatpush2.msra.mxu0 0.0
    %798 = vmatprep.subr.mxu0 0.0
    %799 = vmatpush2.msra.mxu0 0.0
    %800 = vmatprep.subr.mxu0 0.0
    %801 = vmatpush2.msra.mxu0 0.0
    %802 = vmatprep.subr.mxu0 0.0
    %803 = vmatpush2.msra.mxu0 0.0
    %804 = vmatprep.subr.mxu0 0.0
    %805 = vmatpush2.msra.mxu0 0.0
    %806 = vmatprep.subr.mxu0 0.0
    %807 = vmatpush2.msra.mxu0 0.0
    %808 = vmatprep.subr.mxu0 0.0
    %809 = vmatpush2.msra.mxu0 0.0
    %810 = vmatprep.subr.mxu0 0.0
    %811 = vmatpush2.msra.mxu0 0.0
    %812 = vmatprep.subr.mxu0 0.0
    %813 = vmatpush2.msra.mxu0 0.0
    %814 = vmatprep.subr.mxu0 0.0
    %815 = vmatpush2.msra.mxu0 0.0
    %816 = vmatprep.subr.mxu0 0.0
    %817 = vmatpush2.msra.mxu0 0.0
    %818 = vmatprep.subr.mxu0 0.0
    %819 = vmatpush2.msra.mxu0 0.0
    %820 = vmatprep.mubr.f32.mxu0 0.0
    %821 = vmatmul.mubr.f32.gmra.mxu0 %v220
    %v822 = vpop.f32.mrf.mxu0
    %v823 = vadd.f32 %v750, %v822
    %v824 = vpop.f32.mrf.mxu0
    %825 = vdwg.mxu0
    %v826 = vmul.f32 %v674, %v674
    %v828 = vsel %vm222, %v826, 0
    %830 = vmatprep.subr.mxu0 0.0
    %831 = vmatpush1.msra.mxu0 0.0
    %832 = vmatprep.subr.mxu0 0.0
    %833 = vmatpush1.msra.mxu0 0.0
    %834 = vmatprep.subr.mxu0 0.0
    %835 = vmatpush1.msra.mxu0 0.0
    %836 = vmatprep.subr.mxu0 0.0
    %837 = vmatpush1.msra.mxu0 0.0
    %838 = vmatprep.subr.mxu0 0.0
    %839 = vmatpush1.msra.mxu0 0.0
    %840 = vmatprep.subr.mxu0 0.0
    %841 = vmatpush1.msra.mxu0 0.0
    %842 = vmatprep.subr.mxu0 0.0
    %843 = vmatpush1.msra.mxu0 0.0
    %844 = vmatprep.subr.mxu0 0.0
    %845 = vmatpush1.msra.mxu0 0.0
    %846 = vmatprep.subr.mxu0 0.0
    %847 = vmatpush1.msra.mxu0 0.0
    %848 = vmatprep.subr.mxu0 0.0
    %849 = vmatpush1.msra.mxu0 0.0
    %850 = vmatprep.subr.mxu0 0.0
    %851 = vmatpush1.msra.mxu0 0.0
    %852 = vmatprep.subr.mxu0 0.0
    %853 = vmatpush1.msra.mxu0 0.0
    %854 = vmatprep.subr.mxu0 0.0
    %855 = vmatpush1.msra.mxu0 0.0
    %856 = vmatprep.subr.mxu0 0.0
    %857 = vmatpush1.msra.mxu0 0.0
    %858 = vmatprep.subr.mxu0 0.0
    %859 = vmatpush1.msra.mxu0 0.0
    %860 = vmatprep.subr.mxu0 0.0
    %861 = vmatpush1.msra.mxu0 %v828
    %862 = vmatprep.subr.mxu0 0.0
    %863 = vmatpush2.msra.mxu0 0.0
    %864 = vmatprep.subr.mxu0 0.0
    %865 = vmatpush2.msra.mxu0 0.0
    %866 = vmatprep.subr.mxu0 0.0
    %867 = vmatpush2.msra.mxu0 0.0
    %868 = vmatprep.subr.mxu0 0.0
    %869 = vmatpush2.msra.mxu0 0.0
    %870 = vmatprep.subr.mxu0 0.0
    %871 = vmatpush2.msra.mxu0 0.0
    %872 = vmatprep.subr.mxu0 0.0
    %873 = vmatpush2.msra.mxu0 0.0
    %874 = vmatprep.subr.mxu0 0.0
    %875 = vmatpush2.msra.mxu0 0.0
    %876 = vmatprep.subr.mxu0 0.0
    %877 = vmatpush2.msra.mxu0 0.0
    %878 = vmatprep.subr.mxu0 0.0
    %879 = vmatpush2.msra.mxu0 0.0
    %880 = vmatprep.subr.mxu0 0.0
    %881 = vmatpush2.msra.mxu0 0.0
    %882 = vmatprep.subr.mxu0 0.0
    %883 = vmatpush2.msra.mxu0 0.0
    %884 = vmatprep.subr.mxu0 0.0
    %885 = vmatpush2.msra.mxu0 0.0
    %886 = vmatprep.subr.mxu0 0.0
    %887 = vmatpush2.msra.mxu0 0.0
    %888 = vmatprep.subr.mxu0 0.0
    %889 = vmatpush2.msra.mxu0 0.0
    %890 = vmatprep.subr.mxu0 0.0
    %891 = vmatpush2.msra.mxu0 0.0
    %892 = vmatprep.subr.mxu0 0.0
    %893 = vmatpush2.msra.mxu0 0.0
    %894 = vmatprep.mubr.f32.mxu0 0.0
    %895 = vmatmul.mubr.f32.gmra.mxu0 %v220
    %v896 = vpop.f32.mrf.mxu0
    %v897 = vadd.f32 0.0, %v896
    %v898 = vpop.f32.mrf.mxu0
    %899 = vdwg.mxu0
    %v901 = vsel %vm222, %v614, 0
    %903 = vmatprep.subr.mxu0 0.0
    %904 = vmatpush1.msra.mxu0 0.0
    %905 = vmatprep.subr.mxu0 0.0
    %906 = vmatpush1.msra.mxu0 0.0
    %907 = vmatprep.subr.mxu0 0.0
    %908 = vmatpush1.msra.mxu0 0.0
    %909 = vmatprep.subr.mxu0 0.0
    %910 = vmatpush1.msra.mxu0 0.0
    %911 = vmatprep.subr.mxu0 0.0
    %912 = vmatpush1.msra.mxu0 0.0
    %913 = vmatprep.subr.mxu0 0.0
    %914 = vmatpush1.msra.mxu0 0.0
    %915 = vmatprep.subr.mxu0 0.0
    %916 = vmatpush1.msra.mxu0 0.0
    %917 = vmatprep.subr.mxu0 0.0
    %918 = vmatpush1.msra.mxu0 0.0
    %919 = vmatprep.subr.mxu0 0.0
    %920 = vmatpush1.msra.mxu0 0.0
    %921 = vmatprep.subr.mxu0 0.0
    %922 = vmatpush1.msra.mxu0 0.0
    %923 = vmatprep.subr.mxu0 0.0
    %924 = vmatpush1.msra.mxu0 0.0
    %925 = vmatprep.subr.mxu0 0.0
    %926 = vmatpush1.msra.mxu0 0.0
    %927 = vmatprep.subr.mxu0 0.0
    %928 = vmatpush1.msra.mxu0 0.0
    %929 = vmatprep.subr.mxu0 0.0
    %930 = vmatpush1.msra.mxu0 0.0
    %931 = vmatprep.subr.mxu0 0.0
    %932 = vmatpush1.msra.mxu0 0.0
    %933 = vmatprep.subr.mxu0 0.0
    %934 = vmatpush1.msra.mxu0 %v901
    %935 = vmatprep.subr.mxu0 0.0
    %936 = vmatpush2.msra.mxu0 0.0
    %937 = vmatprep.subr.mxu0 0.0
    %938 = vmatpush2.msra.mxu0 0.0
    %939 = vmatprep.subr.mxu0 0.0
    %940 = vmatpush2.msra.mxu0 0.0
    %941 = vmatprep.subr.mxu0 0.0
    %942 = vmatpush2.msra.mxu0 0.0
    %943 = vmatprep.subr.mxu0 0.0
    %944 = vmatpush2.msra.mxu0 0.0
    %945 = vmatprep.subr.mxu0 0.0
    %946 = vmatpush2.msra.mxu0 0.0
    %947 = vmatprep.subr.mxu0 0.0
    %948 = vmatpush2.msra.mxu0 0.0
    %949 = vmatprep.subr.mxu0 0.0
    %950 = vmatpush2.msra.mxu0 0.0
    %951 = vmatprep.subr.mxu0 0.0
    %952 = vmatpush2.msra.mxu0 0.0
    %953 = vmatprep.subr.mxu0 0.0
    %954 = vmatpush2.msra.mxu0 0.0
    %955 = vmatprep.subr.mxu0 0.0
    %956 = vmatpush2.msra.mxu0 0.0
    %957 = vmatprep.subr.mxu0 0.0
    %958 = vmatpush2.msra.mxu0 0.0
    %959 = vmatprep.subr.mxu0 0.0
    %960 = vmatpush2.msra.mxu0 0.0
    %961 = vmatprep.subr.mxu0 0.0
    %962 = vmatpush2.msra.mxu0 0.0
    %963 = vmatprep.subr.mxu0 0.0
    %964 = vmatpush2.msra.mxu0 0.0
    %965 = vmatprep.subr.mxu0 0.0
    %966 = vmatpush2.msra.mxu0 0.0
    %967 = vmatprep.mubr.f32.mxu0 0.0
    %968 = vmatmul.mubr.f32.gmra.mxu0 %v220
    %v969 = vpop.f32.mrf.mxu0
    %v970 = vadd.f32 %v897, %v969
    %v971 = vpop.f32.mrf.mxu0
    %972 = vdwg.mxu0
    %v973 = vld [vmem:[#allocation7] sm:$0x1]
    %v974 = vld [vmem:[#allocation8] sm:$0x1]
    %v975 = vmul.f32 %v823, %v518
    %v976 = vmul.f32 %v970, %v518
    %v977 = vmul.f32 %v975, %v975
    %v978 = vsub.f32 %v976, %v977
    %v979 = vmax.f32 %v978, 0.0
    %v980 = vadd.f32 %v979, 1e-05
    %v981 = vrsqrt.pop %v980
    %v982 = vmul.f32 %v973, %v981
    %v983 = vmul.f32 %v975, %v982
    %v984 = vsub.f32 %v974, %v983
    %v985 = vld [vmem:[#allocation2] sm:$0x7f]
    %v987 = vlaneseq
    %v988 = vshrl.u32 %v987, 7
    %v989 = vsub.s32 0, %v988
    %v990 = vrot.slane %v982, %v989
    %v992 = vmul.f32 %v985, %v990
    %v994 = vlaneseq
    %v995 = vshrl.u32 %v994, 7
    %v996 = vsub.s32 0, %v995
    %v997 = vrot.slane %v984, %v996
    %v999 = vadd.f32 %v992, %v997
    %v1000 = vld [vmem:[%s0] sm:$0x7f]
    %v1001 = vadd.f32 %v999, %v1000
    %v1002 = vmax.f32 %v1001, 0.0
    %1003 = vst.msk [vmem:[%s7] sm:$0x7f] %vm151, %v1002
    %v1004 = vld [vmem:[%s216] sm:$0x7f]
    %v1005 = vmul.f32 %v1004, %v990
    %v1006 = vadd.f32 %v1005, %v997
    %v1007 = vld [vmem:[%s154] sm:$0x7f]
    %v1008 = vadd.f32 %v1006, %v1007
    %v1009 = vmax.f32 %v1008, 0.0
    %s1010 = scalar_lea.vmem %s7, 8
    %1011 = vst.msk [vmem:[%s1010] sm:$0x7f] %vm151, %v1009
    // Predicated region
    $region46: #{resnet1d_forward.6} parent=1 // pred_check
      _
    $region47: #{resnet1d_forward.6} parent=1 // pred_check_branch
      %1013 = sbr.rel (0) target = $region49
    $region48: #{resnet1d_forward.6} parent=1 // pred_region
      _
    $region49: #{resnet1d_forward.6} parent=1 // pred_fallthru
      _
    // Predicated region
    $region50: #{resnet1d_forward.6} parent=1 // pred_check
      _
    $region51: #{resnet1d_forward.6} parent=1 // pred_check_branch
      %1015 = sbr.rel (0) target = $region53
    $region52: #{resnet1d_forward.6} parent=1 // pred_region
      _
    $region53: #{resnet1d_forward.6} parent=1 // pred_fallthru
      _
    %1016 = vsyncpa [#allocation4], 1
    %1017 = vsyncpa [#allocation6], 1
    %1018 = vsyncpa [#allocation9], 1

// kernel: resnet1d_forward.8
$region0: #{resnet1d_forward.8}
  #allocation0 [shape = 'u32[]', space=smem, size = 0x4, offset = 0x4, fixed_abs, tag = 'smem constant byte address 0x4 - core index']
  #allocation1 [shape = 'u32[144,128]{1,0:T(1,128)}', space=vmem, size = 0x12000, scoped, tag = 'internal scratch']
  #allocation2 [shape = 'f32[2,7,32]{2,1,0:T(8,128)}', space=vmem, size = 0x2000, scoped, tag = 'scratch operand']
  %s0 = inlined_call_operand.vmem [shape: f32[2,7,16], index: 0, kind: input, shape index: {}]
  %s1 = inlined_call_operand.vmem [shape: f32[48,32], index: 1, kind: input, shape index: {}]
  %s2 = inlined_call_operand.vmem [shape: f32[1,32], index: 2, kind: input, shape index: {}]
  %s3 = inlined_call_operand.vmem [shape: f32[1,32], index: 3, kind: input, shape index: {}]
  %s4 = inlined_call_operand.vmem [shape: f32[96,32], index: 4, kind: input, shape index: {}]
  %s5 = inlined_call_operand.vmem [shape: f32[1,32], index: 5, kind: input, shape index: {}]
  %s6 = inlined_call_operand.vmem [shape: f32[1,32], index: 6, kind: input, shape index: {}]
  %s7 = inlined_call_operand.vmem [shape: f32[16,32], index: 7, kind: input, shape index: {}]
  %s8 = inlined_call_operand.vmem [shape: f32[1,32], index: 8, kind: input, shape index: {}]
  %s9 = inlined_call_operand.vmem [shape: f32[1,32], index: 9, kind: input, shape index: {}]
  %s10 = inlined_call_operand.vmem [shape: f32[2,7,32], index: 10, kind: output, shape index: {}]
  %s11 = sld [smem:[#allocation0]]
  $region50: #{resnet1d_forward.8} parent=0
    _
  %s13 = ssub.s32 1, %s11
  %s14 = scalar_select 0, %s13, %s11
  // Predicated region
  $region2: #{resnet1d_forward.8} parent=0 // pred_check
    _
  $region3: #{resnet1d_forward.8} parent=0 // pred_check_branch
    %16 = sbr.rel (0) target = $region5
  $region4: #{resnet1d_forward.8} parent=0 // pred_region
    _
  $region5: #{resnet1d_forward.8} parent=0 // pred_fallthru
    _
  // Predicated region
  $region6: #{resnet1d_forward.8} parent=0 // pred_check
    _
  $region7: #{resnet1d_forward.8} parent=0 // pred_check_branch
    %18 = sbr.rel (0) target = $region9
  $region8: #{resnet1d_forward.8} parent=0 // pred_region
    _
  $region9: #{resnet1d_forward.8} parent=0 // pred_fallthru
    _
  // Predicated region
  $region10: #{resnet1d_forward.8} parent=0 // pred_check
    _
  $region11: #{resnet1d_forward.8} parent=0 // pred_check_branch
    %20 = sbr.rel (0) target = $region13
  $region12: #{resnet1d_forward.8} parent=0 // pred_region
    _
  $region13: #{resnet1d_forward.8} parent=0 // pred_fallthru
    _
  // Predicated region
  $region14: #{resnet1d_forward.8} parent=0 // pred_check
    _
  $region15: #{resnet1d_forward.8} parent=0 // pred_check_branch
    %22 = sbr.rel (0) target = $region17
  $region16: #{resnet1d_forward.8} parent=0 // pred_region
    _
  $region17: #{resnet1d_forward.8} parent=0 // pred_fallthru
    _
  // Predicated region
  $region18: #{resnet1d_forward.8} parent=0 // pred_check
    _
  $region19: #{resnet1d_forward.8} parent=0 // pred_check_branch
    %24 = sbr.rel (0) target = $region21
  $region20: #{resnet1d_forward.8} parent=0 // pred_region
    _
  $region21: #{resnet1d_forward.8} parent=0 // pred_fallthru
    _
  // Predicated region
  $region22: #{resnet1d_forward.8} parent=0 // pred_check
    _
  $region23: #{resnet1d_forward.8} parent=0 // pred_check_branch
    %26 = sbr.rel (0) target = $region25
  $region24: #{resnet1d_forward.8} parent=0 // pred_region
    _
  $region25: #{resnet1d_forward.8} parent=0 // pred_fallthru
    _
  // Predicated region
  $region26: #{resnet1d_forward.8} parent=0 // pred_check
    _
  $region27: #{resnet1d_forward.8} parent=0 // pred_check_branch
    %28 = sbr.rel (0) target = $region29
  $region28: #{resnet1d_forward.8} parent=0 // pred_region
    _
  $region29: #{resnet1d_forward.8} parent=0 // pred_fallthru
    _
  // Predicated region
  $region30: #{resnet1d_forward.8} parent=0 // pred_check
    _
  $region31: #{resnet1d_forward.8} parent=0 // pred_check_branch
    %30 = sbr.rel (0) target = $region33
  $region32: #{resnet1d_forward.8} parent=0 // pred_region
    _
  $region33: #{resnet1d_forward.8} parent=0 // pred_fallthru
    _
  // Predicated region
  $region34: #{resnet1d_forward.8} parent=0 // pred_check
    _
  $region35: #{resnet1d_forward.8} parent=0 // pred_check_branch
    %32 = sbr.rel (0) target = $region37
  $region36: #{resnet1d_forward.8} parent=0 // pred_region
    _
  $region37: #{resnet1d_forward.8} parent=0 // pred_fallthru
    _
  // Predicated region
  $region38: #{resnet1d_forward.8} parent=0 // pred_check
    _
  $region39: #{resnet1d_forward.8} parent=0 // pred_check_branch
    %34 = sbr.rel (0) target = $region41
  $region40: #{resnet1d_forward.8} parent=0 // pred_region
    _
  $region41: #{resnet1d_forward.8} parent=0 // pred_fallthru
    _
  %v36 = vld [vmem:[%s1] sm:$0xff]
  %v37 = vld [vmem:[%s1 + $0x8] sm:$0xff]
  %v38 = vld [vmem:[%s1 + $0x10] sm:$0xff]
  %v39 = vld [vmem:[%s1 + $0x18] sm:$0xff]
  %v40 = vld [vmem:[%s1 + $0x20] sm:$0xff]
  %v41 = vld [vmem:[%s1 + $0x28] sm:$0xff]
  %v42 = vpack.c.bf16 %v37, %v36
  %v43 = vpack.c.bf16 %v39, %v38
  %v44 = vpack.c.bf16 %v41, %v40
  %v45 = vld [vmem:[%s0] sm:$0x7f]
  %v47 = vrot.slane %v45, 7
  %vm49 = vcmask 1040384
  %v50 = vsel %vm49, 0.0, %v47
  %v52 = vrot.slane %v50, 1
  %53 = vrot.lane.b32.xlu0 %v52, 16
  %v54 = vpop.permute.xlu0 %53
  %vm57 = vcmask 1045504
  %v58 = vrot.slane %v50, 2
  %v59 = vrot.slane 0.0, 2
  %v60 = vsel %vm57, %v58, %v59
  %61 = vrot.lane.b32.xlu0 %v60, 32
  %v62 = vpop.permute.xlu0 %61
  %vm64 = vcmask 130048
  %v65 = vsel %vm64, %v50, %v54
  %vm66 = vcmask 261120
  %v67 = vsel %vm66, %v65, %v62
  %v68 = vpack.c.bf16 %v67, %v67
  %vm69 = vcmask 392192
  %v71 = vsel %vm69, %v68, 0
  %73 = vmatprep.subr.bf16.mxu0 0
  %74 = vmatpush1.bf16.msra.mxu0 0
  %75 = vmatprep.subr.bf16.mxu0 0
  %76 = vmatpush1.bf16.msra.mxu0 0
  %77 = vmatprep.subr.bf16.mxu0 0
  %78 = vmatpush1.bf16.msra.mxu0 0
  %79 = vmatprep.subr.bf16.mxu0 0
  %80 = vmatpush1.bf16.msra.mxu0 0
  %81 = vmatprep.subr.bf16.mxu0 0
  %82 = vmatpush1.bf16.msra.mxu0 0
  %83 = vmatprep.subr.bf16.mxu0 0
  %84 = vmatpush1.bf16.msra.mxu0 %v44
  %85 = vmatprep.subr.bf16.mxu0 0
  %86 = vmatpush1.bf16.msra.mxu0 %v43
  %87 = vmatprep.subr.bf16.mxu0 0
  %88 = vmatpush1.bf16.msra.mxu0 %v42
  %89 = vmatprep.subr.bf16.mxu0 0
  %90 = vmatpush2.bf16.msra.mxu0 0
  %91 = vmatprep.subr.bf16.mxu0 0
  %92 = vmatpush2.bf16.msra.mxu0 0
  %93 = vmatprep.subr.bf16.mxu0 0
  %94 = vmatpush2.bf16.msra.mxu0 0
  %95 = vmatprep.subr.bf16.mxu0 0
  %96 = vmatpush2.bf16.msra.mxu0 0
  %97 = vmatprep.subr.bf16.mxu0 0
  %98 = vmatpush2.bf16.msra.mxu0 0
  %99 = vmatprep.subr.bf16.mxu0 0
  %100 = vmatpush2.bf16.msra.mxu0 0
  %101 = vmatprep.subr.bf16.mxu0 0
  %102 = vmatpush2.bf16.msra.mxu0 0
  %103 = vmatprep.subr.bf16.mxu0 0
  %104 = vmatpush2.bf16.msra.mxu0 0
  %105 = vmatprep.mubr.bf16.mxu0 0
  %106 = vmatmul.mubr.bf16.gmra.mxu0 %v71
  %v107 = vpop.f32.mrf.mxu0
  %v108 = vadd.f32 0.0, %v107
  %v109 = vpop.f32.mrf.mxu0
  %v110 = vpop.f32.mrf.mxu0
  %v111 = vpop.f32.mrf.mxu0
  %112 = vdwg.mxu0
  %vm113 = vcmask 260096
  %114 = vst.msk [vmem:[#allocation2] sm:$0x7f] %vm113, %v108
  %v115 = vmul.f32 %v108, %v108
  %s116 = scalar_lea.vmem %s0, 8
  %v117 = vld [vmem:[%s116] sm:$0x7f]
  %v119 = vrot.slane %v117, 7
  %v121 = vsel %vm49, 0.0, %v119
  %v123 = vrot.slane %v121, 1
  %124 = vrot.lane.b32.xlu0 %v123, 16
  %v125 = vpop.permute.xlu0 %124
  %v127 = vrot.slane %v121, 2
  %v128 = vsel %vm57, %v127, %v59
  %129 = vrot.lane.b32.xlu0 %v128, 32
  %v130 = vpop.permute.xlu0 %129
  %v132 = vsel %vm64, %v121, %v125
  %v133 = vsel %vm66, %v132, %v130
  %v134 = vpack.c.bf16 %v133, %v133
  %v136 = vsel %vm69, %v134, 0
  %138 = vmatprep.subr.bf16.mxu0 0
  %139 = vmatpush1.bf16.msra.mxu0 0
  %140 = vmatprep.subr.bf16.mxu0 0
  %141 = vmatpush1.bf16.msra.mxu0 0
  %142 = vmatprep.subr.bf16.mxu0 0
  %143 = vmatpush1.bf16.msra.mxu0 0
  %144 = vmatprep.subr.bf16.mxu0 0
  %145 = vmatpush1.bf16.msra.mxu0 0
  %146 = vmatprep.subr.bf16.mxu0 0
  %147 = vmatpush1.bf16.msra.mxu0 0
  %148 = vmatprep.subr.bf16.mxu0 0
  %149 = vmatpush1.bf16.msra.mxu0 %v44
  %150 = vmatprep.subr.bf16.mxu0 0
  %151 = vmatpush1.bf16.msra.mxu0 %v43
  %152 = vmatprep.subr.bf16.mxu0 0
  %153 = vmatpush1.bf16.msra.mxu0 %v42
  %154 = vmatprep.subr.bf16.mxu0 0
  %155 = vmatpush2.bf16.msra.mxu0 0
  %156 = vmatprep.subr.bf16.mxu0 0
  %157 = vmatpush2.bf16.msra.mxu0 0
  %158 = vmatprep.subr.bf16.mxu0 0
  %159 = vmatpush2.bf16.msra.mxu0 0
  %160 = vmatprep.subr.bf16.mxu0 0
  %161 = vmatpush2.bf16.msra.mxu0 0
  %162 = vmatprep.subr.bf16.mxu0 0
  %163 = vmatpush2.bf16.msra.mxu0 0
  %164 = vmatprep.subr.bf16.mxu0 0
  %165 = vmatpush2.bf16.msra.mxu0 0
  %166 = vmatprep.subr.bf16.mxu0 0
  %167 = vmatpush2.bf16.msra.mxu0 0
  %168 = vmatprep.subr.bf16.mxu0 0
  %169 = vmatpush2.bf16.msra.mxu0 0
  %170 = vmatprep.mubr.bf16.mxu0 0
  %171 = vmatmul.mubr.bf16.gmra.mxu0 %v136
  %v172 = vpop.f32.mrf.mxu0
  %v173 = vadd.f32 0.0, %v172
  %v174 = vpop.f32.mrf.mxu0
  %v175 = vpop.f32.mrf.mxu0
  %v176 = vpop.f32.mrf.mxu0
  %177 = vdwg.mxu0
  %s178 = scalar_lea.vmem [#allocation2], 8
  %179 = vst.msk [vmem:[%s178] sm:$0x7f] %vm113, %v173
  %vm180 = vcmask 56320
  %v182 = vsel %vm180, 1.0, 0
  %vm184 = vcmask 1046528
  %v186 = vsel %vm184, %v173, 0
  %188 = vmatprep.subr.mxu0 0.0
  %189 = vmatpush1.msra.mxu0 0.0
  %190 = vmatprep.subr.mxu0 0.0
  %191 = vmatpush1.msra.mxu0 0.0
  %192 = vmatprep.subr.mxu0 0.0
  %193 = vmatpush1.msra.mxu0 0.0
  %194 = vmatprep.subr.mxu0 0.0
  %195 = vmatpush1.msra.mxu0 0.0
  %196 = vmatprep.subr.mxu0 0.0
  %197 = vmatpush1.msra.mxu0 0.0
  %198 = vmatprep.subr.mxu0 0.0
  %199 = vmatpush1.msra.mxu0 0.0
  %200 = vmatprep.subr.mxu0 0.0
  %201 = vmatpush1.msra.mxu0 0.0
  %202 = vmatprep.subr.mxu0 0.0
  %203 = vmatpush1.msra.mxu0 0.0
  %204 = vmatprep.subr.mxu0 0.0
  %205 = vmatpush1.msra.mxu0 0.0
  %206 = vmatprep.subr.mxu0 0.0
  %207 = vmatpush1.msra.mxu0 0.0
  %208 = vmatprep.subr.mxu0 0.0
  %209 = vmatpush1.msra.mxu0 0.0
  %210 = vmatprep.subr.mxu0 0.0
  %211 = vmatpush1.msra.mxu0 0.0
  %212 = vmatprep.subr.mxu0 0.0
  %213 = vmatpush1.msra.mxu0 0.0
  %214 = vmatprep.subr.mxu0 0.0
  %215 = vmatpush1.msra.mxu0 0.0
  %216 = vmatprep.subr.mxu0 0.0
  %217 = vmatpush1.msra.mxu0 0.0
  %218 = vmatprep.subr.mxu0 0.0
  %219 = vmatpush1.msra.mxu0 %v186
  %220 = vmatprep.subr.mxu0 0.0
  %221 = vmatpush2.msra.mxu0 0.0
  %222 = vmatprep.subr.mxu0 0.0
  %223 = vmatpush2.msra.mxu0 0.0
  %224 = vmatprep.subr.mxu0 0.0
  %225 = vmatpush2.msra.mxu0 0.0
  %226 = vmatprep.subr.mxu0 0.0
  %227 = vmatpush2.msra.mxu0 0.0
  %228 = vmatprep.subr.mxu0 0.0
  %229 = vmatpush2.msra.mxu0 0.0
  %230 = vmatprep.subr.mxu0 0.0
  %231 = vmatpush2.msra.mxu0 0.0
  %232 = vmatprep.subr.mxu0 0.0
  %233 = vmatpush2.msra.mxu0 0.0
  %234 = vmatprep.subr.mxu0 0.0
  %235 = vmatpush2.msra.mxu0 0.0
  %236 = vmatprep.subr.mxu0 0.0
  %237 = vmatpush2.msra.mxu0 0.0
  %238 = vmatprep.subr.mxu0 0.0
  %239 = vmatpush2.msra.mxu0 0.0
  %240 = vmatprep.subr.mxu0 0.0
  %241 = vmatpush2.msra.mxu0 0.0
  %242 = vmatprep.subr.mxu0 0.0
  %243 = vmatpush2.msra.mxu0 0.0
  %244 = vmatprep.subr.mxu0 0.0
  %245 = vmatpush2.msra.mxu0 0.0
  %246 = vmatprep.subr.mxu0 0.0
  %247 = vmatpush2.msra.mxu0 0.0
  %248 = vmatprep.subr.mxu0 0.0
  %249 = vmatpush2.msra.mxu0 0.0
  %250 = vmatprep.subr.mxu0 0.0
  %251 = vmatpush2.msra.mxu0 0.0
  %252 = vmatprep.mubr.f32.mxu0 0.0
  %253 = vmatmul.mubr.f32.gmra.mxu0 %v182
  %v254 = vpop.f32.mrf.mxu0
  %v255 = vadd.f32 0.0, %v254
  %v256 = vpop.f32.mrf.mxu0
  %257 = vdwg.mxu0
  %v259 = vsel %vm184, %v108, 0
  %261 = vmatprep.subr.mxu0 0.0
  %262 = vmatpush1.msra.mxu0 0.0
  %263 = vmatprep.subr.mxu0 0.0
  %264 = vmatpush1.msra.mxu0 0.0
  %265 = vmatprep.subr.mxu0 0.0
  %266 = vmatpush1.msra.mxu0 0.0
  %267 = vmatprep.subr.mxu0 0.0
  %268 = vmatpush1.msra.mxu0 0.0
  %269 = vmatprep.subr.mxu0 0.0
  %270 = vmatpush1.msra.mxu0 0.0
  %271 = vmatprep.subr.mxu0 0.0
  %272 = vmatpush1.msra.mxu0 0.0
  %273 = vmatprep.subr.mxu0 0.0
  %274 = vmatpush1.msra.mxu0 0.0
  %275 = vmatprep.subr.mxu0 0.0
  %276 = vmatpush1.msra.mxu0 0.0
  %277 = vmatprep.subr.mxu0 0.0
  %278 = vmatpush1.msra.mxu0 0.0
  %279 = vmatprep.subr.mxu0 0.0
  %280 = vmatpush1.msra.mxu0 0.0
  %281 = vmatprep.subr.mxu0 0.0
  %282 = vmatpush1.msra.mxu0 0.0
  %283 = vmatprep.subr.mxu0 0.0
  %284 = vmatpush1.msra.mxu0 0.0
  %285 = vmatprep.subr.mxu0 0.0
  %286 = vmatpush1.msra.mxu0 0.0
  %287 = vmatprep.subr.mxu0 0.0
  %288 = vmatpush1.msra.mxu0 0.0
  %289 = vmatprep.subr.mxu0 0.0
  %290 = vmatpush1.msra.mxu0 0.0
  %291 = vmatprep.subr.mxu0 0.0
  %292 = vmatpush1.msra.mxu0 %v259
  %293 = vmatprep.subr.mxu0 0.0
  %294 = vmatpush2.msra.mxu0 0.0
  %295 = vmatprep.subr.mxu0 0.0
  %296 = vmatpush2.msra.mxu0 0.0
  %297 = vmatprep.subr.mxu0 0.0
  %298 = vmatpush2.msra.mxu0 0.0
  %299 = vmatprep.subr.mxu0 0.0
  %300 = vmatpush2.msra.mxu0 0.0
  %301 = vmatprep.subr.mxu0 0.0
  %302 = vmatpush2.msra.mxu0 0.0
  %303 = vmatprep.subr.mxu0 0.0
  %304 = vmatpush2.msra.mxu0 0.0
  %305 = vmatprep.subr.mxu0 0.0
  %306 = vmatpush2.msra.mxu0 0.0
  %307 = vmatprep.subr.mxu0 0.0
  %308 = vmatpush2.msra.mxu0 0.0
  %309 = vmatprep.subr.mxu0 0.0
  %310 = vmatpush2.msra.mxu0 0.0
  %311 = vmatprep.subr.mxu0 0.0
  %312 = vmatpush2.msra.mxu0 0.0
  %313 = vmatprep.subr.mxu0 0.0
  %314 = vmatpush2.msra.mxu0 0.0
  %315 = vmatprep.subr.mxu0 0.0
  %316 = vmatpush2.msra.mxu0 0.0
  %317 = vmatprep.subr.mxu0 0.0
  %318 = vmatpush2.msra.mxu0 0.0
  %319 = vmatprep.subr.mxu0 0.0
  %320 = vmatpush2.msra.mxu0 0.0
  %321 = vmatprep.subr.mxu0 0.0
  %322 = vmatpush2.msra.mxu0 0.0
  %323 = vmatprep.subr.mxu0 0.0
  %324 = vmatpush2.msra.mxu0 0.0
  %325 = vmatprep.mubr.f32.mxu0 0.0
  %326 = vmatmul.mubr.f32.gmra.mxu0 %v182
  %v327 = vpop.f32.mrf.mxu0
  %v328 = vadd.f32 %v255, %v327
  %v329 = vpop.f32.mrf.mxu0
  %330 = vdwg.mxu0
  %v331 = vmul.f32 %v173, %v173
  %v333 = vsel %vm184, %v331, 0
  %335 = vmatprep.subr.mxu0 0.0
  %336 = vmatpush1.msra.mxu0 0.0
  %337 = vmatprep.subr.mxu0 0.0
  %338 = vmatpush1.msra.mxu0 0.0
  %339 = vmatprep.subr.mxu0 0.0
  %340 = vmatpush1.msra.mxu0 0.0
  %341 = vmatprep.subr.mxu0 0.0
  %342 = vmatpush1.msra.mxu0 0.0
  %343 = vmatprep.subr.mxu0 0.0
  %344 = vmatpush1.msra.mxu0 0.0
  %345 = vmatprep.subr.mxu0 0.0
  %346 = vmatpush1.msra.mxu0 0.0
  %347 = vmatprep.subr.mxu0 0.0
  %348 = vmatpush1.msra.mxu0 0.0
  %349 = vmatprep.subr.mxu0 0.0
  %350 = vmatpush1.msra.mxu0 0.0
  %351 = vmatprep.subr.mxu0 0.0
  %352 = vmatpush1.msra.mxu0 0.0
  %353 = vmatprep.subr.mxu0 0.0
  %354 = vmatpush1.msra.mxu0 0.0
  %355 = vmatprep.subr.mxu0 0.0
  %356 = vmatpush1.msra.mxu0 0.0
  %357 = vmatprep.subr.mxu0 0.0
  %358 = vmatpush1.msra.mxu0 0.0
  %359 = vmatprep.subr.mxu0 0.0
  %360 = vmatpush1.msra.mxu0 0.0
  %361 = vmatprep.subr.mxu0 0.0
  %362 = vmatpush1.msra.mxu0 0.0
  %363 = vmatprep.subr.mxu0 0.0
  %364 = vmatpush1.msra.mxu0 0.0
  %365 = vmatprep.subr.mxu0 0.0
  %366 = vmatpush1.msra.mxu0 %v333
  %367 = vmatprep.subr.mxu0 0.0
  %368 = vmatpush2.msra.mxu0 0.0
  %369 = vmatprep.subr.mxu0 0.0
  %370 = vmatpush2.msra.mxu0 0.0
  %371 = vmatprep.subr.mxu0 0.0
  %372 = vmatpush2.msra.mxu0 0.0
  %373 = vmatprep.subr.mxu0 0.0
  %374 = vmatpush2.msra.mxu0 0.0
  %375 = vmatprep.subr.mxu0 0.0
  %376 = vmatpush2.msra.mxu0 0.0
  %377 = vmatprep.subr.mxu0 0.0
  %378 = vmatpush2.msra.mxu0 0.0
  %379 = vmatprep.subr.mxu0 0.0
  %380 = vmatpush2.msra.mxu0 0.0
  %381 = vmatprep.subr.mxu0 0.0
  %382 = vmatpush2.msra.mxu0 0.0
  %383 = vmatprep.subr.mxu0 0.0
  %384 = vmatpush2.msra.mxu0 0.0
  %385 = vmatprep.subr.mxu0 0.0
  %386 = vmatpush2.msra.mxu0 0.0
  %387 = vmatprep.subr.mxu0 0.0
  %388 = vmatpush2.msra.mxu0 0.0
  %389 = vmatprep.subr.mxu0 0.0
  %390 = vmatpush2.msra.mxu0 0.0
  %391 = vmatprep.subr.mxu0 0.0
  %392 = vmatpush2.msra.mxu0 0.0
  %393 = vmatprep.subr.mxu0 0.0
  %394 = vmatpush2.msra.mxu0 0.0
  %395 = vmatprep.subr.mxu0 0.0
  %396 = vmatpush2.msra.mxu0 0.0
  %397 = vmatprep.subr.mxu0 0.0
  %398 = vmatpush2.msra.mxu0 0.0
  %399 = vmatprep.mubr.f32.mxu0 0.0
  %400 = vmatmul.mubr.f32.gmra.mxu0 %v182
  %v401 = vpop.f32.mrf.mxu0
  %v402 = vadd.f32 0.0, %v401
  %v403 = vpop.f32.mrf.mxu0
  %404 = vdwg.mxu0
  %v406 = vsel %vm184, %v115, 0
  %408 = vmatprep.subr.mxu0 0.0
  %409 = vmatpush1.msra.mxu0 0.0
  %410 = vmatprep.subr.mxu0 0.0
  %411 = vmatpush1.msra.mxu0 0.0
  %412 = vmatprep.subr.mxu0 0.0
  %413 = vmatpush1.msra.mxu0 0.0
  %414 = vmatprep.subr.mxu0 0.0
  %415 = vmatpush1.msra.mxu0 0.0
  %416 = vmatprep.subr.mxu0 0.0
  %417 = vmatpush1.msra.mxu0 0.0
  %418 = vmatprep.subr.mxu0 0.0
  %419 = vmatpush1.msra.mxu0 0.0
  %420 = vmatprep.subr.mxu0 0.0
  %421 = vmatpush1.msra.mxu0 0.0
  %422 = vmatprep.subr.mxu0 0.0
  %423 = vmatpush1.msra.mxu0 0.0
  %424 = vmatprep.subr.mxu0 0.0
  %425 = vmatpush1.msra.mxu0 0.0
  %426 = vmatprep.subr.mxu0 0.0
  %427 = vmatpush1.msra.mxu0 0.0
  %428 = vmatprep.subr.mxu0 0.0
  %429 = vmatpush1.msra.mxu0 0.0
  %430 = vmatprep.subr.mxu0 0.0
  %431 = vmatpush1.msra.mxu0 0.0
  %432 = vmatprep.subr.mxu0 0.0
  %433 = vmatpush1.msra.mxu0 0.0
  %434 = vmatprep.subr.mxu0 0.0
  %435 = vmatpush1.msra.mxu0 0.0
  %436 = vmatprep.subr.mxu0 0.0
  %437 = vmatpush1.msra.mxu0 0.0
  %438 = vmatprep.subr.mxu0 0.0
  %439 = vmatpush1.msra.mxu0 %v406
  %440 = vmatprep.subr.mxu0 0.0
  %441 = vmatpush2.msra.mxu0 0.0
  %442 = vmatprep.subr.mxu0 0.0
  %443 = vmatpush2.msra.mxu0 0.0
  %444 = vmatprep.subr.mxu0 0.0
  %445 = vmatpush2.msra.mxu0 0.0
  %446 = vmatprep.subr.mxu0 0.0
  %447 = vmatpush2.msra.mxu0 0.0
  %448 = vmatprep.subr.mxu0 0.0
  %449 = vmatpush2.msra.mxu0 0.0
  %450 = vmatprep.subr.mxu0 0.0
  %451 = vmatpush2.msra.mxu0 0.0
  %452 = vmatprep.subr.mxu0 0.0
  %453 = vmatpush2.msra.mxu0 0.0
  %454 = vmatprep.subr.mxu0 0.0
  %455 = vmatpush2.msra.mxu0 0.0
  %456 = vmatprep.subr.mxu0 0.0
  %457 = vmatpush2.msra.mxu0 0.0
  %458 = vmatprep.subr.mxu0 0.0
  %459 = vmatpush2.msra.mxu0 0.0
  %460 = vmatprep.subr.mxu0 0.0
  %461 = vmatpush2.msra.mxu0 0.0
  %462 = vmatprep.subr.mxu0 0.0
  %463 = vmatpush2.msra.mxu0 0.0
  %464 = vmatprep.subr.mxu0 0.0
  %465 = vmatpush2.msra.mxu0 0.0
  %466 = vmatprep.subr.mxu0 0.0
  %467 = vmatpush2.msra.mxu0 0.0
  %468 = vmatprep.subr.mxu0 0.0
  %469 = vmatpush2.msra.mxu0 0.0
  %470 = vmatprep.subr.mxu0 0.0
  %471 = vmatpush2.msra.mxu0 0.0
  %472 = vmatprep.mubr.f32.mxu0 0.0
  %473 = vmatmul.mubr.f32.gmra.mxu0 %v182
  %v474 = vpop.f32.mrf.mxu0
  %v475 = vadd.f32 %v402, %v474
  %v476 = vpop.f32.mrf.mxu0
  %477 = vdwg.mxu0
  %v478 = vld [vmem:[%s2] sm:$0x1]
  %v479 = vld [vmem:[%s3] sm:$0x1]
  %v480 = vrcp.pop 14.0
  %v481 = vmul.f32 %v328, %v480
  %v482 = vmul.f32 %v475, %v480
  %v483 = vmul.f32 %v481, %v481
  %v484 = vsub.f32 %v482, %v483
  %v485 = vmax.f32 %v484, 0.0
  %v486 = vadd.f32 %v485, 1e-05
  %v487 = vrsqrt.pop %v486
  %v488 = vmul.f32 %v478, %v487
  %v489 = vmul.f32 %v481, %v488
  %v490 = vsub.f32 %v479, %v489
  %v491 = vld [vmem:[%s4] sm:$0xff]
  %v492 = vld [vmem:[%s4 + $0x8] sm:$0xff]
  %v493 = vld [vmem:[%s4 + $0x10] sm:$0xff]
  %v494 = vld [vmem:[%s4 + $0x18] sm:$0xff]
  %v495 = vld [vmem:[%s4 + $0x20] sm:$0xff]
  %v496 = vld [vmem:[%s4 + $0x28] sm:$0xff]
  %v497 = vld [vmem:[%s4 + $0x30] sm:$0xff]
  %v498 = vld [vmem:[%s4 + $0x38] sm:$0xff]
  %v499 = vld [vmem:[%s4 + $0x40] sm:$0xff]
  %v500 = vld [vmem:[%s4 + $0x48] sm:$0xff]
  %v501 = vld [vmem:[%s4 + $0x50] sm:$0xff]
  %v502 = vld [vmem:[%s4 + $0x58] sm:$0xff]
  %v503 = vpack.c.bf16 %v492, %v491
  %v504 = vpack.c.bf16 %v494, %v493
  %v505 = vpack.c.bf16 %v496, %v495
  %v506 = vpack.c.bf16 %v498, %v497
  %v507 = vpack.c.bf16 %v500, %v499
  %v508 = vpack.c.bf16 %v502, %v501
  %v509 = vld [vmem:[#allocation2] sm:$0x7f]
  %v511 = vlaneseq
  %v512 = vshrl.u32 %v511, 7
  %v513 = vsub.s32 0, %v512
  %v514 = vrot.slane %v488, %v513
  %v516 = vmul.f32 %v509, %v514
  %v518 = vlaneseq
  %v519 = vshrl.u32 %v518, 7
  %v520 = vsub.s32 0, %v519
  %v521 = vrot.slane %v490, %v520
  %v523 = vadd.f32 %v516, %v521
  %v524 = vmax.f32 %v523, 0.0
  %v526 = vrot.slane %v524, 7
  %v528 = vsel %vm49, 0.0, %v526
  %v530 = vrot.slane %v528, 1
  %531 = vrot.lane.b32.xlu0 %v530, 32
  %v532 = vpop.permute.xlu0 %531
  %v534 = vrot.slane %v528, 2
  %v535 = vsel %vm57, %v534, %v59
  %536 = vrot.lane.b32.xlu0 %v535, 64
  %v537 = vpop.permute.xlu0 %536
  %v539 = vsel %vm66, %v528, %v532
  %vm540 = vcmask 523264
  %v541 = vsel %vm540, %v539, %v537
  %v542 = vpack.c.bf16 %v541, %v541
  %vm543 = vcmask 785408
  %v545 = vsel %vm543, %v542, 0
  %547 = vmatprep.subr.bf16.mxu0 0
  %548 = vmatpush1.bf16.msra.mxu0 0
  %549 = vmatprep.subr.bf16.mxu0 0
  %550 = vmatpush1.bf16.msra.mxu0 0
  %551 = vmatprep.subr.bf16.mxu0 0
  %552 = vmatpush1.bf16.msra.mxu0 %v508
  %553 = vmatprep.subr.bf16.mxu0 0
  %554 = vmatpush1.bf16.msra.mxu0 %v507
  %555 = vmatprep.subr.bf16.mxu0 0
  %556 = vmatpush1.bf16.msra.mxu0 %v506
  %557 = vmatprep.subr.bf16.mxu0 0
  %558 = vmatpush1.bf16.msra.mxu0 %v505
  %559 = vmatprep.subr.bf16.mxu0 0
  %560 = vmatpush1.bf16.msra.mxu0 %v504
  %561 = vmatprep.subr.bf16.mxu0 0
  %562 = vmatpush1.bf16.msra.mxu0 %v503
  %563 = vmatprep.subr.bf16.mxu0 0
  %564 = vmatpush2.bf16.msra.mxu0 0
  %565 = vmatprep.subr.bf16.mxu0 0
  %566 = vmatpush2.bf16.msra.mxu0 0
  %567 = vmatprep.subr.bf16.mxu0 0
  %568 = vmatpush2.bf16.msra.mxu0 0
  %569 = vmatprep.subr.bf16.mxu0 0
  %570 = vmatpush2.bf16.msra.mxu0 0
  %571 = vmatprep.subr.bf16.mxu0 0
  %572 = vmatpush2.bf16.msra.mxu0 0
  %573 = vmatprep.subr.bf16.mxu0 0
  %574 = vmatpush2.bf16.msra.mxu0 0
  %575 = vmatprep.subr.bf16.mxu0 0
  %576 = vmatpush2.bf16.msra.mxu0 0
  %577 = vmatprep.subr.bf16.mxu0 0
  %578 = vmatpush2.bf16.msra.mxu0 0
  %579 = vmatprep.mubr.bf16.mxu0 0
  %580 = vmatmul.mubr.bf16.gmra.mxu0 %v545
  %v581 = vpop.f32.mrf.mxu0
  %v582 = vadd.f32 0.0, %v581
  %v583 = vpop.f32.mrf.mxu0
  %v584 = vpop.f32.mrf.mxu0
  %v585 = vpop.f32.mrf.mxu0
  %586 = vdwg.mxu0
  %587 = vst.msk [vmem:[#allocation2] sm:$0x7f] %vm113, %v582
  %v588 = vmul.f32 %v582, %v582
  %v589 = vld [vmem:[%s178] sm:$0x7f]
  %v590 = vmul.f32 %v589, %v514
  %v591 = vadd.f32 %v590, %v521
  %v592 = vmax.f32 %v591, 0.0
  %v594 = vrot.slane %v592, 7
  %v596 = vsel %vm49, 0.0, %v594
  %v598 = vrot.slane %v596, 1
  %599 = vrot.lane.b32.xlu0 %v598, 32
  %v600 = vpop.permute.xlu0 %599
  %v602 = vrot.slane %v596, 2
  %v603 = vsel %vm57, %v602, %v59
  %604 = vrot.lane.b32.xlu0 %v603, 64
  %v605 = vpop.permute.xlu0 %604
  %v607 = vsel %vm66, %v596, %v600
  %v608 = vsel %vm540, %v607, %v605
  %v609 = vpack.c.bf16 %v608, %v608
  %v611 = vsel %vm543, %v609, 0
  %613 = vmatprep.subr.bf16.mxu0 0
  %614 = vmatpush1.bf16.msra.mxu0 0
  %615 = vmatprep.subr.bf16.mxu0 0
  %616 = vmatpush1.bf16.msra.mxu0 0
  %617 = vmatprep.subr.bf16.mxu0 0
  %618 = vmatpush1.bf16.msra.mxu0 %v508
  %619 = vmatprep.subr.bf16.mxu0 0
  %620 = vmatpush1.bf16.msra.mxu0 %v507
  %621 = vmatprep.subr.bf16.mxu0 0
  %622 = vmatpush1.bf16.msra.mxu0 %v506
  %623 = vmatprep.subr.bf16.mxu0 0
  %624 = vmatpush1.bf16.msra.mxu0 %v505
  %625 = vmatprep.subr.bf16.mxu0 0
  %626 = vmatpush1.bf16.msra.mxu0 %v504
  %627 = vmatprep.subr.bf16.mxu0 0
  %628 = vmatpush1.bf16.msra.mxu0 %v503
  %629 = vmatprep.subr.bf16.mxu0 0
  %630 = vmatpush2.bf16.msra.mxu0 0
  %631 = vmatprep.subr.bf16.mxu0 0
  %632 = vmatpush2.bf16.msra.mxu0 0
  %633 = vmatprep.subr.bf16.mxu0 0
  %634 = vmatpush2.bf16.msra.mxu0 0
  %635 = vmatprep.subr.bf16.mxu0 0
  %636 = vmatpush2.bf16.msra.mxu0 0
  %637 = vmatprep.subr.bf16.mxu0 0
  %638 = vmatpush2.bf16.msra.mxu0 0
  %639 = vmatprep.subr.bf16.mxu0 0
  %640 = vmatpush2.bf16.msra.mxu0 0
  %641 = vmatprep.subr.bf16.mxu0 0
  %642 = vmatpush2.bf16.msra.mxu0 0
  %643 = vmatprep.subr.bf16.mxu0 0
  %644 = vmatpush2.bf16.msra.mxu0 0
  %645 = vmatprep.mubr.bf16.mxu0 0
  %646 = vmatmul.mubr.bf16.gmra.mxu0 %v611
  %v647 = vpop.f32.mrf.mxu0
  %v648 = vadd.f32 0.0, %v647
  %v649 = vpop.f32.mrf.mxu0
  %v650 = vpop.f32.mrf.mxu0
  %v651 = vpop.f32.mrf.mxu0
  %652 = vdwg.mxu0
  %653 = vst.msk [vmem:[%s178] sm:$0x7f] %vm113, %v648
  %v655 = vsel %vm184, %v648, 0
  %657 = vmatprep.subr.mxu0 0.0
  %658 = vmatpush1.msra.mxu0 0.0
  %659 = vmatprep.subr.mxu0 0.0
  %660 = vmatpush1.msra.mxu0 0.0
  %661 = vmatprep.subr.mxu0 0.0
  %662 = vmatpush1.msra.mxu0 0.0
  %663 = vmatprep.subr.mxu0 0.0
  %664 = vmatpush1.msra.mxu0 0.0
  %665 = vmatprep.subr.mxu0 0.0
  %666 = vmatpush1.msra.mxu0 0.0
  %667 = vmatprep.subr.mxu0 0.0
  %668 = vmatpush1.msra.mxu0 0.0
  %669 = vmatprep.subr.mxu0 0.0
  %670 = vmatpush1.msra.mxu0 0.0
  %671 = vmatprep.subr.mxu0 0.0
  %672 = vmatpush1.msra.mxu0 0.0
  %673 = vmatprep.subr.mxu0 0.0
  %674 = vmatpush1.msra.mxu0 0.0
  %675 = vmatprep.subr.mxu0 0.0
  %676 = vmatpush1.msra.mxu0 0.0
  %677 = vmatprep.subr.mxu0 0.0
  %678 = vmatpush1.msra.mxu0 0.0
  %679 = vmatprep.subr.mxu0 0.0
  %680 = vmatpush1.msra.mxu0 0.0
  %681 = vmatprep.subr.mxu0 0.0
  %682 = vmatpush1.msra.mxu0 0.0
  %683 = vmatprep.subr.mxu0 0.0
  %684 = vmatpush1.msra.mxu0 0.0
  %685 = vmatprep.subr.mxu0 0.0
  %686 = vmatpush1.msra.mxu0 0.0
  %687 = vmatprep.subr.mxu0 0.0
  %688 = vmatpush1.msra.mxu0 %v655
  %689 = vmatprep.subr.mxu0 0.0
  %690 = vmatpush2.msra.mxu0 0.0
  %691 = vmatprep.subr.mxu0 0.0
  %692 = vmatpush2.msra.mxu0 0.0
  %693 = vmatprep.subr.mxu0 0.0
  %694 = vmatpush2.msra.mxu0 0.0
  %695 = vmatprep.subr.mxu0 0.0
  %696 = vmatpush2.msra.mxu0 0.0
  %697 = vmatprep.subr.mxu0 0.0
  %698 = vmatpush2.msra.mxu0 0.0
  %699 = vmatprep.subr.mxu0 0.0
  %700 = vmatpush2.msra.mxu0 0.0
  %701 = vmatprep.subr.mxu0 0.0
  %702 = vmatpush2.msra.mxu0 0.0
  %703 = vmatprep.subr.mxu0 0.0
  %704 = vmatpush2.msra.mxu0 0.0
  %705 = vmatprep.subr.mxu0 0.0
  %706 = vmatpush2.msra.mxu0 0.0
  %707 = vmatprep.subr.mxu0 0.0
  %708 = vmatpush2.msra.mxu0 0.0
  %709 = vmatprep.subr.mxu0 0.0
  %710 = vmatpush2.msra.mxu0 0.0
  %711 = vmatprep.subr.mxu0 0.0
  %712 = vmatpush2.msra.mxu0 0.0
  %713 = vmatprep.subr.mxu0 0.0
  %714 = vmatpush2.msra.mxu0 0.0
  %715 = vmatprep.subr.mxu0 0.0
  %716 = vmatpush2.msra.mxu0 0.0
  %717 = vmatprep.subr.mxu0 0.0
  %718 = vmatpush2.msra.mxu0 0.0
  %719 = vmatprep.subr.mxu0 0.0
  %720 = vmatpush2.msra.mxu0 0.0
  %721 = vmatprep.mubr.f32.mxu0 0.0
  %722 = vmatmul.mubr.f32.gmra.mxu0 %v182
  %v723 = vpop.f32.mrf.mxu0
  %v724 = vadd.f32 0.0, %v723
  %v725 = vpop.f32.mrf.mxu0
  %726 = vdwg.mxu0
  %v728 = vsel %vm184, %v582, 0
  %730 = vmatprep.subr.mxu0 0.0
  %731 = vmatpush1.msra.mxu0 0.0
  %732 = vmatprep.subr.mxu0 0.0
  %733 = vmatpush1.msra.mxu0 0.0
  %734 = vmatprep.subr.mxu0 0.0
  %735 = vmatpush1.msra.mxu0 0.0
  %736 = vmatprep.subr.mxu0 0.0
  %737 = vmatpush1.msra.mxu0 0.0
  %738 = vmatprep.subr.mxu0 0.0
  %739 = vmatpush1.msra.mxu0 0.0
  %740 = vmatprep.subr.mxu0 0.0
  %741 = vmatpush1.msra.mxu0 0.0
  %742 = vmatprep.subr.mxu0 0.0
  %743 = vmatpush1.msra.mxu0 0.0
  %744 = vmatprep.subr.mxu0 0.0
  %745 = vmatpush1.msra.mxu0 0.0
  %746 = vmatprep.subr.mxu0 0.0
  %747 = vmatpush1.msra.mxu0 0.0
  %748 = vmatprep.subr.mxu0 0.0
  %749 = vmatpush1.msra.mxu0 0.0
  %750 = vmatprep.subr.mxu0 0.0
  %751 = vmatpush1.msra.mxu0 0.0
  %752 = vmatprep.subr.mxu0 0.0
  %753 = vmatpush1.msra.mxu0 0.0
  %754 = vmatprep.subr.mxu0 0.0
  %755 = vmatpush1.msra.mxu0 0.0
  %756 = vmatprep.subr.mxu0 0.0
  %757 = vmatpush1.msra.mxu0 0.0
  %758 = vmatprep.subr.mxu0 0.0
  %759 = vmatpush1.msra.mxu0 0.0
  %760 = vmatprep.subr.mxu0 0.0
  %761 = vmatpush1.msra.mxu0 %v728
  %762 = vmatprep.subr.mxu0 0.0
  %763 = vmatpush2.msra.mxu0 0.0
  %764 = vmatprep.subr.mxu0 0.0
  %765 = vmatpush2.msra.mxu0 0.0
  %766 = vmatprep.subr.mxu0 0.0
  %767 = vmatpush2.msra.mxu0 0.0
  %768 = vmatprep.subr.mxu0 0.0
  %769 = vmatpush2.msra.mxu0 0.0
  %770 = vmatprep.subr.mxu0 0.0
  %771 = vmatpush2.msra.mxu0 0.0
  %772 = vmatprep.subr.mxu0 0.0
  %773 = vmatpush2.msra.mxu0 0.0
  %774 = vmatprep.subr.mxu0 0.0
  %775 = vmatpush2.msra.mxu0 0.0
  %776 = vmatprep.subr.mxu0 0.0
  %777 = vmatpush2.msra.mxu0 0.0
  %778 = vmatprep.subr.mxu0 0.0
  %779 = vmatpush2.msra.mxu0 0.0
  %780 = vmatprep.subr.mxu0 0.0
  %781 = vmatpush2.msra.mxu0 0.0
  %782 = vmatprep.subr.mxu0 0.0
  %783 = vmatpush2.msra.mxu0 0.0
  %784 = vmatprep.subr.mxu0 0.0
  %785 = vmatpush2.msra.mxu0 0.0
  %786 = vmatprep.subr.mxu0 0.0
  %787 = vmatpush2.msra.mxu0 0.0
  %788 = vmatprep.subr.mxu0 0.0
  %789 = vmatpush2.msra.mxu0 0.0
  %790 = vmatprep.subr.mxu0 0.0
  %791 = vmatpush2.msra.mxu0 0.0
  %792 = vmatprep.subr.mxu0 0.0
  %793 = vmatpush2.msra.mxu0 0.0
  %794 = vmatprep.mubr.f32.mxu0 0.0
  %795 = vmatmul.mubr.f32.gmra.mxu0 %v182
  %v796 = vpop.f32.mrf.mxu0
  %v797 = vadd.f32 %v724, %v796
  %v798 = vpop.f32.mrf.mxu0
  %799 = vdwg.mxu0
  %v800 = vmul.f32 %v648, %v648
  %v802 = vsel %vm184, %v800, 0
  %804 = vmatprep.subr.mxu0 0.0
  %805 = vmatpush1.msra.mxu0 0.0
  %806 = vmatprep.subr.mxu0 0.0
  %807 = vmatpush1.msra.mxu0 0.0
  %808 = vmatprep.subr.mxu0 0.0
  %809 = vmatpush1.msra.mxu0 0.0
  %810 = vmatprep.subr.mxu0 0.0
  %811 = vmatpush1.msra.mxu0 0.0
  %812 = vmatprep.subr.mxu0 0.0
  %813 = vmatpush1.msra.mxu0 0.0
  %814 = vmatprep.subr.mxu0 0.0
  %815 = vmatpush1.msra.mxu0 0.0
  %816 = vmatprep.subr.mxu0 0.0
  %817 = vmatpush1.msra.mxu0 0.0
  %818 = vmatprep.subr.mxu0 0.0
  %819 = vmatpush1.msra.mxu0 0.0
  %820 = vmatprep.subr.mxu0 0.0
  %821 = vmatpush1.msra.mxu0 0.0
  %822 = vmatprep.subr.mxu0 0.0
  %823 = vmatpush1.msra.mxu0 0.0
  %824 = vmatprep.subr.mxu0 0.0
  %825 = vmatpush1.msra.mxu0 0.0
  %826 = vmatprep.subr.mxu0 0.0
  %827 = vmatpush1.msra.mxu0 0.0
  %828 = vmatprep.subr.mxu0 0.0
  %829 = vmatpush1.msra.mxu0 0.0
  %830 = vmatprep.subr.mxu0 0.0
  %831 = vmatpush1.msra.mxu0 0.0
  %832 = vmatprep.subr.mxu0 0.0
  %833 = vmatpush1.msra.mxu0 0.0
  %834 = vmatprep.subr.mxu0 0.0
  %835 = vmatpush1.msra.mxu0 %v802
  %836 = vmatprep.subr.mxu0 0.0
  %837 = vmatpush2.msra.mxu0 0.0
  %838 = vmatprep.subr.mxu0 0.0
  %839 = vmatpush2.msra.mxu0 0.0
  %840 = vmatprep.subr.mxu0 0.0
  %841 = vmatpush2.msra.mxu0 0.0
  %842 = vmatprep.subr.mxu0 0.0
  %843 = vmatpush2.msra.mxu0 0.0
  %844 = vmatprep.subr.mxu0 0.0
  %845 = vmatpush2.msra.mxu0 0.0
  %846 = vmatprep.subr.mxu0 0.0
  %847 = vmatpush2.msra.mxu0 0.0
  %848 = vmatprep.subr.mxu0 0.0
  %849 = vmatpush2.msra.mxu0 0.0
  %850 = vmatprep.subr.mxu0 0.0
  %851 = vmatpush2.msra.mxu0 0.0
  %852 = vmatprep.subr.mxu0 0.0
  %853 = vmatpush2.msra.mxu0 0.0
  %854 = vmatprep.subr.mxu0 0.0
  %855 = vmatpush2.msra.mxu0 0.0
  %856 = vmatprep.subr.mxu0 0.0
  %857 = vmatpush2.msra.mxu0 0.0
  %858 = vmatprep.subr.mxu0 0.0
  %859 = vmatpush2.msra.mxu0 0.0
  %860 = vmatprep.subr.mxu0 0.0
  %861 = vmatpush2.msra.mxu0 0.0
  %862 = vmatprep.subr.mxu0 0.0
  %863 = vmatpush2.msra.mxu0 0.0
  %864 = vmatprep.subr.mxu0 0.0
  %865 = vmatpush2.msra.mxu0 0.0
  %866 = vmatprep.subr.mxu0 0.0
  %867 = vmatpush2.msra.mxu0 0.0
  %868 = vmatprep.mubr.f32.mxu0 0.0
  %869 = vmatmul.mubr.f32.gmra.mxu0 %v182
  %v870 = vpop.f32.mrf.mxu0
  %v871 = vadd.f32 0.0, %v870
  %v872 = vpop.f32.mrf.mxu0
  %873 = vdwg.mxu0
  %v875 = vsel %vm184, %v588, 0
  %877 = vmatprep.subr.mxu0 0.0
  %878 = vmatpush1.msra.mxu0 0.0
  %879 = vmatprep.subr.mxu0 0.0
  %880 = vmatpush1.msra.mxu0 0.0
  %881 = vmatprep.subr.mxu0 0.0
  %882 = vmatpush1.msra.mxu0 0.0
  %883 = vmatprep.subr.mxu0 0.0
  %884 = vmatpush1.msra.mxu0 0.0
  %885 = vmatprep.subr.mxu0 0.0
  %886 = vmatpush1.msra.mxu0 0.0
  %887 = vmatprep.subr.mxu0 0.0
  %888 = vmatpush1.msra.mxu0 0.0
  %889 = vmatprep.subr.mxu0 0.0
  %890 = vmatpush1.msra.mxu0 0.0
  %891 = vmatprep.subr.mxu0 0.0
  %892 = vmatpush1.msra.mxu0 0.0
  %893 = vmatprep.subr.mxu0 0.0
  %894 = vmatpush1.msra.mxu0 0.0
  %895 = vmatprep.subr.mxu0 0.0
  %896 = vmatpush1.msra.mxu0 0.0
  %897 = vmatprep.subr.mxu0 0.0
  %898 = vmatpush1.msra.mxu0 0.0
  %899 = vmatprep.subr.mxu0 0.0
  %900 = vmatpush1.msra.mxu0 0.0
  %901 = vmatprep.subr.mxu0 0.0
  %902 = vmatpush1.msra.mxu0 0.0
  %903 = vmatprep.subr.mxu0 0.0
  %904 = vmatpush1.msra.mxu0 0.0
  %905 = vmatprep.subr.mxu0 0.0
  %906 = vmatpush1.msra.mxu0 0.0
  %907 = vmatprep.subr.mxu0 0.0
  %908 = vmatpush1.msra.mxu0 %v875
  %909 = vmatprep.subr.mxu0 0.0
  %910 = vmatpush2.msra.mxu0 0.0
  %911 = vmatprep.subr.mxu0 0.0
  %912 = vmatpush2.msra.mxu0 0.0
  %913 = vmatprep.subr.mxu0 0.0
  %914 = vmatpush2.msra.mxu0 0.0
  %915 = vmatprep.subr.mxu0 0.0
  %916 = vmatpush2.msra.mxu0 0.0
  %917 = vmatprep.subr.mxu0 0.0
  %918 = vmatpush2.msra.mxu0 0.0
  %919 = vmatprep.subr.mxu0 0.0
  %920 = vmatpush2.msra.mxu0 0.0
  %921 = vmatprep.subr.mxu0 0.0
  %922 = vmatpush2.msra.mxu0 0.0
  %923 = vmatprep.subr.mxu0 0.0
  %924 = vmatpush2.msra.mxu0 0.0
  %925 = vmatprep.subr.mxu0 0.0
  %926 = vmatpush2.msra.mxu0 0.0
  %927 = vmatprep.subr.mxu0 0.0
  %928 = vmatpush2.msra.mxu0 0.0
  %929 = vmatprep.subr.mxu0 0.0
  %930 = vmatpush2.msra.mxu0 0.0
  %931 = vmatprep.subr.mxu0 0.0
  %932 = vmatpush2.msra.mxu0 0.0
  %933 = vmatprep.subr.mxu0 0.0
  %934 = vmatpush2.msra.mxu0 0.0
  %935 = vmatprep.subr.mxu0 0.0
  %936 = vmatpush2.msra.mxu0 0.0
  %937 = vmatprep.subr.mxu0 0.0
  %938 = vmatpush2.msra.mxu0 0.0
  %939 = vmatprep.subr.mxu0 0.0
  %940 = vmatpush2.msra.mxu0 0.0
  %941 = vmatprep.mubr.f32.mxu0 0.0
  %942 = vmatmul.mubr.f32.gmra.mxu0 %v182
  %v943 = vpop.f32.mrf.mxu0
  %v944 = vadd.f32 %v871, %v943
  %v945 = vpop.f32.mrf.mxu0
  %946 = vdwg.mxu0
  %v947 = vld [vmem:[%s5] sm:$0x1]
  %v948 = vld [vmem:[%s6] sm:$0x1]
  %v949 = vmul.f32 %v797, %v480
  %v950 = vmul.f32 %v944, %v480
  %v951 = vmul.f32 %v949, %v949
  %v952 = vsub.f32 %v950, %v951
  %v953 = vmax.f32 %v952, 0.0
  %v954 = vadd.f32 %v953, 1e-05
  %v955 = vrsqrt.pop %v954
  %v956 = vmul.f32 %v947, %v955
  %v957 = vmul.f32 %v949, %v956
  %v958 = vsub.f32 %v948, %v957
  %v959 = vld [vmem:[%s7] sm:$0xff]
  %v960 = vld [vmem:[%s7 + $0x8] sm:$0xff]
  %v961 = vpack.c.bf16 %v960, %v959
  %v962 = vld [vmem:[%s0] sm:$0x7f]
  %v963 = vpack.c.bf16 %v962, %v962
  %v965 = vsel %vm64, %v963, 0
  %967 = vmatprep.subr.bf16.mxu0 0
  %968 = vmatpush1.bf16.msra.mxu0 0
  %969 = vmatprep.subr.bf16.mxu0 0
  %970 = vmatpush1.bf16.msra.mxu0 0
  %971 = vmatprep.subr.bf16.mxu0 0
  %972 = vmatpush1.bf16.msra.mxu0 0
  %973 = vmatprep.subr.bf16.mxu0 0
  %974 = vmatpush1.bf16.msra.mxu0 0
  %975 = vmatprep.subr.bf16.mxu0 0
  %976 = vmatpush1.bf16.msra.mxu0 0
  %977 = vmatprep.subr.bf16.mxu0 0
  %978 = vmatpush1.bf16.msra.mxu0 0
  %979 = vmatprep.subr.bf16.mxu0 0
  %980 = vmatpush1.bf16.msra.mxu0 0
  %981 = vmatprep.subr.bf16.mxu0 0
  %982 = vmatpush1.bf16.msra.mxu0 %v961
  %983 = vmatprep.subr.bf16.mxu0 0
  %984 = vmatpush2.bf16.msra.mxu0 0
  %985 = vmatprep.subr.bf16.mxu0 0
  %986 = vmatpush2.bf16.msra.mxu0 0
  %987 = vmatprep.subr.bf16.mxu0 0
  %988 = vmatpush2.bf16.msra.mxu0 0
  %989 = vmatprep.subr.bf16.mxu0 0
  %990 = vmatpush2.bf16.msra.mxu0 0
  %991 = vmatprep.subr.bf16.mxu0 0
  %992 = vmatpush2.bf16.msra.mxu0 0
  %993 = vmatprep.subr.bf16.mxu0 0
  %994 = vmatpush2.bf16.msra.mxu0 0
  %995 = vmatprep.subr.bf16.mxu0 0
  %996 = vmatpush2.bf16.msra.mxu0 0
  %997 = vmatprep.subr.bf16.mxu0 0
  %998 = vmatpush2.bf16.msra.mxu0 0
  %999 = vmatprep.mubr.bf16.mxu0 0
  %1000 = vmatmul.mubr.bf16.gmra.mxu0 %v965
  %v1001 = vpop.f32.mrf.mxu0
  %v1002 = vadd.f32 0.0, %v1001
  %v1003 = vpop.f32.mrf.mxu0
  %v1004 = vpop.f32.mrf.mxu0
  %v1005 = vpop.f32.mrf.mxu0
  %1006 = vdwg.mxu0
  %v1007 = vmul.f32 %v1002, %v1002
  %v1008 = vld [vmem:[%s116] sm:$0x7f]
  %v1009 = vpack.c.bf16 %v1008, %v1008
  %v1011 = vsel %vm64, %v1009, 0
  %1013 = vmatprep.subr.bf16.mxu0 0
  %1014 = vmatpush1.bf16.msra.mxu0 0
  %1015 = vmatprep.subr.bf16.mxu0 0
  %1016 = vmatpush1.bf16.msra.mxu0 0
  %1017 = vmatprep.subr.bf16.mxu0 0
  %1018 = vmatpush1.bf16.msra.mxu0 0
  %1019 = vmatprep.subr.bf16.mxu0 0
  %1020 = vmatpush1.bf16.msra.mxu0 0
  %1021 = vmatprep.subr.bf16.mxu0 0
  %1022 = vmatpush1.bf16.msra.mxu0 0
  %1023 = vmatprep.subr.bf16.mxu0 0
  %1024 = vmatpush1.bf16.msra.mxu0 0
  %1025 = vmatprep.subr.bf16.mxu0 0
  %1026 = vmatpush1.bf16.msra.mxu0 0
  %1027 = vmatprep.subr.bf16.mxu0 0
  %1028 = vmatpush1.bf16.msra.mxu0 %v961
  %1029 = vmatprep.subr.bf16.mxu0 0
  %1030 = vmatpush2.bf16.msra.mxu0 0
  %1031 = vmatprep.subr.bf16.mxu0 0
  %1032 = vmatpush2.bf16.msra.mxu0 0
  %1033 = vmatprep.subr.bf16.mxu0 0
  %1034 = vmatpush2.bf16.msra.mxu0 0
  %1035 = vmatprep.subr.bf16.mxu0 0
  %1036 = vmatpush2.bf16.msra.mxu0 0
  %1037 = vmatprep.subr.bf16.mxu0 0
  %1038 = vmatpush2.bf16.msra.mxu0 0
  %1039 = vmatprep.subr.bf16.mxu0 0
  %1040 = vmatpush2.bf16.msra.mxu0 0
  %1041 = vmatprep.subr.bf16.mxu0 0
  %1042 = vmatpush2.bf16.msra.mxu0 0
  %1043 = vmatprep.subr.bf16.mxu0 0
  %1044 = vmatpush2.bf16.msra.mxu0 0
  %1045 = vmatprep.mubr.bf16.mxu0 0
  %1046 = vmatmul.mubr.bf16.gmra.mxu0 %v1011
  %v1047 = vpop.f32.mrf.mxu0
  %v1048 = vadd.f32 0.0, %v1047
  %v1049 = vpop.f32.mrf.mxu0
  %v1050 = vpop.f32.mrf.mxu0
  %v1051 = vpop.f32.mrf.mxu0
  %1052 = vdwg.mxu0
  %v1054 = vsel %vm184, %v1048, 0
  %1056 = vmatprep.subr.mxu0 0.0
  %1057 = vmatpush1.msra.mxu0 0.0
  %1058 = vmatprep.subr.mxu0 0.0
  %1059 = vmatpush1.msra.mxu0 0.0
  %1060 = vmatprep.subr.mxu0 0.0
  %1061 = vmatpush1.msra.mxu0 0.0
  %1062 = vmatprep.subr.mxu0 0.0
  %1063 = vmatpush1.msra.mxu0 0.0
  %1064 = vmatprep.subr.mxu0 0.0
  %1065 = vmatpush1.msra.mxu0 0.0
  %1066 = vmatprep.subr.mxu0 0.0
  %1067 = vmatpush1.msra.mxu0 0.0
  %1068 = vmatprep.subr.mxu0 0.0
  %1069 = vmatpush1.msra.mxu0 0.0
  %1070 = vmatprep.subr.mxu0 0.0
  %1071 = vmatpush1.msra.mxu0 0.0
  %1072 = vmatprep.subr.mxu0 0.0
  %1073 = vmatpush1.msra.mxu0 0.0
  %1074 = vmatprep.subr.mxu0 0.0
  %1075 = vmatpush1.msra.mxu0 0.0
  %1076 = vmatprep.subr.mxu0 0.0
  %1077 = vmatpush1.msra.mxu0 0.0
  %1078 = vmatprep.subr.mxu0 0.0
  %1079 = vmatpush1.msra.mxu0 0.0
  %1080 = vmatprep.subr.mxu0 0.0
  %1081 = vmatpush1.msra.mxu0 0.0
  %1082 = vmatprep.subr.mxu0 0.0
  %1083 = vmatpush1.msra.mxu0 0.0
  %1084 = vmatprep.subr.mxu0 0.0
  %1085 = vmatpush1.msra.mxu0 0.0
  %1086 = vmatprep.subr.mxu0 0.0
  %1087 = vmatpush1.msra.mxu0 %v1054
  %1088 = vmatprep.subr.mxu0 0.0
  %1089 = vmatpush2.msra.mxu0 0.0
  %1090 = vmatprep.subr.mxu0 0.0
  %1091 = vmatpush2.msra.mxu0 0.0
  %1092 = vmatprep.subr.mxu0 0.0
  %1093 = vmatpush2.msra.mxu0 0.0
  %1094 = vmatprep.subr.mxu0 0.0
  %1095 = vmatpush2.msra.mxu0 0.0
  %1096 = vmatprep.subr.mxu0 0.0
  %1097 = vmatpush2.msra.mxu0 0.0
  %1098 = vmatprep.subr.mxu0 0.0
  %1099 = vmatpush2.msra.mxu0 0.0
  %1100 = vmatprep.subr.mxu0 0.0
  %1101 = vmatpush2.msra.mxu0 0.0
  %1102 = vmatprep.subr.mxu0 0.0
  %1103 = vmatpush2.msra.mxu0 0.0
  %1104 = vmatprep.subr.mxu0 0.0
  %1105 = vmatpush2.msra.mxu0 0.0
  %1106 = vmatprep.subr.mxu0 0.0
  %1107 = vmatpush2.msra.mxu0 0.0
  %1108 = vmatprep.subr.mxu0 0.0
  %1109 = vmatpush2.msra.mxu0 0.0
  %1110 = vmatprep.subr.mxu0 0.0
  %1111 = vmatpush2.msra.mxu0 0.0
  %1112 = vmatprep.subr.mxu0 0.0
  %1113 = vmatpush2.msra.mxu0 0.0
  %1114 = vmatprep.subr.mxu0 0.0
  %1115 = vmatpush2.msra.mxu0 0.0
  %1116 = vmatprep.subr.mxu0 0.0
  %1117 = vmatpush2.msra.mxu0 0.0
  %1118 = vmatprep.subr.mxu0 0.0
  %1119 = vmatpush2.msra.mxu0 0.0
  %1120 = vmatprep.mubr.f32.mxu0 0.0
  %1121 = vmatmul.mubr.f32.gmra.mxu0 %v182
  %v1122 = vpop.f32.mrf.mxu0
  %v1123 = vadd.f32 0.0, %v1122
  %v1124 = vpop.f32.mrf.mxu0
  %1125 = vdwg.mxu0
  %v1127 = vsel %vm184, %v1002, 0
  %1129 = vmatprep.subr.mxu0 0.0
  %1130 = vmatpush1.msra.mxu0 0.0
  %1131 = vmatprep.subr.mxu0 0.0
  %1132 = vmatpush1.msra.mxu0 0.0
  %1133 = vmatprep.subr.mxu0 0.0
  %1134 = vmatpush1.msra.mxu0 0.0
  %1135 = vmatprep.subr.mxu0 0.0
  %1136 = vmatpush1.msra.mxu0 0.0
  %1137 = vmatprep.subr.mxu0 0.0
  %1138 = vmatpush1.msra.mxu0 0.0
  %1139 = vmatprep.subr.mxu0 0.0
  %1140 = vmatpush1.msra.mxu0 0.0
  %1141 = vmatprep.subr.mxu0 0.0
  %1142 = vmatpush1.msra.mxu0 0.0
  %1143 = vmatprep.subr.mxu0 0.0
  %1144 = vmatpush1.msra.mxu0 0.0
  %1145 = vmatprep.subr.mxu0 0.0
  %1146 = vmatpush1.msra.mxu0 0.0
  %1147 = vmatprep.subr.mxu0 0.0
  %1148 = vmatpush1.msra.mxu0 0.0
  %1149 = vmatprep.subr.mxu0 0.0
  %1150 = vmatpush1.msra.mxu0 0.0
  %1151 = vmatprep.subr.mxu0 0.0
  %1152 = vmatpush1.msra.mxu0 0.0
  %1153 = vmatprep.subr.mxu0 0.0
  %1154 = vmatpush1.msra.mxu0 0.0
  %1155 = vmatprep.subr.mxu0 0.0
  %1156 = vmatpush1.msra.mxu0 0.0
  %1157 = vmatprep.subr.mxu0 0.0
  %1158 = vmatpush1.msra.mxu0 0.0
  %1159 = vmatprep.subr.mxu0 0.0
  %1160 = vmatpush1.msra.mxu0 %v1127
  %1161 = vmatprep.subr.mxu0 0.0
  %1162 = vmatpush2.msra.mxu0 0.0
  %1163 = vmatprep.subr.mxu0 0.0
  %1164 = vmatpush2.msra.mxu0 0.0
  %1165 = vmatprep.subr.mxu0 0.0
  %1166 = vmatpush2.msra.mxu0 0.0
  %1167 = vmatprep.subr.mxu0 0.0
  %1168 = vmatpush2.msra.mxu0 0.0
  %1169 = vmatprep.subr.mxu0 0.0
  %1170 = vmatpush2.msra.mxu0 0.0
  %1171 = vmatprep.subr.mxu0 0.0
  %1172 = vmatpush2.msra.mxu0 0.0
  %1173 = vmatprep.subr.mxu0 0.0
  %1174 = vmatpush2.msra.mxu0 0.0
  %1175 = vmatprep.subr.mxu0 0.0
  %1176 = vmatpush2.msra.mxu0 0.0
  %1177 = vmatprep.subr.mxu0 0.0
  %1178 = vmatpush2.msra.mxu0 0.0
  %1179 = vmatprep.subr.mxu0 0.0
  %1180 = vmatpush2.msra.mxu0 0.0
  %1181 = vmatprep.subr.mxu0 0.0
  %1182 = vmatpush2.msra.mxu0 0.0
  %1183 = vmatprep.subr.mxu0 0.0
  %1184 = vmatpush2.msra.mxu0 0.0
  %1185 = vmatprep.subr.mxu0 0.0
  %1186 = vmatpush2.msra.mxu0 0.0
  %1187 = vmatprep.subr.mxu0 0.0
  %1188 = vmatpush2.msra.mxu0 0.0
  %1189 = vmatprep.subr.mxu0 0.0
  %1190 = vmatpush2.msra.mxu0 0.0
  %1191 = vmatprep.subr.mxu0 0.0
  %1192 = vmatpush2.msra.mxu0 0.0
  %1193 = vmatprep.mubr.f32.mxu0 0.0
  %1194 = vmatmul.mubr.f32.gmra.mxu0 %v182
  %v1195 = vpop.f32.mrf.mxu0
  %v1196 = vadd.f32 %v1123, %v1195
  %v1197 = vpop.f32.mrf.mxu0
  %1198 = vdwg.mxu0
  %v1199 = vmul.f32 %v1048, %v1048
  %v1201 = vsel %vm184, %v1199, 0
  %1203 = vmatprep.subr.mxu0 0.0
  %1204 = vmatpush1.msra.mxu0 0.0
  %1205 = vmatprep.subr.mxu0 0.0
  %1206 = vmatpush1.msra.mxu0 0.0
  %1207 = vmatprep.subr.mxu0 0.0
  %1208 = vmatpush1.msra.mxu0 0.0
  %1209 = vmatprep.subr.mxu0 0.0
  %1210 = vmatpush1.msra.mxu0 0.0
  %1211 = vmatprep.subr.mxu0 0.0
  %1212 = vmatpush1.msra.mxu0 0.0
  %1213 = vmatprep.subr.mxu0 0.0
  %1214 = vmatpush1.msra.mxu0 0.0
  %1215 = vmatprep.subr.mxu0 0.0
  %1216 = vmatpush1.msra.mxu0 0.0
  %1217 = vmatprep.subr.mxu0 0.0
  %1218 = vmatpush1.msra.mxu0 0.0
  %1219 = vmatprep.subr.mxu0 0.0
  %1220 = vmatpush1.msra.mxu0 0.0
  %1221 = vmatprep.subr.mxu0 0.0
  %1222 = vmatpush1.msra.mxu0 0.0
  %1223 = vmatprep.subr.mxu0 0.0
  %1224 = vmatpush1.msra.mxu0 0.0
  %1225 = vmatprep.subr.mxu0 0.0
  %1226 = vmatpush1.msra.mxu0 0.0
  %1227 = vmatprep.subr.mxu0 0.0
  %1228 = vmatpush1.msra.mxu0 0.0
  %1229 = vmatprep.subr.mxu0 0.0
  %1230 = vmatpush1.msra.mxu0 0.0
  %1231 = vmatprep.subr.mxu0 0.0
  %1232 = vmatpush1.msra.mxu0 0.0
  %1233 = vmatprep.subr.mxu0 0.0
  %1234 = vmatpush1.msra.mxu0 %v1201
  %1235 = vmatprep.subr.mxu0 0.0
  %1236 = vmatpush2.msra.mxu0 0.0
  %1237 = vmatprep.subr.mxu0 0.0
  %1238 = vmatpush2.msra.mxu0 0.0
  %1239 = vmatprep.subr.mxu0 0.0
  %1240 = vmatpush2.msra.mxu0 0.0
  %1241 = vmatprep.subr.mxu0 0.0
  %1242 = vmatpush2.msra.mxu0 0.0
  %1243 = vmatprep.subr.mxu0 0.0
  %1244 = vmatpush2.msra.mxu0 0.0
  %1245 = vmatprep.subr.mxu0 0.0
  %1246 = vmatpush2.msra.mxu0 0.0
  %1247 = vmatprep.subr.mxu0 0.0
  %1248 = vmatpush2.msra.mxu0 0.0
  %1249 = vmatprep.subr.mxu0 0.0
  %1250 = vmatpush2.msra.mxu0 0.0
  %1251 = vmatprep.subr.mxu0 0.0
  %1252 = vmatpush2.msra.mxu0 0.0
  %1253 = vmatprep.subr.mxu0 0.0
  %1254 = vmatpush2.msra.mxu0 0.0
  %1255 = vmatprep.subr.mxu0 0.0
  %1256 = vmatpush2.msra.mxu0 0.0
  %1257 = vmatprep.subr.mxu0 0.0
  %1258 = vmatpush2.msra.mxu0 0.0
  %1259 = vmatprep.subr.mxu0 0.0
  %1260 = vmatpush2.msra.mxu0 0.0
  %1261 = vmatprep.subr.mxu0 0.0
  %1262 = vmatpush2.msra.mxu0 0.0
  %1263 = vmatprep.subr.mxu0 0.0
  %1264 = vmatpush2.msra.mxu0 0.0
  %1265 = vmatprep.subr.mxu0 0.0
  %1266 = vmatpush2.msra.mxu0 0.0
  %1267 = vmatprep.mubr.f32.mxu0 0.0
  %1268 = vmatmul.mubr.f32.gmra.mxu0 %v182
  %v1269 = vpop.f32.mrf.mxu0
  %v1270 = vadd.f32 0.0, %v1269
  %v1271 = vpop.f32.mrf.mxu0
  %1272 = vdwg.mxu0
  %v1274 = vsel %vm184, %v1007, 0
  %1276 = vmatprep.subr.mxu0 0.0
  %1277 = vmatpush1.msra.mxu0 0.0
  %1278 = vmatprep.subr.mxu0 0.0
  %1279 = vmatpush1.msra.mxu0 0.0
  %1280 = vmatprep.subr.mxu0 0.0
  %1281 = vmatpush1.msra.mxu0 0.0
  %1282 = vmatprep.subr.mxu0 0.0
  %1283 = vmatpush1.msra.mxu0 0.0
  %1284 = vmatprep.subr.mxu0 0.0
  %1285 = vmatpush1.msra.mxu0 0.0
  %1286 = vmatprep.subr.mxu0 0.0
  %1287 = vmatpush1.msra.mxu0 0.0
  %1288 = vmatprep.subr.mxu0 0.0
  %1289 = vmatpush1.msra.mxu0 0.0
  %1290 = vmatprep.subr.mxu0 0.0
  %1291 = vmatpush1.msra.mxu0 0.0
  %1292 = vmatprep.subr.mxu0 0.0
  %1293 = vmatpush1.msra.mxu0 0.0
  %1294 = vmatprep.subr.mxu0 0.0
  %1295 = vmatpush1.msra.mxu0 0.0
  %1296 = vmatprep.subr.mxu0 0.0
  %1297 = vmatpush1.msra.mxu0 0.0
  %1298 = vmatprep.subr.mxu0 0.0
  %1299 = vmatpush1.msra.mxu0 0.0
  %1300 = vmatprep.subr.mxu0 0.0
  %1301 = vmatpush1.msra.mxu0 0.0
  %1302 = vmatprep.subr.mxu0 0.0
  %1303 = vmatpush1.msra.mxu0 0.0
  %1304 = vmatprep.subr.mxu0 0.0
  %1305 = vmatpush1.msra.mxu0 0.0
  %1306 = vmatprep.subr.mxu0 0.0
  %1307 = vmatpush1.msra.mxu0 %v1274
  %1308 = vmatprep.subr.mxu0 0.0
  %1309 = vmatpush2.msra.mxu0 0.0
  %1310 = vmatprep.subr.mxu0 0.0
  %1311 = vmatpush2.msra.mxu0 0.0
  %1312 = vmatprep.subr.mxu0 0.0
  %1313 = vmatpush2.msra.mxu0 0.0
  %1314 = vmatprep.subr.mxu0 0.0
  %1315 = vmatpush2.msra.mxu0 0.0
  %1316 = vmatprep.subr.mxu0 0.0
  %1317 = vmatpush2.msra.mxu0 0.0
  %1318 = vmatprep.subr.mxu0 0.0
  %1319 = vmatpush2.msra.mxu0 0.0
  %1320 = vmatprep.subr.mxu0 0.0
  %1321 = vmatpush2.msra.mxu0 0.0
  %1322 = vmatprep.subr.mxu0 0.0
  %1323 = vmatpush2.msra.mxu0 0.0
  %1324 = vmatprep.subr.mxu0 0.0
  %1325 = vmatpush2.msra.mxu0 0.0
  %1326 = vmatprep.subr.mxu0 0.0
  %1327 = vmatpush2.msra.mxu0 0.0
  %1328 = vmatprep.subr.mxu0 0.0
  %1329 = vmatpush2.msra.mxu0 0.0
  %1330 = vmatprep.subr.mxu0 0.0
  %1331 = vmatpush2.msra.mxu0 0.0
  %1332 = vmatprep.subr.mxu0 0.0
  %1333 = vmatpush2.msra.mxu0 0.0
  %1334 = vmatprep.subr.mxu0 0.0
  %1335 = vmatpush2.msra.mxu0 0.0
  %1336 = vmatprep.subr.mxu0 0.0
  %1337 = vmatpush2.msra.mxu0 0.0
  %1338 = vmatprep.subr.mxu0 0.0
  %1339 = vmatpush2.msra.mxu0 0.0
  %1340 = vmatprep.mubr.f32.mxu0 0.0
  %1341 = vmatmul.mubr.f32.gmra.mxu0 %v182
  %v1342 = vpop.f32.mrf.mxu0
  %v1343 = vadd.f32 %v1270, %v1342
  %v1344 = vpop.f32.mrf.mxu0
  %1345 = vdwg.mxu0
  %v1346 = vld [vmem:[%s8] sm:$0x1]
  %v1347 = vld [vmem:[%s9] sm:$0x1]
  %v1348 = vmul.f32 %v1196, %v480
  %v1349 = vmul.f32 %v1343, %v480
  %v1350 = vmul.f32 %v1348, %v1348
  %v1351 = vsub.f32 %v1349, %v1350
  %v1352 = vmax.f32 %v1351, 0.0
  %v1353 = vadd.f32 %v1352, 1e-05
  %v1354 = vrsqrt.pop %v1353
  %v1355 = vmul.f32 %v1346, %v1354
  %v1356 = vmul.f32 %v1348, %v1355
  %v1357 = vsub.f32 %v1347, %v1356
  %v1358 = vld [vmem:[#allocation2] sm:$0x7f]
  %v1360 = vlaneseq
  %v1361 = vshrl.u32 %v1360, 7
  %v1362 = vsub.s32 0, %v1361
  %v1363 = vrot.slane %v956, %v1362
  %v1365 = vmul.f32 %v1358, %v1363
  %v1367 = vlaneseq
  %v1368 = vshrl.u32 %v1367, 7
  %v1369 = vsub.s32 0, %v1368
  %v1370 = vrot.slane %v958, %v1369
  %v1372 = vadd.f32 %v1365, %v1370
  %v1374 = vlaneseq
  %v1375 = vshrl.u32 %v1374, 7
  %v1376 = vsub.s32 0, %v1375
  %v1377 = vrot.slane %v1355, %v1376
  %v1379 = vmul.f32 %v1002, %v1377
  %v1380 = vadd.f32 %v1372, %v1379
  %v1382 = vlaneseq
  %v1383 = vshrl.u32 %v1382, 7
  %v1384 = vsub.s32 0, %v1383
  %v1385 = vrot.slane %v1357, %v1384
  %v1387 = vadd.f32 %v1380, %v1385
  %v1388 = vmax.f32 %v1387, 0.0
  %1389 = vst.msk [vmem:[%s10] sm:$0x7f] %vm113, %v1388
  %v1390 = vld [vmem:[%s116] sm:$0x7f]
  %v1391 = vpack.c.bf16 %v1390, %v1390
  %v1393 = vsel %vm64, %v1391, 0
  %1395 = vmatprep.subr.bf16.mxu0 0
  %1396 = vmatpush1.bf16.msra.mxu0 0
  %1397 = vmatprep.subr.bf16.mxu0 0
  %1398 = vmatpush1.bf16.msra.mxu0 0
  %1399 = vmatprep.subr.bf16.mxu0 0
  %1400 = vmatpush1.bf16.msra.mxu0 0
  %1401 = vmatprep.subr.bf16.mxu0 0
  %1402 = vmatpush1.bf16.msra.mxu0 0
  %1403 = vmatprep.subr.bf16.mxu0 0
  %1404 = vmatpush1.bf16.msra.mxu0 0
  %1405 = vmatprep.subr.bf16.mxu0 0
  %1406 = vmatpush1.bf16.msra.mxu0 0
  %1407 = vmatprep.subr.bf16.mxu0 0
  %1408 = vmatpush1.bf16.msra.mxu0 0
  %1409 = vmatprep.subr.bf16.mxu0 0
  %1410 = vmatpush1.bf16.msra.mxu0 %v961
  %1411 = vmatprep.subr.bf16.mxu0 0
  %1412 = vmatpush2.bf16.msra.mxu0 0
  %1413 = vmatprep.subr.bf16.mxu0 0
  %1414 = vmatpush2.bf16.msra.mxu0 0
  %1415 = vmatprep.subr.bf16.mxu0 0
  %1416 = vmatpush2.bf16.msra.mxu0 0
  %1417 = vmatprep.subr.bf16.mxu0 0
  %1418 = vmatpush2.bf16.msra.mxu0 0
  %1419 = vmatprep.subr.bf16.mxu0 0
  %1420 = vmatpush2.bf16.msra.mxu0 0
  %1421 = vmatprep.subr.bf16.mxu0 0
  %1422 = vmatpush2.bf16.msra.mxu0 0
  %1423 = vmatprep.subr.bf16.mxu0 0
  %1424 = vmatpush2.bf16.msra.mxu0 0
  %1425 = vmatprep.subr.bf16.mxu0 0
  %1426 = vmatpush2.bf16.msra.mxu0 0
  %1427 = vmatprep.mubr.bf16.mxu0 0
  %1428 = vmatmul.mubr.bf16.gmra.mxu0 %v1393
  %v1429 = vpop.f32.mrf.mxu0
  %v1430 = vadd.f32 0.0, %v1429
  %v1431 = vpop.f32.mrf.mxu0
  %v1432 = vpop.f32.mrf.mxu0
  %v1433 = vpop.f32.mrf.mxu0
  %1434 = vdwg.mxu0
  %v1435 = vld [vmem:[%s178] sm:$0x7f]
  %v1436 = vmul.f32 %v1435, %v1363
  %v1437 = vadd.f32 %v1436, %v1370
  %v1438 = vmul.f32 %v1430, %v1377
  %v1439 = vadd.f32 %v1437, %v1438
  %v1440 = vadd.f32 %v1439, %v1385
  %v1441 = vmax.f32 %v1440, 0.0
  %s1442 = scalar_lea.vmem %s10, 8
  %1443 = vst.msk [vmem:[%s1442] sm:$0x7f] %vm113, %v1441
  // Predicated region
  $region42: #{resnet1d_forward.8} parent=0 // pred_check
    _
  $region43: #{resnet1d_forward.8} parent=0 // pred_check_branch
    %1445 = sbr.rel (0) target = $region45
  $region44: #{resnet1d_forward.8} parent=0 // pred_region
    _
  $region45: #{resnet1d_forward.8} parent=0 // pred_fallthru
    _
  // Predicated region
  $region46: #{resnet1d_forward.8} parent=0 // pred_check
    _
  $region47: #{resnet1d_forward.8} parent=0 // pred_check_branch
    %1447 = sbr.rel (0) target = $region49
  $region48: #{resnet1d_forward.8} parent=0 // pred_region
    _
  $region49: #{resnet1d_forward.8} parent=0 // pred_fallthru
    _

// kernel: resnet1d_forward.7
$region0: #{resnet1d_forward.7}
  #allocation0 [shape = 'u32[]', space=smem, size = 0x4, offset = 0x4, fixed_abs, tag = 'smem constant byte address 0x4 - core index']
  #allocation1 [shape = 'u32[144,128]{1,0:T(1,128)}', space=vmem, size = 0x12000, scoped, tag = 'internal scratch']
  #allocation2 [shape = 'f32[2,7,16]{2,1,0:T(8,128)}', space=vmem, size = 0x2000, scoped, tag = 'scratch operand']
  %s0 = inlined_call_operand.vmem [shape: f32[2,7,8], index: 0, kind: input, shape index: {}]
  %s1 = inlined_call_operand.vmem [shape: f32[24,16], index: 1, kind: input, shape index: {}]
  %s2 = inlined_call_operand.hbm [shape: f32[1,16], index: 2, kind: input, shape index: {}]
  %s3 = inlined_call_operand.hbm [shape: f32[1,16], index: 3, kind: input, shape index: {}]
  %s4 = inlined_call_operand.vmem [shape: f32[48,16], index: 4, kind: input, shape index: {}]
  %s5 = inlined_call_operand.hbm [shape: f32[1,16], index: 5, kind: input, shape index: {}]
  %s6 = inlined_call_operand.hbm [shape: f32[1,16], index: 6, kind: input, shape index: {}]
  %s7 = inlined_call_operand.vmem [shape: f32[8,16], index: 7, kind: input, shape index: {}]
  %s8 = inlined_call_operand.vmem [shape: f32[1,16], index: 8, kind: input, shape index: {}]
  %s9 = inlined_call_operand.hbm [shape: f32[1,16], index: 9, kind: input, shape index: {}]
  %s10 = inlined_call_operand.vmem [shape: f32[2,7,16], index: 10, kind: output, shape index: {}]
  %s11 = sld [smem:[#allocation0]]
  $region70: #{resnet1d_forward.7} parent=0
    _
  %s13 = ssub.s32 1, %s11
  %s14 = scalar_select 0, %s13, %s11
  $region1: #{resnet1d_forward.7} parent=0
    #allocation3 [shape = 'u8[512]{0}', space=vmem, size = 0x400, scoped, tag = 'input window, operand 2, single buffered']
    #allocation4 [shape = 's32[1]{0}', space=sflag, size = 0x4, scoped, tag = 'scoped memory for resnet1d_forward.7']
    #allocation5 [shape = 'u8[512]{0}', space=vmem, size = 0x400, scoped, tag = 'input window, operand 3, single buffered']
    #allocation6 [shape = 's32[1]{0}', space=sflag, size = 0x4, scoped, tag = 'scoped memory for resnet1d_forward.7']
    #allocation7 [shape = 'u8[512]{0}', space=vmem, size = 0x400, scoped, tag = 'input window, operand 5, single buffered']
    #allocation8 [shape = 'u8[512]{0}', space=vmem, size = 0x400, scoped, tag = 'input window, operand 6, single buffered']
    #allocation9 [shape = 's32[1]{0}', space=sflag, size = 0x4, scoped, tag = 'scoped memory for resnet1d_forward.7']
    #allocation10 [shape = 'u8[512]{0}', space=vmem, size = 0x400, scoped, tag = 'input window, operand 9, single buffered']
    %15 = vsyncpa [#allocation4], 0
    %16 = vsyncpa [#allocation6], 0
    %17 = vsyncpa [#allocation9], 0
    // Predicated region
    $region2: #{resnet1d_forward.7} parent=1 // pred_check
      _
    $region3: #{resnet1d_forward.7} parent=1 // pred_check_branch
      %19 = sbr.rel (0) target = $region5
    $region4: #{resnet1d_forward.7} parent=1 // pred_region
      _
    $region5: #{resnet1d_forward.7} parent=1 // pred_fallthru
      _
    // Predicated region
    $region6: #{resnet1d_forward.7} parent=1 // pred_check
      _
    $region7: #{resnet1d_forward.7} parent=1 // pred_check_branch
      %21 = sbr.rel (0) target = $region9
    $region8: #{resnet1d_forward.7} parent=1 // pred_region
      _
    $region9: #{resnet1d_forward.7} parent=1 // pred_fallthru
      _
    // Predicated region
    $region10: #{resnet1d_forward.7} parent=1 // pred_check
      _
    $region11: #{resnet1d_forward.7} parent=1 // pred_check_branch
      %23 = sbr.rel (0) target = $region13
    $region12: #{resnet1d_forward.7} parent=1 // pred_region
      %s25 = ssub.s32 16, 16
      %26 = vsyncadd [#allocation4], %s25
      %s28 = sshll.u32 [#allocation3], 4
      %s29 = int_to_ptr.vmem [resolvable:$true] %s28
      %31 = dma.hbm_to_vmem [thread:$0]  %s2, 16, %s29, [#allocation4]
    $region13: #{resnet1d_forward.7} parent=1 // pred_fallthru
      _
    // Predicated region
    $region14: #{resnet1d_forward.7} parent=1 // pred_check
      _
    $region15: #{resnet1d_forward.7} parent=1 // pred_check_branch
      %33 = sbr.rel (0) target = $region17
    $region16: #{resnet1d_forward.7} parent=1 // pred_region
      %s35 = ssub.s32 16, 16
      %36 = vsyncadd [#allocation6], %s35
      %s38 = sshll.u32 [#allocation5], 4
      %s39 = int_to_ptr.vmem [resolvable:$true] %s38
      %41 = dma.hbm_to_vmem [thread:$0]  %s3, 16, %s39, [#allocation6]
    $region17: #{resnet1d_forward.7} parent=1 // pred_fallthru
      _
    // Predicated region
    $region18: #{resnet1d_forward.7} parent=1 // pred_check
      _
    $region19: #{resnet1d_forward.7} parent=1 // pred_check_branch
      %43 = sbr.rel (0) target = $region21
    $region20: #{resnet1d_forward.7} parent=1 // pred_region
      _
    $region21: #{resnet1d_forward.7} parent=1 // pred_fallthru
      _
    // Predicated region
    $region22: #{resnet1d_forward.7} parent=1 // pred_check
      _
    $region23: #{resnet1d_forward.7} parent=1 // pred_check_branch
      %45 = sbr.rel (0) target = $region25
    $region24: #{resnet1d_forward.7} parent=1 // pred_region
      %s47 = ssub.s32 16, 16
      %48 = vsyncadd [#allocation6], %s47
      %s50 = sshll.u32 [#allocation7], 4
      %s51 = int_to_ptr.vmem [resolvable:$true] %s50
      %53 = dma.hbm_to_vmem [thread:$0]  %s5, 16, %s51, [#allocation6]
    $region25: #{resnet1d_forward.7} parent=1 // pred_fallthru
      _
    // Predicated region
    $region26: #{resnet1d_forward.7} parent=1 // pred_check
      _
    $region27: #{resnet1d_forward.7} parent=1 // pred_check_branch
      %55 = sbr.rel (0) target = $region29
    $region28: #{resnet1d_forward.7} parent=1 // pred_region
      %s57 = ssub.s32 16, 16
      %58 = vsyncadd [#allocation9], %s57
      %s60 = sshll.u32 [#allocation8], 4
      %s61 = int_to_ptr.vmem [resolvable:$true] %s60
      %63 = dma.hbm_to_vmem [thread:$0]  %s6, 16, %s61, [#allocation9]
    $region29: #{resnet1d_forward.7} parent=1 // pred_fallthru
      _
    // Predicated region
    $region30: #{resnet1d_forward.7} parent=1 // pred_check
      _
    $region31: #{resnet1d_forward.7} parent=1 // pred_check_branch
      %65 = sbr.rel (0) target = $region33
    $region32: #{resnet1d_forward.7} parent=1 // pred_region
      _
    $region33: #{resnet1d_forward.7} parent=1 // pred_fallthru
      _
    // Predicated region
    $region34: #{resnet1d_forward.7} parent=1 // pred_check
      _
    $region35: #{resnet1d_forward.7} parent=1 // pred_check_branch
      %67 = sbr.rel (0) target = $region37
    $region36: #{resnet1d_forward.7} parent=1 // pred_region
      _
    $region37: #{resnet1d_forward.7} parent=1 // pred_fallthru
      _
    // Predicated region
    $region38: #{resnet1d_forward.7} parent=1 // pred_check
      _
    $region39: #{resnet1d_forward.7} parent=1 // pred_check_branch
      %69 = sbr.rel (0) target = $region41
    $region40: #{resnet1d_forward.7} parent=1 // pred_region
      %s71 = ssub.s32 16, 16
      %72 = vsyncadd [#allocation9], %s71
      %s74 = sshll.u32 [#allocation10], 4
      %s75 = int_to_ptr.vmem [resolvable:$true] %s74
      %77 = dma.hbm_to_vmem [thread:$0]  %s9, 16, %s75, [#allocation9]
    $region41: #{resnet1d_forward.7} parent=1 // pred_fallthru
      _
    // Predicated region
    $region42: #{resnet1d_forward.7} parent=1 // pred_check
      _
    $region43: #{resnet1d_forward.7} parent=1 // pred_check_branch
      %79 = sbr.rel (0) target = $region45
    $region44: #{resnet1d_forward.7} parent=1 // pred_region
      %80 = dma.done [#allocation4], 16
    $region45: #{resnet1d_forward.7} parent=1 // pred_fallthru
      _
    // Predicated region
    $region46: #{resnet1d_forward.7} parent=1 // pred_check
      _
    $region47: #{resnet1d_forward.7} parent=1 // pred_check_branch
      %82 = sbr.rel (0) target = $region49
    $region48: #{resnet1d_forward.7} parent=1 // pred_region
      %83 = dma.done [#allocation6], 16
    $region49: #{resnet1d_forward.7} parent=1 // pred_fallthru
      _
    // Predicated region
    $region50: #{resnet1d_forward.7} parent=1 // pred_check
      _
    $region51: #{resnet1d_forward.7} parent=1 // pred_check_branch
      %85 = sbr.rel (0) target = $region53
    $region52: #{resnet1d_forward.7} parent=1 // pred_region
      %86 = dma.done [#allocation6], 16
    $region53: #{resnet1d_forward.7} parent=1 // pred_fallthru
      _
    // Predicated region
    $region54: #{resnet1d_forward.7} parent=1 // pred_check
      _
    $region55: #{resnet1d_forward.7} parent=1 // pred_check_branch
      %88 = sbr.rel (0) target = $region57
    $region56: #{resnet1d_forward.7} parent=1 // pred_region
      %89 = dma.done [#allocation9], 16
    $region57: #{resnet1d_forward.7} parent=1 // pred_fallthru
      _
    // Predicated region
    $region58: #{resnet1d_forward.7} parent=1 // pred_check
      _
    $region59: #{resnet1d_forward.7} parent=1 // pred_check_branch
      %91 = sbr.rel (0) target = $region61
    $region60: #{resnet1d_forward.7} parent=1 // pred_region
      %92 = dma.done [#allocation9], 16
    $region61: #{resnet1d_forward.7} parent=1 // pred_fallthru
      _
    %v94 = vld [vmem:[%s1] sm:$0xff]
    %v95 = vld [vmem:[%s1 + $0x8] sm:$0xff]
    %v96 = vld [vmem:[%s1 + $0x10] sm:$0xff]
    %v97 = vpack.c.bf16 %v95, %v94
    %v98 = vpack.c.bf16 %v96, %v96
    %v99 = vld [vmem:[%s0] sm:$0x7f]
    %v101 = vrot.slane %v99, 7
    %vm103 = vcmask 1040384
    %v104 = vsel %vm103, 0.0, %v101
    %v106 = vrot.slane %v104, 1
    %107 = vrot.lane.b32.xlu0 %v106, 8
    %v108 = vpop.permute.xlu0 %107
    %vm111 = vcmask 1045504
    %v112 = vrot.slane %v104, 2
    %v113 = vrot.slane 0.0, 2
    %v114 = vsel %vm111, %v112, %v113
    %115 = vrot.lane.b32.xlu0 %v114, 16
    %v116 = vpop.permute.xlu0 %115
    %vm118 = vcmask 64512
    %v119 = vsel %vm118, %v104, %v108
    %vm120 = vcmask 130048
    %v121 = vsel %vm120, %v119, %v116
    %v122 = vpack.c.bf16 %v121, %v121
    %vm123 = vcmask 195584
    %v125 = vsel %vm123, %v122, 0
    %vm127 = vcmask 1043456
    %v129 = vsel %vm127, %v98, 0
    %131 = vmatprep.subr.bf16.mxu0 0
    %132 = vmatpush1.bf16.msra.mxu0 0
    %133 = vmatprep.subr.bf16.mxu0 0
    %134 = vmatpush1.bf16.msra.mxu0 0
    %135 = vmatprep.subr.bf16.mxu0 0
    %136 = vmatpush1.bf16.msra.mxu0 0
    %137 = vmatprep.subr.bf16.mxu0 0
    %138 = vmatpush1.bf16.msra.mxu0 0
    %139 = vmatprep.subr.bf16.mxu0 0
    %140 = vmatpush1.bf16.msra.mxu0 0
    %141 = vmatprep.subr.bf16.mxu0 0
    %142 = vmatpush1.bf16.msra.mxu0 0
    %143 = vmatprep.subr.bf16.mxu0 0
    %144 = vmatpush1.bf16.msra.mxu0 %v129
    %145 = vmatprep.subr.bf16.mxu0 0
    %146 = vmatpush1.bf16.msra.mxu0 %v97
    %147 = vmatprep.subr.bf16.mxu0 0
    %148 = vmatpush2.bf16.msra.mxu0 0
    %149 = vmatprep.subr.bf16.mxu0 0
    %150 = vmatpush2.bf16.msra.mxu0 0
    %151 = vmatprep.subr.bf16.mxu0 0
    %152 = vmatpush2.bf16.msra.mxu0 0
    %153 = vmatprep.subr.bf16.mxu0 0
    %154 = vmatpush2.bf16.msra.mxu0 0
    %155 = vmatprep.subr.bf16.mxu0 0
    %156 = vmatpush2.bf16.msra.mxu0 0
    %157 = vmatprep.subr.bf16.mxu0 0
    %158 = vmatpush2.bf16.msra.mxu0 0
    %159 = vmatprep.subr.bf16.mxu0 0
    %160 = vmatpush2.bf16.msra.mxu0 0
    %161 = vmatprep.subr.bf16.mxu0 0
    %162 = vmatpush2.bf16.msra.mxu0 0
    %163 = vmatprep.mubr.bf16.mxu0 0
    %164 = vmatmul.mubr.bf16.gmra.mxu0 %v125
    %v165 = vpop.f32.mrf.mxu0
    %v166 = vadd.f32 0.0, %v165
    %v167 = vpop.f32.mrf.mxu0
    %v168 = vpop.f32.mrf.mxu0
    %v169 = vpop.f32.mrf.mxu0
    %170 = vdwg.mxu0
    %vm171 = vcmask 129024
    %172 = vst.msk [vmem:[#allocation2] sm:$0x7f] %vm171, %v166
    %v173 = vmul.f32 %v166, %v166
    %s174 = scalar_lea.vmem %s0, 8
    %v175 = vld [vmem:[%s174] sm:$0x7f]
    %v177 = vrot.slane %v175, 7
    %v179 = vsel %vm103, 0.0, %v177
    %v181 = vrot.slane %v179, 1
    %182 = vrot.lane.b32.xlu0 %v181, 8
    %v183 = vpop.permute.xlu0 %182
    %v185 = vrot.slane %v179, 2
    %v186 = vsel %vm111, %v185, %v113
    %187 = vrot.lane.b32.xlu0 %v186, 16
    %v188 = vpop.permute.xlu0 %187
    %v190 = vsel %vm118, %v179, %v183
    %v191 = vsel %vm120, %v190, %v188
    %v192 = vpack.c.bf16 %v191, %v191
    %v194 = vsel %vm123, %v192, 0
    %196 = vmatprep.subr.bf16.mxu0 0
    %197 = vmatpush1.bf16.msra.mxu0 0
    %198 = vmatprep.subr.bf16.mxu0 0
    %199 = vmatpush1.bf16.msra.mxu0 0
    %200 = vmatprep.subr.bf16.mxu0 0
    %201 = vmatpush1.bf16.msra.mxu0 0
    %202 = vmatprep.subr.bf16.mxu0 0
    %203 = vmatpush1.bf16.msra.mxu0 0
    %204 = vmatprep.subr.bf16.mxu0 0
    %205 = vmatpush1.bf16.msra.mxu0 0
    %206 = vmatprep.subr.bf16.mxu0 0
    %207 = vmatpush1.bf16.msra.mxu0 0
    %208 = vmatprep.subr.bf16.mxu0 0
    %209 = vmatpush1.bf16.msra.mxu0 %v129
    %210 = vmatprep.subr.bf16.mxu0 0
    %211 = vmatpush1.bf16.msra.mxu0 %v97
    %212 = vmatprep.subr.bf16.mxu0 0
    %213 = vmatpush2.bf16.msra.mxu0 0
    %214 = vmatprep.subr.bf16.mxu0 0
    %215 = vmatpush2.bf16.msra.mxu0 0
    %216 = vmatprep.subr.bf16.mxu0 0
    %217 = vmatpush2.bf16.msra.mxu0 0
    %218 = vmatprep.subr.bf16.mxu0 0
    %219 = vmatpush2.bf16.msra.mxu0 0
    %220 = vmatprep.subr.bf16.mxu0 0
    %221 = vmatpush2.bf16.msra.mxu0 0
    %222 = vmatprep.subr.bf16.mxu0 0
    %223 = vmatpush2.bf16.msra.mxu0 0
    %224 = vmatprep.subr.bf16.mxu0 0
    %225 = vmatpush2.bf16.msra.mxu0 0
    %226 = vmatprep.subr.bf16.mxu0 0
    %227 = vmatpush2.bf16.msra.mxu0 0
    %228 = vmatprep.mubr.bf16.mxu0 0
    %229 = vmatmul.mubr.bf16.gmra.mxu0 %v194
    %v230 = vpop.f32.mrf.mxu0
    %v231 = vadd.f32 0.0, %v230
    %v232 = vpop.f32.mrf.mxu0
    %v233 = vpop.f32.mrf.mxu0
    %v234 = vpop.f32.mrf.mxu0
    %235 = vdwg.mxu0
    %s236 = scalar_lea.vmem [#allocation2], 8
    %237 = vst.msk [vmem:[%s236] sm:$0x7f] %vm171, %v231
    %vm238 = vcmask 56320
    %v240 = vsel %vm238, 1.0, 0
    %vm242 = vcmask 1046528
    %v244 = vsel %vm242, %v231, 0
    %246 = vmatprep.subr.mxu0 0.0
    %247 = vmatpush1.msra.mxu0 0.0
    %248 = vmatprep.subr.mxu0 0.0
    %249 = vmatpush1.msra.mxu0 0.0
    %250 = vmatprep.subr.mxu0 0.0
    %251 = vmatpush1.msra.mxu0 0.0
    %252 = vmatprep.subr.mxu0 0.0
    %253 = vmatpush1.msra.mxu0 0.0
    %254 = vmatprep.subr.mxu0 0.0
    %255 = vmatpush1.msra.mxu0 0.0
    %256 = vmatprep.subr.mxu0 0.0
    %257 = vmatpush1.msra.mxu0 0.0
    %258 = vmatprep.subr.mxu0 0.0
    %259 = vmatpush1.msra.mxu0 0.0
    %260 = vmatprep.subr.mxu0 0.0
    %261 = vmatpush1.msra.mxu0 0.0
    %262 = vmatprep.subr.mxu0 0.0
    %263 = vmatpush1.msra.mxu0 0.0
    %264 = vmatprep.subr.mxu0 0.0
    %265 = vmatpush1.msra.mxu0 0.0
    %266 = vmatprep.subr.mxu0 0.0
    %267 = vmatpush1.msra.mxu0 0.0
    %268 = vmatprep.subr.mxu0 0.0
    %269 = vmatpush1.msra.mxu0 0.0
    %270 = vmatprep.subr.mxu0 0.0
    %271 = vmatpush1.msra.mxu0 0.0
    %272 = vmatprep.subr.mxu0 0.0
    %273 = vmatpush1.msra.mxu0 0.0
    %274 = vmatprep.subr.mxu0 0.0
    %275 = vmatpush1.msra.mxu0 0.0
    %276 = vmatprep.subr.mxu0 0.0
    %277 = vmatpush1.msra.mxu0 %v244
    %278 = vmatprep.subr.mxu0 0.0
    %279 = vmatpush2.msra.mxu0 0.0
    %280 = vmatprep.subr.mxu0 0.0
    %281 = vmatpush2.msra.mxu0 0.0
    %282 = vmatprep.subr.mxu0 0.0
    %283 = vmatpush2.msra.mxu0 0.0
    %284 = vmatprep.subr.mxu0 0.0
    %285 = vmatpush2.msra.mxu0 0.0
    %286 = vmatprep.subr.mxu0 0.0
    %287 = vmatpush2.msra.mxu0 0.0
    %288 = vmatprep.subr.mxu0 0.0
    %289 = vmatpush2.msra.mxu0 0.0
    %290 = vmatprep.subr.mxu0 0.0
    %291 = vmatpush2.msra.mxu0 0.0
    %292 = vmatprep.subr.mxu0 0.0
    %293 = vmatpush2.msra.mxu0 0.0
    %294 = vmatprep.subr.mxu0 0.0
    %295 = vmatpush2.msra.mxu0 0.0
    %296 = vmatprep.subr.mxu0 0.0
    %297 = vmatpush2.msra.mxu0 0.0
    %298 = vmatprep.subr.mxu0 0.0
    %299 = vmatpush2.msra.mxu0 0.0
    %300 = vmatprep.subr.mxu0 0.0
    %301 = vmatpush2.msra.mxu0 0.0
    %302 = vmatprep.subr.mxu0 0.0
    %303 = vmatpush2.msra.mxu0 0.0
    %304 = vmatprep.subr.mxu0 0.0
    %305 = vmatpush2.msra.mxu0 0.0
    %306 = vmatprep.subr.mxu0 0.0
    %307 = vmatpush2.msra.mxu0 0.0
    %308 = vmatprep.subr.mxu0 0.0
    %309 = vmatpush2.msra.mxu0 0.0
    %310 = vmatprep.mubr.f32.mxu0 0.0
    %311 = vmatmul.mubr.f32.gmra.mxu0 %v240
    %v312 = vpop.f32.mrf.mxu0
    %v313 = vadd.f32 0.0, %v312
    %v314 = vpop.f32.mrf.mxu0
    %315 = vdwg.mxu0
    %v317 = vsel %vm242, %v166, 0
    %319 = vmatprep.subr.mxu0 0.0
    %320 = vmatpush1.msra.mxu0 0.0
    %321 = vmatprep.subr.mxu0 0.0
    %322 = vmatpush1.msra.mxu0 0.0
    %323 = vmatprep.subr.mxu0 0.0
    %324 = vmatpush1.msra.mxu0 0.0
    %325 = vmatprep.subr.mxu0 0.0
    %326 = vmatpush1.msra.mxu0 0.0
    %327 = vmatprep.subr.mxu0 0.0
    %328 = vmatpush1.msra.mxu0 0.0
    %329 = vmatprep.subr.mxu0 0.0
    %330 = vmatpush1.msra.mxu0 0.0
    %331 = vmatprep.subr.mxu0 0.0
    %332 = vmatpush1.msra.mxu0 0.0
    %333 = vmatprep.subr.mxu0 0.0
    %334 = vmatpush1.msra.mxu0 0.0
    %335 = vmatprep.subr.mxu0 0.0
    %336 = vmatpush1.msra.mxu0 0.0
    %337 = vmatprep.subr.mxu0 0.0
    %338 = vmatpush1.msra.mxu0 0.0
    %339 = vmatprep.subr.mxu0 0.0
    %340 = vmatpush1.msra.mxu0 0.0
    %341 = vmatprep.subr.mxu0 0.0
    %342 = vmatpush1.msra.mxu0 0.0
    %343 = vmatprep.subr.mxu0 0.0
    %344 = vmatpush1.msra.mxu0 0.0
    %345 = vmatprep.subr.mxu0 0.0
    %346 = vmatpush1.msra.mxu0 0.0
    %347 = vmatprep.subr.mxu0 0.0
    %348 = vmatpush1.msra.mxu0 0.0
    %349 = vmatprep.subr.mxu0 0.0
    %350 = vmatpush1.msra.mxu0 %v317
    %351 = vmatprep.subr.mxu0 0.0
    %352 = vmatpush2.msra.mxu0 0.0
    %353 = vmatprep.subr.mxu0 0.0
    %354 = vmatpush2.msra.mxu0 0.0
    %355 = vmatprep.subr.mxu0 0.0
    %356 = vmatpush2.msra.mxu0 0.0
    %357 = vmatprep.subr.mxu0 0.0
    %358 = vmatpush2.msra.mxu0 0.0
    %359 = vmatprep.subr.mxu0 0.0
    %360 = vmatpush2.msra.mxu0 0.0
    %361 = vmatprep.subr.mxu0 0.0
    %362 = vmatpush2.msra.mxu0 0.0
    %363 = vmatprep.subr.mxu0 0.0
    %364 = vmatpush2.msra.mxu0 0.0
    %365 = vmatprep.subr.mxu0 0.0
    %366 = vmatpush2.msra.mxu0 0.0
    %367 = vmatprep.subr.mxu0 0.0
    %368 = vmatpush2.msra.mxu0 0.0
    %369 = vmatprep.subr.mxu0 0.0
    %370 = vmatpush2.msra.mxu0 0.0
    %371 = vmatprep.subr.mxu0 0.0
    %372 = vmatpush2.msra.mxu0 0.0
    %373 = vmatprep.subr.mxu0 0.0
    %374 = vmatpush2.msra.mxu0 0.0
    %375 = vmatprep.subr.mxu0 0.0
    %376 = vmatpush2.msra.mxu0 0.0
    %377 = vmatprep.subr.mxu0 0.0
    %378 = vmatpush2.msra.mxu0 0.0
    %379 = vmatprep.subr.mxu0 0.0
    %380 = vmatpush2.msra.mxu0 0.0
    %381 = vmatprep.subr.mxu0 0.0
    %382 = vmatpush2.msra.mxu0 0.0
    %383 = vmatprep.mubr.f32.mxu0 0.0
    %384 = vmatmul.mubr.f32.gmra.mxu0 %v240
    %v385 = vpop.f32.mrf.mxu0
    %v386 = vadd.f32 %v313, %v385
    %v387 = vpop.f32.mrf.mxu0
    %388 = vdwg.mxu0
    %v389 = vmul.f32 %v231, %v231
    %v391 = vsel %vm242, %v389, 0
    %393 = vmatprep.subr.mxu0 0.0
    %394 = vmatpush1.msra.mxu0 0.0
    %395 = vmatprep.subr.mxu0 0.0
    %396 = vmatpush1.msra.mxu0 0.0
    %397 = vmatprep.subr.mxu0 0.0
    %398 = vmatpush1.msra.mxu0 0.0
    %399 = vmatprep.subr.mxu0 0.0
    %400 = vmatpush1.msra.mxu0 0.0
    %401 = vmatprep.subr.mxu0 0.0
    %402 = vmatpush1.msra.mxu0 0.0
    %403 = vmatprep.subr.mxu0 0.0
    %404 = vmatpush1.msra.mxu0 0.0
    %405 = vmatprep.subr.mxu0 0.0
    %406 = vmatpush1.msra.mxu0 0.0
    %407 = vmatprep.subr.mxu0 0.0
    %408 = vmatpush1.msra.mxu0 0.0
    %409 = vmatprep.subr.mxu0 0.0
    %410 = vmatpush1.msra.mxu0 0.0
    %411 = vmatprep.subr.mxu0 0.0
    %412 = vmatpush1.msra.mxu0 0.0
    %413 = vmatprep.subr.mxu0 0.0
    %414 = vmatpush1.msra.mxu0 0.0
    %415 = vmatprep.subr.mxu0 0.0
    %416 = vmatpush1.msra.mxu0 0.0
    %417 = vmatprep.subr.mxu0 0.0
    %418 = vmatpush1.msra.mxu0 0.0
    %419 = vmatprep.subr.mxu0 0.0
    %420 = vmatpush1.msra.mxu0 0.0
    %421 = vmatprep.subr.mxu0 0.0
    %422 = vmatpush1.msra.mxu0 0.0
    %423 = vmatprep.subr.mxu0 0.0
    %424 = vmatpush1.msra.mxu0 %v391
    %425 = vmatprep.subr.mxu0 0.0
    %426 = vmatpush2.msra.mxu0 0.0
    %427 = vmatprep.subr.mxu0 0.0
    %428 = vmatpush2.msra.mxu0 0.0
    %429 = vmatprep.subr.mxu0 0.0
    %430 = vmatpush2.msra.mxu0 0.0
    %431 = vmatprep.subr.mxu0 0.0
    %432 = vmatpush2.msra.mxu0 0.0
    %433 = vmatprep.subr.mxu0 0.0
    %434 = vmatpush2.msra.mxu0 0.0
    %435 = vmatprep.subr.mxu0 0.0
    %436 = vmatpush2.msra.mxu0 0.0
    %437 = vmatprep.subr.mxu0 0.0
    %438 = vmatpush2.msra.mxu0 0.0
    %439 = vmatprep.subr.mxu0 0.0
    %440 = vmatpush2.msra.mxu0 0.0
    %441 = vmatprep.subr.mxu0 0.0
    %442 = vmatpush2.msra.mxu0 0.0
    %443 = vmatprep.subr.mxu0 0.0
    %444 = vmatpush2.msra.mxu0 0.0
    %445 = vmatprep.subr.mxu0 0.0
    %446 = vmatpush2.msra.mxu0 0.0
    %447 = vmatprep.subr.mxu0 0.0
    %448 = vmatpush2.msra.mxu0 0.0
    %449 = vmatprep.subr.mxu0 0.0
    %450 = vmatpush2.msra.mxu0 0.0
    %451 = vmatprep.subr.mxu0 0.0
    %452 = vmatpush2.msra.mxu0 0.0
    %453 = vmatprep.subr.mxu0 0.0
    %454 = vmatpush2.msra.mxu0 0.0
    %455 = vmatprep.subr.mxu0 0.0
    %456 = vmatpush2.msra.mxu0 0.0
    %457 = vmatprep.mubr.f32.mxu0 0.0
    %458 = vmatmul.mubr.f32.gmra.mxu0 %v240
    %v459 = vpop.f32.mrf.mxu0
    %v460 = vadd.f32 0.0, %v459
    %v461 = vpop.f32.mrf.mxu0
    %462 = vdwg.mxu0
    %v464 = vsel %vm242, %v173, 0
    %466 = vmatprep.subr.mxu0 0.0
    %467 = vmatpush1.msra.mxu0 0.0
    %468 = vmatprep.subr.mxu0 0.0
    %469 = vmatpush1.msra.mxu0 0.0
    %470 = vmatprep.subr.mxu0 0.0
    %471 = vmatpush1.msra.mxu0 0.0
    %472 = vmatprep.subr.mxu0 0.0
    %473 = vmatpush1.msra.mxu0 0.0
    %474 = vmatprep.subr.mxu0 0.0
    %475 = vmatpush1.msra.mxu0 0.0
    %476 = vmatprep.subr.mxu0 0.0
    %477 = vmatpush1.msra.mxu0 0.0
    %478 = vmatprep.subr.mxu0 0.0
    %479 = vmatpush1.msra.mxu0 0.0
    %480 = vmatprep.subr.mxu0 0.0
    %481 = vmatpush1.msra.mxu0 0.0
    %482 = vmatprep.subr.mxu0 0.0
    %483 = vmatpush1.msra.mxu0 0.0
    %484 = vmatprep.subr.mxu0 0.0
    %485 = vmatpush1.msra.mxu0 0.0
    %486 = vmatprep.subr.mxu0 0.0
    %487 = vmatpush1.msra.mxu0 0.0
    %488 = vmatprep.subr.mxu0 0.0
    %489 = vmatpush1.msra.mxu0 0.0
    %490 = vmatprep.subr.mxu0 0.0
    %491 = vmatpush1.msra.mxu0 0.0
    %492 = vmatprep.subr.mxu0 0.0
    %493 = vmatpush1.msra.mxu0 0.0
    %494 = vmatprep.subr.mxu0 0.0
    %495 = vmatpush1.msra.mxu0 0.0
    %496 = vmatprep.subr.mxu0 0.0
    %497 = vmatpush1.msra.mxu0 %v464
    %498 = vmatprep.subr.mxu0 0.0
    %499 = vmatpush2.msra.mxu0 0.0
    %500 = vmatprep.subr.mxu0 0.0
    %501 = vmatpush2.msra.mxu0 0.0
    %502 = vmatprep.subr.mxu0 0.0
    %503 = vmatpush2.msra.mxu0 0.0
    %504 = vmatprep.subr.mxu0 0.0
    %505 = vmatpush2.msra.mxu0 0.0
    %506 = vmatprep.subr.mxu0 0.0
    %507 = vmatpush2.msra.mxu0 0.0
    %508 = vmatprep.subr.mxu0 0.0
    %509 = vmatpush2.msra.mxu0 0.0
    %510 = vmatprep.subr.mxu0 0.0
    %511 = vmatpush2.msra.mxu0 0.0
    %512 = vmatprep.subr.mxu0 0.0
    %513 = vmatpush2.msra.mxu0 0.0
    %514 = vmatprep.subr.mxu0 0.0
    %515 = vmatpush2.msra.mxu0 0.0
    %516 = vmatprep.subr.mxu0 0.0
    %517 = vmatpush2.msra.mxu0 0.0
    %518 = vmatprep.subr.mxu0 0.0
    %519 = vmatpush2.msra.mxu0 0.0
    %520 = vmatprep.subr.mxu0 0.0
    %521 = vmatpush2.msra.mxu0 0.0
    %522 = vmatprep.subr.mxu0 0.0
    %523 = vmatpush2.msra.mxu0 0.0
    %524 = vmatprep.subr.mxu0 0.0
    %525 = vmatpush2.msra.mxu0 0.0
    %526 = vmatprep.subr.mxu0 0.0
    %527 = vmatpush2.msra.mxu0 0.0
    %528 = vmatprep.subr.mxu0 0.0
    %529 = vmatpush2.msra.mxu0 0.0
    %530 = vmatprep.mubr.f32.mxu0 0.0
    %531 = vmatmul.mubr.f32.gmra.mxu0 %v240
    %v532 = vpop.f32.mrf.mxu0
    %v533 = vadd.f32 %v460, %v532
    %v534 = vpop.f32.mrf.mxu0
    %535 = vdwg.mxu0
    %v536 = vld [vmem:[#allocation3] sm:$0x1]
    %v537 = vld [vmem:[#allocation5] sm:$0x1]
    %v538 = vrcp.pop 14.0
    %v539 = vmul.f32 %v386, %v538
    %v540 = vmul.f32 %v533, %v538
    %v541 = vmul.f32 %v539, %v539
    %v542 = vsub.f32 %v540, %v541
    %v543 = vmax.f32 %v542, 0.0
    %v544 = vadd.f32 %v543, 1e-05
    %v545 = vrsqrt.pop %v544
    %v546 = vmul.f32 %v536, %v545
    %v547 = vmul.f32 %v539, %v546
    %v548 = vsub.f32 %v537, %v547
    %v549 = vld [vmem:[%s4] sm:$0xff]
    %v550 = vld [vmem:[%s4 + $0x8] sm:$0xff]
    %v551 = vld [vmem:[%s4 + $0x10] sm:$0xff]
    %v552 = vld [vmem:[%s4 + $0x18] sm:$0xff]
    %v553 = vld [vmem:[%s4 + $0x20] sm:$0xff]
    %v554 = vld [vmem:[%s4 + $0x28] sm:$0xff]
    %v555 = vpack.c.bf16 %v550, %v549
    %v556 = vpack.c.bf16 %v552, %v551
    %v557 = vpack.c.bf16 %v554, %v553
    %v558 = vld [vmem:[#allocation2] sm:$0x7f]
    %v560 = vlaneseq
    %v561 = vshrl.u32 %v560, 7
    %v562 = vsub.s32 0, %v561
    %v563 = vrot.slane %v546, %v562
    %v565 = vmul.f32 %v558, %v563
    %v567 = vlaneseq
    %v568 = vshrl.u32 %v567, 7
    %v569 = vsub.s32 0, %v568
    %v570 = vrot.slane %v548, %v569
    %v572 = vadd.f32 %v565, %v570
    %v573 = vmax.f32 %v572, 0.0
    %v575 = vrot.slane %v573, 7
    %v577 = vsel %vm103, 0.0, %v575
    %v579 = vrot.slane %v577, 1
    %580 = vrot.lane.b32.xlu0 %v579, 16
    %v581 = vpop.permute.xlu0 %580
    %v583 = vrot.slane %v577, 2
    %v584 = vsel %vm111, %v583, %v113
    %585 = vrot.lane.b32.xlu0 %v584, 32
    %v586 = vpop.permute.xlu0 %585
    %v588 = vsel %vm120, %v577, %v581
    %vm589 = vcmask 261120
    %v590 = vsel %vm589, %v588, %v586
    %v591 = vpack.c.bf16 %v590, %v590
    %vm592 = vcmask 392192
    %v594 = vsel %vm592, %v591, 0
    %596 = vmatprep.subr.bf16.mxu0 0
    %597 = vmatpush1.bf16.msra.mxu0 0
    %598 = vmatprep.subr.bf16.mxu0 0
    %599 = vmatpush1.bf16.msra.mxu0 0
    %600 = vmatprep.subr.bf16.mxu0 0
    %601 = vmatpush1.bf16.msra.mxu0 0
    %602 = vmatprep.subr.bf16.mxu0 0
    %603 = vmatpush1.bf16.msra.mxu0 0
    %604 = vmatprep.subr.bf16.mxu0 0
    %605 = vmatpush1.bf16.msra.mxu0 0
    %606 = vmatprep.subr.bf16.mxu0 0
    %607 = vmatpush1.bf16.msra.mxu0 %v557
    %608 = vmatprep.subr.bf16.mxu0 0
    %609 = vmatpush1.bf16.msra.mxu0 %v556
    %610 = vmatprep.subr.bf16.mxu0 0
    %611 = vmatpush1.bf16.msra.mxu0 %v555
    %612 = vmatprep.subr.bf16.mxu0 0
    %613 = vmatpush2.bf16.msra.mxu0 0
    %614 = vmatprep.subr.bf16.mxu0 0
    %615 = vmatpush2.bf16.msra.mxu0 0
    %616 = vmatprep.subr.bf16.mxu0 0
    %617 = vmatpush2.bf16.msra.mxu0 0
    %618 = vmatprep.subr.bf16.mxu0 0
    %619 = vmatpush2.bf16.msra.mxu0 0
    %620 = vmatprep.subr.bf16.mxu0 0
    %621 = vmatpush2.bf16.msra.mxu0 0
    %622 = vmatprep.subr.bf16.mxu0 0
    %623 = vmatpush2.bf16.msra.mxu0 0
    %624 = vmatprep.subr.bf16.mxu0 0
    %625 = vmatpush2.bf16.msra.mxu0 0
    %626 = vmatprep.subr.bf16.mxu0 0
    %627 = vmatpush2.bf16.msra.mxu0 0
    %628 = vmatprep.mubr.bf16.mxu0 0
    %629 = vmatmul.mubr.bf16.gmra.mxu0 %v594
    %v630 = vpop.f32.mrf.mxu0
    %v631 = vadd.f32 0.0, %v630
    %v632 = vpop.f32.mrf.mxu0
    %v633 = vpop.f32.mrf.mxu0
    %v634 = vpop.f32.mrf.mxu0
    %635 = vdwg.mxu0
    %636 = vst.msk [vmem:[#allocation2] sm:$0x7f] %vm171, %v631
    %v637 = vmul.f32 %v631, %v631
    %v638 = vld [vmem:[%s236] sm:$0x7f]
    %v639 = vmul.f32 %v638, %v563
    %v640 = vadd.f32 %v639, %v570
    %v641 = vmax.f32 %v640, 0.0
    %v643 = vrot.slane %v641, 7
    %v645 = vsel %vm103, 0.0, %v643
    %v647 = vrot.slane %v645, 1
    %648 = vrot.lane.b32.xlu0 %v647, 16
    %v649 = vpop.permute.xlu0 %648
    %v651 = vrot.slane %v645, 2
    %v652 = vsel %vm111, %v651, %v113
    %653 = vrot.lane.b32.xlu0 %v652, 32
    %v654 = vpop.permute.xlu0 %653
    %v656 = vsel %vm120, %v645, %v649
    %v657 = vsel %vm589, %v656, %v654
    %v658 = vpack.c.bf16 %v657, %v657
    %v660 = vsel %vm592, %v658, 0
    %662 = vmatprep.subr.bf16.mxu0 0
    %663 = vmatpush1.bf16.msra.mxu0 0
    %664 = vmatprep.subr.bf16.mxu0 0
    %665 = vmatpush1.bf16.msra.mxu0 0
    %666 = vmatprep.subr.bf16.mxu0 0
    %667 = vmatpush1.bf16.msra.mxu0 0
    %668 = vmatprep.subr.bf16.mxu0 0
    %669 = vmatpush1.bf16.msra.mxu0 0
    %670 = vmatprep.subr.bf16.mxu0 0
    %671 = vmatpush1.bf16.msra.mxu0 0
    %672 = vmatprep.subr.bf16.mxu0 0
    %673 = vmatpush1.bf16.msra.mxu0 %v557
    %674 = vmatprep.subr.bf16.mxu0 0
    %675 = vmatpush1.bf16.msra.mxu0 %v556
    %676 = vmatprep.subr.bf16.mxu0 0
    %677 = vmatpush1.bf16.msra.mxu0 %v555
    %678 = vmatprep.subr.bf16.mxu0 0
    %679 = vmatpush2.bf16.msra.mxu0 0
    %680 = vmatprep.subr.bf16.mxu0 0
    %681 = vmatpush2.bf16.msra.mxu0 0
    %682 = vmatprep.subr.bf16.mxu0 0
    %683 = vmatpush2.bf16.msra.mxu0 0
    %684 = vmatprep.subr.bf16.mxu0 0
    %685 = vmatpush2.bf16.msra.mxu0 0
    %686 = vmatprep.subr.bf16.mxu0 0
    %687 = vmatpush2.bf16.msra.mxu0 0
    %688 = vmatprep.subr.bf16.mxu0 0
    %689 = vmatpush2.bf16.msra.mxu0 0
    %690 = vmatprep.subr.bf16.mxu0 0
    %691 = vmatpush2.bf16.msra.mxu0 0
    %692 = vmatprep.subr.bf16.mxu0 0
    %693 = vmatpush2.bf16.msra.mxu0 0
    %694 = vmatprep.mubr.bf16.mxu0 0
    %695 = vmatmul.mubr.bf16.gmra.mxu0 %v660
    %v696 = vpop.f32.mrf.mxu0
    %v697 = vadd.f32 0.0, %v696
    %v698 = vpop.f32.mrf.mxu0
    %v699 = vpop.f32.mrf.mxu0
    %v700 = vpop.f32.mrf.mxu0
    %701 = vdwg.mxu0
    %702 = vst.msk [vmem:[%s236] sm:$0x7f] %vm171, %v697
    %v704 = vsel %vm242, %v697, 0
    %706 = vmatprep.subr.mxu0 0.0
    %707 = vmatpush1.msra.mxu0 0.0
    %708 = vmatprep.subr.mxu0 0.0
    %709 = vmatpush1.msra.mxu0 0.0
    %710 = vmatprep.subr.mxu0 0.0
    %711 = vmatpush1.msra.mxu0 0.0
    %712 = vmatprep.subr.mxu0 0.0
    %713 = vmatpush1.msra.mxu0 0.0
    %714 = vmatprep.subr.mxu0 0.0
    %715 = vmatpush1.msra.mxu0 0.0
    %716 = vmatprep.subr.mxu0 0.0
    %717 = vmatpush1.msra.mxu0 0.0
    %718 = vmatprep.subr.mxu0 0.0
    %719 = vmatpush1.msra.mxu0 0.0
    %720 = vmatprep.subr.mxu0 0.0
    %721 = vmatpush1.msra.mxu0 0.0
    %722 = vmatprep.subr.mxu0 0.0
    %723 = vmatpush1.msra.mxu0 0.0
    %724 = vmatprep.subr.mxu0 0.0
    %725 = vmatpush1.msra.mxu0 0.0
    %726 = vmatprep.subr.mxu0 0.0
    %727 = vmatpush1.msra.mxu0 0.0
    %728 = vmatprep.subr.mxu0 0.0
    %729 = vmatpush1.msra.mxu0 0.0
    %730 = vmatprep.subr.mxu0 0.0
    %731 = vmatpush1.msra.mxu0 0.0
    %732 = vmatprep.subr.mxu0 0.0
    %733 = vmatpush1.msra.mxu0 0.0
    %734 = vmatprep.subr.mxu0 0.0
    %735 = vmatpush1.msra.mxu0 0.0
    %736 = vmatprep.subr.mxu0 0.0
    %737 = vmatpush1.msra.mxu0 %v704
    %738 = vmatprep.subr.mxu0 0.0
    %739 = vmatpush2.msra.mxu0 0.0
    %740 = vmatprep.subr.mxu0 0.0
    %741 = vmatpush2.msra.mxu0 0.0
    %742 = vmatprep.subr.mxu0 0.0
    %743 = vmatpush2.msra.mxu0 0.0
    %744 = vmatprep.subr.mxu0 0.0
    %745 = vmatpush2.msra.mxu0 0.0
    %746 = vmatprep.subr.mxu0 0.0
    %747 = vmatpush2.msra.mxu0 0.0
    %748 = vmatprep.subr.mxu0 0.0
    %749 = vmatpush2.msra.mxu0 0.0
    %750 = vmatprep.subr.mxu0 0.0
    %751 = vmatpush2.msra.mxu0 0.0
    %752 = vmatprep.subr.mxu0 0.0
    %753 = vmatpush2.msra.mxu0 0.0
    %754 = vmatprep.subr.mxu0 0.0
    %755 = vmatpush2.msra.mxu0 0.0
    %756 = vmatprep.subr.mxu0 0.0
    %757 = vmatpush2.msra.mxu0 0.0
    %758 = vmatprep.subr.mxu0 0.0
    %759 = vmatpush2.msra.mxu0 0.0
    %760 = vmatprep.subr.mxu0 0.0
    %761 = vmatpush2.msra.mxu0 0.0
    %762 = vmatprep.subr.mxu0 0.0
    %763 = vmatpush2.msra.mxu0 0.0
    %764 = vmatprep.subr.mxu0 0.0
    %765 = vmatpush2.msra.mxu0 0.0
    %766 = vmatprep.subr.mxu0 0.0
    %767 = vmatpush2.msra.mxu0 0.0
    %768 = vmatprep.subr.mxu0 0.0
    %769 = vmatpush2.msra.mxu0 0.0
    %770 = vmatprep.mubr.f32.mxu0 0.0
    %771 = vmatmul.mubr.f32.gmra.mxu0 %v240
    %v772 = vpop.f32.mrf.mxu0
    %v773 = vadd.f32 0.0, %v772
    %v774 = vpop.f32.mrf.mxu0
    %775 = vdwg.mxu0
    %v777 = vsel %vm242, %v631, 0
    %779 = vmatprep.subr.mxu0 0.0
    %780 = vmatpush1.msra.mxu0 0.0
    %781 = vmatprep.subr.mxu0 0.0
    %782 = vmatpush1.msra.mxu0 0.0
    %783 = vmatprep.subr.mxu0 0.0
    %784 = vmatpush1.msra.mxu0 0.0
    %785 = vmatprep.subr.mxu0 0.0
    %786 = vmatpush1.msra.mxu0 0.0
    %787 = vmatprep.subr.mxu0 0.0
    %788 = vmatpush1.msra.mxu0 0.0
    %789 = vmatprep.subr.mxu0 0.0
    %790 = vmatpush1.msra.mxu0 0.0
    %791 = vmatprep.subr.mxu0 0.0
    %792 = vmatpush1.msra.mxu0 0.0
    %793 = vmatprep.subr.mxu0 0.0
    %794 = vmatpush1.msra.mxu0 0.0
    %795 = vmatprep.subr.mxu0 0.0
    %796 = vmatpush1.msra.mxu0 0.0
    %797 = vmatprep.subr.mxu0 0.0
    %798 = vmatpush1.msra.mxu0 0.0
    %799 = vmatprep.subr.mxu0 0.0
    %800 = vmatpush1.msra.mxu0 0.0
    %801 = vmatprep.subr.mxu0 0.0
    %802 = vmatpush1.msra.mxu0 0.0
    %803 = vmatprep.subr.mxu0 0.0
    %804 = vmatpush1.msra.mxu0 0.0
    %805 = vmatprep.subr.mxu0 0.0
    %806 = vmatpush1.msra.mxu0 0.0
    %807 = vmatprep.subr.mxu0 0.0
    %808 = vmatpush1.msra.mxu0 0.0
    %809 = vmatprep.subr.mxu0 0.0
    %810 = vmatpush1.msra.mxu0 %v777
    %811 = vmatprep.subr.mxu0 0.0
    %812 = vmatpush2.msra.mxu0 0.0
    %813 = vmatprep.subr.mxu0 0.0
    %814 = vmatpush2.msra.mxu0 0.0
    %815 = vmatprep.subr.mxu0 0.0
    %816 = vmatpush2.msra.mxu0 0.0
    %817 = vmatprep.subr.mxu0 0.0
    %818 = vmatpush2.msra.mxu0 0.0
    %819 = vmatprep.subr.mxu0 0.0
    %820 = vmatpush2.msra.mxu0 0.0
    %821 = vmatprep.subr.mxu0 0.0
    %822 = vmatpush2.msra.mxu0 0.0
    %823 = vmatprep.subr.mxu0 0.0
    %824 = vmatpush2.msra.mxu0 0.0
    %825 = vmatprep.subr.mxu0 0.0
    %826 = vmatpush2.msra.mxu0 0.0
    %827 = vmatprep.subr.mxu0 0.0
    %828 = vmatpush2.msra.mxu0 0.0
    %829 = vmatprep.subr.mxu0 0.0
    %830 = vmatpush2.msra.mxu0 0.0
    %831 = vmatprep.subr.mxu0 0.0
    %832 = vmatpush2.msra.mxu0 0.0
    %833 = vmatprep.subr.mxu0 0.0
    %834 = vmatpush2.msra.mxu0 0.0
    %835 = vmatprep.subr.mxu0 0.0
    %836 = vmatpush2.msra.mxu0 0.0
    %837 = vmatprep.subr.mxu0 0.0
    %838 = vmatpush2.msra.mxu0 0.0
    %839 = vmatprep.subr.mxu0 0.0
    %840 = vmatpush2.msra.mxu0 0.0
    %841 = vmatprep.subr.mxu0 0.0
    %842 = vmatpush2.msra.mxu0 0.0
    %843 = vmatprep.mubr.f32.mxu0 0.0
    %844 = vmatmul.mubr.f32.gmra.mxu0 %v240
    %v845 = vpop.f32.mrf.mxu0
    %v846 = vadd.f32 %v773, %v845
    %v847 = vpop.f32.mrf.mxu0
    %848 = vdwg.mxu0
    %v849 = vmul.f32 %v697, %v697
    %v851 = vsel %vm242, %v849, 0
    %853 = vmatprep.subr.mxu0 0.0
    %854 = vmatpush1.msra.mxu0 0.0
    %855 = vmatprep.subr.mxu0 0.0
    %856 = vmatpush1.msra.mxu0 0.0
    %857 = vmatprep.subr.mxu0 0.0
    %858 = vmatpush1.msra.mxu0 0.0
    %859 = vmatprep.subr.mxu0 0.0
    %860 = vmatpush1.msra.mxu0 0.0
    %861 = vmatprep.subr.mxu0 0.0
    %862 = vmatpush1.msra.mxu0 0.0
    %863 = vmatprep.subr.mxu0 0.0
    %864 = vmatpush1.msra.mxu0 0.0
    %865 = vmatprep.subr.mxu0 0.0
    %866 = vmatpush1.msra.mxu0 0.0
    %867 = vmatprep.subr.mxu0 0.0
    %868 = vmatpush1.msra.mxu0 0.0
    %869 = vmatprep.subr.mxu0 0.0
    %870 = vmatpush1.msra.mxu0 0.0
    %871 = vmatprep.subr.mxu0 0.0
    %872 = vmatpush1.msra.mxu0 0.0
    %873 = vmatprep.subr.mxu0 0.0
    %874 = vmatpush1.msra.mxu0 0.0
    %875 = vmatprep.subr.mxu0 0.0
    %876 = vmatpush1.msra.mxu0 0.0
    %877 = vmatprep.subr.mxu0 0.0
    %878 = vmatpush1.msra.mxu0 0.0
    %879 = vmatprep.subr.mxu0 0.0
    %880 = vmatpush1.msra.mxu0 0.0
    %881 = vmatprep.subr.mxu0 0.0
    %882 = vmatpush1.msra.mxu0 0.0
    %883 = vmatprep.subr.mxu0 0.0
    %884 = vmatpush1.msra.mxu0 %v851
    %885 = vmatprep.subr.mxu0 0.0
    %886 = vmatpush2.msra.mxu0 0.0
    %887 = vmatprep.subr.mxu0 0.0
    %888 = vmatpush2.msra.mxu0 0.0
    %889 = vmatprep.subr.mxu0 0.0
    %890 = vmatpush2.msra.mxu0 0.0
    %891 = vmatprep.subr.mxu0 0.0
    %892 = vmatpush2.msra.mxu0 0.0
    %893 = vmatprep.subr.mxu0 0.0
    %894 = vmatpush2.msra.mxu0 0.0
    %895 = vmatprep.subr.mxu0 0.0
    %896 = vmatpush2.msra.mxu0 0.0
    %897 = vmatprep.subr.mxu0 0.0
    %898 = vmatpush2.msra.mxu0 0.0
    %899 = vmatprep.subr.mxu0 0.0
    %900 = vmatpush2.msra.mxu0 0.0
    %901 = vmatprep.subr.mxu0 0.0
    %902 = vmatpush2.msra.mxu0 0.0
    %903 = vmatprep.subr.mxu0 0.0
    %904 = vmatpush2.msra.mxu0 0.0
    %905 = vmatprep.subr.mxu0 0.0
    %906 = vmatpush2.msra.mxu0 0.0
    %907 = vmatprep.subr.mxu0 0.0
    %908 = vmatpush2.msra.mxu0 0.0
    %909 = vmatprep.subr.mxu0 0.0
    %910 = vmatpush2.msra.mxu0 0.0
    %911 = vmatprep.subr.mxu0 0.0
    %912 = vmatpush2.msra.mxu0 0.0
    %913 = vmatprep.subr.mxu0 0.0
    %914 = vmatpush2.msra.mxu0 0.0
    %915 = vmatprep.subr.mxu0 0.0
    %916 = vmatpush2.msra.mxu0 0.0
    %917 = vmatprep.mubr.f32.mxu0 0.0
    %918 = vmatmul.mubr.f32.gmra.mxu0 %v240
    %v919 = vpop.f32.mrf.mxu0
    %v920 = vadd.f32 0.0, %v919
    %v921 = vpop.f32.mrf.mxu0
    %922 = vdwg.mxu0
    %v924 = vsel %vm242, %v637, 0
    %926 = vmatprep.subr.mxu0 0.0
    %927 = vmatpush1.msra.mxu0 0.0
    %928 = vmatprep.subr.mxu0 0.0
    %929 = vmatpush1.msra.mxu0 0.0
    %930 = vmatprep.subr.mxu0 0.0
    %931 = vmatpush1.msra.mxu0 0.0
    %932 = vmatprep.subr.mxu0 0.0
    %933 = vmatpush1.msra.mxu0 0.0
    %934 = vmatprep.subr.mxu0 0.0
    %935 = vmatpush1.msra.mxu0 0.0
    %936 = vmatprep.subr.mxu0 0.0
    %937 = vmatpush1.msra.mxu0 0.0
    %938 = vmatprep.subr.mxu0 0.0
    %939 = vmatpush1.msra.mxu0 0.0
    %940 = vmatprep.subr.mxu0 0.0
    %941 = vmatpush1.msra.mxu0 0.0
    %942 = vmatprep.subr.mxu0 0.0
    %943 = vmatpush1.msra.mxu0 0.0
    %944 = vmatprep.subr.mxu0 0.0
    %945 = vmatpush1.msra.mxu0 0.0
    %946 = vmatprep.subr.mxu0 0.0
    %947 = vmatpush1.msra.mxu0 0.0
    %948 = vmatprep.subr.mxu0 0.0
    %949 = vmatpush1.msra.mxu0 0.0
    %950 = vmatprep.subr.mxu0 0.0
    %951 = vmatpush1.msra.mxu0 0.0
    %952 = vmatprep.subr.mxu0 0.0
    %953 = vmatpush1.msra.mxu0 0.0
    %954 = vmatprep.subr.mxu0 0.0
    %955 = vmatpush1.msra.mxu0 0.0
    %956 = vmatprep.subr.mxu0 0.0
    %957 = vmatpush1.msra.mxu0 %v924
    %958 = vmatprep.subr.mxu0 0.0
    %959 = vmatpush2.msra.mxu0 0.0
    %960 = vmatprep.subr.mxu0 0.0
    %961 = vmatpush2.msra.mxu0 0.0
    %962 = vmatprep.subr.mxu0 0.0
    %963 = vmatpush2.msra.mxu0 0.0
    %964 = vmatprep.subr.mxu0 0.0
    %965 = vmatpush2.msra.mxu0 0.0
    %966 = vmatprep.subr.mxu0 0.0
    %967 = vmatpush2.msra.mxu0 0.0
    %968 = vmatprep.subr.mxu0 0.0
    %969 = vmatpush2.msra.mxu0 0.0
    %970 = vmatprep.subr.mxu0 0.0
    %971 = vmatpush2.msra.mxu0 0.0
    %972 = vmatprep.subr.mxu0 0.0
    %973 = vmatpush2.msra.mxu0 0.0
    %974 = vmatprep.subr.mxu0 0.0
    %975 = vmatpush2.msra.mxu0 0.0
    %976 = vmatprep.subr.mxu0 0.0
    %977 = vmatpush2.msra.mxu0 0.0
    %978 = vmatprep.subr.mxu0 0.0
    %979 = vmatpush2.msra.mxu0 0.0
    %980 = vmatprep.subr.mxu0 0.0
    %981 = vmatpush2.msra.mxu0 0.0
    %982 = vmatprep.subr.mxu0 0.0
    %983 = vmatpush2.msra.mxu0 0.0
    %984 = vmatprep.subr.mxu0 0.0
    %985 = vmatpush2.msra.mxu0 0.0
    %986 = vmatprep.subr.mxu0 0.0
    %987 = vmatpush2.msra.mxu0 0.0
    %988 = vmatprep.subr.mxu0 0.0
    %989 = vmatpush2.msra.mxu0 0.0
    %990 = vmatprep.mubr.f32.mxu0 0.0
    %991 = vmatmul.mubr.f32.gmra.mxu0 %v240
    %v992 = vpop.f32.mrf.mxu0
    %v993 = vadd.f32 %v920, %v992
    %v994 = vpop.f32.mrf.mxu0
    %995 = vdwg.mxu0
    %v996 = vld [vmem:[#allocation7] sm:$0x1]
    %v997 = vld [vmem:[#allocation8] sm:$0x1]
    %v998 = vmul.f32 %v846, %v538
    %v999 = vmul.f32 %v993, %v538
    %v1000 = vmul.f32 %v998, %v998
    %v1001 = vsub.f32 %v999, %v1000
    %v1002 = vmax.f32 %v1001, 0.0
    %v1003 = vadd.f32 %v1002, 1e-05
    %v1004 = vrsqrt.pop %v1003
    %v1005 = vmul.f32 %v996, %v1004
    %v1006 = vmul.f32 %v998, %v1005
    %v1007 = vsub.f32 %v997, %v1006
    %v1008 = vld [vmem:[%s7] sm:$0xff]
    %v1009 = vpack.c.bf16 %v1008, %v1008
    %v1010 = vld [vmem:[%s0] sm:$0x7f]
    %v1011 = vpack.c.bf16 %v1010, %v1010
    %v1013 = vsel %vm118, %v1011, 0
    %v1016 = vsel %vm127, %v1009, 0
    %1018 = vmatprep.subr.bf16.mxu0 0
    %1019 = vmatpush1.bf16.msra.mxu0 0
    %1020 = vmatprep.subr.bf16.mxu0 0
    %1021 = vmatpush1.bf16.msra.mxu0 0
    %1022 = vmatprep.subr.bf16.mxu0 0
    %1023 = vmatpush1.bf16.msra.mxu0 0
    %1024 = vmatprep.subr.bf16.mxu0 0
    %1025 = vmatpush1.bf16.msra.mxu0 0
    %1026 = vmatprep.subr.bf16.mxu0 0
    %1027 = vmatpush1.bf16.msra.mxu0 0
    %1028 = vmatprep.subr.bf16.mxu0 0
    %1029 = vmatpush1.bf16.msra.mxu0 0
    %1030 = vmatprep.subr.bf16.mxu0 0
    %1031 = vmatpush1.bf16.msra.mxu0 0
    %1032 = vmatprep.subr.bf16.mxu0 0
    %1033 = vmatpush1.bf16.msra.mxu0 %v1016
    %1034 = vmatprep.subr.bf16.mxu0 0
    %1035 = vmatpush2.bf16.msra.mxu0 0
    %1036 = vmatprep.subr.bf16.mxu0 0
    %1037 = vmatpush2.bf16.msra.mxu0 0
    %1038 = vmatprep.subr.bf16.mxu0 0
    %1039 = vmatpush2.bf16.msra.mxu0 0
    %1040 = vmatprep.subr.bf16.mxu0 0
    %1041 = vmatpush2.bf16.msra.mxu0 0
    %1042 = vmatprep.subr.bf16.mxu0 0
    %1043 = vmatpush2.bf16.msra.mxu0 0
    %1044 = vmatprep.subr.bf16.mxu0 0
    %1045 = vmatpush2.bf16.msra.mxu0 0
    %1046 = vmatprep.subr.bf16.mxu0 0
    %1047 = vmatpush2.bf16.msra.mxu0 0
    %1048 = vmatprep.subr.bf16.mxu0 0
    %1049 = vmatpush2.bf16.msra.mxu0 0
    %1050 = vmatprep.mubr.bf16.mxu0 0
    %1051 = vmatmul.mubr.bf16.gmra.mxu0 %v1013
    %v1052 = vpop.f32.mrf.mxu0
    %v1053 = vadd.f32 0.0, %v1052
    %v1054 = vpop.f32.mrf.mxu0
    %v1055 = vpop.f32.mrf.mxu0
    %v1056 = vpop.f32.mrf.mxu0
    %1057 = vdwg.mxu0
    %v1058 = vmul.f32 %v1053, %v1053
    %v1059 = vld [vmem:[%s174] sm:$0x7f]
    %v1060 = vpack.c.bf16 %v1059, %v1059
    %v1062 = vsel %vm118, %v1060, 0
    %1064 = vmatprep.subr.bf16.mxu0 0
    %1065 = vmatpush1.bf16.msra.mxu0 0
    %1066 = vmatprep.subr.bf16.mxu0 0
    %1067 = vmatpush1.bf16.msra.mxu0 0
    %1068 = vmatprep.subr.bf16.mxu0 0
    %1069 = vmatpush1.bf16.msra.mxu0 0
    %1070 = vmatprep.subr.bf16.mxu0 0
    %1071 = vmatpush1.bf16.msra.mxu0 0
    %1072 = vmatprep.subr.bf16.mxu0 0
    %1073 = vmatpush1.bf16.msra.mxu0 0
    %1074 = vmatprep.subr.bf16.mxu0 0
    %1075 = vmatpush1.bf16.msra.mxu0 0
    %1076 = vmatprep.subr.bf16.mxu0 0
    %1077 = vmatpush1.bf16.msra.mxu0 0
    %1078 = vmatprep.subr.bf16.mxu0 0
    %1079 = vmatpush1.bf16.msra.mxu0 %v1016
    %1080 = vmatprep.subr.bf16.mxu0 0
    %1081 = vmatpush2.bf16.msra.mxu0 0
    %1082 = vmatprep.subr.bf16.mxu0 0
    %1083 = vmatpush2.bf16.msra.mxu0 0
    %1084 = vmatprep.subr.bf16.mxu0 0
    %1085 = vmatpush2.bf16.msra.mxu0 0
    %1086 = vmatprep.subr.bf16.mxu0 0
    %1087 = vmatpush2.bf16.msra.mxu0 0
    %1088 = vmatprep.subr.bf16.mxu0 0
    %1089 = vmatpush2.bf16.msra.mxu0 0
    %1090 = vmatprep.subr.bf16.mxu0 0
    %1091 = vmatpush2.bf16.msra.mxu0 0
    %1092 = vmatprep.subr.bf16.mxu0 0
    %1093 = vmatpush2.bf16.msra.mxu0 0
    %1094 = vmatprep.subr.bf16.mxu0 0
    %1095 = vmatpush2.bf16.msra.mxu0 0
    %1096 = vmatprep.mubr.bf16.mxu0 0
    %1097 = vmatmul.mubr.bf16.gmra.mxu0 %v1062
    %v1098 = vpop.f32.mrf.mxu0
    %v1099 = vadd.f32 0.0, %v1098
    %v1100 = vpop.f32.mrf.mxu0
    %v1101 = vpop.f32.mrf.mxu0
    %v1102 = vpop.f32.mrf.mxu0
    %1103 = vdwg.mxu0
    %v1105 = vsel %vm242, %v1099, 0
    %1107 = vmatprep.subr.mxu0 0.0
    %1108 = vmatpush1.msra.mxu0 0.0
    %1109 = vmatprep.subr.mxu0 0.0
    %1110 = vmatpush1.msra.mxu0 0.0
    %1111 = vmatprep.subr.mxu0 0.0
    %1112 = vmatpush1.msra.mxu0 0.0
    %1113 = vmatprep.subr.mxu0 0.0
    %1114 = vmatpush1.msra.mxu0 0.0
    %1115 = vmatprep.subr.mxu0 0.0
    %1116 = vmatpush1.msra.mxu0 0.0
    %1117 = vmatprep.subr.mxu0 0.0
    %1118 = vmatpush1.msra.mxu0 0.0
    %1119 = vmatprep.subr.mxu0 0.0
    %1120 = vmatpush1.msra.mxu0 0.0
    %1121 = vmatprep.subr.mxu0 0.0
    %1122 = vmatpush1.msra.mxu0 0.0
    %1123 = vmatprep.subr.mxu0 0.0
    %1124 = vmatpush1.msra.mxu0 0.0
    %1125 = vmatprep.subr.mxu0 0.0
    %1126 = vmatpush1.msra.mxu0 0.0
    %1127 = vmatprep.subr.mxu0 0.0
    %1128 = vmatpush1.msra.mxu0 0.0
    %1129 = vmatprep.subr.mxu0 0.0
    %1130 = vmatpush1.msra.mxu0 0.0
    %1131 = vmatprep.subr.mxu0 0.0
    %1132 = vmatpush1.msra.mxu0 0.0
    %1133 = vmatprep.subr.mxu0 0.0
    %1134 = vmatpush1.msra.mxu0 0.0
    %1135 = vmatprep.subr.mxu0 0.0
    %1136 = vmatpush1.msra.mxu0 0.0
    %1137 = vmatprep.subr.mxu0 0.0
    %1138 = vmatpush1.msra.mxu0 %v1105
    %1139 = vmatprep.subr.mxu0 0.0
    %1140 = vmatpush2.msra.mxu0 0.0
    %1141 = vmatprep.subr.mxu0 0.0
    %1142 = vmatpush2.msra.mxu0 0.0
    %1143 = vmatprep.subr.mxu0 0.0
    %1144 = vmatpush2.msra.mxu0 0.0
    %1145 = vmatprep.subr.mxu0 0.0
    %1146 = vmatpush2.msra.mxu0 0.0
    %1147 = vmatprep.subr.mxu0 0.0
    %1148 = vmatpush2.msra.mxu0 0.0
    %1149 = vmatprep.subr.mxu0 0.0
    %1150 = vmatpush2.msra.mxu0 0.0
    %1151 = vmatprep.subr.mxu0 0.0
    %1152 = vmatpush2.msra.mxu0 0.0
    %1153 = vmatprep.subr.mxu0 0.0
    %1154 = vmatpush2.msra.mxu0 0.0
    %1155 = vmatprep.subr.mxu0 0.0
    %1156 = vmatpush2.msra.mxu0 0.0
    %1157 = vmatprep.subr.mxu0 0.0
    %1158 = vmatpush2.msra.mxu0 0.0
    %1159 = vmatprep.subr.mxu0 0.0
    %1160 = vmatpush2.msra.mxu0 0.0
    %1161 = vmatprep.subr.mxu0 0.0
    %1162 = vmatpush2.msra.mxu0 0.0
    %1163 = vmatprep.subr.mxu0 0.0
    %1164 = vmatpush2.msra.mxu0 0.0
    %1165 = vmatprep.subr.mxu0 0.0
    %1166 = vmatpush2.msra.mxu0 0.0
    %1167 = vmatprep.subr.mxu0 0.0
    %1168 = vmatpush2.msra.mxu0 0.0
    %1169 = vmatprep.subr.mxu0 0.0
    %1170 = vmatpush2.msra.mxu0 0.0
    %1171 = vmatprep.mubr.f32.mxu0 0.0
    %1172 = vmatmul.mubr.f32.gmra.mxu0 %v240
    %v1173 = vpop.f32.mrf.mxu0
    %v1174 = vadd.f32 0.0, %v1173
    %v1175 = vpop.f32.mrf.mxu0
    %1176 = vdwg.mxu0
    %v1178 = vsel %vm242, %v1053, 0
    %1180 = vmatprep.subr.mxu0 0.0
    %1181 = vmatpush1.msra.mxu0 0.0
    %1182 = vmatprep.subr.mxu0 0.0
    %1183 = vmatpush1.msra.mxu0 0.0
    %1184 = vmatprep.subr.mxu0 0.0
    %1185 = vmatpush1.msra.mxu0 0.0
    %1186 = vmatprep.subr.mxu0 0.0
    %1187 = vmatpush1.msra.mxu0 0.0
    %1188 = vmatprep.subr.mxu0 0.0
    %1189 = vmatpush1.msra.mxu0 0.0
    %1190 = vmatprep.subr.mxu0 0.0
    %1191 = vmatpush1.msra.mxu0 0.0
    %1192 = vmatprep.subr.mxu0 0.0
    %1193 = vmatpush1.msra.mxu0 0.0
    %1194 = vmatprep.subr.mxu0 0.0
    %1195 = vmatpush1.msra.mxu0 0.0
    %1196 = vmatprep.subr.mxu0 0.0
    %1197 = vmatpush1.msra.mxu0 0.0
    %1198 = vmatprep.subr.mxu0 0.0
    %1199 = vmatpush1.msra.mxu0 0.0
    %1200 = vmatprep.subr.mxu0 0.0
    %1201 = vmatpush1.msra.mxu0 0.0
    %1202 = vmatprep.subr.mxu0 0.0
    %1203 = vmatpush1.msra.mxu0 0.0
    %1204 = vmatprep.subr.mxu0 0.0
    %1205 = vmatpush1.msra.mxu0 0.0
    %1206 = vmatprep.subr.mxu0 0.0
    %1207 = vmatpush1.msra.mxu0 0.0
    %1208 = vmatprep.subr.mxu0 0.0
    %1209 = vmatpush1.msra.mxu0 0.0
    %1210 = vmatprep.subr.mxu0 0.0
    %1211 = vmatpush1.msra.mxu0 %v1178
    %1212 = vmatprep.subr.mxu0 0.0
    %1213 = vmatpush2.msra.mxu0 0.0
    %1214 = vmatprep.subr.mxu0 0.0
    %1215 = vmatpush2.msra.mxu0 0.0
    %1216 = vmatprep.subr.mxu0 0.0
    %1217 = vmatpush2.msra.mxu0 0.0
    %1218 = vmatprep.subr.mxu0 0.0
    %1219 = vmatpush2.msra.mxu0 0.0
    %1220 = vmatprep.subr.mxu0 0.0
    %1221 = vmatpush2.msra.mxu0 0.0
    %1222 = vmatprep.subr.mxu0 0.0
    %1223 = vmatpush2.msra.mxu0 0.0
    %1224 = vmatprep.subr.mxu0 0.0
    %1225 = vmatpush2.msra.mxu0 0.0
    %1226 = vmatprep.subr.mxu0 0.0
    %1227 = vmatpush2.msra.mxu0 0.0
    %1228 = vmatprep.subr.mxu0 0.0
    %1229 = vmatpush2.msra.mxu0 0.0
    %1230 = vmatprep.subr.mxu0 0.0
    %1231 = vmatpush2.msra.mxu0 0.0
    %1232 = vmatprep.subr.mxu0 0.0
    %1233 = vmatpush2.msra.mxu0 0.0
    %1234 = vmatprep.subr.mxu0 0.0
    %1235 = vmatpush2.msra.mxu0 0.0
    %1236 = vmatprep.subr.mxu0 0.0
    %1237 = vmatpush2.msra.mxu0 0.0
    %1238 = vmatprep.subr.mxu0 0.0
    %1239 = vmatpush2.msra.mxu0 0.0
    %1240 = vmatprep.subr.mxu0 0.0
    %1241 = vmatpush2.msra.mxu0 0.0
    %1242 = vmatprep.subr.mxu0 0.0
    %1243 = vmatpush2.msra.mxu0 0.0
    %1244 = vmatprep.mubr.f32.mxu0 0.0
    %1245 = vmatmul.mubr.f32.gmra.mxu0 %v240
    %v1246 = vpop.f32.mrf.mxu0
    %v1247 = vadd.f32 %v1174, %v1246
    %v1248 = vpop.f32.mrf.mxu0
    %1249 = vdwg.mxu0
    %v1250 = vmul.f32 %v1099, %v1099
    %v1252 = vsel %vm242, %v1250, 0
    %1254 = vmatprep.subr.mxu0 0.0
    %1255 = vmatpush1.msra.mxu0 0.0
    %1256 = vmatprep.subr.mxu0 0.0
    %1257 = vmatpush1.msra.mxu0 0.0
    %1258 = vmatprep.subr.mxu0 0.0
    %1259 = vmatpush1.msra.mxu0 0.0
    %1260 = vmatprep.subr.mxu0 0.0
    %1261 = vmatpush1.msra.mxu0 0.0
    %1262 = vmatprep.subr.mxu0 0.0
    %1263 = vmatpush1.msra.mxu0 0.0
    %1264 = vmatprep.subr.mxu0 0.0
    %1265 = vmatpush1.msra.mxu0 0.0
    %1266 = vmatprep.subr.mxu0 0.0
    %1267 = vmatpush1.msra.mxu0 0.0
    %1268 = vmatprep.subr.mxu0 0.0
    %1269 = vmatpush1.msra.mxu0 0.0
    %1270 = vmatprep.subr.mxu0 0.0
    %1271 = vmatpush1.msra.mxu0 0.0
    %1272 = vmatprep.subr.mxu0 0.0
    %1273 = vmatpush1.msra.mxu0 0.0
    %1274 = vmatprep.subr.mxu0 0.0
    %1275 = vmatpush1.msra.mxu0 0.0
    %1276 = vmatprep.subr.mxu0 0.0
    %1277 = vmatpush1.msra.mxu0 0.0
    %1278 = vmatprep.subr.mxu0 0.0
    %1279 = vmatpush1.msra.mxu0 0.0
    %1280 = vmatprep.subr.mxu0 0.0
    %1281 = vmatpush1.msra.mxu0 0.0
    %1282 = vmatprep.subr.mxu0 0.0
    %1283 = vmatpush1.msra.mxu0 0.0
    %1284 = vmatprep.subr.mxu0 0.0
    %1285 = vmatpush1.msra.mxu0 %v1252
    %1286 = vmatprep.subr.mxu0 0.0
    %1287 = vmatpush2.msra.mxu0 0.0
    %1288 = vmatprep.subr.mxu0 0.0
    %1289 = vmatpush2.msra.mxu0 0.0
    %1290 = vmatprep.subr.mxu0 0.0
    %1291 = vmatpush2.msra.mxu0 0.0
    %1292 = vmatprep.subr.mxu0 0.0
    %1293 = vmatpush2.msra.mxu0 0.0
    %1294 = vmatprep.subr.mxu0 0.0
    %1295 = vmatpush2.msra.mxu0 0.0
    %1296 = vmatprep.subr.mxu0 0.0
    %1297 = vmatpush2.msra.mxu0 0.0
    %1298 = vmatprep.subr.mxu0 0.0
    %1299 = vmatpush2.msra.mxu0 0.0
    %1300 = vmatprep.subr.mxu0 0.0
    %1301 = vmatpush2.msra.mxu0 0.0
    %1302 = vmatprep.subr.mxu0 0.0
    %1303 = vmatpush2.msra.mxu0 0.0
    %1304 = vmatprep.subr.mxu0 0.0
    %1305 = vmatpush2.msra.mxu0 0.0
    %1306 = vmatprep.subr.mxu0 0.0
    %1307 = vmatpush2.msra.mxu0 0.0
    %1308 = vmatprep.subr.mxu0 0.0
    %1309 = vmatpush2.msra.mxu0 0.0
    %1310 = vmatprep.subr.mxu0 0.0
    %1311 = vmatpush2.msra.mxu0 0.0
    %1312 = vmatprep.subr.mxu0 0.0
    %1313 = vmatpush2.msra.mxu0 0.0
    %1314 = vmatprep.subr.mxu0 0.0
    %1315 = vmatpush2.msra.mxu0 0.0
    %1316 = vmatprep.subr.mxu0 0.0
    %1317 = vmatpush2.msra.mxu0 0.0
    %1318 = vmatprep.mubr.f32.mxu0 0.0
    %1319 = vmatmul.mubr.f32.gmra.mxu0 %v240
    %v1320 = vpop.f32.mrf.mxu0
    %v1321 = vadd.f32 0.0, %v1320
    %v1322 = vpop.f32.mrf.mxu0
    %1323 = vdwg.mxu0
    %v1325 = vsel %vm242, %v1058, 0
    %1327 = vmatprep.subr.mxu0 0.0
    %1328 = vmatpush1.msra.mxu0 0.0
    %1329 = vmatprep.subr.mxu0 0.0
    %1330 = vmatpush1.msra.mxu0 0.0
    %1331 = vmatprep.subr.mxu0 0.0
    %1332 = vmatpush1.msra.mxu0 0.0
    %1333 = vmatprep.subr.mxu0 0.0
    %1334 = vmatpush1.msra.mxu0 0.0
    %1335 = vmatprep.subr.mxu0 0.0
    %1336 = vmatpush1.msra.mxu0 0.0
    %1337 = vmatprep.subr.mxu0 0.0
    %1338 = vmatpush1.msra.mxu0 0.0
    %1339 = vmatprep.subr.mxu0 0.0
    %1340 = vmatpush1.msra.mxu0 0.0
    %1341 = vmatprep.subr.mxu0 0.0
    %1342 = vmatpush1.msra.mxu0 0.0
    %1343 = vmatprep.subr.mxu0 0.0
    %1344 = vmatpush1.msra.mxu0 0.0
    %1345 = vmatprep.subr.mxu0 0.0
    %1346 = vmatpush1.msra.mxu0 0.0
    %1347 = vmatprep.subr.mxu0 0.0
    %1348 = vmatpush1.msra.mxu0 0.0
    %1349 = vmatprep.subr.mxu0 0.0
    %1350 = vmatpush1.msra.mxu0 0.0
    %1351 = vmatprep.subr.mxu0 0.0
    %1352 = vmatpush1.msra.mxu0 0.0
    %1353 = vmatprep.subr.mxu0 0.0
    %1354 = vmatpush1.msra.mxu0 0.0
    %1355 = vmatprep.subr.mxu0 0.0
    %1356 = vmatpush1.msra.mxu0 0.0
    %1357 = vmatprep.subr.mxu0 0.0
    %1358 = vmatpush1.msra.mxu0 %v1325
    %1359 = vmatprep.subr.mxu0 0.0
    %1360 = vmatpush2.msra.mxu0 0.0
    %1361 = vmatprep.subr.mxu0 0.0
    %1362 = vmatpush2.msra.mxu0 0.0
    %1363 = vmatprep.subr.mxu0 0.0
    %1364 = vmatpush2.msra.mxu0 0.0
    %1365 = vmatprep.subr.mxu0 0.0
    %1366 = vmatpush2.msra.mxu0 0.0
    %1367 = vmatprep.subr.mxu0 0.0
    %1368 = vmatpush2.msra.mxu0 0.0
    %1369 = vmatprep.subr.mxu0 0.0
    %1370 = vmatpush2.msra.mxu0 0.0
    %1371 = vmatprep.subr.mxu0 0.0
    %1372 = vmatpush2.msra.mxu0 0.0
    %1373 = vmatprep.subr.mxu0 0.0
    %1374 = vmatpush2.msra.mxu0 0.0
    %1375 = vmatprep.subr.mxu0 0.0
    %1376 = vmatpush2.msra.mxu0 0.0
    %1377 = vmatprep.subr.mxu0 0.0
    %1378 = vmatpush2.msra.mxu0 0.0
    %1379 = vmatprep.subr.mxu0 0.0
    %1380 = vmatpush2.msra.mxu0 0.0
    %1381 = vmatprep.subr.mxu0 0.0
    %1382 = vmatpush2.msra.mxu0 0.0
    %1383 = vmatprep.subr.mxu0 0.0
    %1384 = vmatpush2.msra.mxu0 0.0
    %1385 = vmatprep.subr.mxu0 0.0
    %1386 = vmatpush2.msra.mxu0 0.0
    %1387 = vmatprep.subr.mxu0 0.0
    %1388 = vmatpush2.msra.mxu0 0.0
    %1389 = vmatprep.subr.mxu0 0.0
    %1390 = vmatpush2.msra.mxu0 0.0
    %1391 = vmatprep.mubr.f32.mxu0 0.0
    %1392 = vmatmul.mubr.f32.gmra.mxu0 %v240
    %v1393 = vpop.f32.mrf.mxu0
    %v1394 = vadd.f32 %v1321, %v1393
    %v1395 = vpop.f32.mrf.mxu0
    %1396 = vdwg.mxu0
    %v1397 = vld [vmem:[%s8] sm:$0x1]
    %v1398 = vld [vmem:[#allocation10] sm:$0x1]
    %v1399 = vmul.f32 %v1247, %v538
    %v1400 = vmul.f32 %v1394, %v538
    %v1401 = vmul.f32 %v1399, %v1399
    %v1402 = vsub.f32 %v1400, %v1401
    %v1403 = vmax.f32 %v1402, 0.0
    %v1404 = vadd.f32 %v1403, 1e-05
    %v1405 = vrsqrt.pop %v1404
    %v1406 = vmul.f32 %v1397, %v1405
    %v1407 = vmul.f32 %v1399, %v1406
    %v1408 = vsub.f32 %v1398, %v1407
    %v1409 = vld [vmem:[#allocation2] sm:$0x7f]
    %v1411 = vlaneseq
    %v1412 = vshrl.u32 %v1411, 7
    %v1413 = vsub.s32 0, %v1412
    %v1414 = vrot.slane %v1005, %v1413
    %v1416 = vmul.f32 %v1409, %v1414
    %v1418 = vlaneseq
    %v1419 = vshrl.u32 %v1418, 7
    %v1420 = vsub.s32 0, %v1419
    %v1421 = vrot.slane %v1007, %v1420
    %v1423 = vadd.f32 %v1416, %v1421
    %v1425 = vlaneseq
    %v1426 = vshrl.u32 %v1425, 7
    %v1427 = vsub.s32 0, %v1426
    %v1428 = vrot.slane %v1406, %v1427
    %v1430 = vmul.f32 %v1053, %v1428
    %v1431 = vadd.f32 %v1423, %v1430
    %v1433 = vlaneseq
    %v1434 = vshrl.u32 %v1433, 7
    %v1435 = vsub.s32 0, %v1434
    %v1436 = vrot.slane %v1408, %v1435
    %v1438 = vadd.f32 %v1431, %v1436
    %v1439 = vmax.f32 %v1438, 0.0
    %1440 = vst.msk [vmem:[%s10] sm:$0x7f] %vm171, %v1439
    %v1441 = vld [vmem:[%s174] sm:$0x7f]
    %v1442 = vpack.c.bf16 %v1441, %v1441
    %v1444 = vsel %vm118, %v1442, 0
    %1446 = vmatprep.subr.bf16.mxu0 0
    %1447 = vmatpush1.bf16.msra.mxu0 0
    %1448 = vmatprep.subr.bf16.mxu0 0
    %1449 = vmatpush1.bf16.msra.mxu0 0
    %1450 = vmatprep.subr.bf16.mxu0 0
    %1451 = vmatpush1.bf16.msra.mxu0 0
    %1452 = vmatprep.subr.bf16.mxu0 0
    %1453 = vmatpush1.bf16.msra.mxu0 0
    %1454 = vmatprep.subr.bf16.mxu0 0
    %1455 = vmatpush1.bf16.msra.mxu0 0
    %1456 = vmatprep.subr.bf16.mxu0 0
    %1457 = vmatpush1.bf16.msra.mxu0 0
    %1458 = vmatprep.subr.bf16.mxu0 0
    %1459 = vmatpush1.bf16.msra.mxu0 0
    %1460 = vmatprep.subr.bf16.mxu0 0
    %1461 = vmatpush1.bf16.msra.mxu0 %v1016
    %1462 = vmatprep.subr.bf16.mxu0 0
    %1463 = vmatpush2.bf16.msra.mxu0 0
    %1464 = vmatprep.subr.bf16.mxu0 0
    %1465 = vmatpush2.bf16.msra.mxu0 0
    %1466 = vmatprep.subr.bf16.mxu0 0
    %1467 = vmatpush2.bf16.msra.mxu0 0
    %1468 = vmatprep.subr.bf16.mxu0 0
    %1469 = vmatpush2.bf16.msra.mxu0 0
    %1470 = vmatprep.subr.bf16.mxu0 0
    %1471 = vmatpush2.bf16.msra.mxu0 0
    %1472 = vmatprep.subr.bf16.mxu0 0
    %1473 = vmatpush2.bf16.msra.mxu0 0
    %1474 = vmatprep.subr.bf16.mxu0 0
    %1475 = vmatpush2.bf16.msra.mxu0 0
    %1476 = vmatprep.subr.bf16.mxu0 0
    %1477 = vmatpush2.bf16.msra.mxu0 0
    %1478 = vmatprep.mubr.bf16.mxu0 0
    %1479 = vmatmul.mubr.bf16.gmra.mxu0 %v1444
    %v1480 = vpop.f32.mrf.mxu0
    %v1481 = vadd.f32 0.0, %v1480
    %v1482 = vpop.f32.mrf.mxu0
    %v1483 = vpop.f32.mrf.mxu0
    %v1484 = vpop.f32.mrf.mxu0
    %1485 = vdwg.mxu0
    %v1486 = vld [vmem:[%s236] sm:$0x7f]
    %v1487 = vmul.f32 %v1486, %v1414
    %v1488 = vadd.f32 %v1487, %v1421
    %v1489 = vmul.f32 %v1481, %v1428
    %v1490 = vadd.f32 %v1488, %v1489
    %v1491 = vadd.f32 %v1490, %v1436
    %v1492 = vmax.f32 %v1491, 0.0
    %s1493 = scalar_lea.vmem %s10, 8
    %1494 = vst.msk [vmem:[%s1493] sm:$0x7f] %vm171, %v1492
    // Predicated region
    $region62: #{resnet1d_forward.7} parent=1 // pred_check
      _
    $region63: #{resnet1d_forward.7} parent=1 // pred_check_branch
      %1496 = sbr.rel (0) target = $region65
    $region64: #{resnet1d_forward.7} parent=1 // pred_region
      _
    $region65: #{resnet1d_forward.7} parent=1 // pred_fallthru
      _
    // Predicated region
    $region66: #{resnet1d_forward.7} parent=1 // pred_check
      _
    $region67: #{resnet1d_forward.7} parent=1 // pred_check_branch
      %1498 = sbr.rel (0) target = $region69
    $region68: #{resnet1d_forward.7} parent=1 // pred_region
      _
    $region69: #{resnet1d_forward.7} parent=1 // pred_fallthru
      _
    %1499 = vsyncpa [#allocation4], 1
    %1500 = vsyncpa [#allocation6], 1
    %1501 = vsyncpa [#allocation9], 1

// kernel: resnet1d_forward.9
$region0: #{resnet1d_forward.9}
  #allocation0 [shape = 'u32[]', space=smem, size = 0x4, offset = 0x4, fixed_abs, tag = 'smem constant byte address 0x4 - core index']
  #allocation1 [shape = 'u32[144,128]{1,0:T(1,128)}', space=vmem, size = 0x12000, scoped, tag = 'internal scratch']
  #allocation2 [shape = 'f32[2,7,64]{2,1,0:T(8,128)}', space=vmem, size = 0x2000, scoped, tag = 'scratch operand']
  %s0 = inlined_call_operand.vmem [shape: f32[2,7,32], index: 0, kind: input, shape index: {}]
  %s1 = inlined_call_operand.vmem [shape: f32[96,64], index: 1, kind: input, shape index: {}]
  %s2 = inlined_call_operand.vmem [shape: f32[1,64], index: 2, kind: input, shape index: {}]
  %s3 = inlined_call_operand.vmem [shape: f32[1,64], index: 3, kind: input, shape index: {}]
  %s4 = inlined_call_operand.vmem [shape: f32[192,64], index: 4, kind: input, shape index: {}]
  %s5 = inlined_call_operand.vmem [shape: f32[1,64], index: 5, kind: input, shape index: {}]
  %s6 = inlined_call_operand.vmem [shape: f32[1,64], index: 6, kind: input, shape index: {}]
  %s7 = inlined_call_operand.vmem [shape: f32[32,64], index: 7, kind: input, shape index: {}]
  %s8 = inlined_call_operand.vmem [shape: f32[1,64], index: 8, kind: input, shape index: {}]
  %s9 = inlined_call_operand.vmem [shape: f32[1,64], index: 9, kind: input, shape index: {}]
  %s10 = inlined_call_operand.vmem [shape: f32[2,7,64], index: 10, kind: output, shape index: {}]
  %s11 = sld [smem:[#allocation0]]
  $region50: #{resnet1d_forward.9} parent=0
    _
  %s13 = ssub.s32 1, %s11
  %s14 = scalar_select 0, %s13, %s11
  // Predicated region
  $region2: #{resnet1d_forward.9} parent=0 // pred_check
    _
  $region3: #{resnet1d_forward.9} parent=0 // pred_check_branch
    %16 = sbr.rel (0) target = $region5
  $region4: #{resnet1d_forward.9} parent=0 // pred_region
    _
  $region5: #{resnet1d_forward.9} parent=0 // pred_fallthru
    _
  // Predicated region
  $region6: #{resnet1d_forward.9} parent=0 // pred_check
    _
  $region7: #{resnet1d_forward.9} parent=0 // pred_check_branch
    %18 = sbr.rel (0) target = $region9
  $region8: #{resnet1d_forward.9} parent=0 // pred_region
    _
  $region9: #{resnet1d_forward.9} parent=0 // pred_fallthru
    _
  // Predicated region
  $region10: #{resnet1d_forward.9} parent=0 // pred_check
    _
  $region11: #{resnet1d_forward.9} parent=0 // pred_check_branch
    %20 = sbr.rel (0) target = $region13
  $region12: #{resnet1d_forward.9} parent=0 // pred_region
    _
  $region13: #{resnet1d_forward.9} parent=0 // pred_fallthru
    _
  // Predicated region
  $region14: #{resnet1d_forward.9} parent=0 // pred_check
    _
  $region15: #{resnet1d_forward.9} parent=0 // pred_check_branch
    %22 = sbr.rel (0) target = $region17
  $region16: #{resnet1d_forward.9} parent=0 // pred_region
    _
  $region17: #{resnet1d_forward.9} parent=0 // pred_fallthru
    _
  // Predicated region
  $region18: #{resnet1d_forward.9} parent=0 // pred_check
    _
  $region19: #{resnet1d_forward.9} parent=0 // pred_check_branch
    %24 = sbr.rel (0) target = $region21
  $region20: #{resnet1d_forward.9} parent=0 // pred_region
    _
  $region21: #{resnet1d_forward.9} parent=0 // pred_fallthru
    _
  // Predicated region
  $region22: #{resnet1d_forward.9} parent=0 // pred_check
    _
  $region23: #{resnet1d_forward.9} parent=0 // pred_check_branch
    %26 = sbr.rel (0) target = $region25
  $region24: #{resnet1d_forward.9} parent=0 // pred_region
    _
  $region25: #{resnet1d_forward.9} parent=0 // pred_fallthru
    _
  // Predicated region
  $region26: #{resnet1d_forward.9} parent=0 // pred_check
    _
  $region27: #{resnet1d_forward.9} parent=0 // pred_check_branch
    %28 = sbr.rel (0) target = $region29
  $region28: #{resnet1d_forward.9} parent=0 // pred_region
    _
  $region29: #{resnet1d_forward.9} parent=0 // pred_fallthru
    _
  // Predicated region
  $region30: #{resnet1d_forward.9} parent=0 // pred_check
    _
  $region31: #{resnet1d_forward.9} parent=0 // pred_check_branch
    %30 = sbr.rel (0) target = $region33
  $region32: #{resnet1d_forward.9} parent=0 // pred_region
    _
  $region33: #{resnet1d_forward.9} parent=0 // pred_fallthru
    _
  // Predicated region
  $region34: #{resnet1d_forward.9} parent=0 // pred_check
    _
  $region35: #{resnet1d_forward.9} parent=0 // pred_check_branch
    %32 = sbr.rel (0) target = $region37
  $region36: #{resnet1d_forward.9} parent=0 // pred_region
    _
  $region37: #{resnet1d_forward.9} parent=0 // pred_fallthru
    _
  // Predicated region
  $region38: #{resnet1d_forward.9} parent=0 // pred_check
    _
  $region39: #{resnet1d_forward.9} parent=0 // pred_check_branch
    %34 = sbr.rel (0) target = $region41
  $region40: #{resnet1d_forward.9} parent=0 // pred_region
    _
  $region41: #{resnet1d_forward.9} parent=0 // pred_fallthru
    _
  %v36 = vld [vmem:[%s1] sm:$0xff]
  %v37 = vld [vmem:[%s1 + $0x8] sm:$0xff]
  %v38 = vld [vmem:[%s1 + $0x10] sm:$0xff]
  %v39 = vld [vmem:[%s1 + $0x18] sm:$0xff]
  %v40 = vld [vmem:[%s1 + $0x20] sm:$0xff]
  %v41 = vld [vmem:[%s1 + $0x28] sm:$0xff]
  %v42 = vld [vmem:[%s1 + $0x30] sm:$0xff]
  %v43 = vld [vmem:[%s1 + $0x38] sm:$0xff]
  %v44 = vld [vmem:[%s1 + $0x40] sm:$0xff]
  %v45 = vld [vmem:[%s1 + $0x48] sm:$0xff]
  %v46 = vld [vmem:[%s1 + $0x50] sm:$0xff]
  %v47 = vld [vmem:[%s1 + $0x58] sm:$0xff]
  %v48 = vpack.c.bf16 %v37, %v36
  %v49 = vpack.c.bf16 %v39, %v38
  %v50 = vpack.c.bf16 %v41, %v40
  %v51 = vpack.c.bf16 %v43, %v42
  %v52 = vpack.c.bf16 %v45, %v44
  %v53 = vpack.c.bf16 %v47, %v46
  %v54 = vld [vmem:[%s0] sm:$0x7f]
  %v56 = vrot.slane %v54, 7
  %vm58 = vcmask 1040384
  %v59 = vsel %vm58, 0.0, %v56
  %v61 = vrot.slane %v59, 1
  %62 = vrot.lane.b32.xlu0 %v61, 32
  %v63 = vpop.permute.xlu0 %62
  %vm66 = vcmask 1045504
  %v67 = vrot.slane %v59, 2
  %v68 = vrot.slane 0.0, 2
  %v69 = vsel %vm66, %v67, %v68
  %70 = vrot.lane.b32.xlu0 %v69, 64
  %v71 = vpop.permute.xlu0 %70
  %vm73 = vcmask 261120
  %v74 = vsel %vm73, %v59, %v63
  %vm75 = vcmask 523264
  %v76 = vsel %vm75, %v74, %v71
  %v77 = vpack.c.bf16 %v76, %v76
  %vm78 = vcmask 785408
  %v80 = vsel %vm78, %v77, 0
  %82 = vmatprep.subr.bf16.mxu0 0
  %83 = vmatpush1.bf16.msra.mxu0 0
  %84 = vmatprep.subr.bf16.mxu0 0
  %85 = vmatpush1.bf16.msra.mxu0 0
  %86 = vmatprep.subr.bf16.mxu0 0
  %87 = vmatpush1.bf16.msra.mxu0 %v53
  %88 = vmatprep.subr.bf16.mxu0 0
  %89 = vmatpush1.bf16.msra.mxu0 %v52
  %90 = vmatprep.subr.bf16.mxu0 0
  %91 = vmatpush1.bf16.msra.mxu0 %v51
  %92 = vmatprep.subr.bf16.mxu0 0
  %93 = vmatpush1.bf16.msra.mxu0 %v50
  %94 = vmatprep.subr.bf16.mxu0 0
  %95 = vmatpush1.bf16.msra.mxu0 %v49
  %96 = vmatprep.subr.bf16.mxu0 0
  %97 = vmatpush1.bf16.msra.mxu0 %v48
  %98 = vmatprep.subr.bf16.mxu0 0
  %99 = vmatpush2.bf16.msra.mxu0 0
  %100 = vmatprep.subr.bf16.mxu0 0
  %101 = vmatpush2.bf16.msra.mxu0 0
  %102 = vmatprep.subr.bf16.mxu0 0
  %103 = vmatpush2.bf16.msra.mxu0 0
  %104 = vmatprep.subr.bf16.mxu0 0
  %105 = vmatpush2.bf16.msra.mxu0 0
  %106 = vmatprep.subr.bf16.mxu0 0
  %107 = vmatpush2.bf16.msra.mxu0 0
  %108 = vmatprep.subr.bf16.mxu0 0
  %109 = vmatpush2.bf16.msra.mxu0 0
  %110 = vmatprep.subr.bf16.mxu0 0
  %111 = vmatpush2.bf16.msra.mxu0 0
  %112 = vmatprep.subr.bf16.mxu0 0
  %113 = vmatpush2.bf16.msra.mxu0 0
  %114 = vmatprep.mubr.bf16.mxu0 0
  %115 = vmatmul.mubr.bf16.gmra.mxu0 %v80
  %v116 = vpop.f32.mrf.mxu0
  %v117 = vadd.f32 0.0, %v116
  %v118 = vpop.f32.mrf.mxu0
  %v119 = vpop.f32.mrf.mxu0
  %v120 = vpop.f32.mrf.mxu0
  %121 = vdwg.mxu0
  %vm122 = vcmask 522240
  %123 = vst.msk [vmem:[#allocation2] sm:$0x7f] %vm122, %v117
  %v124 = vmul.f32 %v117, %v117
  %s125 = scalar_lea.vmem %s0, 8
  %v126 = vld [vmem:[%s125] sm:$0x7f]
  %v128 = vrot.slane %v126, 7
  %v130 = vsel %vm58, 0.0, %v128
  %v132 = vrot.slane %v130, 1
  %133 = vrot.lane.b32.xlu0 %v132, 32
  %v134 = vpop.permute.xlu0 %133
  %v136 = vrot.slane %v130, 2
  %v137 = vsel %vm66, %v136, %v68
  %138 = vrot.lane.b32.xlu0 %v137, 64
  %v139 = vpop.permute.xlu0 %138
  %v141 = vsel %vm73, %v130, %v134
  %v142 = vsel %vm75, %v141, %v139
  %v143 = vpack.c.bf16 %v142, %v142
  %v145 = vsel %vm78, %v143, 0
  %147 = vmatprep.subr.bf16.mxu0 0
  %148 = vmatpush1.bf16.msra.mxu0 0
  %149 = vmatprep.subr.bf16.mxu0 0
  %150 = vmatpush1.bf16.msra.mxu0 0
  %151 = vmatprep.subr.bf16.mxu0 0
  %152 = vmatpush1.bf16.msra.mxu0 %v53
  %153 = vmatprep.subr.bf16.mxu0 0
  %154 = vmatpush1.bf16.msra.mxu0 %v52
  %155 = vmatprep.subr.bf16.mxu0 0
  %156 = vmatpush1.bf16.msra.mxu0 %v51
  %157 = vmatprep.subr.bf16.mxu0 0
  %158 = vmatpush1.bf16.msra.mxu0 %v50
  %159 = vmatprep.subr.bf16.mxu0 0
  %160 = vmatpush1.bf16.msra.mxu0 %v49
  %161 = vmatprep.subr.bf16.mxu0 0
  %162 = vmatpush1.bf16.msra.mxu0 %v48
  %163 = vmatprep.subr.bf16.mxu0 0
  %164 = vmatpush2.bf16.msra.mxu0 0
  %165 = vmatprep.subr.bf16.mxu0 0
  %166 = vmatpush2.bf16.msra.mxu0 0
  %167 = vmatprep.subr.bf16.mxu0 0
  %168 = vmatpush2.bf16.msra.mxu0 0
  %169 = vmatprep.subr.bf16.mxu0 0
  %170 = vmatpush2.bf16.msra.mxu0 0
  %171 = vmatprep.subr.bf16.mxu0 0
  %172 = vmatpush2.bf16.msra.mxu0 0
  %173 = vmatprep.subr.bf16.mxu0 0
  %174 = vmatpush2.bf16.msra.mxu0 0
  %175 = vmatprep.subr.bf16.mxu0 0
  %176 = vmatpush2.bf16.msra.mxu0 0
  %177 = vmatprep.subr.bf16.mxu0 0
  %178 = vmatpush2.bf16.msra.mxu0 0
  %179 = vmatprep.mubr.bf16.mxu0 0
  %180 = vmatmul.mubr.bf16.gmra.mxu0 %v145
  %v181 = vpop.f32.mrf.mxu0
  %v182 = vadd.f32 0.0, %v181
  %v183 = vpop.f32.mrf.mxu0
  %v184 = vpop.f32.mrf.mxu0
  %v185 = vpop.f32.mrf.mxu0
  %186 = vdwg.mxu0
  %s187 = scalar_lea.vmem [#allocation2], 8
  %188 = vst.msk [vmem:[%s187] sm:$0x7f] %vm122, %v182
  %vm189 = vcmask 56320
  %v191 = vsel %vm189, 1.0, 0
  %vm193 = vcmask 1046528
  %v195 = vsel %vm193, %v182, 0
  %197 = vmatprep.subr.mxu0 0.0
  %198 = vmatpush1.msra.mxu0 0.0
  %199 = vmatprep.subr.mxu0 0.0
  %200 = vmatpush1.msra.mxu0 0.0
  %201 = vmatprep.subr.mxu0 0.0
  %202 = vmatpush1.msra.mxu0 0.0
  %203 = vmatprep.subr.mxu0 0.0
  %204 = vmatpush1.msra.mxu0 0.0
  %205 = vmatprep.subr.mxu0 0.0
  %206 = vmatpush1.msra.mxu0 0.0
  %207 = vmatprep.subr.mxu0 0.0
  %208 = vmatpush1.msra.mxu0 0.0
  %209 = vmatprep.subr.mxu0 0.0
  %210 = vmatpush1.msra.mxu0 0.0
  %211 = vmatprep.subr.mxu0 0.0
  %212 = vmatpush1.msra.mxu0 0.0
  %213 = vmatprep.subr.mxu0 0.0
  %214 = vmatpush1.msra.mxu0 0.0
  %215 = vmatprep.subr.mxu0 0.0
  %216 = vmatpush1.msra.mxu0 0.0
  %217 = vmatprep.subr.mxu0 0.0
  %218 = vmatpush1.msra.mxu0 0.0
  %219 = vmatprep.subr.mxu0 0.0
  %220 = vmatpush1.msra.mxu0 0.0
  %221 = vmatprep.subr.mxu0 0.0
  %222 = vmatpush1.msra.mxu0 0.0
  %223 = vmatprep.subr.mxu0 0.0
  %224 = vmatpush1.msra.mxu0 0.0
  %225 = vmatprep.subr.mxu0 0.0
  %226 = vmatpush1.msra.mxu0 0.0
  %227 = vmatprep.subr.mxu0 0.0
  %228 = vmatpush1.msra.mxu0 %v195
  %229 = vmatprep.subr.mxu0 0.0
  %230 = vmatpush2.msra.mxu0 0.0
  %231 = vmatprep.subr.mxu0 0.0
  %232 = vmatpush2.msra.mxu0 0.0
  %233 = vmatprep.subr.mxu0 0.0
  %234 = vmatpush2.msra.mxu0 0.0
  %235 = vmatprep.subr.mxu0 0.0
  %236 = vmatpush2.msra.mxu0 0.0
  %237 = vmatprep.subr.mxu0 0.0
  %238 = vmatpush2.msra.mxu0 0.0
  %239 = vmatprep.subr.mxu0 0.0
  %240 = vmatpush2.msra.mxu0 0.0
  %241 = vmatprep.subr.mxu0 0.0
  %242 = vmatpush2.msra.mxu0 0.0
  %243 = vmatprep.subr.mxu0 0.0
  %244 = vmatpush2.msra.mxu0 0.0
  %245 = vmatprep.subr.mxu0 0.0
  %246 = vmatpush2.msra.mxu0 0.0
  %247 = vmatprep.subr.mxu0 0.0
  %248 = vmatpush2.msra.mxu0 0.0
  %249 = vmatprep.subr.mxu0 0.0
  %250 = vmatpush2.msra.mxu0 0.0
  %251 = vmatprep.subr.mxu0 0.0
  %252 = vmatpush2.msra.mxu0 0.0
  %253 = vmatprep.subr.mxu0 0.0
  %254 = vmatpush2.msra.mxu0 0.0
  %255 = vmatprep.subr.mxu0 0.0
  %256 = vmatpush2.msra.mxu0 0.0
  %257 = vmatprep.subr.mxu0 0.0
  %258 = vmatpush2.msra.mxu0 0.0
  %259 = vmatprep.subr.mxu0 0.0
  %260 = vmatpush2.msra.mxu0 0.0
  %261 = vmatprep.mubr.f32.mxu0 0.0
  %262 = vmatmul.mubr.f32.gmra.mxu0 %v191
  %v263 = vpop.f32.mrf.mxu0
  %v264 = vadd.f32 0.0, %v263
  %v265 = vpop.f32.mrf.mxu0
  %266 = vdwg.mxu0
  %v268 = vsel %vm193, %v117, 0
  %270 = vmatprep.subr.mxu0 0.0
  %271 = vmatpush1.msra.mxu0 0.0
  %272 = vmatprep.subr.mxu0 0.0
  %273 = vmatpush1.msra.mxu0 0.0
  %274 = vmatprep.subr.mxu0 0.0
  %275 = vmatpush1.msra.mxu0 0.0
  %276 = vmatprep.subr.mxu0 0.0
  %277 = vmatpush1.msra.mxu0 0.0
  %278 = vmatprep.subr.mxu0 0.0
  %279 = vmatpush1.msra.mxu0 0.0
  %280 = vmatprep.subr.mxu0 0.0
  %281 = vmatpush1.msra.mxu0 0.0
  %282 = vmatprep.subr.mxu0 0.0
  %283 = vmatpush1.msra.mxu0 0.0
  %284 = vmatprep.subr.mxu0 0.0
  %285 = vmatpush1.msra.mxu0 0.0
  %286 = vmatprep.subr.mxu0 0.0
  %287 = vmatpush1.msra.mxu0 0.0
  %288 = vmatprep.subr.mxu0 0.0
  %289 = vmatpush1.msra.mxu0 0.0
  %290 = vmatprep.subr.mxu0 0.0
  %291 = vmatpush1.msra.mxu0 0.0
  %292 = vmatprep.subr.mxu0 0.0
  %293 = vmatpush1.msra.mxu0 0.0
  %294 = vmatprep.subr.mxu0 0.0
  %295 = vmatpush1.msra.mxu0 0.0
  %296 = vmatprep.subr.mxu0 0.0
  %297 = vmatpush1.msra.mxu0 0.0
  %298 = vmatprep.subr.mxu0 0.0
  %299 = vmatpush1.msra.mxu0 0.0
  %300 = vmatprep.subr.mxu0 0.0
  %301 = vmatpush1.msra.mxu0 %v268
  %302 = vmatprep.subr.mxu0 0.0
  %303 = vmatpush2.msra.mxu0 0.0
  %304 = vmatprep.subr.mxu0 0.0
  %305 = vmatpush2.msra.mxu0 0.0
  %306 = vmatprep.subr.mxu0 0.0
  %307 = vmatpush2.msra.mxu0 0.0
  %308 = vmatprep.subr.mxu0 0.0
  %309 = vmatpush2.msra.mxu0 0.0
  %310 = vmatprep.subr.mxu0 0.0
  %311 = vmatpush2.msra.mxu0 0.0
  %312 = vmatprep.subr.mxu0 0.0
  %313 = vmatpush2.msra.mxu0 0.0
  %314 = vmatprep.subr.mxu0 0.0
  %315 = vmatpush2.msra.mxu0 0.0
  %316 = vmatprep.subr.mxu0 0.0
  %317 = vmatpush2.msra.mxu0 0.0
  %318 = vmatprep.subr.mxu0 0.0
  %319 = vmatpush2.msra.mxu0 0.0
  %320 = vmatprep.subr.mxu0 0.0
  %321 = vmatpush2.msra.mxu0 0.0
  %322 = vmatprep.subr.mxu0 0.0
  %323 = vmatpush2.msra.mxu0 0.0
  %324 = vmatprep.subr.mxu0 0.0
  %325 = vmatpush2.msra.mxu0 0.0
  %326 = vmatprep.subr.mxu0 0.0
  %327 = vmatpush2.msra.mxu0 0.0
  %328 = vmatprep.subr.mxu0 0.0
  %329 = vmatpush2.msra.mxu0 0.0
  %330 = vmatprep.subr.mxu0 0.0
  %331 = vmatpush2.msra.mxu0 0.0
  %332 = vmatprep.subr.mxu0 0.0
  %333 = vmatpush2.msra.mxu0 0.0
  %334 = vmatprep.mubr.f32.mxu0 0.0
  %335 = vmatmul.mubr.f32.gmra.mxu0 %v191
  %v336 = vpop.f32.mrf.mxu0
  %v337 = vadd.f32 %v264, %v336
  %v338 = vpop.f32.mrf.mxu0
  %339 = vdwg.mxu0
  %v340 = vmul.f32 %v182, %v182
  %v342 = vsel %vm193, %v340, 0
  %344 = vmatprep.subr.mxu0 0.0
  %345 = vmatpush1.msra.mxu0 0.0
  %346 = vmatprep.subr.mxu0 0.0
  %347 = vmatpush1.msra.mxu0 0.0
  %348 = vmatprep.subr.mxu0 0.0
  %349 = vmatpush1.msra.mxu0 0.0
  %350 = vmatprep.subr.mxu0 0.0
  %351 = vmatpush1.msra.mxu0 0.0
  %352 = vmatprep.subr.mxu0 0.0
  %353 = vmatpush1.msra.mxu0 0.0
  %354 = vmatprep.subr.mxu0 0.0
  %355 = vmatpush1.msra.mxu0 0.0
  %356 = vmatprep.subr.mxu0 0.0
  %357 = vmatpush1.msra.mxu0 0.0
  %358 = vmatprep.subr.mxu0 0.0
  %359 = vmatpush1.msra.mxu0 0.0
  %360 = vmatprep.subr.mxu0 0.0
  %361 = vmatpush1.msra.mxu0 0.0
  %362 = vmatprep.subr.mxu0 0.0
  %363 = vmatpush1.msra.mxu0 0.0
  %364 = vmatprep.subr.mxu0 0.0
  %365 = vmatpush1.msra.mxu0 0.0
  %366 = vmatprep.subr.mxu0 0.0
  %367 = vmatpush1.msra.mxu0 0.0
  %368 = vmatprep.subr.mxu0 0.0
  %369 = vmatpush1.msra.mxu0 0.0
  %370 = vmatprep.subr.mxu0 0.0
  %371 = vmatpush1.msra.mxu0 0.0
  %372 = vmatprep.subr.mxu0 0.0
  %373 = vmatpush1.msra.mxu0 0.0
  %374 = vmatprep.subr.mxu0 0.0
  %375 = vmatpush1.msra.mxu0 %v342
  %376 = vmatprep.subr.mxu0 0.0
  %377 = vmatpush2.msra.mxu0 0.0
  %378 = vmatprep.subr.mxu0 0.0
  %379 = vmatpush2.msra.mxu0 0.0
  %380 = vmatprep.subr.mxu0 0.0
  %381 = vmatpush2.msra.mxu0 0.0
  %382 = vmatprep.subr.mxu0 0.0
  %383 = vmatpush2.msra.mxu0 0.0
  %384 = vmatprep.subr.mxu0 0.0
  %385 = vmatpush2.msra.mxu0 0.0
  %386 = vmatprep.subr.mxu0 0.0
  %387 = vmatpush2.msra.mxu0 0.0
  %388 = vmatprep.subr.mxu0 0.0
  %389 = vmatpush2.msra.mxu0 0.0
  %390 = vmatprep.subr.mxu0 0.0
  %391 = vmatpush2.msra.mxu0 0.0
  %392 = vmatprep.subr.mxu0 0.0
  %393 = vmatpush2.msra.mxu0 0.0
  %394 = vmatprep.subr.mxu0 0.0
  %395 = vmatpush2.msra.mxu0 0.0
  %396 = vmatprep.subr.mxu0 0.0
  %397 = vmatpush2.msra.mxu0 0.0
  %398 = vmatprep.subr.mxu0 0.0
  %399 = vmatpush2.msra.mxu0 0.0
  %400 = vmatprep.subr.mxu0 0.0
  %401 = vmatpush2.msra.mxu0 0.0
  %402 = vmatprep.subr.mxu0 0.0
  %403 = vmatpush2.msra.mxu0 0.0
  %404 = vmatprep.subr.mxu0 0.0
  %405 = vmatpush2.msra.mxu0 0.0
  %406 = vmatprep.subr.mxu0 0.0
  %407 = vmatpush2.msra.mxu0 0.0
  %408 = vmatprep.mubr.f32.mxu0 0.0
  %409 = vmatmul.mubr.f32.gmra.mxu0 %v191
  %v410 = vpop.f32.mrf.mxu0
  %v411 = vadd.f32 0.0, %v410
  %v412 = vpop.f32.mrf.mxu0
  %413 = vdwg.mxu0
  %v415 = vsel %vm193, %v124, 0
  %417 = vmatprep.subr.mxu0 0.0
  %418 = vmatpush1.msra.mxu0 0.0
  %419 = vmatprep.subr.mxu0 0.0
  %420 = vmatpush1.msra.mxu0 0.0
  %421 = vmatprep.subr.mxu0 0.0
  %422 = vmatpush1.msra.mxu0 0.0
  %423 = vmatprep.subr.mxu0 0.0
  %424 = vmatpush1.msra.mxu0 0.0
  %425 = vmatprep.subr.mxu0 0.0
  %426 = vmatpush1.msra.mxu0 0.0
  %427 = vmatprep.subr.mxu0 0.0
  %428 = vmatpush1.msra.mxu0 0.0
  %429 = vmatprep.subr.mxu0 0.0
  %430 = vmatpush1.msra.mxu0 0.0
  %431 = vmatprep.subr.mxu0 0.0
  %432 = vmatpush1.msra.mxu0 0.0
  %433 = vmatprep.subr.mxu0 0.0
  %434 = vmatpush1.msra.mxu0 0.0
  %435 = vmatprep.subr.mxu0 0.0
  %436 = vmatpush1.msra.mxu0 0.0
  %437 = vmatprep.subr.mxu0 0.0
  %438 = vmatpush1.msra.mxu0 0.0
  %439 = vmatprep.subr.mxu0 0.0
  %440 = vmatpush1.msra.mxu0 0.0
  %441 = vmatprep.subr.mxu0 0.0
  %442 = vmatpush1.msra.mxu0 0.0
  %443 = vmatprep.subr.mxu0 0.0
  %444 = vmatpush1.msra.mxu0 0.0
  %445 = vmatprep.subr.mxu0 0.0
  %446 = vmatpush1.msra.mxu0 0.0
  %447 = vmatprep.subr.mxu0 0.0
  %448 = vmatpush1.msra.mxu0 %v415
  %449 = vmatprep.subr.mxu0 0.0
  %450 = vmatpush2.msra.mxu0 0.0
  %451 = vmatprep.subr.mxu0 0.0
  %452 = vmatpush2.msra.mxu0 0.0
  %453 = vmatprep.subr.mxu0 0.0
  %454 = vmatpush2.msra.mxu0 0.0
  %455 = vmatprep.subr.mxu0 0.0
  %456 = vmatpush2.msra.mxu0 0.0
  %457 = vmatprep.subr.mxu0 0.0
  %458 = vmatpush2.msra.mxu0 0.0
  %459 = vmatprep.subr.mxu0 0.0
  %460 = vmatpush2.msra.mxu0 0.0
  %461 = vmatprep.subr.mxu0 0.0
  %462 = vmatpush2.msra.mxu0 0.0
  %463 = vmatprep.subr.mxu0 0.0
  %464 = vmatpush2.msra.mxu0 0.0
  %465 = vmatprep.subr.mxu0 0.0
  %466 = vmatpush2.msra.mxu0 0.0
  %467 = vmatprep.subr.mxu0 0.0
  %468 = vmatpush2.msra.mxu0 0.0
  %469 = vmatprep.subr.mxu0 0.0
  %470 = vmatpush2.msra.mxu0 0.0
  %471 = vmatprep.subr.mxu0 0.0
  %472 = vmatpush2.msra.mxu0 0.0
  %473 = vmatprep.subr.mxu0 0.0
  %474 = vmatpush2.msra.mxu0 0.0
  %475 = vmatprep.subr.mxu0 0.0
  %476 = vmatpush2.msra.mxu0 0.0
  %477 = vmatprep.subr.mxu0 0.0
  %478 = vmatpush2.msra.mxu0 0.0
  %479 = vmatprep.subr.mxu0 0.0
  %480 = vmatpush2.msra.mxu0 0.0
  %481 = vmatprep.mubr.f32.mxu0 0.0
  %482 = vmatmul.mubr.f32.gmra.mxu0 %v191
  %v483 = vpop.f32.mrf.mxu0
  %v484 = vadd.f32 %v411, %v483
  %v485 = vpop.f32.mrf.mxu0
  %486 = vdwg.mxu0
  %v487 = vld [vmem:[%s2] sm:$0x1]
  %v488 = vld [vmem:[%s3] sm:$0x1]
  %v489 = vrcp.pop 14.0
  %v490 = vmul.f32 %v337, %v489
  %v491 = vmul.f32 %v484, %v489
  %v492 = vmul.f32 %v490, %v490
  %v493 = vsub.f32 %v491, %v492
  %v494 = vmax.f32 %v493, 0.0
  %v495 = vadd.f32 %v494, 1e-05
  %v496 = vrsqrt.pop %v495
  %v497 = vmul.f32 %v487, %v496
  %v498 = vmul.f32 %v490, %v497
  %v499 = vsub.f32 %v488, %v498
  %v500 = vld [vmem:[%s4] sm:$0xff]
  %v501 = vld [vmem:[%s4 + $0x8] sm:$0xff]
  %v502 = vld [vmem:[%s4 + $0x10] sm:$0xff]
  %v503 = vld [vmem:[%s4 + $0x18] sm:$0xff]
  %v504 = vld [vmem:[%s4 + $0x20] sm:$0xff]
  %v505 = vld [vmem:[%s4 + $0x28] sm:$0xff]
  %v506 = vld [vmem:[%s4 + $0x30] sm:$0xff]
  %v507 = vld [vmem:[%s4 + $0x38] sm:$0xff]
  %v508 = vld [vmem:[%s4 + $0x40] sm:$0xff]
  %v509 = vld [vmem:[%s4 + $0x48] sm:$0xff]
  %v510 = vld [vmem:[%s4 + $0x50] sm:$0xff]
  %v511 = vld [vmem:[%s4 + $0x58] sm:$0xff]
  %v512 = vld [vmem:[%s4 + $0x60] sm:$0xff]
  %v513 = vld [vmem:[%s4 + $0x68] sm:$0xff]
  %v514 = vld [vmem:[%s4 + $0x70] sm:$0xff]
  %v515 = vld [vmem:[%s4 + $0x78] sm:$0xff]
  %v516 = vld [vmem:[%s4 + $0x80] sm:$0xff]
  %v517 = vld [vmem:[%s4 + $0x88] sm:$0xff]
  %v518 = vld [vmem:[%s4 + $0x90] sm:$0xff]
  %v519 = vld [vmem:[%s4 + $0x98] sm:$0xff]
  %v520 = vld [vmem:[%s4 + $0xa0] sm:$0xff]
  %v521 = vld [vmem:[%s4 + $0xa8] sm:$0xff]
  %v522 = vld [vmem:[%s4 + $0xb0] sm:$0xff]
  %v523 = vld [vmem:[%s4 + $0xb8] sm:$0xff]
  %v524 = vpack.c.bf16 %v501, %v500
  %v525 = vpack.c.bf16 %v503, %v502
  %v526 = vpack.c.bf16 %v505, %v504
  %v527 = vpack.c.bf16 %v507, %v506
  %v528 = vpack.c.bf16 %v509, %v508
  %v529 = vpack.c.bf16 %v511, %v510
  %v530 = vpack.c.bf16 %v513, %v512
  %v531 = vpack.c.bf16 %v515, %v514
  %v532 = vpack.c.bf16 %v517, %v516
  %v533 = vpack.c.bf16 %v519, %v518
  %v534 = vpack.c.bf16 %v521, %v520
  %v535 = vpack.c.bf16 %v523, %v522
  %v536 = vld [vmem:[#allocation2] sm:$0x7f]
  %v538 = vlaneseq
  %v539 = vshrl.u32 %v538, 7
  %v540 = vsub.s32 0, %v539
  %v541 = vrot.slane %v497, %v540
  %v543 = vmul.f32 %v536, %v541
  %v545 = vlaneseq
  %v546 = vshrl.u32 %v545, 7
  %v547 = vsub.s32 0, %v546
  %v548 = vrot.slane %v499, %v547
  %v550 = vadd.f32 %v543, %v548
  %v551 = vmax.f32 %v550, 0.0
  %v553 = vrot.slane %v551, 7
  %v555 = vsel %vm58, 0.0, %v553
  %v557 = vrot.slane %v555, 1
  %558 = vrot.lane.b32.xlu0 %v557, 64
  %v559 = vpop.permute.xlu0 %558
  %v561 = vrot.slane %v555, 2
  %v562 = vsel %vm66, %v561, %v68
  %v564 = vsel %vm75, %v555, %v559
  %v565 = vpack.c.bf16 %v564, %v564
  %v566 = vpack.c.bf16 %v562, %v562
  %v568 = vsel %vm75, %v566, 0
  %570 = vmatprep.subr.bf16.mxu0 0
  %571 = vmatpush1.bf16.msra.mxu0 %v531
  %572 = vmatprep.subr.bf16.mxu0 0
  %573 = vmatpush1.bf16.msra.mxu0 %v530
  %574 = vmatprep.subr.bf16.mxu0 0
  %575 = vmatpush1.bf16.msra.mxu0 %v529
  %576 = vmatprep.subr.bf16.mxu0 0
  %577 = vmatpush1.bf16.msra.mxu0 %v528
  %578 = vmatprep.subr.bf16.mxu0 0
  %579 = vmatpush1.bf16.msra.mxu0 %v527
  %580 = vmatprep.subr.bf16.mxu0 0
  %581 = vmatpush1.bf16.msra.mxu0 %v526
  %582 = vmatprep.subr.bf16.mxu0 0
  %583 = vmatpush1.bf16.msra.mxu0 %v525
  %584 = vmatprep.subr.bf16.mxu0 0
  %585 = vmatpush1.bf16.msra.mxu0 %v524
  %586 = vmatprep.subr.bf16.mxu0 0
  %587 = vmatpush2.bf16.msra.mxu0 0
  %588 = vmatprep.subr.bf16.mxu0 0
  %589 = vmatpush2.bf16.msra.mxu0 0
  %590 = vmatprep.subr.bf16.mxu0 0
  %591 = vmatpush2.bf16.msra.mxu0 0
  %592 = vmatprep.subr.bf16.mxu0 0
  %593 = vmatpush2.bf16.msra.mxu0 0
  %594 = vmatprep.subr.bf16.mxu0 0
  %595 = vmatpush2.bf16.msra.mxu0 %v535
  %596 = vmatprep.subr.bf16.mxu0 0
  %597 = vmatpush2.bf16.msra.mxu0 %v534
  %598 = vmatprep.subr.bf16.mxu0 0
  %599 = vmatpush2.bf16.msra.mxu0 %v533
  %600 = vmatprep.subr.bf16.mxu0 0
  %601 = vmatpush2.bf16.msra.mxu0 %v532
  %602 = vmatprep.mubr.bf16.mxu0 %v568
  %603 = vmatmul.mubr.bf16.gmra.mxu0 %v565
  %v604 = vpop.f32.mrf.mxu0
  %v605 = vadd.f32 0.0, %v604
  %v606 = vpop.f32.mrf.mxu0
  %v607 = vpop.f32.mrf.mxu0
  %v608 = vpop.f32.mrf.mxu0
  %609 = vdwg.mxu0
  %610 = vst.msk [vmem:[#allocation2] sm:$0x7f] %vm122, %v605
  %v611 = vmul.f32 %v605, %v605
  %v612 = vld [vmem:[%s187] sm:$0x7f]
  %v613 = vmul.f32 %v612, %v541
  %v614 = vadd.f32 %v613, %v548
  %v615 = vmax.f32 %v614, 0.0
  %v617 = vrot.slane %v615, 7
  %v619 = vsel %vm58, 0.0, %v617
  %v621 = vrot.slane %v619, 1
  %622 = vrot.lane.b32.xlu0 %v621, 64
  %v623 = vpop.permute.xlu0 %622
  %v625 = vrot.slane %v619, 2
  %v626 = vsel %vm66, %v625, %v68
  %v628 = vsel %vm75, %v619, %v623
  %v629 = vpack.c.bf16 %v628, %v628
  %v630 = vpack.c.bf16 %v626, %v626
  %v632 = vsel %vm75, %v630, 0
  %634 = vmatprep.subr.bf16.mxu0 0
  %635 = vmatpush1.bf16.msra.mxu0 %v531
  %636 = vmatprep.subr.bf16.mxu0 0
  %637 = vmatpush1.bf16.msra.mxu0 %v530
  %638 = vmatprep.subr.bf16.mxu0 0
  %639 = vmatpush1.bf16.msra.mxu0 %v529
  %640 = vmatprep.subr.bf16.mxu0 0
  %641 = vmatpush1.bf16.msra.mxu0 %v528
  %642 = vmatprep.subr.bf16.mxu0 0
  %643 = vmatpush1.bf16.msra.mxu0 %v527
  %644 = vmatprep.subr.bf16.mxu0 0
  %645 = vmatpush1.bf16.msra.mxu0 %v526
  %646 = vmatprep.subr.bf16.mxu0 0
  %647 = vmatpush1.bf16.msra.mxu0 %v525
  %648 = vmatprep.subr.bf16.mxu0 0
  %649 = vmatpush1.bf16.msra.mxu0 %v524
  %650 = vmatprep.subr.bf16.mxu0 0
  %651 = vmatpush2.bf16.msra.mxu0 0
  %652 = vmatprep.subr.bf16.mxu0 0
  %653 = vmatpush2.bf16.msra.mxu0 0
  %654 = vmatprep.subr.bf16.mxu0 0
  %655 = vmatpush2.bf16.msra.mxu0 0
  %656 = vmatprep.subr.bf16.mxu0 0
  %657 = vmatpush2.bf16.msra.mxu0 0
  %658 = vmatprep.subr.bf16.mxu0 0
  %659 = vmatpush2.bf16.msra.mxu0 %v535
  %660 = vmatprep.subr.bf16.mxu0 0
  %661 = vmatpush2.bf16.msra.mxu0 %v534
  %662 = vmatprep.subr.bf16.mxu0 0
  %663 = vmatpush2.bf16.msra.mxu0 %v533
  %664 = vmatprep.subr.bf16.mxu0 0
  %665 = vmatpush2.bf16.msra.mxu0 %v532
  %666 = vmatprep.mubr.bf16.mxu0 %v632
  %667 = vmatmul.mubr.bf16.gmra.mxu0 %v629
  %v668 = vpop.f32.mrf.mxu0
  %v669 = vadd.f32 0.0, %v668
  %v670 = vpop.f32.mrf.mxu0
  %v671 = vpop.f32.mrf.mxu0
  %v672 = vpop.f32.mrf.mxu0
  %673 = vdwg.mxu0
  %674 = vst.msk [vmem:[%s187] sm:$0x7f] %vm122, %v669
  %v676 = vsel %vm193, %v669, 0
  %678 = vmatprep.subr.mxu0 0.0
  %679 = vmatpush1.msra.mxu0 0.0
  %680 = vmatprep.subr.mxu0 0.0
  %681 = vmatpush1.msra.mxu0 0.0
  %682 = vmatprep.subr.mxu0 0.0
  %683 = vmatpush1.msra.mxu0 0.0
  %684 = vmatprep.subr.mxu0 0.0
  %685 = vmatpush1.msra.mxu0 0.0
  %686 = vmatprep.subr.mxu0 0.0
  %687 = vmatpush1.msra.mxu0 0.0
  %688 = vmatprep.subr.mxu0 0.0
  %689 = vmatpush1.msra.mxu0 0.0
  %690 = vmatprep.subr.mxu0 0.0
  %691 = vmatpush1.msra.mxu0 0.0
  %692 = vmatprep.subr.mxu0 0.0
  %693 = vmatpush1.msra.mxu0 0.0
  %694 = vmatprep.subr.mxu0 0.0
  %695 = vmatpush1.msra.mxu0 0.0
  %696 = vmatprep.subr.mxu0 0.0
  %697 = vmatpush1.msra.mxu0 0.0
  %698 = vmatprep.subr.mxu0 0.0
  %699 = vmatpush1.msra.mxu0 0.0
  %700 = vmatprep.subr.mxu0 0.0
  %701 = vmatpush1.msra.mxu0 0.0
  %702 = vmatprep.subr.mxu0 0.0
  %703 = vmatpush1.msra.mxu0 0.0
  %704 = vmatprep.subr.mxu0 0.0
  %705 = vmatpush1.msra.mxu0 0.0
  %706 = vmatprep.subr.mxu0 0.0
  %707 = vmatpush1.msra.mxu0 0.0
  %708 = vmatprep.subr.mxu0 0.0
  %709 = vmatpush1.msra.mxu0 %v676
  %710 = vmatprep.subr.mxu0 0.0
  %711 = vmatpush2.msra.mxu0 0.0
  %712 = vmatprep.subr.mxu0 0.0
  %713 = vmatpush2.msra.mxu0 0.0
  %714 = vmatprep.subr.mxu0 0.0
  %715 = vmatpush2.msra.mxu0 0.0
  %716 = vmatprep.subr.mxu0 0.0
  %717 = vmatpush2.msra.mxu0 0.0
  %718 = vmatprep.subr.mxu0 0.0
  %719 = vmatpush2.msra.mxu0 0.0
  %720 = vmatprep.subr.mxu0 0.0
  %721 = vmatpush2.msra.mxu0 0.0
  %722 = vmatprep.subr.mxu0 0.0
  %723 = vmatpush2.msra.mxu0 0.0
  %724 = vmatprep.subr.mxu0 0.0
  %725 = vmatpush2.msra.mxu0 0.0
  %726 = vmatprep.subr.mxu0 0.0
  %727 = vmatpush2.msra.mxu0 0.0
  %728 = vmatprep.subr.mxu0 0.0
  %729 = vmatpush2.msra.mxu0 0.0
  %730 = vmatprep.subr.mxu0 0.0
  %731 = vmatpush2.msra.mxu0 0.0
  %732 = vmatprep.subr.mxu0 0.0
  %733 = vmatpush2.msra.mxu0 0.0
  %734 = vmatprep.subr.mxu0 0.0
  %735 = vmatpush2.msra.mxu0 0.0
  %736 = vmatprep.subr.mxu0 0.0
  %737 = vmatpush2.msra.mxu0 0.0
  %738 = vmatprep.subr.mxu0 0.0
  %739 = vmatpush2.msra.mxu0 0.0
  %740 = vmatprep.subr.mxu0 0.0
  %741 = vmatpush2.msra.mxu0 0.0
  %742 = vmatprep.mubr.f32.mxu0 0.0
  %743 = vmatmul.mubr.f32.gmra.mxu0 %v191
  %v744 = vpop.f32.mrf.mxu0
  %v745 = vadd.f32 0.0, %v744
  %v746 = vpop.f32.mrf.mxu0
  %747 = vdwg.mxu0
  %v749 = vsel %vm193, %v605, 0
  %751 = vmatprep.subr.mxu0 0.0
  %752 = vmatpush1.msra.mxu0 0.0
  %753 = vmatprep.subr.mxu0 0.0
  %754 = vmatpush1.msra.mxu0 0.0
  %755 = vmatprep.subr.mxu0 0.0
  %756 = vmatpush1.msra.mxu0 0.0
  %757 = vmatprep.subr.mxu0 0.0
  %758 = vmatpush1.msra.mxu0 0.0
  %759 = vmatprep.subr.mxu0 0.0
  %760 = vmatpush1.msra.mxu0 0.0
  %761 = vmatprep.subr.mxu0 0.0
  %762 = vmatpush1.msra.mxu0 0.0
  %763 = vmatprep.subr.mxu0 0.0
  %764 = vmatpush1.msra.mxu0 0.0
  %765 = vmatprep.subr.mxu0 0.0
  %766 = vmatpush1.msra.mxu0 0.0
  %767 = vmatprep.subr.mxu0 0.0
  %768 = vmatpush1.msra.mxu0 0.0
  %769 = vmatprep.subr.mxu0 0.0
  %770 = vmatpush1.msra.mxu0 0.0
  %771 = vmatprep.subr.mxu0 0.0
  %772 = vmatpush1.msra.mxu0 0.0
  %773 = vmatprep.subr.mxu0 0.0
  %774 = vmatpush1.msra.mxu0 0.0
  %775 = vmatprep.subr.mxu0 0.0
  %776 = vmatpush1.msra.mxu0 0.0
  %777 = vmatprep.subr.mxu0 0.0
  %778 = vmatpush1.msra.mxu0 0.0
  %779 = vmatprep.subr.mxu0 0.0
  %780 = vmatpush1.msra.mxu0 0.0
  %781 = vmatprep.subr.mxu0 0.0
  %782 = vmatpush1.msra.mxu0 %v749
  %783 = vmatprep.subr.mxu0 0.0
  %784 = vmatpush2.msra.mxu0 0.0
  %785 = vmatprep.subr.mxu0 0.0
  %786 = vmatpush2.msra.mxu0 0.0
  %787 = vmatprep.subr.mxu0 0.0
  %788 = vmatpush2.msra.mxu0 0.0
  %789 = vmatprep.subr.mxu0 0.0
  %790 = vmatpush2.msra.mxu0 0.0
  %791 = vmatprep.subr.mxu0 0.0
  %792 = vmatpush2.msra.mxu0 0.0
  %793 = vmatprep.subr.mxu0 0.0
  %794 = vmatpush2.msra.mxu0 0.0
  %795 = vmatprep.subr.mxu0 0.0
  %796 = vmatpush2.msra.mxu0 0.0
  %797 = vmatprep.subr.mxu0 0.0
  %798 = vmatpush2.msra.mxu0 0.0
  %799 = vmatprep.subr.mxu0 0.0
  %800 = vmatpush2.msra.mxu0 0.0
  %801 = vmatprep.subr.mxu0 0.0
  %802 = vmatpush2.msra.mxu0 0.0
  %803 = vmatprep.subr.mxu0 0.0
  %804 = vmatpush2.msra.mxu0 0.0
  %805 = vmatprep.subr.mxu0 0.0
  %806 = vmatpush2.msra.mxu0 0.0
  %807 = vmatprep.subr.mxu0 0.0
  %808 = vmatpush2.msra.mxu0 0.0
  %809 = vmatprep.subr.mxu0 0.0
  %810 = vmatpush2.msra.mxu0 0.0
  %811 = vmatprep.subr.mxu0 0.0
  %812 = vmatpush2.msra.mxu0 0.0
  %813 = vmatprep.subr.mxu0 0.0
  %814 = vmatpush2.msra.mxu0 0.0
  %815 = vmatprep.mubr.f32.mxu0 0.0
  %816 = vmatmul.mubr.f32.gmra.mxu0 %v191
  %v817 = vpop.f32.mrf.mxu0
  %v818 = vadd.f32 %v745, %v817
  %v819 = vpop.f32.mrf.mxu0
  %820 = vdwg.mxu0
  %v821 = vmul.f32 %v669, %v669
  %v823 = vsel %vm193, %v821, 0
  %825 = vmatprep.subr.mxu0 0.0
  %826 = vmatpush1.msra.mxu0 0.0
  %827 = vmatprep.subr.mxu0 0.0
  %828 = vmatpush1.msra.mxu0 0.0
  %829 = vmatprep.subr.mxu0 0.0
  %830 = vmatpush1.msra.mxu0 0.0
  %831 = vmatprep.subr.mxu0 0.0
  %832 = vmatpush1.msra.mxu0 0.0
  %833 = vmatprep.subr.mxu0 0.0
  %834 = vmatpush1.msra.mxu0 0.0
  %835 = vmatprep.subr.mxu0 0.0
  %836 = vmatpush1.msra.mxu0 0.0
  %837 = vmatprep.subr.mxu0 0.0
  %838 = vmatpush1.msra.mxu0 0.0
  %839 = vmatprep.subr.mxu0 0.0
  %840 = vmatpush1.msra.mxu0 0.0
  %841 = vmatprep.subr.mxu0 0.0
  %842 = vmatpush1.msra.mxu0 0.0
  %843 = vmatprep.subr.mxu0 0.0
  %844 = vmatpush1.msra.mxu0 0.0
  %845 = vmatprep.subr.mxu0 0.0
  %846 = vmatpush1.msra.mxu0 0.0
  %847 = vmatprep.subr.mxu0 0.0
  %848 = vmatpush1.msra.mxu0 0.0
  %849 = vmatprep.subr.mxu0 0.0
  %850 = vmatpush1.msra.mxu0 0.0
  %851 = vmatprep.subr.mxu0 0.0
  %852 = vmatpush1.msra.mxu0 0.0
  %853 = vmatprep.subr.mxu0 0.0
  %854 = vmatpush1.msra.mxu0 0.0
  %855 = vmatprep.subr.mxu0 0.0
  %856 = vmatpush1.msra.mxu0 %v823
  %857 = vmatprep.subr.mxu0 0.0
  %858 = vmatpush2.msra.mxu0 0.0
  %859 = vmatprep.subr.mxu0 0.0
  %860 = vmatpush2.msra.mxu0 0.0
  %861 = vmatprep.subr.mxu0 0.0
  %862 = vmatpush2.msra.mxu0 0.0
  %863 = vmatprep.subr.mxu0 0.0
  %864 = vmatpush2.msra.mxu0 0.0
  %865 = vmatprep.subr.mxu0 0.0
  %866 = vmatpush2.msra.mxu0 0.0
  %867 = vmatprep.subr.mxu0 0.0
  %868 = vmatpush2.msra.mxu0 0.0
  %869 = vmatprep.subr.mxu0 0.0
  %870 = vmatpush2.msra.mxu0 0.0
  %871 = vmatprep.subr.mxu0 0.0
  %872 = vmatpush2.msra.mxu0 0.0
  %873 = vmatprep.subr.mxu0 0.0
  %874 = vmatpush2.msra.mxu0 0.0
  %875 = vmatprep.subr.mxu0 0.0
  %876 = vmatpush2.msra.mxu0 0.0
  %877 = vmatprep.subr.mxu0 0.0
  %878 = vmatpush2.msra.mxu0 0.0
  %879 = vmatprep.subr.mxu0 0.0
  %880 = vmatpush2.msra.mxu0 0.0
  %881 = vmatprep.subr.mxu0 0.0
  %882 = vmatpush2.msra.mxu0 0.0
  %883 = vmatprep.subr.mxu0 0.0
  %884 = vmatpush2.msra.mxu0 0.0
  %885 = vmatprep.subr.mxu0 0.0
  %886 = vmatpush2.msra.mxu0 0.0
  %887 = vmatprep.subr.mxu0 0.0
  %888 = vmatpush2.msra.mxu0 0.0
  %889 = vmatprep.mubr.f32.mxu0 0.0
  %890 = vmatmul.mubr.f32.gmra.mxu0 %v191
  %v891 = vpop.f32.mrf.mxu0
  %v892 = vadd.f32 0.0, %v891
  %v893 = vpop.f32.mrf.mxu0
  %894 = vdwg.mxu0
  %v896 = vsel %vm193, %v611, 0
  %898 = vmatprep.subr.mxu0 0.0
  %899 = vmatpush1.msra.mxu0 0.0
  %900 = vmatprep.subr.mxu0 0.0
  %901 = vmatpush1.msra.mxu0 0.0
  %902 = vmatprep.subr.mxu0 0.0
  %903 = vmatpush1.msra.mxu0 0.0
  %904 = vmatprep.subr.mxu0 0.0
  %905 = vmatpush1.msra.mxu0 0.0
  %906 = vmatprep.subr.mxu0 0.0
  %907 = vmatpush1.msra.mxu0 0.0
  %908 = vmatprep.subr.mxu0 0.0
  %909 = vmatpush1.msra.mxu0 0.0
  %910 = vmatprep.subr.mxu0 0.0
  %911 = vmatpush1.msra.mxu0 0.0
  %912 = vmatprep.subr.mxu0 0.0
  %913 = vmatpush1.msra.mxu0 0.0
  %914 = vmatprep.subr.mxu0 0.0
  %915 = vmatpush1.msra.mxu0 0.0
  %916 = vmatprep.subr.mxu0 0.0
  %917 = vmatpush1.msra.mxu0 0.0
  %918 = vmatprep.subr.mxu0 0.0
  %919 = vmatpush1.msra.mxu0 0.0
  %920 = vmatprep.subr.mxu0 0.0
  %921 = vmatpush1.msra.mxu0 0.0
  %922 = vmatprep.subr.mxu0 0.0
  %923 = vmatpush1.msra.mxu0 0.0
  %924 = vmatprep.subr.mxu0 0.0
  %925 = vmatpush1.msra.mxu0 0.0
  %926 = vmatprep.subr.mxu0 0.0
  %927 = vmatpush1.msra.mxu0 0.0
  %928 = vmatprep.subr.mxu0 0.0
  %929 = vmatpush1.msra.mxu0 %v896
  %930 = vmatprep.subr.mxu0 0.0
  %931 = vmatpush2.msra.mxu0 0.0
  %932 = vmatprep.subr.mxu0 0.0
  %933 = vmatpush2.msra.mxu0 0.0
  %934 = vmatprep.subr.mxu0 0.0
  %935 = vmatpush2.msra.mxu0 0.0
  %936 = vmatprep.subr.mxu0 0.0
  %937 = vmatpush2.msra.mxu0 0.0
  %938 = vmatprep.subr.mxu0 0.0
  %939 = vmatpush2.msra.mxu0 0.0
  %940 = vmatprep.subr.mxu0 0.0
  %941 = vmatpush2.msra.mxu0 0.0
  %942 = vmatprep.subr.mxu0 0.0
  %943 = vmatpush2.msra.mxu0 0.0
  %944 = vmatprep.subr.mxu0 0.0
  %945 = vmatpush2.msra.mxu0 0.0
  %946 = vmatprep.subr.mxu0 0.0
  %947 = vmatpush2.msra.mxu0 0.0
  %948 = vmatprep.subr.mxu0 0.0
  %949 = vmatpush2.msra.mxu0 0.0
  %950 = vmatprep.subr.mxu0 0.0
  %951 = vmatpush2.msra.mxu0 0.0
  %952 = vmatprep.subr.mxu0 0.0
  %953 = vmatpush2.msra.mxu0 0.0
  %954 = vmatprep.subr.mxu0 0.0
  %955 = vmatpush2.msra.mxu0 0.0
  %956 = vmatprep.subr.mxu0 0.0
  %957 = vmatpush2.msra.mxu0 0.0
  %958 = vmatprep.subr.mxu0 0.0
  %959 = vmatpush2.msra.mxu0 0.0
  %960 = vmatprep.subr.mxu0 0.0
  %961 = vmatpush2.msra.mxu0 0.0
  %962 = vmatprep.mubr.f32.mxu0 0.0
  %963 = vmatmul.mubr.f32.gmra.mxu0 %v191
  %v964 = vpop.f32.mrf.mxu0
  %v965 = vadd.f32 %v892, %v964
  %v966 = vpop.f32.mrf.mxu0
  %967 = vdwg.mxu0
  %v968 = vld [vmem:[%s5] sm:$0x1]
  %v969 = vld [vmem:[%s6] sm:$0x1]
  %v970 = vmul.f32 %v818, %v489
  %v971 = vmul.f32 %v965, %v489
  %v972 = vmul.f32 %v970, %v970
  %v973 = vsub.f32 %v971, %v972
  %v974 = vmax.f32 %v973, 0.0
  %v975 = vadd.f32 %v974, 1e-05
  %v976 = vrsqrt.pop %v975
  %v977 = vmul.f32 %v968, %v976
  %v978 = vmul.f32 %v970, %v977
  %v979 = vsub.f32 %v969, %v978
  %v980 = vld [vmem:[%s7] sm:$0xff]
  %v981 = vld [vmem:[%s7 + $0x8] sm:$0xff]
  %v982 = vld [vmem:[%s7 + $0x10] sm:$0xff]
  %v983 = vld [vmem:[%s7 + $0x18] sm:$0xff]
  %v984 = vpack.c.bf16 %v981, %v980
  %v985 = vpack.c.bf16 %v983, %v982
  %v986 = vld [vmem:[%s0] sm:$0x7f]
  %v987 = vpack.c.bf16 %v986, %v986
  %v989 = vsel %vm73, %v987, 0
  %991 = vmatprep.subr.bf16.mxu0 0
  %992 = vmatpush1.bf16.msra.mxu0 0
  %993 = vmatprep.subr.bf16.mxu0 0
  %994 = vmatpush1.bf16.msra.mxu0 0
  %995 = vmatprep.subr.bf16.mxu0 0
  %996 = vmatpush1.bf16.msra.mxu0 0
  %997 = vmatprep.subr.bf16.mxu0 0
  %998 = vmatpush1.bf16.msra.mxu0 0
  %999 = vmatprep.subr.bf16.mxu0 0
  %1000 = vmatpush1.bf16.msra.mxu0 0
  %1001 = vmatprep.subr.bf16.mxu0 0
  %1002 = vmatpush1.bf16.msra.mxu0 0
  %1003 = vmatprep.subr.bf16.mxu0 0
  %1004 = vmatpush1.bf16.msra.mxu0 %v985
  %1005 = vmatprep.subr.bf16.mxu0 0
  %1006 = vmatpush1.bf16.msra.mxu0 %v984
  %1007 = vmatprep.subr.bf16.mxu0 0
  %1008 = vmatpush2.bf16.msra.mxu0 0
  %1009 = vmatprep.subr.bf16.mxu0 0
  %1010 = vmatpush2.bf16.msra.mxu0 0
  %1011 = vmatprep.subr.bf16.mxu0 0
  %1012 = vmatpush2.bf16.msra.mxu0 0
  %1013 = vmatprep.subr.bf16.mxu0 0
  %1014 = vmatpush2.bf16.msra.mxu0 0
  %1015 = vmatprep.subr.bf16.mxu0 0
  %1016 = vmatpush2.bf16.msra.mxu0 0
  %1017 = vmatprep.subr.bf16.mxu0 0
  %1018 = vmatpush2.bf16.msra.mxu0 0
  %1019 = vmatprep.subr.bf16.mxu0 0
  %1020 = vmatpush2.bf16.msra.mxu0 0
  %1021 = vmatprep.subr.bf16.mxu0 0
  %1022 = vmatpush2.bf16.msra.mxu0 0
  %1023 = vmatprep.mubr.bf16.mxu0 0
  %1024 = vmatmul.mubr.bf16.gmra.mxu0 %v989
  %v1025 = vpop.f32.mrf.mxu0
  %v1026 = vadd.f32 0.0, %v1025
  %v1027 = vpop.f32.mrf.mxu0
  %v1028 = vpop.f32.mrf.mxu0
  %v1029 = vpop.f32.mrf.mxu0
  %1030 = vdwg.mxu0
  %v1031 = vmul.f32 %v1026, %v1026
  %v1032 = vld [vmem:[%s125] sm:$0x7f]
  %v1033 = vpack.c.bf16 %v1032, %v1032
  %v1035 = vsel %vm73, %v1033, 0
  %1037 = vmatprep.subr.bf16.mxu0 0
  %1038 = vmatpush1.bf16.msra.mxu0 0
  %1039 = vmatprep.subr.bf16.mxu0 0
  %1040 = vmatpush1.bf16.msra.mxu0 0
  %1041 = vmatprep.subr.bf16.mxu0 0
  %1042 = vmatpush1.bf16.msra.mxu0 0
  %1043 = vmatprep.subr.bf16.mxu0 0
  %1044 = vmatpush1.bf16.msra.mxu0 0
  %1045 = vmatprep.subr.bf16.mxu0 0
  %1046 = vmatpush1.bf16.msra.mxu0 0
  %1047 = vmatprep.subr.bf16.mxu0 0
  %1048 = vmatpush1.bf16.msra.mxu0 0
  %1049 = vmatprep.subr.bf16.mxu0 0
  %1050 = vmatpush1.bf16.msra.mxu0 %v985
  %1051 = vmatprep.subr.bf16.mxu0 0
  %1052 = vmatpush1.bf16.msra.mxu0 %v984
  %1053 = vmatprep.subr.bf16.mxu0 0
  %1054 = vmatpush2.bf16.msra.mxu0 0
  %1055 = vmatprep.subr.bf16.mxu0 0
  %1056 = vmatpush2.bf16.msra.mxu0 0
  %1057 = vmatprep.subr.bf16.mxu0 0
  %1058 = vmatpush2.bf16.msra.mxu0 0
  %1059 = vmatprep.subr.bf16.mxu0 0
  %1060 = vmatpush2.bf16.msra.mxu0 0
  %1061 = vmatprep.subr.bf16.mxu0 0
  %1062 = vmatpush2.bf16.msra.mxu0 0
  %1063 = vmatprep.subr.bf16.mxu0 0
  %1064 = vmatpush2.bf16.msra.mxu0 0
  %1065 = vmatprep.subr.bf16.mxu0 0
  %1066 = vmatpush2.bf16.msra.mxu0 0
  %1067 = vmatprep.subr.bf16.mxu0 0
  %1068 = vmatpush2.bf16.msra.mxu0 0
  %1069 = vmatprep.mubr.bf16.mxu0 0
  %1070 = vmatmul.mubr.bf16.gmra.mxu0 %v1035
  %v1071 = vpop.f32.mrf.mxu0
  %v1072 = vadd.f32 0.0, %v1071
  %v1073 = vpop.f32.mrf.mxu0
  %v1074 = vpop.f32.mrf.mxu0
  %v1075 = vpop.f32.mrf.mxu0
  %1076 = vdwg.mxu0
  %v1078 = vsel %vm193, %v1072, 0
  %1080 = vmatprep.subr.mxu0 0.0
  %1081 = vmatpush1.msra.mxu0 0.0
  %1082 = vmatprep.subr.mxu0 0.0
  %1083 = vmatpush1.msra.mxu0 0.0
  %1084 = vmatprep.subr.mxu0 0.0
  %1085 = vmatpush1.msra.mxu0 0.0
  %1086 = vmatprep.subr.mxu0 0.0
  %1087 = vmatpush1.msra.mxu0 0.0
  %1088 = vmatprep.subr.mxu0 0.0
  %1089 = vmatpush1.msra.mxu0 0.0
  %1090 = vmatprep.subr.mxu0 0.0
  %1091 = vmatpush1.msra.mxu0 0.0
  %1092 = vmatprep.subr.mxu0 0.0
  %1093 = vmatpush1.msra.mxu0 0.0
  %1094 = vmatprep.subr.mxu0 0.0
  %1095 = vmatpush1.msra.mxu0 0.0
  %1096 = vmatprep.subr.mxu0 0.0
  %1097 = vmatpush1.msra.mxu0 0.0
  %1098 = vmatprep.subr.mxu0 0.0
  %1099 = vmatpush1.msra.mxu0 0.0
  %1100 = vmatprep.subr.mxu0 0.0
  %1101 = vmatpush1.msra.mxu0 0.0
  %1102 = vmatprep.subr.mxu0 0.0
  %1103 = vmatpush1.msra.mxu0 0.0
  %1104 = vmatprep.subr.mxu0 0.0
  %1105 = vmatpush1.msra.mxu0 0.0
  %1106 = vmatprep.subr.mxu0 0.0
  %1107 = vmatpush1.msra.mxu0 0.0
  %1108 = vmatprep.subr.mxu0 0.0
  %1109 = vmatpush1.msra.mxu0 0.0
  %1110 = vmatprep.subr.mxu0 0.0
  %1111 = vmatpush1.msra.mxu0 %v1078
  %1112 = vmatprep.subr.mxu0 0.0
  %1113 = vmatpush2.msra.mxu0 0.0
  %1114 = vmatprep.subr.mxu0 0.0
  %1115 = vmatpush2.msra.mxu0 0.0
  %1116 = vmatprep.subr.mxu0 0.0
  %1117 = vmatpush2.msra.mxu0 0.0
  %1118 = vmatprep.subr.mxu0 0.0
  %1119 = vmatpush2.msra.mxu0 0.0
  %1120 = vmatprep.subr.mxu0 0.0
  %1121 = vmatpush2.msra.mxu0 0.0
  %1122 = vmatprep.subr.mxu0 0.0
  %1123 = vmatpush2.msra.mxu0 0.0
  %1124 = vmatprep.subr.mxu0 0.0
  %1125 = vmatpush2.msra.mxu0 0.0
  %1126 = vmatprep.subr.mxu0 0.0
  %1127 = vmatpush2.msra.mxu0 0.0
  %1128 = vmatprep.subr.mxu0 0.0
  %1129 = vmatpush2.msra.mxu0 0.0
  %1130 = vmatprep.subr.mxu0 0.0
  %1131 = vmatpush2.msra.mxu0 0.0
  %1132 = vmatprep.subr.mxu0 0.0
  %1133 = vmatpush2.msra.mxu0 0.0
  %1134 = vmatprep.subr.mxu0 0.0
  %1135 = vmatpush2.msra.mxu0 0.0
  %1136 = vmatprep.subr.mxu0 0.0
  %1137 = vmatpush2.msra.mxu0 0.0
  %1138 = vmatprep.subr.mxu0 0.0
  %1139 = vmatpush2.msra.mxu0 0.0
  %1140 = vmatprep.subr.mxu0 0.0
  %1141 = vmatpush2.msra.mxu0 0.0
  %1142 = vmatprep.subr.mxu0 0.0
  %1143 = vmatpush2.msra.mxu0 0.0
  %1144 = vmatprep.mubr.f32.mxu0 0.0
  %1145 = vmatmul.mubr.f32.gmra.mxu0 %v191
  %v1146 = vpop.f32.mrf.mxu0
  %v1147 = vadd.f32 0.0, %v1146
  %v1148 = vpop.f32.mrf.mxu0
  %1149 = vdwg.mxu0
  %v1151 = vsel %vm193, %v1026, 0
  %1153 = vmatprep.subr.mxu0 0.0
  %1154 = vmatpush1.msra.mxu0 0.0
  %1155 = vmatprep.subr.mxu0 0.0
  %1156 = vmatpush1.msra.mxu0 0.0
  %1157 = vmatprep.subr.mxu0 0.0
  %1158 = vmatpush1.msra.mxu0 0.0
  %1159 = vmatprep.subr.mxu0 0.0
  %1160 = vmatpush1.msra.mxu0 0.0
  %1161 = vmatprep.subr.mxu0 0.0
  %1162 = vmatpush1.msra.mxu0 0.0
  %1163 = vmatprep.subr.mxu0 0.0
  %1164 = vmatpush1.msra.mxu0 0.0
  %1165 = vmatprep.subr.mxu0 0.0
  %1166 = vmatpush1.msra.mxu0 0.0
  %1167 = vmatprep.subr.mxu0 0.0
  %1168 = vmatpush1.msra.mxu0 0.0
  %1169 = vmatprep.subr.mxu0 0.0
  %1170 = vmatpush1.msra.mxu0 0.0
  %1171 = vmatprep.subr.mxu0 0.0
  %1172 = vmatpush1.msra.mxu0 0.0
  %1173 = vmatprep.subr.mxu0 0.0
  %1174 = vmatpush1.msra.mxu0 0.0
  %1175 = vmatprep.subr.mxu0 0.0
  %1176 = vmatpush1.msra.mxu0 0.0
  %1177 = vmatprep.subr.mxu0 0.0
  %1178 = vmatpush1.msra.mxu0 0.0
  %1179 = vmatprep.subr.mxu0 0.0
  %1180 = vmatpush1.msra.mxu0 0.0
  %1181 = vmatprep.subr.mxu0 0.0
  %1182 = vmatpush1.msra.mxu0 0.0
  %1183 = vmatprep.subr.mxu0 0.0
  %1184 = vmatpush1.msra.mxu0 %v1151
  %1185 = vmatprep.subr.mxu0 0.0
  %1186 = vmatpush2.msra.mxu0 0.0
  %1187 = vmatprep.subr.mxu0 0.0
  %1188 = vmatpush2.msra.mxu0 0.0
  %1189 = vmatprep.subr.mxu0 0.0
  %1190 = vmatpush2.msra.mxu0 0.0
  %1191 = vmatprep.subr.mxu0 0.0
  %1192 = vmatpush2.msra.mxu0 0.0
  %1193 = vmatprep.subr.mxu0 0.0
  %1194 = vmatpush2.msra.mxu0 0.0
  %1195 = vmatprep.subr.mxu0 0.0
  %1196 = vmatpush2.msra.mxu0 0.0
  %1197 = vmatprep.subr.mxu0 0.0
  %1198 = vmatpush2.msra.mxu0 0.0
  %1199 = vmatprep.subr.mxu0 0.0
  %1200 = vmatpush2.msra.mxu0 0.0
  %1201 = vmatprep.subr.mxu0 0.0
  %1202 = vmatpush2.msra.mxu0 0.0
  %1203 = vmatprep.subr.mxu0 0.0
  %1204 = vmatpush2.msra.mxu0 0.0
  %1205 = vmatprep.subr.mxu0 0.0
  %1206 = vmatpush2.msra.mxu0 0.0
  %1207 = vmatprep.subr.mxu0 0.0
  %1208 = vmatpush2.msra.mxu0 0.0
  %1209 = vmatprep.subr.mxu0 0.0
  %1210 = vmatpush2.msra.mxu0 0.0
  %1211 = vmatprep.subr.mxu0 0.0
  %1212 = vmatpush2.msra.mxu0 0.0
  %1213 = vmatprep.subr.mxu0 0.0
  %1214 = vmatpush2.msra.mxu0 0.0
  %1215 = vmatprep.subr.mxu0 0.0
  %1216 = vmatpush2.msra.mxu0 0.0
  %1217 = vmatprep.mubr.f32.mxu0 0.0
  %1218 = vmatmul.mubr.f32.gmra.mxu0 %v191
  %v1219 = vpop.f32.mrf.mxu0
  %v1220 = vadd.f32 %v1147, %v1219
  %v1221 = vpop.f32.mrf.mxu0
  %1222 = vdwg.mxu0
  %v1223 = vmul.f32 %v1072, %v1072
  %v1225 = vsel %vm193, %v1223, 0
  %1227 = vmatprep.subr.mxu0 0.0
  %1228 = vmatpush1.msra.mxu0 0.0
  %1229 = vmatprep.subr.mxu0 0.0
  %1230 = vmatpush1.msra.mxu0 0.0
  %1231 = vmatprep.subr.mxu0 0.0
  %1232 = vmatpush1.msra.mxu0 0.0
  %1233 = vmatprep.subr.mxu0 0.0
  %1234 = vmatpush1.msra.mxu0 0.0
  %1235 = vmatprep.subr.mxu0 0.0
  %1236 = vmatpush1.msra.mxu0 0.0
  %1237 = vmatprep.subr.mxu0 0.0
  %1238 = vmatpush1.msra.mxu0 0.0
  %1239 = vmatprep.subr.mxu0 0.0
  %1240 = vmatpush1.msra.mxu0 0.0
  %1241 = vmatprep.subr.mxu0 0.0
  %1242 = vmatpush1.msra.mxu0 0.0
  %1243 = vmatprep.subr.mxu0 0.0
  %1244 = vmatpush1.msra.mxu0 0.0
  %1245 = vmatprep.subr.mxu0 0.0
  %1246 = vmatpush1.msra.mxu0 0.0
  %1247 = vmatprep.subr.mxu0 0.0
  %1248 = vmatpush1.msra.mxu0 0.0
  %1249 = vmatprep.subr.mxu0 0.0
  %1250 = vmatpush1.msra.mxu0 0.0
  %1251 = vmatprep.subr.mxu0 0.0
  %1252 = vmatpush1.msra.mxu0 0.0
  %1253 = vmatprep.subr.mxu0 0.0
  %1254 = vmatpush1.msra.mxu0 0.0
  %1255 = vmatprep.subr.mxu0 0.0
  %1256 = vmatpush1.msra.mxu0 0.0
  %1257 = vmatprep.subr.mxu0 0.0
  %1258 = vmatpush1.msra.mxu0 %v1225
  %1259 = vmatprep.subr.mxu0 0.0
  %1260 = vmatpush2.msra.mxu0 0.0
  %1261 = vmatprep.subr.mxu0 0.0
  %1262 = vmatpush2.msra.mxu0 0.0
  %1263 = vmatprep.subr.mxu0 0.0
  %1264 = vmatpush2.msra.mxu0 0.0
  %1265 = vmatprep.subr.mxu0 0.0
  %1266 = vmatpush2.msra.mxu0 0.0
  %1267 = vmatprep.subr.mxu0 0.0
  %1268 = vmatpush2.msra.mxu0 0.0
  %1269 = vmatprep.subr.mxu0 0.0
  %1270 = vmatpush2.msra.mxu0 0.0
  %1271 = vmatprep.subr.mxu0 0.0
  %1272 = vmatpush2.msra.mxu0 0.0
  %1273 = vmatprep.subr.mxu0 0.0
  %1274 = vmatpush2.msra.mxu0 0.0
  %1275 = vmatprep.subr.mxu0 0.0
  %1276 = vmatpush2.msra.mxu0 0.0
  %1277 = vmatprep.subr.mxu0 0.0
  %1278 = vmatpush2.msra.mxu0 0.0
  %1279 = vmatprep.subr.mxu0 0.0
  %1280 = vmatpush2.msra.mxu0 0.0
  %1281 = vmatprep.subr.mxu0 0.0
  %1282 = vmatpush2.msra.mxu0 0.0
  %1283 = vmatprep.subr.mxu0 0.0
  %1284 = vmatpush2.msra.mxu0 0.0
  %1285 = vmatprep.subr.mxu0 0.0
  %1286 = vmatpush2.msra.mxu0 0.0
  %1287 = vmatprep.subr.mxu0 0.0
  %1288 = vmatpush2.msra.mxu0 0.0
  %1289 = vmatprep.subr.mxu0 0.0
  %1290 = vmatpush2.msra.mxu0 0.0
  %1291 = vmatprep.mubr.f32.mxu0 0.0
  %1292 = vmatmul.mubr.f32.gmra.mxu0 %v191
  %v1293 = vpop.f32.mrf.mxu0
  %v1294 = vadd.f32 0.0, %v1293
  %v1295 = vpop.f32.mrf.mxu0
  %1296 = vdwg.mxu0
  %v1298 = vsel %vm193, %v1031, 0
  %1300 = vmatprep.subr.mxu0 0.0
  %1301 = vmatpush1.msra.mxu0 0.0
  %1302 = vmatprep.subr.mxu0 0.0
  %1303 = vmatpush1.msra.mxu0 0.0
  %1304 = vmatprep.subr.mxu0 0.0
  %1305 = vmatpush1.msra.mxu0 0.0
  %1306 = vmatprep.subr.mxu0 0.0
  %1307 = vmatpush1.msra.mxu0 0.0
  %1308 = vmatprep.subr.mxu0 0.0
  %1309 = vmatpush1.msra.mxu0 0.0
  %1310 = vmatprep.subr.mxu0 0.0
  %1311 = vmatpush1.msra.mxu0 0.0
  %1312 = vmatprep.subr.mxu0 0.0
  %1313 = vmatpush1.msra.mxu0 0.0
  %1314 = vmatprep.subr.mxu0 0.0
  %1315 = vmatpush1.msra.mxu0 0.0
  %1316 = vmatprep.subr.mxu0 0.0
  %1317 = vmatpush1.msra.mxu0 0.0
  %1318 = vmatprep.subr.mxu0 0.0
  %1319 = vmatpush1.msra.mxu0 0.0
  %1320 = vmatprep.subr.mxu0 0.0
  %1321 = vmatpush1.msra.mxu0 0.0
  %1322 = vmatprep.subr.mxu0 0.0
  %1323 = vmatpush1.msra.mxu0 0.0
  %1324 = vmatprep.subr.mxu0 0.0
  %1325 = vmatpush1.msra.mxu0 0.0
  %1326 = vmatprep.subr.mxu0 0.0
  %1327 = vmatpush1.msra.mxu0 0.0
  %1328 = vmatprep.subr.mxu0 0.0
  %1329 = vmatpush1.msra.mxu0 0.0
  %1330 = vmatprep.subr.mxu0 0.0
  %1331 = vmatpush1.msra.mxu0 %v1298
  %1332 = vmatprep.subr.mxu0 0.0
  %1333 = vmatpush2.msra.mxu0 0.0
  %1334 = vmatprep.subr.mxu0 0.0
  %1335 = vmatpush2.msra.mxu0 0.0
  %1336 = vmatprep.subr.mxu0 0.0
  %1337 = vmatpush2.msra.mxu0 0.0
  %1338 = vmatprep.subr.mxu0 0.0
  %1339 = vmatpush2.msra.mxu0 0.0
  %1340 = vmatprep.subr.mxu0 0.0
  %1341 = vmatpush2.msra.mxu0 0.0
  %1342 = vmatprep.subr.mxu0 0.0
  %1343 = vmatpush2.msra.mxu0 0.0
  %1344 = vmatprep.subr.mxu0 0.0
  %1345 = vmatpush2.msra.mxu0 0.0
  %1346 = vmatprep.subr.mxu0 0.0
  %1347 = vmatpush2.msra.mxu0 0.0
  %1348 = vmatprep.subr.mxu0 0.0
  %1349 = vmatpush2.msra.mxu0 0.0
  %1350 = vmatprep.subr.mxu0 0.0
  %1351 = vmatpush2.msra.mxu0 0.0
  %1352 = vmatprep.subr.mxu0 0.0
  %1353 = vmatpush2.msra.mxu0 0.0
  %1354 = vmatprep.subr.mxu0 0.0
  %1355 = vmatpush2.msra.mxu0 0.0
  %1356 = vmatprep.subr.mxu0 0.0
  %1357 = vmatpush2.msra.mxu0 0.0
  %1358 = vmatprep.subr.mxu0 0.0
  %1359 = vmatpush2.msra.mxu0 0.0
  %1360 = vmatprep.subr.mxu0 0.0
  %1361 = vmatpush2.msra.mxu0 0.0
  %1362 = vmatprep.subr.mxu0 0.0
  %1363 = vmatpush2.msra.mxu0 0.0
  %1364 = vmatprep.mubr.f32.mxu0 0.0
  %1365 = vmatmul.mubr.f32.gmra.mxu0 %v191
  %v1366 = vpop.f32.mrf.mxu0
  %v1367 = vadd.f32 %v1294, %v1366
  %v1368 = vpop.f32.mrf.mxu0
  %1369 = vdwg.mxu0
  %v1370 = vld [vmem:[%s8] sm:$0x1]
  %v1371 = vld [vmem:[%s9] sm:$0x1]
  %v1372 = vmul.f32 %v1220, %v489
  %v1373 = vmul.f32 %v1367, %v489
  %v1374 = vmul.f32 %v1372, %v1372
  %v1375 = vsub.f32 %v1373, %v1374
  %v1376 = vmax.f32 %v1375, 0.0
  %v1377 = vadd.f32 %v1376, 1e-05
  %v1378 = vrsqrt.pop %v1377
  %v1379 = vmul.f32 %v1370, %v1378
  %v1380 = vmul.f32 %v1372, %v1379
  %v1381 = vsub.f32 %v1371, %v1380
  %v1382 = vld [vmem:[#allocation2] sm:$0x7f]
  %v1384 = vlaneseq
  %v1385 = vshrl.u32 %v1384, 7
  %v1386 = vsub.s32 0, %v1385
  %v1387 = vrot.slane %v977, %v1386
  %v1389 = vmul.f32 %v1382, %v1387
  %v1391 = vlaneseq
  %v1392 = vshrl.u32 %v1391, 7
  %v1393 = vsub.s32 0, %v1392
  %v1394 = vrot.slane %v979, %v1393
  %v1396 = vadd.f32 %v1389, %v1394
  %v1398 = vlaneseq
  %v1399 = vshrl.u32 %v1398, 7
  %v1400 = vsub.s32 0, %v1399
  %v1401 = vrot.slane %v1379, %v1400
  %v1403 = vmul.f32 %v1026, %v1401
  %v1404 = vadd.f32 %v1396, %v1403
  %v1406 = vlaneseq
  %v1407 = vshrl.u32 %v1406, 7
  %v1408 = vsub.s32 0, %v1407
  %v1409 = vrot.slane %v1381, %v1408
  %v1411 = vadd.f32 %v1404, %v1409
  %v1412 = vmax.f32 %v1411, 0.0
  %1413 = vst.msk [vmem:[%s10] sm:$0x7f] %vm122, %v1412
  %v1414 = vld [vmem:[%s125] sm:$0x7f]
  %v1415 = vpack.c.bf16 %v1414, %v1414
  %v1417 = vsel %vm73, %v1415, 0
  %1419 = vmatprep.subr.bf16.mxu0 0
  %1420 = vmatpush1.bf16.msra.mxu0 0
  %1421 = vmatprep.subr.bf16.mxu0 0
  %1422 = vmatpush1.bf16.msra.mxu0 0
  %1423 = vmatprep.subr.bf16.mxu0 0
  %1424 = vmatpush1.bf16.msra.mxu0 0
  %1425 = vmatprep.subr.bf16.mxu0 0
  %1426 = vmatpush1.bf16.msra.mxu0 0
  %1427 = vmatprep.subr.bf16.mxu0 0
  %1428 = vmatpush1.bf16.msra.mxu0 0
  %1429 = vmatprep.subr.bf16.mxu0 0
  %1430 = vmatpush1.bf16.msra.mxu0 0
  %1431 = vmatprep.subr.bf16.mxu0 0
  %1432 = vmatpush1.bf16.msra.mxu0 %v985
  %1433 = vmatprep.subr.bf16.mxu0 0
  %1434 = vmatpush1.bf16.msra.mxu0 %v984
  %1435 = vmatprep.subr.bf16.mxu0 0
  %1436 = vmatpush2.bf16.msra.mxu0 0
  %1437 = vmatprep.subr.bf16.mxu0 0
  %1438 = vmatpush2.bf16.msra.mxu0 0
  %1439 = vmatprep.subr.bf16.mxu0 0
  %1440 = vmatpush2.bf16.msra.mxu0 0
  %1441 = vmatprep.subr.bf16.mxu0 0
  %1442 = vmatpush2.bf16.msra.mxu0 0
  %1443 = vmatprep.subr.bf16.mxu0 0
  %1444 = vmatpush2.bf16.msra.mxu0 0
  %1445 = vmatprep.subr.bf16.mxu0 0
  %1446 = vmatpush2.bf16.msra.mxu0 0
  %1447 = vmatprep.subr.bf16.mxu0 0
  %1448 = vmatpush2.bf16.msra.mxu0 0
  %1449 = vmatprep.subr.bf16.mxu0 0
  %1450 = vmatpush2.bf16.msra.mxu0 0
  %1451 = vmatprep.mubr.bf16.mxu0 0
  %1452 = vmatmul.mubr.bf16.gmra.mxu0 %v1417
  %v1453 = vpop.f32.mrf.mxu0
  %v1454 = vadd.f32 0.0, %v1453
  %v1455 = vpop.f32.mrf.mxu0
  %v1456 = vpop.f32.mrf.mxu0
  %v1457 = vpop.f32.mrf.mxu0
  %1458 = vdwg.mxu0
  %v1459 = vld [vmem:[%s187] sm:$0x7f]
  %v1460 = vmul.f32 %v1459, %v1387
  %v1461 = vadd.f32 %v1460, %v1394
  %v1462 = vmul.f32 %v1454, %v1401
  %v1463 = vadd.f32 %v1461, %v1462
  %v1464 = vadd.f32 %v1463, %v1409
  %v1465 = vmax.f32 %v1464, 0.0
  %s1466 = scalar_lea.vmem %s10, 8
  %1467 = vst.msk [vmem:[%s1466] sm:$0x7f] %vm122, %v1465
  // Predicated region
  $region42: #{resnet1d_forward.9} parent=0 // pred_check
    _
  $region43: #{resnet1d_forward.9} parent=0 // pred_check_branch
    %1469 = sbr.rel (0) target = $region45
  $region44: #{resnet1d_forward.9} parent=0 // pred_region
    _
  $region45: #{resnet1d_forward.9} parent=0 // pred_fallthru
    _
  // Predicated region
  $region46: #{resnet1d_forward.9} parent=0 // pred_check
    _
  $region47: #{resnet1d_forward.9} parent=0 // pred_check_branch
    %1471 = sbr.rel (0) target = $region49
  $region48: #{resnet1d_forward.9} parent=0 // pred_region
    _
  $region49: #{resnet1d_forward.9} parent=0 // pred_fallthru
    _

</llo_original>
